<compile_context>
chip_gen: v7x
topology: tpu7x:2x2x1
jax: 0.10.0
libtpu: 0.0.40
codegen_flags: <defaults>
</compile_context>

<pallas_src>
import jax
import jax.numpy as jnp
from jax import lax
from jax.experimental import pallas as pl
from jax.experimental.pallas import tpu as pltpu

K = 5          # kernel size
STRIDE = 2
PAD = 2
OUT_PAD = 1
BN_EPS = 1e-5
LEAKY_SLOPE = 0.2

# Phase decomposition of ConvTranspose2d(k=5, s=2, p=2, op=1):
#   out[2*p + r] = sum_taps w[k] * x_halo[p + d],  x_halo = x padded by 1 on each side.
# Each entry is (d = offset into the halo-padded input, k = kernel index).
Y_TAPS = (
    ((0, 4), (1, 2), (2, 0)),   # even output rows: 3 taps
    ((1, 3), (2, 1)),           # odd  output rows: 2 taps
)
X_TAPS = Y_TAPS                  # identical structure along width


def conv_phase_kernel(x_ref, w00_ref, w01_ref, w10_ref, w11_ref, conv_ref, stat_ref):
    """Pass 1: transposed conv as 4 phase matmuls + per-block BN partial sums.

    x_ref:    (1, H+2, W+2, Cin)    halo-padded NHWC input (one batch element)
    w*_ref:   (T*Cin, Cout)         folded per-phase weights, T in {9, 6, 6, 4}
    conv_ref: (1, 4, H, W, Cout)    conv output, phase-major (p = 2*ry + rx)
    stat_ref: (1, 2, Cout)          [sum, sum_sq] over this block, per channel
    """
    H = x_ref.shape[1] - 2
    W = x_ref.shape[2] - 2
    Cout = conv_ref.shape[4]
    w_refs = (w00_ref, w01_ref, w10_ref, w11_ref)

    sums = jnp.zeros((1, 1, Cout), jnp.float32)
    sqs = jnp.zeros((1, 1, Cout), jnp.float32)
    for ry in (0, 1):
        for rx in (0, 1):
            p = 2 * ry + rx
            # im2col: concatenate the shifted halo views so taps*Cin becomes the
            # matmul contraction dimension -> one MXU matmul per phase.
            cols = [
                x_ref[0, dy:dy + H, dx:dx + W, :]
                for (dy, _) in Y_TAPS[ry]
                for (dx, _) in X_TAPS[rx]
            ]
            col = jnp.concatenate(cols, axis=-1)                       # (H, W, T*Cin)
            ph = jnp.einsum("hwc,cd->hwd", col, w_refs[p][...],
                            preferred_element_type=jnp.float32)        # (H, W, Cout)
            conv_ref[0, p] = ph
            # single-pass BN statistics while ph is still live
            sums = sums + jnp.sum(ph, axis=(0, 1), keepdims=True)
            sqs = sqs + jnp.sum(ph * ph, axis=(0, 1), keepdims=True)
    stat_ref[0, 0:1, :] = sums[0]
    stat_ref[0, 1:2, :] = sqs[0]


def bn_act_kernel(conv_ref, scale_ref, shift_ref, o_ref):
    """Pass 2: y = conv * scale + shift (folded BN affine), then LeakyReLU(0.2)."""
    y = conv_ref[...] * scale_ref[...] + shift_ref[...]
    o_ref[...] = jnp.where(y > 0, y, LEAKY_SLOPE * y)


def _fold_phase_weights(w_t):
    """ConvTranspose2d weight (Cin, Cout, K, K) -> 4 folded (T*Cin, Cout) matrices,
    in the same tap order the kernel uses for its im2col concat."""
    folds = []
    for ry in (0, 1):
        for rx in (0, 1):
            blocks = [
                w_t[:, :, ky, kx]                    # (Cin, Cout)
                for (_, ky) in Y_TAPS[ry]
                for (_, kx) in X_TAPS[rx]
            ]
            folds.append(jnp.concatenate(blocks, axis=0))
    return folds


def decoder_block_forward(x_nchw, w_t, gamma, beta):
    """x_nchw: (N, Cin, H, W); w_t: (Cin, Cout, K, K) (ConvTranspose2d layout);
    gamma/beta: (Cout,).  Returns (N, Cout, 2H, 2W) float32 in NCHW."""
    N, Cin, H, W = x_nchw.shape
    Cout = w_t.shape[1]
    Hout, Wout = 2 * H, 2 * W

    # NHWC + 1-pixel halo (replaces the old ~4x-larger zero-dilated buffer).
    x_nhwc = jnp.transpose(x_nchw, (0, 2, 3, 1)).astype(jnp.float32)
    x_halo = jnp.pad(x_nhwc, ((0, 0), (1, 1), (1, 1), (0, 0)))

    w_folds = _fold_phase_weights(w_t.astype(jnp.float32))

    # Pass 1: conv (phase-major layout) + per-batch-element BN partials.
    conv, stats = pl.pallas_call(
        conv_phase_kernel,
        out_shape=(
            jax.ShapeDtypeStruct((N, 4, H, W, Cout), jnp.float32),
            jax.ShapeDtypeStruct((N, 2, Cout), jnp.float32),
        ),
        grid=(N,),
        in_specs=[pl.BlockSpec((1, H + 2, W + 2, Cin), lambda i: (i, 0, 0, 0))]
        + [pl.BlockSpec(w.shape, lambda i: (0, 0)) for w in w_folds],
        out_specs=(
            pl.BlockSpec((1, 4, H, W, Cout), lambda i: (i, 0, 0, 0, 0)),
            pl.BlockSpec((1, 2, Cout), lambda i: (i, 0, 0)),
        ),
        compiler_params=pltpu.CompilerParams(dimension_semantics=("parallel",)),
    )(x_halo, *w_folds)

    # BatchNorm2d training-mode statistics (biased variance), folded to scale/shift.
    cnt = jnp.float32(N * Hout * Wout)
    tot = jnp.sum(stats, axis=0)                              # (2, Cout)
    mean = tot[0] / cnt
    var = jnp.maximum(tot[1] / cnt - mean * mean, 0.0)
    scale = gamma.astype(jnp.float32) * lax.rsqrt(var + BN_EPS)     # (Cout,)
    shift = beta.astype(jnp.float32) - mean * scale                 # (Cout,)
    scale = scale.reshape(1, Cout)
    shift = shift.reshape(1, Cout)

    # Pass 2: normalize + LeakyReLU, tiled over the batch ("parallel" grid axis).
    out_ph = pl.pallas_call(
        bn_act_kernel,
        out_shape=jax.ShapeDtypeStruct((N, 4, H, W, Cout), jnp.float32),
        grid=(N,),
        in_specs=[
            pl.BlockSpec((1, 4, H, W, Cout), lambda i: (i, 0, 0, 0, 0)),
            pl.BlockSpec((1, Cout), lambda i: (0, 0)),
            pl.BlockSpec((1, Cout), lambda i: (0, 0)),
        ],
        out_specs=pl.BlockSpec((1, 4, H, W, Cout), lambda i: (i, 0, 0, 0, 0)),
        compiler_params=pltpu.CompilerParams(dimension_semantics=("parallel",)),
    )(conv, scale, shift)

    # Interleave phases and return NCHW:
    #   out[n, c, 2*py+ry, 2*px+rx] = out_ph[n, 2*ry+rx, py, px, c]
    out = out_ph.reshape(N, 2, 2, H, W, Cout)
    out = jnp.transpose(out, (0, 5, 3, 1, 4, 2)).reshape(N, Cout, Hout, Wout)
    return out


def reference_forward(x_nchw, w_transposed, gamma, beta):
    """Pure-JAX reference (lax conv with lhs dilation == ConvTranspose2d)."""
    Cout = w_transposed.shape[1]
    w_oihw = jnp.transpose(w_transposed[:, :, ::-1, ::-1], (1, 0, 2, 3))
    conv = lax.conv_general_dilated(
        x_nchw.astype(jnp.float32), w_oihw.astype(jnp.float32),
        window_strides=(1, 1),
        padding=[(K - 1 - PAD, K - 1 - PAD + OUT_PAD)] * 2,
        lhs_dilation=(STRIDE, STRIDE),
        dimension_numbers=("NCHW", "OIHW", "NCHW"))
    mean = jnp.mean(conv, axis=(0, 2, 3), keepdims=True)
    var = jnp.mean((conv - mean) ** 2, axis=(0, 2, 3), keepdims=True)
    y = (conv - mean) * lax.rsqrt(var + BN_EPS)
    y = y * gamma.reshape(1, Cout, 1, 1) + beta.reshape(1, Cout, 1, 1)
    return jnp.where(y > 0, y, LEAKY_SLOPE * y)


if __name__ == "__main__":
    # Small shapes consistent with the module: N=2, Cin=4, Cout=8, 16x16 -> 32x32 out.
    N, Cin, Cout, H, W = 2, 4, 8, 16, 16

    key = jax.random.PRNGKey(0)
    kx, kw, kg, kb = jax.random.split(key, 4)

    x = jax.random.normal(kx, (N, Cin, H, W), dtype=jnp.float32)
    # ConvTranspose2d weight shape: (Cin, Cout, K, K), bias=False (norm='batch').
    w_t = jax.random.normal(kw, (Cin, Cout, K, K), dtype=jnp.float32) * 0.1
    gamma = 1.0 + 0.1 * jax.random.normal(kg, (Cout,), dtype=jnp.float32)
    beta = 0.1 * jax.random.normal(kb, (Cout,), dtype=jnp.float32)

    fwd = jax.jit(decoder_block_forward)
    out = jax.block_until_ready(fwd(x, w_t, gamma, beta))

    ref = reference_forward(x, w_t, gamma, beta)
    assert out.shape == (N, Cout, 2 * H, 2 * W), out.shape
    assert jnp.allclose(out, ref, rtol=1e-4, atol=1e-4), float(jnp.max(jnp.abs(out - ref)))

    # TODO(synk): BatchNorm running-stat (momentum=0.9) update is stateful training
    # bookkeeping and is not part of the forward output, so it is not computed here.
    print("KERNEL_OK")
</pallas_src>

<mosaic_0001>
module attributes {stable_mosaic.version = 11 : i64} {
  func.func @conv_phase_kernel(%arg0: i32, %arg1: memref<1x18x18x4xf32, #tpu.memory_space<vmem>>, %arg2: memref<36x8xf32, #tpu.memory_space<vmem>>, %arg3: memref<24x8xf32, #tpu.memory_space<vmem>>, %arg4: memref<24x8xf32, #tpu.memory_space<vmem>>, %arg5: memref<16x8xf32, #tpu.memory_space<vmem>>, %arg6: memref<1x4x16x16x8xf32, #tpu.memory_space<vmem>>, %arg7: memref<1x2x8xf32, #tpu.memory_space<vmem>>) attributes {dimension_semantics = [#tpu.dimension_semantics<parallel>], iteration_bounds = array<i64: 2>, scalar_prefetch = 0 : i64, scratch_operands = 0 : i64, tpu.core_type = #tpu.core_type<tc>, window_params = [{transform_indices = @transform_0, window_bounds = array<i64: 1, 18, 18, 4>}, {pipeline_mode = #tpu.pipeline_mode<synchronous>, transform_indices = @transform_1, window_bounds = array<i64: 36, 8>}, {pipeline_mode = #tpu.pipeline_mode<synchronous>, transform_indices = @transform_2, window_bounds = array<i64: 24, 8>}, {pipeline_mode = #tpu.pipeline_mode<synchronous>, transform_indices = @transform_3, window_bounds = array<i64: 24, 8>}, {pipeline_mode = #tpu.pipeline_mode<synchronous>, transform_indices = @transform_4, window_bounds = array<i64: 16, 8>}, {transform_indices = @transform_5, window_bounds = array<i64: 1, 4, 16, 16, 8>}, {transform_indices = @transform_6, window_bounds = array<i64: 1, 2, 8>}]} {
    %cst = arith.constant 0.000000e+00 : f32
    %0 = vector.broadcast %cst : f32 to vector<1x1x8xf32>
    %cst_0 = arith.constant 0.000000e+00 : f32
    %1 = vector.broadcast %cst_0 : f32 to vector<1x1x8xf32>
    %c0 = arith.constant 0 : index
    %c0_1 = arith.constant 0 : index
    %c0_2 = arith.constant 0 : index
    %c0_3 = arith.constant 0 : index
    %2 = vector.load %arg1[%c0, %c0_1, %c0_2, %c0_3] : memref<1x18x18x4xf32, #tpu.memory_space<vmem>>, vector<1x16x16x4xf32>
    %3 = vector.shape_cast %2 : vector<1x16x16x4xf32> to vector<16x16x4xf32>
    %c0_4 = arith.constant 0 : index
    %c0_5 = arith.constant 0 : index
    %c1 = arith.constant 1 : index
    %c0_6 = arith.constant 0 : index
    %4 = vector.load %arg1[%c0_4, %c0_5, %c1, %c0_6] : memref<1x18x18x4xf32, #tpu.memory_space<vmem>>, vector<1x16x16x4xf32>
    %5 = vector.shape_cast %4 : vector<1x16x16x4xf32> to vector<16x16x4xf32>
    %c0_7 = arith.constant 0 : index
    %c0_8 = arith.constant 0 : index
    %c2 = arith.constant 2 : index
    %c0_9 = arith.constant 0 : index
    %6 = vector.load %arg1[%c0_7, %c0_8, %c2, %c0_9] : memref<1x18x18x4xf32, #tpu.memory_space<vmem>>, vector<1x16x16x4xf32>
    %7 = vector.shape_cast %6 : vector<1x16x16x4xf32> to vector<16x16x4xf32>
    %c0_10 = arith.constant 0 : index
    %c1_11 = arith.constant 1 : index
    %c0_12 = arith.constant 0 : index
    %c0_13 = arith.constant 0 : index
    %8 = vector.load %arg1[%c0_10, %c1_11, %c0_12, %c0_13] : memref<1x18x18x4xf32, #tpu.memory_space<vmem>>, vector<1x16x16x4xf32>
    %9 = vector.shape_cast %8 : vector<1x16x16x4xf32> to vector<16x16x4xf32>
    %c0_14 = arith.constant 0 : index
    %c1_15 = arith.constant 1 : index
    %c1_16 = arith.constant 1 : index
    %c0_17 = arith.constant 0 : index
    %10 = vector.load %arg1[%c0_14, %c1_15, %c1_16, %c0_17] : memref<1x18x18x4xf32, #tpu.memory_space<vmem>>, vector<1x16x16x4xf32>
    %11 = vector.shape_cast %10 : vector<1x16x16x4xf32> to vector<16x16x4xf32>
    %c0_18 = arith.constant 0 : index
    %c1_19 = arith.constant 1 : index
    %c2_20 = arith.constant 2 : index
    %c0_21 = arith.constant 0 : index
    %12 = vector.load %arg1[%c0_18, %c1_19, %c2_20, %c0_21] : memref<1x18x18x4xf32, #tpu.memory_space<vmem>>, vector<1x16x16x4xf32>
    %13 = vector.shape_cast %12 : vector<1x16x16x4xf32> to vector<16x16x4xf32>
    %c0_22 = arith.constant 0 : index
    %c2_23 = arith.constant 2 : index
    %c0_24 = arith.constant 0 : index
    %c0_25 = arith.constant 0 : index
    %14 = vector.load %arg1[%c0_22, %c2_23, %c0_24, %c0_25] : memref<1x18x18x4xf32, #tpu.memory_space<vmem>>, vector<1x16x16x4xf32>
    %15 = vector.shape_cast %14 : vector<1x16x16x4xf32> to vector<16x16x4xf32>
    %c0_26 = arith.constant 0 : index
    %c2_27 = arith.constant 2 : index
    %c1_28 = arith.constant 1 : index
    %c0_29 = arith.constant 0 : index
    %16 = vector.load %arg1[%c0_26, %c2_27, %c1_28, %c0_29] : memref<1x18x18x4xf32, #tpu.memory_space<vmem>>, vector<1x16x16x4xf32>
    %17 = vector.shape_cast %16 : vector<1x16x16x4xf32> to vector<16x16x4xf32>
    %c0_30 = arith.constant 0 : index
    %c2_31 = arith.constant 2 : index
    %c2_32 = arith.constant 2 : index
    %c0_33 = arith.constant 0 : index
    %18 = vector.load %arg1[%c0_30, %c2_31, %c2_32, %c0_33] : memref<1x18x18x4xf32, #tpu.memory_space<vmem>>, vector<1x16x16x4xf32>
    %19 = vector.shape_cast %18 : vector<1x16x16x4xf32> to vector<16x16x4xf32>
    %20 = tpu.concatenate %3, %5, %7, %9, %11, %13, %15, %17, %19 in 2 : vector<16x16x4xf32>, vector<16x16x4xf32>, vector<16x16x4xf32>, vector<16x16x4xf32>, vector<16x16x4xf32>, vector<16x16x4xf32>, vector<16x16x4xf32>, vector<16x16x4xf32>, vector<16x16x4xf32> -> vector<16x16x36xf32>
    %c0_34 = arith.constant 0 : index
    %c0_35 = arith.constant 0 : index
    %21 = vector.load %arg2[%c0_34, %c0_35] : memref<36x8xf32, #tpu.memory_space<vmem>>, vector<36x8xf32>
    "tpu.trace_start"() <{level = 10 : i32, message = "hwc,cd->hwd"}> : () -> ()
    %cst_36 = arith.constant dense<0.000000e+00> : vector<16x16x8xf32>
    %22 = tpu.matmul %20, %21, %cst_36 {dimension_numbers = #tpu.dot_dimension_numbers<[2], [0], [0, 1], [1], [0, 0, 0, 1, 1, 1], [], []>} : vector<16x16x36xf32>, vector<36x8xf32>, vector<16x16x8xf32> -> vector<16x16x8xf32>
    "tpu.trace_stop"() : () -> ()
    %c0_37 = arith.constant 0 : index
    %c0_38 = arith.constant 0 : index
    %c0_39 = arith.constant 0 : index
    %c0_40 = arith.constant 0 : index
    %c0_41 = arith.constant 0 : index
    %23 = vector.load %arg6[%c0_37, %c0_38, %c0_39, %c0_40, %c0_41] : memref<1x4x16x16x8xf32, #tpu.memory_space<vmem>>, vector<1x1x16x16x8xf32>
    %24 = vector.shape_cast %23 : vector<1x1x16x16x8xf32> to vector<16x16x8xf32>
    %25 = vector.shape_cast %22 : vector<16x16x8xf32> to vector<1x1x16x16x8xf32>
    tpu.vector_store %arg6[%c0_37, %c0_38, %c0_39, %c0_40, %c0_41], %25 {strides = array<i32>} : memref<1x4x16x16x8xf32, #tpu.memory_space<vmem>>, vector<1x1x16x16x8xf32>,
    %cst_42 = arith.constant dense<0.000000e+00> : vector<8xf32>
    %26 = vector.multi_reduction <add>, %22, %cst_42 [0, 1] : vector<16x16x8xf32> to vector<8xf32>
    %27 = vector.shape_cast %26 : vector<8xf32> to vector<1x1x8xf32>
    %28 = arith.addf %0, %27 : vector<1x1x8xf32>
    %29 = arith.mulf %22, %22 : vector<16x16x8xf32>
    %cst_43 = arith.constant dense<0.000000e+00> : vector<8xf32>
    %30 = vector.multi_reduction <add>, %29, %cst_43 [0, 1] : vector<16x16x8xf32> to vector<8xf32>
    %31 = vector.shape_cast %30 : vector<8xf32> to vector<1x1x8xf32>
    %32 = arith.addf %1, %31 : vector<1x1x8xf32>
    %c0_44 = arith.constant 0 : index
    %c0_45 = arith.constant 0 : index
    %c1_46 = arith.constant 1 : index
    %c0_47 = arith.constant 0 : index
    %33 = vector.load %arg1[%c0_44, %c0_45, %c1_46, %c0_47] : memref<1x18x18x4xf32, #tpu.memory_space<vmem>>, vector<1x16x16x4xf32>
    %34 = vector.shape_cast %33 : vector<1x16x16x4xf32> to vector<16x16x4xf32>
    %c0_48 = arith.constant 0 : index
    %c0_49 = arith.constant 0 : index
    %c2_50 = arith.constant 2 : index
    %c0_51 = arith.constant 0 : index
    %35 = vector.load %arg1[%c0_48, %c0_49, %c2_50, %c0_51] : memref<1x18x18x4xf32, #tpu.memory_space<vmem>>, vector<1x16x16x4xf32>
    %36 = vector.shape_cast %35 : vector<1x16x16x4xf32> to vector<16x16x4xf32>
    %c0_52 = arith.constant 0 : index
    %c1_53 = arith.constant 1 : index
    %c1_54 = arith.constant 1 : index
    %c0_55 = arith.constant 0 : index
    %37 = vector.load %arg1[%c0_52, %c1_53, %c1_54, %c0_55] : memref<1x18x18x4xf32, #tpu.memory_space<vmem>>, vector<1x16x16x4xf32>
    %38 = vector.shape_cast %37 : vector<1x16x16x4xf32> to vector<16x16x4xf32>
    %c0_56 = arith.constant 0 : index
    %c1_57 = arith.constant 1 : index
    %c2_58 = arith.constant 2 : index
    %c0_59 = arith.constant 0 : index
    %39 = vector.load %arg1[%c0_56, %c1_57, %c2_58, %c0_59] : memref<1x18x18x4xf32, #tpu.memory_space<vmem>>, vector<1x16x16x4xf32>
    %40 = vector.shape_cast %39 : vector<1x16x16x4xf32> to vector<16x16x4xf32>
    %c0_60 = arith.constant 0 : index
    %c2_61 = arith.constant 2 : index
    %c1_62 = arith.constant 1 : index
    %c0_63 = arith.constant 0 : index
    %41 = vector.load %arg1[%c0_60, %c2_61, %c1_62, %c0_63] : memref<1x18x18x4xf32, #tpu.memory_space<vmem>>, vector<1x16x16x4xf32>
    %42 = vector.shape_cast %41 : vector<1x16x16x4xf32> to vector<16x16x4xf32>
    %c0_64 = arith.constant 0 : index
    %c2_65 = arith.constant 2 : index
    %c2_66 = arith.constant 2 : index
    %c0_67 = arith.constant 0 : index
    %43 = vector.load %arg1[%c0_64, %c2_65, %c2_66, %c0_67] : memref<1x18x18x4xf32, #tpu.memory_space<vmem>>, vector<1x16x16x4xf32>
    %44 = vector.shape_cast %43 : vector<1x16x16x4xf32> to vector<16x16x4xf32>
    %45 = tpu.concatenate %34, %36, %38, %40, %42, %44 in 2 : vector<16x16x4xf32>, vector<16x16x4xf32>, vector<16x16x4xf32>, vector<16x16x4xf32>, vector<16x16x4xf32>, vector<16x16x4xf32> -> vector<16x16x24xf32>
    %c0_68 = arith.constant 0 : index
    %c0_69 = arith.constant 0 : index
    %46 = vector.load %arg3[%c0_68, %c0_69] : memref<24x8xf32, #tpu.memory_space<vmem>>, vector<24x8xf32>
    "tpu.trace_start"() <{level = 10 : i32, message = "hwc,cd->hwd"}> : () -> ()
    %cst_70 = arith.constant dense<0.000000e+00> : vector<16x16x8xf32>
    %47 = tpu.matmul %45, %46, %cst_70 {dimension_numbers = #tpu.dot_dimension_numbers<[2], [0], [0, 1], [1], [0, 0, 0, 1, 1, 1], [], []>} : vector<16x16x24xf32>, vector<24x8xf32>, vector<16x16x8xf32> -> vector<16x16x8xf32>
    "tpu.trace_stop"() : () -> ()
    %c0_71 = arith.constant 0 : index
    %c1_72 = arith.constant 1 : index
    %c0_73 = arith.constant 0 : index
    %c0_74 = arith.constant 0 : index
    %c0_75 = arith.constant 0 : index
    %48 = vector.load %arg6[%c0_71, %c1_72, %c0_73, %c0_74, %c0_75] : memref<1x4x16x16x8xf32, #tpu.memory_space<vmem>>, vector<1x1x16x16x8xf32>
    %49 = vector.shape_cast %48 : vector<1x1x16x16x8xf32> to vector<16x16x8xf32>
    %50 = vector.shape_cast %47 : vector<16x16x8xf32> to vector<1x1x16x16x8xf32>
    tpu.vector_store %arg6[%c0_71, %c1_72, %c0_73, %c0_74, %c0_75], %50 {strides = array<i32>} : memref<1x4x16x16x8xf32, #tpu.memory_space<vmem>>, vector<1x1x16x16x8xf32>,
    %cst_76 = arith.constant dense<0.000000e+00> : vector<8xf32>
    %51 = vector.multi_reduction <add>, %47, %cst_76 [0, 1] : vector<16x16x8xf32> to vector<8xf32>
    %52 = vector.shape_cast %51 : vector<8xf32> to vector<1x1x8xf32>
    %53 = arith.addf %28, %52 : vector<1x1x8xf32>
    %54 = arith.mulf %47, %47 : vector<16x16x8xf32>
    %cst_77 = arith.constant dense<0.000000e+00> : vector<8xf32>
    %55 = vector.multi_reduction <add>, %54, %cst_77 [0, 1] : vector<16x16x8xf32> to vector<8xf32>
    %56 = vector.shape_cast %55 : vector<8xf32> to vector<1x1x8xf32>
    %57 = arith.addf %32, %56 : vector<1x1x8xf32>
    %c0_78 = arith.constant 0 : index
    %c1_79 = arith.constant 1 : index
    %c0_80 = arith.constant 0 : index
    %c0_81 = arith.constant 0 : index
    %58 = vector.load %arg1[%c0_78, %c1_79, %c0_80, %c0_81] : memref<1x18x18x4xf32, #tpu.memory_space<vmem>>, vector<1x16x16x4xf32>
    %59 = vector.shape_cast %58 : vector<1x16x16x4xf32> to vector<16x16x4xf32>
    %c0_82 = arith.constant 0 : index
    %c1_83 = arith.constant 1 : index
    %c1_84 = arith.constant 1 : index
    %c0_85 = arith.constant 0 : index
    %60 = vector.load %arg1[%c0_82, %c1_83, %c1_84, %c0_85] : memref<1x18x18x4xf32, #tpu.memory_space<vmem>>, vector<1x16x16x4xf32>
    %61 = vector.shape_cast %60 : vector<1x16x16x4xf32> to vector<16x16x4xf32>
    %c0_86 = arith.constant 0 : index
    %c1_87 = arith.constant 1 : index
    %c2_88 = arith.constant 2 : index
    %c0_89 = arith.constant 0 : index
    %62 = vector.load %arg1[%c0_86, %c1_87, %c2_88, %c0_89] : memref<1x18x18x4xf32, #tpu.memory_space<vmem>>, vector<1x16x16x4xf32>
    %63 = vector.shape_cast %62 : vector<1x16x16x4xf32> to vector<16x16x4xf32>
    %c0_90 = arith.constant 0 : index
    %c2_91 = arith.constant 2 : index
    %c0_92 = arith.constant 0 : index
    %c0_93 = arith.constant 0 : index
    %64 = vector.load %arg1[%c0_90, %c2_91, %c0_92, %c0_93] : memref<1x18x18x4xf32, #tpu.memory_space<vmem>>, vector<1x16x16x4xf32>
    %65 = vector.shape_cast %64 : vector<1x16x16x4xf32> to vector<16x16x4xf32>
    %c0_94 = arith.constant 0 : index
    %c2_95 = arith.constant 2 : index
    %c1_96 = arith.constant 1 : index
    %c0_97 = arith.constant 0 : index
    %66 = vector.load %arg1[%c0_94, %c2_95, %c1_96, %c0_97] : memref<1x18x18x4xf32, #tpu.memory_space<vmem>>, vector<1x16x16x4xf32>
    %67 = vector.shape_cast %66 : vector<1x16x16x4xf32> to vector<16x16x4xf32>
    %c0_98 = arith.constant 0 : index
    %c2_99 = arith.constant 2 : index
    %c2_100 = arith.constant 2 : index
    %c0_101 = arith.constant 0 : index
    %68 = vector.load %arg1[%c0_98, %c2_99, %c2_100, %c0_101] : memref<1x18x18x4xf32, #tpu.memory_space<vmem>>, vector<1x16x16x4xf32>
    %69 = vector.shape_cast %68 : vector<1x16x16x4xf32> to vector<16x16x4xf32>
    %70 = tpu.concatenate %59, %61, %63, %65, %67, %69 in 2 : vector<16x16x4xf32>, vector<16x16x4xf32>, vector<16x16x4xf32>, vector<16x16x4xf32>, vector<16x16x4xf32>, vector<16x16x4xf32> -> vector<16x16x24xf32>
    %c0_102 = arith.constant 0 : index
    %c0_103 = arith.constant 0 : index
    %71 = vector.load %arg4[%c0_102, %c0_103] : memref<24x8xf32, #tpu.memory_space<vmem>>, vector<24x8xf32>
    "tpu.trace_start"() <{level = 10 : i32, message = "hwc,cd->hwd"}> : () -> ()
    %cst_104 = arith.constant dense<0.000000e+00> : vector<16x16x8xf32>
    %72 = tpu.matmul %70, %71, %cst_104 {dimension_numbers = #tpu.dot_dimension_numbers<[2], [0], [0, 1], [1], [0, 0, 0, 1, 1, 1], [], []>} : vector<16x16x24xf32>, vector<24x8xf32>, vector<16x16x8xf32> -> vector<16x16x8xf32>
    "tpu.trace_stop"() : () -> ()
    %c0_105 = arith.constant 0 : index
    %c2_106 = arith.constant 2 : index
    %c0_107 = arith.constant 0 : index
    %c0_108 = arith.constant 0 : index
    %c0_109 = arith.constant 0 : index
    %73 = vector.load %arg6[%c0_105, %c2_106, %c0_107, %c0_108, %c0_109] : memref<1x4x16x16x8xf32, #tpu.memory_space<vmem>>, vector<1x1x16x16x8xf32>
    %74 = vector.shape_cast %73 : vector<1x1x16x16x8xf32> to vector<16x16x8xf32>
    %75 = vector.shape_cast %72 : vector<16x16x8xf32> to vector<1x1x16x16x8xf32>
    tpu.vector_store %arg6[%c0_105, %c2_106, %c0_107, %c0_108, %c0_109], %75 {strides = array<i32>} : memref<1x4x16x16x8xf32, #tpu.memory_space<vmem>>, vector<1x1x16x16x8xf32>,
    %cst_110 = arith.constant dense<0.000000e+00> : vector<8xf32>
    %76 = vector.multi_reduction <add>, %72, %cst_110 [0, 1] : vector<16x16x8xf32> to vector<8xf32>
    %77 = vector.shape_cast %76 : vector<8xf32> to vector<1x1x8xf32>
    %78 = arith.addf %53, %77 : vector<1x1x8xf32>
    %79 = arith.mulf %72, %72 : vector<16x16x8xf32>
    %cst_111 = arith.constant dense<0.000000e+00> : vector<8xf32>
    %80 = vector.multi_reduction <add>, %79, %cst_111 [0, 1] : vector<16x16x8xf32> to vector<8xf32>
    %81 = vector.shape_cast %80 : vector<8xf32> to vector<1x1x8xf32>
    %82 = arith.addf %57, %81 : vector<1x1x8xf32>
    %c0_112 = arith.constant 0 : index
    %c1_113 = arith.constant 1 : index
    %c1_114 = arith.constant 1 : index
    %c0_115 = arith.constant 0 : index
    %83 = vector.load %arg1[%c0_112, %c1_113, %c1_114, %c0_115] : memref<1x18x18x4xf32, #tpu.memory_space<vmem>>, vector<1x16x16x4xf32>
    %84 = vector.shape_cast %83 : vector<1x16x16x4xf32> to vector<16x16x4xf32>
    %c0_116 = arith.constant 0 : index
    %c1_117 = arith.constant 1 : index
    %c2_118 = arith.constant 2 : index
    %c0_119 = arith.constant 0 : index
    %85 = vector.load %arg1[%c0_116, %c1_117, %c2_118, %c0_119] : memref<1x18x18x4xf32, #tpu.memory_space<vmem>>, vector<1x16x16x4xf32>
    %86 = vector.shape_cast %85 : vector<1x16x16x4xf32> to vector<16x16x4xf32>
    %c0_120 = arith.constant 0 : index
    %c2_121 = arith.constant 2 : index
    %c1_122 = arith.constant 1 : index
    %c0_123 = arith.constant 0 : index
    %87 = vector.load %arg1[%c0_120, %c2_121, %c1_122, %c0_123] : memref<1x18x18x4xf32, #tpu.memory_space<vmem>>, vector<1x16x16x4xf32>
    %88 = vector.shape_cast %87 : vector<1x16x16x4xf32> to vector<16x16x4xf32>
    %c0_124 = arith.constant 0 : index
    %c2_125 = arith.constant 2 : index
    %c2_126 = arith.constant 2 : index
    %c0_127 = arith.constant 0 : index
    %89 = vector.load %arg1[%c0_124, %c2_125, %c2_126, %c0_127] : memref<1x18x18x4xf32, #tpu.memory_space<vmem>>, vector<1x16x16x4xf32>
    %90 = vector.shape_cast %89 : vector<1x16x16x4xf32> to vector<16x16x4xf32>
    %91 = tpu.concatenate %84, %86, %88, %90 in 2 : vector<16x16x4xf32>, vector<16x16x4xf32>, vector<16x16x4xf32>, vector<16x16x4xf32> -> vector<16x16x16xf32>
    %c0_128 = arith.constant 0 : index
    %c0_129 = arith.constant 0 : index
    %92 = vector.load %arg5[%c0_128, %c0_129] : memref<16x8xf32, #tpu.memory_space<vmem>>, vector<16x8xf32>
    "tpu.trace_start"() <{level = 10 : i32, message = "hwc,cd->hwd"}> : () -> ()
    %cst_130 = arith.constant dense<0.000000e+00> : vector<16x16x8xf32>
    %93 = tpu.matmul %91, %92, %cst_130 {dimension_numbers = #tpu.dot_dimension_numbers<[2], [0], [0, 1], [1], [0, 0, 0, 1, 1, 1], [], []>} : vector<16x16x16xf32>, vector<16x8xf32>, vector<16x16x8xf32> -> vector<16x16x8xf32>
    "tpu.trace_stop"() : () -> ()
    %c0_131 = arith.constant 0 : index
    %c3 = arith.constant 3 : index
    %c0_132 = arith.constant 0 : index
    %c0_133 = arith.constant 0 : index
    %c0_134 = arith.constant 0 : index
    %94 = vector.load %arg6[%c0_131, %c3, %c0_132, %c0_133, %c0_134] : memref<1x4x16x16x8xf32, #tpu.memory_space<vmem>>, vector<1x1x16x16x8xf32>
    %95 = vector.shape_cast %94 : vector<1x1x16x16x8xf32> to vector<16x16x8xf32>
    %96 = vector.shape_cast %93 : vector<16x16x8xf32> to vector<1x1x16x16x8xf32>
    tpu.vector_store %arg6[%c0_131, %c3, %c0_132, %c0_133, %c0_134], %96 {strides = array<i32>} : memref<1x4x16x16x8xf32, #tpu.memory_space<vmem>>, vector<1x1x16x16x8xf32>,
    %cst_135 = arith.constant dense<0.000000e+00> : vector<8xf32>
    %97 = vector.multi_reduction <add>, %93, %cst_135 [0, 1] : vector<16x16x8xf32> to vector<8xf32>
    %98 = vector.shape_cast %97 : vector<8xf32> to vector<1x1x8xf32>
    %99 = arith.addf %78, %98 : vector<1x1x8xf32>
    %100 = arith.mulf %93, %93 : vector<16x16x8xf32>
    %cst_136 = arith.constant dense<0.000000e+00> : vector<8xf32>
    %101 = vector.multi_reduction <add>, %100, %cst_136 [0, 1] : vector<16x16x8xf32> to vector<8xf32>
    %102 = vector.shape_cast %101 : vector<8xf32> to vector<1x1x8xf32>
    %103 = arith.addf %82, %102 : vector<1x1x8xf32>
    %104 = vector.shape_cast %99 : vector<1x1x8xf32> to vector<1x8xf32>
    %c0_137 = arith.constant 0 : index
    %c0_138 = arith.constant 0 : index
    %c0_139 = arith.constant 0 : index
    %105 = vector.load %arg7[%c0_137, %c0_138, %c0_139] : memref<1x2x8xf32, #tpu.memory_space<vmem>>, vector<1x1x8xf32>
    %106 = vector.shape_cast %105 : vector<1x1x8xf32> to vector<1x8xf32>
    %107 = vector.shape_cast %104 : vector<1x8xf32> to vector<1x1x8xf32>
    tpu.vector_store %arg7[%c0_137, %c0_138, %c0_139], %107 {strides = array<i32>} : memref<1x2x8xf32, #tpu.memory_space<vmem>>, vector<1x1x8xf32>,
    %108 = vector.shape_cast %103 : vector<1x1x8xf32> to vector<1x8xf32>
    %c0_140 = arith.constant 0 : index
    %c1_141 = arith.constant 1 : index
    %c0_142 = arith.constant 0 : index
    %109 = vector.load %arg7[%c0_140, %c1_141, %c0_142] : memref<1x2x8xf32, #tpu.memory_space<vmem>>, vector<1x1x8xf32>
    %110 = vector.shape_cast %109 : vector<1x1x8xf32> to vector<1x8xf32>
    %111 = vector.shape_cast %108 : vector<1x8xf32> to vector<1x1x8xf32>
    tpu.vector_store %arg7[%c0_140, %c1_141, %c0_142], %111 {strides = array<i32>} : memref<1x2x8xf32, #tpu.memory_space<vmem>>, vector<1x1x8xf32>,
    return
  }
  func.func @transform_0(%arg0: i32) -> (i32, i32, i32, i32) {
    %c0_i32 = arith.constant 0 : i32
    %c0_i32_0 = arith.constant 0 : i32
    %c0_i32_1 = arith.constant 0 : i32
    %c0_i32_2 = arith.constant 0 : i32
    return %arg0, %c0_i32, %c0_i32_0, %c0_i32_1 : i32, i32, i32, i32
  }
  func.func @transform_1(%arg0: i32) -> (i32, i32) {
    %c0_i32 = arith.constant 0 : i32
    %c0_i32_0 = arith.constant 0 : i32
    %c0_i32_1 = arith.constant 0 : i32
    return %c0_i32, %c0_i32_0 : i32, i32
  }
  func.func @transform_2(%arg0: i32) -> (i32, i32) {
    %c0_i32 = arith.constant 0 : i32
    %c0_i32_0 = arith.constant 0 : i32
    %c0_i32_1 = arith.constant 0 : i32
    return %c0_i32, %c0_i32_0 : i32, i32
  }
  func.func @transform_3(%arg0: i32) -> (i32, i32) {
    %c0_i32 = arith.constant 0 : i32
    %c0_i32_0 = arith.constant 0 : i32
    %c0_i32_1 = arith.constant 0 : i32
    return %c0_i32, %c0_i32_0 : i32, i32
  }
  func.func @transform_4(%arg0: i32) -> (i32, i32) {
    %c0_i32 = arith.constant 0 : i32
    %c0_i32_0 = arith.constant 0 : i32
    %c0_i32_1 = arith.constant 0 : i32
    return %c0_i32, %c0_i32_0 : i32, i32
  }
  func.func @transform_5(%arg0: i32) -> (i32, i32, i32, i32, i32) {
    %c0_i32 = arith.constant 0 : i32
    %c0_i32_0 = arith.constant 0 : i32
    %c0_i32_1 = arith.constant 0 : i32
    %c0_i32_2 = arith.constant 0 : i32
    %c0_i32_3 = arith.constant 0 : i32
    return %arg0, %c0_i32, %c0_i32_0, %c0_i32_1, %c0_i32_2 : i32, i32, i32, i32, i32
  }
  func.func @transform_6(%arg0: i32) -> (i32, i32, i32) {
    %c0_i32 = arith.constant 0 : i32
    %c0_i32_0 = arith.constant 0 : i32
    %c0_i32_1 = arith.constant 0 : i32
    return %arg0, %c0_i32, %c0_i32_0 : i32, i32, i32
  }
}

module attributes {stable_mosaic.version = 11 : i64} {
  func.func @bn_act_kernel(%arg0: i32, %arg1: memref<1x4x16x16x8xf32, #tpu.memory_space<vmem>>, %arg2: memref<1x8xf32, #tpu.memory_space<vmem>>, %arg3: memref<1x8xf32, #tpu.memory_space<vmem>>, %arg4: memref<1x4x16x16x8xf32, #tpu.memory_space<vmem>>) attributes {dimension_semantics = [#tpu.dimension_semantics<parallel>], iteration_bounds = array<i64: 2>, scalar_prefetch = 0 : i64, scratch_operands = 0 : i64, tpu.core_type = #tpu.core_type<tc>, window_params = [{transform_indices = @transform_0, window_bounds = array<i64: 1, 4, 16, 16, 8>}, {pipeline_mode = #tpu.pipeline_mode<synchronous>, transform_indices = @transform_1, window_bounds = array<i64: 1, 8>}, {pipeline_mode = #tpu.pipeline_mode<synchronous>, transform_indices = @transform_2, window_bounds = array<i64: 1, 8>}, {transform_indices = @transform_3, window_bounds = array<i64: 1, 4, 16, 16, 8>}]} {
    %c0 = arith.constant 0 : index
    %c0_0 = arith.constant 0 : index
    %c0_1 = arith.constant 0 : index
    %c0_2 = arith.constant 0 : index
    %c0_3 = arith.constant 0 : index
    %0 = vector.load %arg1[%c0, %c0_0, %c0_1, %c0_2, %c0_3] : memref<1x4x16x16x8xf32, #tpu.memory_space<vmem>>, vector<1x4x16x16x8xf32>
    %c0_4 = arith.constant 0 : index
    %c0_5 = arith.constant 0 : index
    %1 = vector.load %arg2[%c0_4, %c0_5] : memref<1x8xf32, #tpu.memory_space<vmem>>, vector<1x8xf32>
    %2 = vector.shape_cast %1 : vector<1x8xf32> to vector<1x1x1x1x8xf32>
    %3 = vector.broadcast %2 : vector<1x1x1x1x8xf32> to vector<1x4x16x16x8xf32>
    %4 = arith.mulf %0, %3 : vector<1x4x16x16x8xf32>
    %c0_6 = arith.constant 0 : index
    %c0_7 = arith.constant 0 : index
    %5 = vector.load %arg3[%c0_6, %c0_7] : memref<1x8xf32, #tpu.memory_space<vmem>>, vector<1x8xf32>
    %6 = vector.shape_cast %5 : vector<1x8xf32> to vector<1x1x1x1x8xf32>
    %7 = vector.broadcast %6 : vector<1x1x1x1x8xf32> to vector<1x4x16x16x8xf32>
    %8 = arith.addf %4, %7 : vector<1x4x16x16x8xf32>
    %cst = arith.constant 0.000000e+00 : f32
    %9 = vector.broadcast %cst : f32 to vector<1x4x16x16x8xf32>
    %10 = arith.cmpf ogt, %8, %9 : vector<1x4x16x16x8xf32>
    %cst_8 = arith.constant 2.000000e-01 : f32
    %11 = vector.broadcast %cst_8 : f32 to vector<1x4x16x16x8xf32>
    %12 = arith.mulf %11, %8 : vector<1x4x16x16x8xf32>
    %13 = arith.select %10, %8, %12 : vector<1x4x16x16x8xi1>, vector<1x4x16x16x8xf32>
    %c0_9 = arith.constant 0 : index
    %c0_10 = arith.constant 0 : index
    %c0_11 = arith.constant 0 : index
    %c0_12 = arith.constant 0 : index
    %c0_13 = arith.constant 0 : index
    %14 = vector.load %arg4[%c0_9, %c0_10, %c0_11, %c0_12, %c0_13] : memref<1x4x16x16x8xf32, #tpu.memory_space<vmem>>, vector<1x4x16x16x8xf32>
    tpu.vector_store %arg4[%c0_9, %c0_10, %c0_11, %c0_12, %c0_13], %13 {strides = array<i32>} : memref<1x4x16x16x8xf32, #tpu.memory_space<vmem>>, vector<1x4x16x16x8xf32>,
    return
  }
  func.func @transform_0(%arg0: i32) -> (i32, i32, i32, i32, i32) {
    %c0_i32 = arith.constant 0 : i32
    %c0_i32_0 = arith.constant 0 : i32
    %c0_i32_1 = arith.constant 0 : i32
    %c0_i32_2 = arith.constant 0 : i32
    %c0_i32_3 = arith.constant 0 : i32
    return %arg0, %c0_i32, %c0_i32_0, %c0_i32_1, %c0_i32_2 : i32, i32, i32, i32, i32
  }
  func.func @transform_1(%arg0: i32) -> (i32, i32) {
    %c0_i32 = arith.constant 0 : i32
    %c0_i32_0 = arith.constant 0 : i32
    %c0_i32_1 = arith.constant 0 : i32
    return %c0_i32, %c0_i32_0 : i32, i32
  }
  func.func @transform_2(%arg0: i32) -> (i32, i32) {
    %c0_i32 = arith.constant 0 : i32
    %c0_i32_0 = arith.constant 0 : i32
    %c0_i32_1 = arith.constant 0 : i32
    return %c0_i32, %c0_i32_0 : i32, i32
  }
  func.func @transform_3(%arg0: i32) -> (i32, i32, i32, i32, i32) {
    %c0_i32 = arith.constant 0 : i32
    %c0_i32_0 = arith.constant 0 : i32
    %c0_i32_1 = arith.constant 0 : i32
    %c0_i32_2 = arith.constant 0 : i32
    %c0_i32_3 = arith.constant 0 : i32
    return %arg0, %c0_i32, %c0_i32_0, %c0_i32_1, %c0_i32_2 : i32, i32, i32, i32, i32
  }
}

</mosaic_0001>

<llo_original>
// kernel: decoder_block_forward.3
$region0: #{decoder_block_forward.3}
  #allocation0 [shape = 'u32[]', space=smem, size = 0x4, offset = 0x4, fixed_abs, tag = 'smem constant byte address 0x4 - core index']
  #allocation1 [shape = 'u32[144,128]{1,0:T(1,128)}', space=vmem, size = 0x12000, scoped, tag = 'internal scratch']
  %s0 = inlined_call_operand.vmem [shape: f32[2,4,16,16,8], index: 0, kind: input, shape index: {}]
  %s1 = inlined_call_operand.vmem [shape: f32[1,8], index: 1, kind: input, shape index: {}]
  %s2 = inlined_call_operand.vmem [shape: f32[1,8], index: 2, kind: input, shape index: {}]
  %s3 = inlined_call_operand.vmem [shape: f32[2,4,16,16,8], index: 3, kind: output, shape index: {}]
  %s4 = sld [smem:[#allocation0]]
  $region45: #{decoder_block_forward.3} parent=0
    _
  %s6 = ssub.s32 1, %s4
  %s7 = scalar_select 0, %s6, %s4
  loop: start=0, step=1, limit=4
  $region2: #{decoder_block_forward.3} parent=0 // loop_pre_header
    _
  $region3: #{decoder_block_forward.3} parent=0 // loop_header
    %s9 = sphi 0, %s13
    %p10 = scmp.ge.s32.totalorder %s9, 4
    %s19 = sphi 0, %s21
    %s22 = sphi 0, %s19
    %s23 = sphi 0, %s22
    %s39 = sphi 0, %s23
    %s43 = sphi 0, %s43
    %s45 = sphi 0, %s43
    %s46 = sphi 0, %s45
    %s60 = sphi 0, %s46
    %s64 = sphi 0, %s64
    %s66 = sphi 0, %s64
    %s67 = sphi 0, %s66
    %s81 = sphi 0, %s67
    %s87 = sphi 0, %s89
    %s90 = sphi 0, %s87
    %s91 = sphi 0, %s90
    %s107 = sphi 0, %s91
  $region4: #{decoder_block_forward.3} parent=0 // loop_header_branch
    %12 = sbr.rel (%p10) target = $region8
  $region5: #{decoder_block_forward.3} parent=0 // loop_body
    %s14 = ssub.s32 %s9, 1
    %s15 = ssub.s32 %s9, 2
    %s16 = sadd.s32 %s9, 1
    %s17 = ssub.s32 %s9, %s16
    %p18 = scmp.eq.s32.totalorder %s17, 0
    %s20 = sadd.s32 %s19, 1
    %s21 = scalar_select %p18, %s19, %s20
    %p24 = pneg %p18
    %p25 = scmp.eq.s32.totalorder %s9, 1
    %p26 = por %p24, %p25
    %p27 = scmp.ne.s32.totalorder %s19, %s22
    %p28 = scmp.eq.s32.totalorder %s9, 0
    %p29 = por %p27, %p28
    %p30 = scmp.ne.s32.totalorder %s19, %s22
    %p31 = scmp.eq.s32.totalorder %s14, 1
    %p32 = por %p30, %p31
    %p33 = scmp.ne.s32.totalorder %s22, %s23
    %p34 = scmp.eq.s32.totalorder %s14, 0
    %p35 = por %p33, %p34
    %p36 = scmp.ne.s32.totalorder %s22, %s23
    %p37 = scmp.eq.s32.totalorder %s15, 1
    %p38 = por %p36, %p37
    %p40 = scmp.ne.s32.totalorder %s23, %s39
    %p41 = scmp.eq.s32.totalorder %s15, 0
    %p42 = por %p40, %p41
    %s44 = sadd.s32 %s43, 1
    %p47 = scmp.eq.s32.totalorder %s9, 1
    %p48 = scmp.ne.s32.totalorder %s43, %s45
    %p49 = scmp.eq.s32.totalorder %s9, 0
    %p50 = por %p48, %p49
    %p51 = scmp.ne.s32.totalorder %s43, %s45
    %p52 = scmp.eq.s32.totalorder %s14, 1
    %p53 = por %p51, %p52
    %p54 = scmp.ne.s32.totalorder %s45, %s46
    %p55 = scmp.eq.s32.totalorder %s14, 0
    %p56 = por %p54, %p55
    %p57 = scmp.ne.s32.totalorder %s45, %s46
    %p58 = scmp.eq.s32.totalorder %s15, 1
    %p59 = por %p57, %p58
    %p61 = scmp.ne.s32.totalorder %s46, %s60
    %p62 = scmp.eq.s32.totalorder %s15, 0
    %p63 = por %p61, %p62
    %s65 = sadd.s32 %s64, 1
    %p68 = scmp.eq.s32.totalorder %s9, 1
    %p69 = scmp.ne.s32.totalorder %s64, %s66
    %p70 = scmp.eq.s32.totalorder %s9, 0
    %p71 = por %p69, %p70
    %p72 = scmp.ne.s32.totalorder %s64, %s66
    %p73 = scmp.eq.s32.totalorder %s14, 1
    %p74 = por %p72, %p73
    %p75 = scmp.ne.s32.totalorder %s66, %s67
    %p76 = scmp.eq.s32.totalorder %s14, 0
    %p77 = por %p75, %p76
    %p78 = scmp.ne.s32.totalorder %s66, %s67
    %p79 = scmp.eq.s32.totalorder %s15, 1
    %p80 = por %p78, %p79
    %p82 = scmp.ne.s32.totalorder %s67, %s81
    %p83 = scmp.eq.s32.totalorder %s15, 0
    %p84 = por %p82, %p83
    %s85 = ssub.s32 %s9, %s16
    %p86 = scmp.eq.s32.totalorder %s85, 0
    %s88 = sadd.s32 %s87, 1
    %s89 = scalar_select %p86, %s87, %s88
    %p92 = pneg %p86
    %p93 = scmp.eq.s32.totalorder %s9, 1
    %p94 = por %p92, %p93
    %p95 = scmp.ne.s32.totalorder %s87, %s90
    %p96 = scmp.eq.s32.totalorder %s9, 0
    %p97 = por %p95, %p96
    %p98 = scmp.ne.s32.totalorder %s87, %s90
    %p99 = scmp.eq.s32.totalorder %s14, 1
    %p100 = por %p98, %p99
    %p101 = scmp.ne.s32.totalorder %s90, %s91
    %p102 = scmp.eq.s32.totalorder %s14, 0
    %p103 = por %p101, %p102
    %p104 = scmp.ne.s32.totalorder %s90, %s91
    %p105 = scmp.eq.s32.totalorder %s15, 1
    %p106 = por %p104, %p105
    %p108 = scmp.ne.s32.totalorder %s91, %s107
    %p109 = scmp.eq.s32.totalorder %s15, 0
    %p110 = por %p108, %p109
    %p111 = scmp.le.s32.totalorder 1, %s9
    %p112 = scmp.lt.s32.totalorder %s9, 3
    %p113 = pnand %p111, %p112
    %p114 = pneg %p113
    // Predicated region
    $region9: #{decoder_block_forward.3} parent=5 // pred_check
      _
    $region10: #{decoder_block_forward.3} parent=5 // pred_check_branch
      %116 = sbr.rel (%p113) target = $region12
    $region11: #{decoder_block_forward.3} parent=5 // pred_region
      %s117 = ssub.s32 %s9, 1
      // Predicated region
      $region13: #{decoder_block_forward.3} parent=11 // pred_check
        %p118 = pneg %p56
      $region14: #{decoder_block_forward.3} parent=11 // pred_check_branch
        %120 = sbr.rel (%p118) target = $region16
      $region15: #{decoder_block_forward.3} parent=11 // pred_region
        _
      $region16: #{decoder_block_forward.3} parent=11 // pred_fallthru
        _
      // Predicated region
      $region17: #{decoder_block_forward.3} parent=11 // pred_check
        %p121 = pneg %p77
      $region18: #{decoder_block_forward.3} parent=11 // pred_check_branch
        %123 = sbr.rel (%p121) target = $region20
      $region19: #{decoder_block_forward.3} parent=11 // pred_region
        _
      $region20: #{decoder_block_forward.3} parent=11 // pred_fallthru
        _
    $region12: #{decoder_block_forward.3} parent=5 // pred_fallthru
      _
    %p124 = scmp.lt.s32.totalorder %s9, 2
    // Predicated region
    $region21: #{decoder_block_forward.3} parent=5 // pred_check
      %p125 = pneg %p124
    $region22: #{decoder_block_forward.3} parent=5 // pred_check_branch
      %127 = sbr.rel (%p125) target = $region24
    $region23: #{decoder_block_forward.3} parent=5 // pred_region
      // Predicated region
      $region25: #{decoder_block_forward.3} parent=23 // pred_check
        %p128 = pneg %p29
      $region26: #{decoder_block_forward.3} parent=23 // pred_check_branch
        %130 = sbr.rel (%p128) target = $region28
      $region27: #{decoder_block_forward.3} parent=23 // pred_region
        %p131 = scmp.lt.s32.totalorder %s9, 1
        %s132 = scalar_select %p131, %s9, 1
        %s133 = smul.addr %s132, 128
        %s134 = smul.addr %s133, 8
        %s135 = scalar_lea.vmem %s0, %s134
      $region28: #{decoder_block_forward.3} parent=23 // pred_fallthru
        _
    $region24: #{decoder_block_forward.3} parent=5 // pred_fallthru
      _
    %p136 = scmp.le.s32.totalorder 1, %s9
    %p137 = scmp.lt.s32.totalorder %s9, 3
    %p138 = pnand %p136, %p137
    %p139 = pneg %p138
    // Predicated region
    $region29: #{decoder_block_forward.3} parent=5 // pred_check
      _
    $region30: #{decoder_block_forward.3} parent=5 // pred_check_branch
      %141 = sbr.rel (%p138) target = $region32
    $region31: #{decoder_block_forward.3} parent=5 // pred_region
      %s142 = ssub.s32 %s9, 1
      %p143 = scmp.lt.s32.totalorder %s14, 1
      %s144 = scalar_select %p143, %s14, 1
      %s145 = smul.addr %s144, 128
      %s146 = smul.addr %s145, 8
      %s147 = scalar_lea.vmem %s0, %s146
      %p148 = pneg %p35
      %p149 = pneg %p32
      %p150 = pneg %p56
      %p151 = pneg %p53
      %p152 = pneg %p77
      %p153 = pneg %p74
      %p154 = pneg %p103
      %p155 = pneg %p100
      %p156 = scmp.lt.s32.totalorder %s14, 1
      %s157 = scalar_select %p156, %s14, 1
      %s158 = smul.addr %s157, 128
      %s159 = smul.addr %s158, 8
      %s160 = scalar_lea.vmem %s3, %s159
      %p161 = scmp.lt.s32.totalorder %s14, 1
      %s162 = scalar_select %p161, %s14, 1
      %s163 = smul.addr %s162, 128
      %s164 = smul.addr %s163, 8
      %s165 = scalar_lea.vmem %s0, %s164
      %p166 = scmp.lt.s32.totalorder %s14, 1
      %s167 = scalar_select %p166, %s14, 1
      %s168 = smul.addr %s167, 128
      %s169 = smul.addr %s168, 8
      %s170 = scalar_lea.vmem %s3, %s169
      %v171 = vld [vmem:[%s165] sm:$0xff]
      %v172 = vld [vmem:[%s165 + $0x8] sm:$0xff]
      %v173 = vld [vmem:[%s165 + $0x10] sm:$0xff]
      %v174 = vld [vmem:[%s165 + $0x18] sm:$0xff]
      %v175 = vld [vmem:[%s165 + $0x20] sm:$0xff]
      %v176 = vld [vmem:[%s165 + $0x28] sm:$0xff]
      %v177 = vld [vmem:[%s165 + $0x30] sm:$0xff]
      %v178 = vld [vmem:[%s165 + $0x38] sm:$0xff]
      %v179 = vld [vmem:[%s165 + $0x40] sm:$0xff]
      %v180 = vld [vmem:[%s165 + $0x48] sm:$0xff]
      %v181 = vld [vmem:[%s165 + $0x50] sm:$0xff]
      %v182 = vld [vmem:[%s165 + $0x58] sm:$0xff]
      %v183 = vld [vmem:[%s165 + $0x60] sm:$0xff]
      %v184 = vld [vmem:[%s165 + $0x68] sm:$0xff]
      %v185 = vld [vmem:[%s165 + $0x70] sm:$0xff]
      %v186 = vld [vmem:[%s165 + $0x78] sm:$0xff]
      %v187 = vld [vmem:[%s165 + $0x80] sm:$0xff]
      %v188 = vld [vmem:[%s165 + $0x88] sm:$0xff]
      %v189 = vld [vmem:[%s165 + $0x90] sm:$0xff]
      %v190 = vld [vmem:[%s165 + $0x98] sm:$0xff]
      %v191 = vld [vmem:[%s165 + $0xa0] sm:$0xff]
      %v192 = vld [vmem:[%s165 + $0xa8] sm:$0xff]
      %v193 = vld [vmem:[%s165 + $0xb0] sm:$0xff]
      %v194 = vld [vmem:[%s165 + $0xb8] sm:$0xff]
      %v195 = vld [vmem:[%s165 + $0xc0] sm:$0xff]
      %v196 = vld [vmem:[%s165 + $0xc8] sm:$0xff]
      %v197 = vld [vmem:[%s165 + $0xd0] sm:$0xff]
      %v198 = vld [vmem:[%s165 + $0xd8] sm:$0xff]
      %v199 = vld [vmem:[%s165 + $0xe0] sm:$0xff]
      %v200 = vld [vmem:[%s165 + $0xe8] sm:$0xff]
      %v201 = vld [vmem:[%s165 + $0xf0] sm:$0xff]
      %v202 = vld [vmem:[%s165 + $0xf8] sm:$0xff]
      %v203 = vld [vmem:[%s165 + $0x100] sm:$0xff]
      %v204 = vld [vmem:[%s165 + $0x108] sm:$0xff]
      %v205 = vld [vmem:[%s165 + $0x110] sm:$0xff]
      %v206 = vld [vmem:[%s165 + $0x118] sm:$0xff]
      %v207 = vld [vmem:[%s165 + $0x120] sm:$0xff]
      %v208 = vld [vmem:[%s165 + $0x128] sm:$0xff]
      %v209 = vld [vmem:[%s165 + $0x130] sm:$0xff]
      %v210 = vld [vmem:[%s165 + $0x138] sm:$0xff]
      %v211 = vld [vmem:[%s165 + $0x140] sm:$0xff]
      %v212 = vld [vmem:[%s165 + $0x148] sm:$0xff]
      %v213 = vld [vmem:[%s165 + $0x150] sm:$0xff]
      %v214 = vld [vmem:[%s165 + $0x158] sm:$0xff]
      %v215 = vld [vmem:[%s165 + $0x160] sm:$0xff]
      %v216 = vld [vmem:[%s165 + $0x168] sm:$0xff]
      %v217 = vld [vmem:[%s165 + $0x170] sm:$0xff]
      %v218 = vld [vmem:[%s165 + $0x178] sm:$0xff]
      %v219 = vld [vmem:[%s165 + $0x180] sm:$0xff]
      %v220 = vld [vmem:[%s165 + $0x188] sm:$0xff]
      %v221 = vld [vmem:[%s165 + $0x190] sm:$0xff]
      %v222 = vld [vmem:[%s165 + $0x198] sm:$0xff]
      %v223 = vld [vmem:[%s165 + $0x1a0] sm:$0xff]
      %v224 = vld [vmem:[%s165 + $0x1a8] sm:$0xff]
      %v225 = vld [vmem:[%s165 + $0x1b0] sm:$0xff]
      %v226 = vld [vmem:[%s165 + $0x1b8] sm:$0xff]
      %v227 = vld [vmem:[%s165 + $0x1c0] sm:$0xff]
      %v228 = vld [vmem:[%s165 + $0x1c8] sm:$0xff]
      %v229 = vld [vmem:[%s165 + $0x1d0] sm:$0xff]
      %v230 = vld [vmem:[%s165 + $0x1d8] sm:$0xff]
      %v231 = vld [vmem:[%s165 + $0x1e0] sm:$0xff]
      %v232 = vld [vmem:[%s165 + $0x1e8] sm:$0xff]
      %v233 = vld [vmem:[%s165 + $0x1f0] sm:$0xff]
      %v234 = vld [vmem:[%s165 + $0x1f8] sm:$0xff]
      %v235 = vld [vmem:[%s165 + $0x200] sm:$0xff]
      %v236 = vld [vmem:[%s165 + $0x208] sm:$0xff]
      %v237 = vld [vmem:[%s165 + $0x210] sm:$0xff]
      %v238 = vld [vmem:[%s165 + $0x218] sm:$0xff]
      %v239 = vld [vmem:[%s165 + $0x220] sm:$0xff]
      %v240 = vld [vmem:[%s165 + $0x228] sm:$0xff]
      %v241 = vld [vmem:[%s165 + $0x230] sm:$0xff]
      %v242 = vld [vmem:[%s165 + $0x238] sm:$0xff]
      %v243 = vld [vmem:[%s165 + $0x240] sm:$0xff]
      %v244 = vld [vmem:[%s165 + $0x248] sm:$0xff]
      %v245 = vld [vmem:[%s165 + $0x250] sm:$0xff]
      %v246 = vld [vmem:[%s165 + $0x258] sm:$0xff]
      %v247 = vld [vmem:[%s165 + $0x260] sm:$0xff]
      %v248 = vld [vmem:[%s165 + $0x268] sm:$0xff]
      %v249 = vld [vmem:[%s165 + $0x270] sm:$0xff]
      %v250 = vld [vmem:[%s165 + $0x278] sm:$0xff]
      %v251 = vld [vmem:[%s165 + $0x280] sm:$0xff]
      %v252 = vld [vmem:[%s165 + $0x288] sm:$0xff]
      %v253 = vld [vmem:[%s165 + $0x290] sm:$0xff]
      %v254 = vld [vmem:[%s165 + $0x298] sm:$0xff]
      %v255 = vld [vmem:[%s165 + $0x2a0] sm:$0xff]
      %v256 = vld [vmem:[%s165 + $0x2a8] sm:$0xff]
      %v257 = vld [vmem:[%s165 + $0x2b0] sm:$0xff]
      %v258 = vld [vmem:[%s165 + $0x2b8] sm:$0xff]
      %v259 = vld [vmem:[%s165 + $0x2c0] sm:$0xff]
      %v260 = vld [vmem:[%s165 + $0x2c8] sm:$0xff]
      %v261 = vld [vmem:[%s165 + $0x2d0] sm:$0xff]
      %v262 = vld [vmem:[%s165 + $0x2d8] sm:$0xff]
      %v263 = vld [vmem:[%s165 + $0x2e0] sm:$0xff]
      %v264 = vld [vmem:[%s165 + $0x2e8] sm:$0xff]
      %v265 = vld [vmem:[%s165 + $0x2f0] sm:$0xff]
      %v266 = vld [vmem:[%s165 + $0x2f8] sm:$0xff]
      %v267 = vld [vmem:[%s165 + $0x300] sm:$0xff]
      %v268 = vld [vmem:[%s165 + $0x308] sm:$0xff]
      %v269 = vld [vmem:[%s165 + $0x310] sm:$0xff]
      %v270 = vld [vmem:[%s165 + $0x318] sm:$0xff]
      %v271 = vld [vmem:[%s165 + $0x320] sm:$0xff]
      %v272 = vld [vmem:[%s165 + $0x328] sm:$0xff]
      %v273 = vld [vmem:[%s165 + $0x330] sm:$0xff]
      %v274 = vld [vmem:[%s165 + $0x338] sm:$0xff]
      %v275 = vld [vmem:[%s165 + $0x340] sm:$0xff]
      %v276 = vld [vmem:[%s165 + $0x348] sm:$0xff]
      %v277 = vld [vmem:[%s165 + $0x350] sm:$0xff]
      %v278 = vld [vmem:[%s165 + $0x358] sm:$0xff]
      %v279 = vld [vmem:[%s165 + $0x360] sm:$0xff]
      %v280 = vld [vmem:[%s165 + $0x368] sm:$0xff]
      %v281 = vld [vmem:[%s165 + $0x370] sm:$0xff]
      %v282 = vld [vmem:[%s165 + $0x378] sm:$0xff]
      %v283 = vld [vmem:[%s165 + $0x380] sm:$0xff]
      %v284 = vld [vmem:[%s165 + $0x388] sm:$0xff]
      %v285 = vld [vmem:[%s165 + $0x390] sm:$0xff]
      %v286 = vld [vmem:[%s165 + $0x398] sm:$0xff]
      %v287 = vld [vmem:[%s165 + $0x3a0] sm:$0xff]
      %v288 = vld [vmem:[%s165 + $0x3a8] sm:$0xff]
      %v289 = vld [vmem:[%s165 + $0x3b0] sm:$0xff]
      %v290 = vld [vmem:[%s165 + $0x3b8] sm:$0xff]
      %v291 = vld [vmem:[%s165 + $0x3c0] sm:$0xff]
      %v292 = vld [vmem:[%s165 + $0x3c8] sm:$0xff]
      %v293 = vld [vmem:[%s165 + $0x3d0] sm:$0xff]
      %v294 = vld [vmem:[%s165 + $0x3d8] sm:$0xff]
      %v295 = vld [vmem:[%s165 + $0x3e0] sm:$0xff]
      %v296 = vld [vmem:[%s165 + $0x3e8] sm:$0xff]
      %v297 = vld [vmem:[%s165 + $0x3f0] sm:$0xff]
      %v298 = vld [vmem:[%s165 + $0x3f8] sm:$0xff]
      %v299 = vld [vmem:[%s1] sm:$0x1]
      %v301 = vlaneseq
      %v302 = vshrl.u32 %v301, 7
      %v303 = vsub.s32 0, %v302
      %v304 = vrot.slane %v299, %v303
      %v306 = vmul.f32 %v171, %v304
      %v307 = vmul.f32 %v172, %v304
      %v308 = vmul.f32 %v173, %v304
      %v309 = vmul.f32 %v174, %v304
      %v310 = vmul.f32 %v175, %v304
      %v311 = vmul.f32 %v176, %v304
      %v312 = vmul.f32 %v177, %v304
      %v313 = vmul.f32 %v178, %v304
      %v314 = vmul.f32 %v179, %v304
      %v315 = vmul.f32 %v180, %v304
      %v316 = vmul.f32 %v181, %v304
      %v317 = vmul.f32 %v182, %v304
      %v318 = vmul.f32 %v183, %v304
      %v319 = vmul.f32 %v184, %v304
      %v320 = vmul.f32 %v185, %v304
      %v321 = vmul.f32 %v186, %v304
      %v322 = vmul.f32 %v187, %v304
      %v323 = vmul.f32 %v188, %v304
      %v324 = vmul.f32 %v189, %v304
      %v325 = vmul.f32 %v190, %v304
      %v326 = vmul.f32 %v191, %v304
      %v327 = vmul.f32 %v192, %v304
      %v328 = vmul.f32 %v193, %v304
      %v329 = vmul.f32 %v194, %v304
      %v330 = vmul.f32 %v195, %v304
      %v331 = vmul.f32 %v196, %v304
      %v332 = vmul.f32 %v197, %v304
      %v333 = vmul.f32 %v198, %v304
      %v334 = vmul.f32 %v199, %v304
      %v335 = vmul.f32 %v200, %v304
      %v336 = vmul.f32 %v201, %v304
      %v337 = vmul.f32 %v202, %v304
      %v338 = vmul.f32 %v203, %v304
      %v339 = vmul.f32 %v204, %v304
      %v340 = vmul.f32 %v205, %v304
      %v341 = vmul.f32 %v206, %v304
      %v342 = vmul.f32 %v207, %v304
      %v343 = vmul.f32 %v208, %v304
      %v344 = vmul.f32 %v209, %v304
      %v345 = vmul.f32 %v210, %v304
      %v346 = vmul.f32 %v211, %v304
      %v347 = vmul.f32 %v212, %v304
      %v348 = vmul.f32 %v213, %v304
      %v349 = vmul.f32 %v214, %v304
      %v350 = vmul.f32 %v215, %v304
      %v351 = vmul.f32 %v216, %v304
      %v352 = vmul.f32 %v217, %v304
      %v353 = vmul.f32 %v218, %v304
      %v354 = vmul.f32 %v219, %v304
      %v355 = vmul.f32 %v220, %v304
      %v356 = vmul.f32 %v221, %v304
      %v357 = vmul.f32 %v222, %v304
      %v358 = vmul.f32 %v223, %v304
      %v359 = vmul.f32 %v224, %v304
      %v360 = vmul.f32 %v225, %v304
      %v361 = vmul.f32 %v226, %v304
      %v362 = vmul.f32 %v227, %v304
      %v363 = vmul.f32 %v228, %v304
      %v364 = vmul.f32 %v229, %v304
      %v365 = vmul.f32 %v230, %v304
      %v366 = vmul.f32 %v231, %v304
      %v367 = vmul.f32 %v232, %v304
      %v368 = vmul.f32 %v233, %v304
      %v369 = vmul.f32 %v234, %v304
      %v370 = vmul.f32 %v235, %v304
      %v371 = vmul.f32 %v236, %v304
      %v372 = vmul.f32 %v237, %v304
      %v373 = vmul.f32 %v238, %v304
      %v374 = vmul.f32 %v239, %v304
      %v375 = vmul.f32 %v240, %v304
      %v376 = vmul.f32 %v241, %v304
      %v377 = vmul.f32 %v242, %v304
      %v378 = vmul.f32 %v243, %v304
      %v379 = vmul.f32 %v244, %v304
      %v380 = vmul.f32 %v245, %v304
      %v381 = vmul.f32 %v246, %v304
      %v382 = vmul.f32 %v247, %v304
      %v383 = vmul.f32 %v248, %v304
      %v384 = vmul.f32 %v249, %v304
      %v385 = vmul.f32 %v250, %v304
      %v386 = vmul.f32 %v251, %v304
      %v387 = vmul.f32 %v252, %v304
      %v388 = vmul.f32 %v253, %v304
      %v389 = vmul.f32 %v254, %v304
      %v390 = vmul.f32 %v255, %v304
      %v391 = vmul.f32 %v256, %v304
      %v392 = vmul.f32 %v257, %v304
      %v393 = vmul.f32 %v258, %v304
      %v394 = vmul.f32 %v259, %v304
      %v395 = vmul.f32 %v260, %v304
      %v396 = vmul.f32 %v261, %v304
      %v397 = vmul.f32 %v262, %v304
      %v398 = vmul.f32 %v263, %v304
      %v399 = vmul.f32 %v264, %v304
      %v400 = vmul.f32 %v265, %v304
      %v401 = vmul.f32 %v266, %v304
      %v402 = vmul.f32 %v267, %v304
      %v403 = vmul.f32 %v268, %v304
      %v404 = vmul.f32 %v269, %v304
      %v405 = vmul.f32 %v270, %v304
      %v406 = vmul.f32 %v271, %v304
      %v407 = vmul.f32 %v272, %v304
      %v408 = vmul.f32 %v273, %v304
      %v409 = vmul.f32 %v274, %v304
      %v410 = vmul.f32 %v275, %v304
      %v411 = vmul.f32 %v276, %v304
      %v412 = vmul.f32 %v277, %v304
      %v413 = vmul.f32 %v278, %v304
      %v414 = vmul.f32 %v279, %v304
      %v415 = vmul.f32 %v280, %v304
      %v416 = vmul.f32 %v281, %v304
      %v417 = vmul.f32 %v282, %v304
      %v418 = vmul.f32 %v283, %v304
      %v419 = vmul.f32 %v284, %v304
      %v420 = vmul.f32 %v285, %v304
      %v421 = vmul.f32 %v286, %v304
      %v422 = vmul.f32 %v287, %v304
      %v423 = vmul.f32 %v288, %v304
      %v424 = vmul.f32 %v289, %v304
      %v425 = vmul.f32 %v290, %v304
      %v426 = vmul.f32 %v291, %v304
      %v427 = vmul.f32 %v292, %v304
      %v428 = vmul.f32 %v293, %v304
      %v429 = vmul.f32 %v294, %v304
      %v430 = vmul.f32 %v295, %v304
      %v431 = vmul.f32 %v296, %v304
      %v432 = vmul.f32 %v297, %v304
      %v433 = vmul.f32 %v298, %v304
      %v434 = vld [vmem:[%s2] sm:$0x1]
      %v436 = vlaneseq
      %v437 = vshrl.u32 %v436, 7
      %v438 = vsub.s32 0, %v437
      %v439 = vrot.slane %v434, %v438
      %v441 = vadd.f32 %v306, %v439
      %v442 = vadd.f32 %v307, %v439
      %v443 = vadd.f32 %v308, %v439
      %v444 = vadd.f32 %v309, %v439
      %v445 = vadd.f32 %v310, %v439
      %v446 = vadd.f32 %v311, %v439
      %v447 = vadd.f32 %v312, %v439
      %v448 = vadd.f32 %v313, %v439
      %v449 = vadd.f32 %v314, %v439
      %v450 = vadd.f32 %v315, %v439
      %v451 = vadd.f32 %v316, %v439
      %v452 = vadd.f32 %v317, %v439
      %v453 = vadd.f32 %v318, %v439
      %v454 = vadd.f32 %v319, %v439
      %v455 = vadd.f32 %v320, %v439
      %v456 = vadd.f32 %v321, %v439
      %v457 = vadd.f32 %v322, %v439
      %v458 = vadd.f32 %v323, %v439
      %v459 = vadd.f32 %v324, %v439
      %v460 = vadd.f32 %v325, %v439
      %v461 = vadd.f32 %v326, %v439
      %v462 = vadd.f32 %v327, %v439
      %v463 = vadd.f32 %v328, %v439
      %v464 = vadd.f32 %v329, %v439
      %v465 = vadd.f32 %v330, %v439
      %v466 = vadd.f32 %v331, %v439
      %v467 = vadd.f32 %v332, %v439
      %v468 = vadd.f32 %v333, %v439
      %v469 = vadd.f32 %v334, %v439
      %v470 = vadd.f32 %v335, %v439
      %v471 = vadd.f32 %v336, %v439
      %v472 = vadd.f32 %v337, %v439
      %v473 = vadd.f32 %v338, %v439
      %v474 = vadd.f32 %v339, %v439
      %v475 = vadd.f32 %v340, %v439
      %v476 = vadd.f32 %v341, %v439
      %v477 = vadd.f32 %v342, %v439
      %v478 = vadd.f32 %v343, %v439
      %v479 = vadd.f32 %v344, %v439
      %v480 = vadd.f32 %v345, %v439
      %v481 = vadd.f32 %v346, %v439
      %v482 = vadd.f32 %v347, %v439
      %v483 = vadd.f32 %v348, %v439
      %v484 = vadd.f32 %v349, %v439
      %v485 = vadd.f32 %v350, %v439
      %v486 = vadd.f32 %v351, %v439
      %v487 = vadd.f32 %v352, %v439
      %v488 = vadd.f32 %v353, %v439
      %v489 = vadd.f32 %v354, %v439
      %v490 = vadd.f32 %v355, %v439
      %v491 = vadd.f32 %v356, %v439
      %v492 = vadd.f32 %v357, %v439
      %v493 = vadd.f32 %v358, %v439
      %v494 = vadd.f32 %v359, %v439
      %v495 = vadd.f32 %v360, %v439
      %v496 = vadd.f32 %v361, %v439
      %v497 = vadd.f32 %v362, %v439
      %v498 = vadd.f32 %v363, %v439
      %v499 = vadd.f32 %v364, %v439
      %v500 = vadd.f32 %v365, %v439
      %v501 = vadd.f32 %v366, %v439
      %v502 = vadd.f32 %v367, %v439
      %v503 = vadd.f32 %v368, %v439
      %v504 = vadd.f32 %v369, %v439
      %v505 = vadd.f32 %v370, %v439
      %v506 = vadd.f32 %v371, %v439
      %v507 = vadd.f32 %v372, %v439
      %v508 = vadd.f32 %v373, %v439
      %v509 = vadd.f32 %v374, %v439
      %v510 = vadd.f32 %v375, %v439
      %v511 = vadd.f32 %v376, %v439
      %v512 = vadd.f32 %v377, %v439
      %v513 = vadd.f32 %v378, %v439
      %v514 = vadd.f32 %v379, %v439
      %v515 = vadd.f32 %v380, %v439
      %v516 = vadd.f32 %v381, %v439
      %v517 = vadd.f32 %v382, %v439
      %v518 = vadd.f32 %v383, %v439
      %v519 = vadd.f32 %v384, %v439
      %v520 = vadd.f32 %v385, %v439
      %v521 = vadd.f32 %v386, %v439
      %v522 = vadd.f32 %v387, %v439
      %v523 = vadd.f32 %v388, %v439
      %v524 = vadd.f32 %v389, %v439
      %v525 = vadd.f32 %v390, %v439
      %v526 = vadd.f32 %v391, %v439
      %v527 = vadd.f32 %v392, %v439
      %v528 = vadd.f32 %v393, %v439
      %v529 = vadd.f32 %v394, %v439
      %v530 = vadd.f32 %v395, %v439
      %v531 = vadd.f32 %v396, %v439
      %v532 = vadd.f32 %v397, %v439
      %v533 = vadd.f32 %v398, %v439
      %v534 = vadd.f32 %v399, %v439
      %v535 = vadd.f32 %v400, %v439
      %v536 = vadd.f32 %v401, %v439
      %v537 = vadd.f32 %v402, %v439
      %v538 = vadd.f32 %v403, %v439
      %v539 = vadd.f32 %v404, %v439
      %v540 = vadd.f32 %v405, %v439
      %v541 = vadd.f32 %v406, %v439
      %v542 = vadd.f32 %v407, %v439
      %v543 = vadd.f32 %v408, %v439
      %v544 = vadd.f32 %v409, %v439
      %v545 = vadd.f32 %v410, %v439
      %v546 = vadd.f32 %v411, %v439
      %v547 = vadd.f32 %v412, %v439
      %v548 = vadd.f32 %v413, %v439
      %v549 = vadd.f32 %v414, %v439
      %v550 = vadd.f32 %v415, %v439
      %v551 = vadd.f32 %v416, %v439
      %v552 = vadd.f32 %v417, %v439
      %v553 = vadd.f32 %v418, %v439
      %v554 = vadd.f32 %v419, %v439
      %v555 = vadd.f32 %v420, %v439
      %v556 = vadd.f32 %v421, %v439
      %v557 = vadd.f32 %v422, %v439
      %v558 = vadd.f32 %v423, %v439
      %v559 = vadd.f32 %v424, %v439
      %v560 = vadd.f32 %v425, %v439
      %v561 = vadd.f32 %v426, %v439
      %v562 = vadd.f32 %v427, %v439
      %v563 = vadd.f32 %v428, %v439
      %v564 = vadd.f32 %v429, %v439
      %v565 = vadd.f32 %v430, %v439
      %v566 = vadd.f32 %v431, %v439
      %v567 = vadd.f32 %v432, %v439
      %v568 = vadd.f32 %v433, %v439
      %vm569 = vcmp.gt.f32.partialorder %v441, 0.0
      %vm570 = vcmp.gt.f32.partialorder %v442, 0.0
      %vm571 = vcmp.gt.f32.partialorder %v443, 0.0
      %vm572 = vcmp.gt.f32.partialorder %v444, 0.0
      %vm573 = vcmp.gt.f32.partialorder %v445, 0.0
      %vm574 = vcmp.gt.f32.partialorder %v446, 0.0
      %vm575 = vcmp.gt.f32.partialorder %v447, 0.0
      %vm576 = vcmp.gt.f32.partialorder %v448, 0.0
      %vm577 = vcmp.gt.f32.partialorder %v449, 0.0
      %vm578 = vcmp.gt.f32.partialorder %v450, 0.0
      %vm579 = vcmp.gt.f32.partialorder %v451, 0.0
      %vm580 = vcmp.gt.f32.partialorder %v452, 0.0
      %vm581 = vcmp.gt.f32.partialorder %v453, 0.0
      %vm582 = vcmp.gt.f32.partialorder %v454, 0.0
      %vm583 = vcmp.gt.f32.partialorder %v455, 0.0
      %vm584 = vcmp.gt.f32.partialorder %v456, 0.0
      %vm585 = vcmp.gt.f32.partialorder %v457, 0.0
      %vm586 = vcmp.gt.f32.partialorder %v458, 0.0
      %vm587 = vcmp.gt.f32.partialorder %v459, 0.0
      %vm588 = vcmp.gt.f32.partialorder %v460, 0.0
      %vm589 = vcmp.gt.f32.partialorder %v461, 0.0
      %vm590 = vcmp.gt.f32.partialorder %v462, 0.0
      %vm591 = vcmp.gt.f32.partialorder %v463, 0.0
      %vm592 = vcmp.gt.f32.partialorder %v464, 0.0
      %vm593 = vcmp.gt.f32.partialorder %v465, 0.0
      %vm594 = vcmp.gt.f32.partialorder %v466, 0.0
      %vm595 = vcmp.gt.f32.partialorder %v467, 0.0
      %vm596 = vcmp.gt.f32.partialorder %v468, 0.0
      %vm597 = vcmp.gt.f32.partialorder %v469, 0.0
      %vm598 = vcmp.gt.f32.partialorder %v470, 0.0
      %vm599 = vcmp.gt.f32.partialorder %v471, 0.0
      %vm600 = vcmp.gt.f32.partialorder %v472, 0.0
      %vm601 = vcmp.gt.f32.partialorder %v473, 0.0
      %vm602 = vcmp.gt.f32.partialorder %v474, 0.0
      %vm603 = vcmp.gt.f32.partialorder %v475, 0.0
      %vm604 = vcmp.gt.f32.partialorder %v476, 0.0
      %vm605 = vcmp.gt.f32.partialorder %v477, 0.0
      %vm606 = vcmp.gt.f32.partialorder %v478, 0.0
      %vm607 = vcmp.gt.f32.partialorder %v479, 0.0
      %vm608 = vcmp.gt.f32.partialorder %v480, 0.0
      %vm609 = vcmp.gt.f32.partialorder %v481, 0.0
      %vm610 = vcmp.gt.f32.partialorder %v482, 0.0
      %vm611 = vcmp.gt.f32.partialorder %v483, 0.0
      %vm612 = vcmp.gt.f32.partialorder %v484, 0.0
      %vm613 = vcmp.gt.f32.partialorder %v485, 0.0
      %vm614 = vcmp.gt.f32.partialorder %v486, 0.0
      %vm615 = vcmp.gt.f32.partialorder %v487, 0.0
      %vm616 = vcmp.gt.f32.partialorder %v488, 0.0
      %vm617 = vcmp.gt.f32.partialorder %v489, 0.0
      %vm618 = vcmp.gt.f32.partialorder %v490, 0.0
      %vm619 = vcmp.gt.f32.partialorder %v491, 0.0
      %vm620 = vcmp.gt.f32.partialorder %v492, 0.0
      %vm621 = vcmp.gt.f32.partialorder %v493, 0.0
      %vm622 = vcmp.gt.f32.partialorder %v494, 0.0
      %vm623 = vcmp.gt.f32.partialorder %v495, 0.0
      %vm624 = vcmp.gt.f32.partialorder %v496, 0.0
      %vm625 = vcmp.gt.f32.partialorder %v497, 0.0
      %vm626 = vcmp.gt.f32.partialorder %v498, 0.0
      %vm627 = vcmp.gt.f32.partialorder %v499, 0.0
      %vm628 = vcmp.gt.f32.partialorder %v500, 0.0
      %vm629 = vcmp.gt.f32.partialorder %v501, 0.0
      %vm630 = vcmp.gt.f32.partialorder %v502, 0.0
      %vm631 = vcmp.gt.f32.partialorder %v503, 0.0
      %vm632 = vcmp.gt.f32.partialorder %v504, 0.0
      %vm633 = vcmp.gt.f32.partialorder %v505, 0.0
      %vm634 = vcmp.gt.f32.partialorder %v506, 0.0
      %vm635 = vcmp.gt.f32.partialorder %v507, 0.0
      %vm636 = vcmp.gt.f32.partialorder %v508, 0.0
      %vm637 = vcmp.gt.f32.partialorder %v509, 0.0
      %vm638 = vcmp.gt.f32.partialorder %v510, 0.0
      %vm639 = vcmp.gt.f32.partialorder %v511, 0.0
      %vm640 = vcmp.gt.f32.partialorder %v512, 0.0
      %vm641 = vcmp.gt.f32.partialorder %v513, 0.0
      %vm642 = vcmp.gt.f32.partialorder %v514, 0.0
      %vm643 = vcmp.gt.f32.partialorder %v515, 0.0
      %vm644 = vcmp.gt.f32.partialorder %v516, 0.0
      %vm645 = vcmp.gt.f32.partialorder %v517, 0.0
      %vm646 = vcmp.gt.f32.partialorder %v518, 0.0
      %vm647 = vcmp.gt.f32.partialorder %v519, 0.0
      %vm648 = vcmp.gt.f32.partialorder %v520, 0.0
      %vm649 = vcmp.gt.f32.partialorder %v521, 0.0
      %vm650 = vcmp.gt.f32.partialorder %v522, 0.0
      %vm651 = vcmp.gt.f32.partialorder %v523, 0.0
      %vm652 = vcmp.gt.f32.partialorder %v524, 0.0
      %vm653 = vcmp.gt.f32.partialorder %v525, 0.0
      %vm654 = vcmp.gt.f32.partialorder %v526, 0.0
      %vm655 = vcmp.gt.f32.partialorder %v527, 0.0
      %vm656 = vcmp.gt.f32.partialorder %v528, 0.0
      %vm657 = vcmp.gt.f32.partialorder %v529, 0.0
      %vm658 = vcmp.gt.f32.partialorder %v530, 0.0
      %vm659 = vcmp.gt.f32.partialorder %v531, 0.0
      %vm660 = vcmp.gt.f32.partialorder %v532, 0.0
      %vm661 = vcmp.gt.f32.partialorder %v533, 0.0
      %vm662 = vcmp.gt.f32.partialorder %v534, 0.0
      %vm663 = vcmp.gt.f32.partialorder %v535, 0.0
      %vm664 = vcmp.gt.f32.partialorder %v536, 0.0
      %vm665 = vcmp.gt.f32.partialorder %v537, 0.0
      %vm666 = vcmp.gt.f32.partialorder %v538, 0.0
      %vm667 = vcmp.gt.f32.partialorder %v539, 0.0
      %vm668 = vcmp.gt.f32.partialorder %v540, 0.0
      %vm669 = vcmp.gt.f32.partialorder %v541, 0.0
      %vm670 = vcmp.gt.f32.partialorder %v542, 0.0
      %vm671 = vcmp.gt.f32.partialorder %v543, 0.0
      %vm672 = vcmp.gt.f32.partialorder %v544, 0.0
      %vm673 = vcmp.gt.f32.partialorder %v545, 0.0
      %vm674 = vcmp.gt.f32.partialorder %v546, 0.0
      %vm675 = vcmp.gt.f32.partialorder %v547, 0.0
      %vm676 = vcmp.gt.f32.partialorder %v548, 0.0
      %vm677 = vcmp.gt.f32.partialorder %v549, 0.0
      %vm678 = vcmp.gt.f32.partialorder %v550, 0.0
      %vm679 = vcmp.gt.f32.partialorder %v551, 0.0
      %vm680 = vcmp.gt.f32.partialorder %v552, 0.0
      %vm681 = vcmp.gt.f32.partialorder %v553, 0.0
      %vm682 = vcmp.gt.f32.partialorder %v554, 0.0
      %vm683 = vcmp.gt.f32.partialorder %v555, 0.0
      %vm684 = vcmp.gt.f32.partialorder %v556, 0.0
      %vm685 = vcmp.gt.f32.partialorder %v557, 0.0
      %vm686 = vcmp.gt.f32.partialorder %v558, 0.0
      %vm687 = vcmp.gt.f32.partialorder %v559, 0.0
      %vm688 = vcmp.gt.f32.partialorder %v560, 0.0
      %vm689 = vcmp.gt.f32.partialorder %v561, 0.0
      %vm690 = vcmp.gt.f32.partialorder %v562, 0.0
      %vm691 = vcmp.gt.f32.partialorder %v563, 0.0
      %vm692 = vcmp.gt.f32.partialorder %v564, 0.0
      %vm693 = vcmp.gt.f32.partialorder %v565, 0.0
      %vm694 = vcmp.gt.f32.partialorder %v566, 0.0
      %vm695 = vcmp.gt.f32.partialorder %v567, 0.0
      %vm696 = vcmp.gt.f32.partialorder %v568, 0.0
      %v697 = vmul.f32 %v441, 0.2
      %v698 = vmul.f32 %v442, 0.2
      %v699 = vmul.f32 %v443, 0.2
      %v700 = vmul.f32 %v444, 0.2
      %v701 = vmul.f32 %v445, 0.2
      %v702 = vmul.f32 %v446, 0.2
      %v703 = vmul.f32 %v447, 0.2
      %v704 = vmul.f32 %v448, 0.2
      %v705 = vmul.f32 %v449, 0.2
      %v706 = vmul.f32 %v450, 0.2
      %v707 = vmul.f32 %v451, 0.2
      %v708 = vmul.f32 %v452, 0.2
      %v709 = vmul.f32 %v453, 0.2
      %v710 = vmul.f32 %v454, 0.2
      %v711 = vmul.f32 %v455, 0.2
      %v712 = vmul.f32 %v456, 0.2
      %v713 = vmul.f32 %v457, 0.2
      %v714 = vmul.f32 %v458, 0.2
      %v715 = vmul.f32 %v459, 0.2
      %v716 = vmul.f32 %v460, 0.2
      %v717 = vmul.f32 %v461, 0.2
      %v718 = vmul.f32 %v462, 0.2
      %v719 = vmul.f32 %v463, 0.2
      %v720 = vmul.f32 %v464, 0.2
      %v721 = vmul.f32 %v465, 0.2
      %v722 = vmul.f32 %v466, 0.2
      %v723 = vmul.f32 %v467, 0.2
      %v724 = vmul.f32 %v468, 0.2
      %v725 = vmul.f32 %v469, 0.2
      %v726 = vmul.f32 %v470, 0.2
      %v727 = vmul.f32 %v471, 0.2
      %v728 = vmul.f32 %v472, 0.2
      %v729 = vmul.f32 %v473, 0.2
      %v730 = vmul.f32 %v474, 0.2
      %v731 = vmul.f32 %v475, 0.2
      %v732 = vmul.f32 %v476, 0.2
      %v733 = vmul.f32 %v477, 0.2
      %v734 = vmul.f32 %v478, 0.2
      %v735 = vmul.f32 %v479, 0.2
      %v736 = vmul.f32 %v480, 0.2
      %v737 = vmul.f32 %v481, 0.2
      %v738 = vmul.f32 %v482, 0.2
      %v739 = vmul.f32 %v483, 0.2
      %v740 = vmul.f32 %v484, 0.2
      %v741 = vmul.f32 %v485, 0.2
      %v742 = vmul.f32 %v486, 0.2
      %v743 = vmul.f32 %v487, 0.2
      %v744 = vmul.f32 %v488, 0.2
      %v745 = vmul.f32 %v489, 0.2
      %v746 = vmul.f32 %v490, 0.2
      %v747 = vmul.f32 %v491, 0.2
      %v748 = vmul.f32 %v492, 0.2
      %v749 = vmul.f32 %v493, 0.2
      %v750 = vmul.f32 %v494, 0.2
      %v751 = vmul.f32 %v495, 0.2
      %v752 = vmul.f32 %v496, 0.2
      %v753 = vmul.f32 %v497, 0.2
      %v754 = vmul.f32 %v498, 0.2
      %v755 = vmul.f32 %v499, 0.2
      %v756 = vmul.f32 %v500, 0.2
      %v757 = vmul.f32 %v501, 0.2
      %v758 = vmul.f32 %v502, 0.2
      %v759 = vmul.f32 %v503, 0.2
      %v760 = vmul.f32 %v504, 0.2
      %v761 = vmul.f32 %v505, 0.2
      %v762 = vmul.f32 %v506, 0.2
      %v763 = vmul.f32 %v507, 0.2
      %v764 = vmul.f32 %v508, 0.2
      %v765 = vmul.f32 %v509, 0.2
      %v766 = vmul.f32 %v510, 0.2
      %v767 = vmul.f32 %v511, 0.2
      %v768 = vmul.f32 %v512, 0.2
      %v769 = vmul.f32 %v513, 0.2
      %v770 = vmul.f32 %v514, 0.2
      %v771 = vmul.f32 %v515, 0.2
      %v772 = vmul.f32 %v516, 0.2
      %v773 = vmul.f32 %v517, 0.2
      %v774 = vmul.f32 %v518, 0.2
      %v775 = vmul.f32 %v519, 0.2
      %v776 = vmul.f32 %v520, 0.2
      %v777 = vmul.f32 %v521, 0.2
      %v778 = vmul.f32 %v522, 0.2
      %v779 = vmul.f32 %v523, 0.2
      %v780 = vmul.f32 %v524, 0.2
      %v781 = vmul.f32 %v525, 0.2
      %v782 = vmul.f32 %v526, 0.2
      %v783 = vmul.f32 %v527, 0.2
      %v784 = vmul.f32 %v528, 0.2
      %v785 = vmul.f32 %v529, 0.2
      %v786 = vmul.f32 %v530, 0.2
      %v787 = vmul.f32 %v531, 0.2
      %v788 = vmul.f32 %v532, 0.2
      %v789 = vmul.f32 %v533, 0.2
      %v790 = vmul.f32 %v534, 0.2
      %v791 = vmul.f32 %v535, 0.2
      %v792 = vmul.f32 %v536, 0.2
      %v793 = vmul.f32 %v537, 0.2
      %v794 = vmul.f32 %v538, 0.2
      %v795 = vmul.f32 %v539, 0.2
      %v796 = vmul.f32 %v540, 0.2
      %v797 = vmul.f32 %v541, 0.2
      %v798 = vmul.f32 %v542, 0.2
      %v799 = vmul.f32 %v543, 0.2
      %v800 = vmul.f32 %v544, 0.2
      %v801 = vmul.f32 %v545, 0.2
      %v802 = vmul.f32 %v546, 0.2
      %v803 = vmul.f32 %v547, 0.2
      %v804 = vmul.f32 %v548, 0.2
      %v805 = vmul.f32 %v549, 0.2
      %v806 = vmul.f32 %v550, 0.2
      %v807 = vmul.f32 %v551, 0.2
      %v808 = vmul.f32 %v552, 0.2
      %v809 = vmul.f32 %v553, 0.2
      %v810 = vmul.f32 %v554, 0.2
      %v811 = vmul.f32 %v555, 0.2
      %v812 = vmul.f32 %v556, 0.2
      %v813 = vmul.f32 %v557, 0.2
      %v814 = vmul.f32 %v558, 0.2
      %v815 = vmul.f32 %v559, 0.2
      %v816 = vmul.f32 %v560, 0.2
      %v817 = vmul.f32 %v561, 0.2
      %v818 = vmul.f32 %v562, 0.2
      %v819 = vmul.f32 %v563, 0.2
      %v820 = vmul.f32 %v564, 0.2
      %v821 = vmul.f32 %v565, 0.2
      %v822 = vmul.f32 %v566, 0.2
      %v823 = vmul.f32 %v567, 0.2
      %v824 = vmul.f32 %v568, 0.2
      %v825 = vsel %vm569, %v441, %v697
      %v826 = vsel %vm570, %v442, %v698
      %v827 = vsel %vm571, %v443, %v699
      %v828 = vsel %vm572, %v444, %v700
      %v829 = vsel %vm573, %v445, %v701
      %v830 = vsel %vm574, %v446, %v702
      %v831 = vsel %vm575, %v447, %v703
      %v832 = vsel %vm576, %v448, %v704
      %v833 = vsel %vm577, %v449, %v705
      %v834 = vsel %vm578, %v450, %v706
      %v835 = vsel %vm579, %v451, %v707
      %v836 = vsel %vm580, %v452, %v708
      %v837 = vsel %vm581, %v453, %v709
      %v838 = vsel %vm582, %v454, %v710
      %v839 = vsel %vm583, %v455, %v711
      %v840 = vsel %vm584, %v456, %v712
      %v841 = vsel %vm585, %v457, %v713
      %v842 = vsel %vm586, %v458, %v714
      %v843 = vsel %vm587, %v459, %v715
      %v844 = vsel %vm588, %v460, %v716
      %v845 = vsel %vm589, %v461, %v717
      %v846 = vsel %vm590, %v462, %v718
      %v847 = vsel %vm591, %v463, %v719
      %v848 = vsel %vm592, %v464, %v720
      %v849 = vsel %vm593, %v465, %v721
      %v850 = vsel %vm594, %v466, %v722
      %v851 = vsel %vm595, %v467, %v723
      %v852 = vsel %vm596, %v468, %v724
      %v853 = vsel %vm597, %v469, %v725
      %v854 = vsel %vm598, %v470, %v726
      %v855 = vsel %vm599, %v471, %v727
      %v856 = vsel %vm600, %v472, %v728
      %v857 = vsel %vm601, %v473, %v729
      %v858 = vsel %vm602, %v474, %v730
      %v859 = vsel %vm603, %v475, %v731
      %v860 = vsel %vm604, %v476, %v732
      %v861 = vsel %vm605, %v477, %v733
      %v862 = vsel %vm606, %v478, %v734
      %v863 = vsel %vm607, %v479, %v735
      %v864 = vsel %vm608, %v480, %v736
      %v865 = vsel %vm609, %v481, %v737
      %v866 = vsel %vm610, %v482, %v738
      %v867 = vsel %vm611, %v483, %v739
      %v868 = vsel %vm612, %v484, %v740
      %v869 = vsel %vm613, %v485, %v741
      %v870 = vsel %vm614, %v486, %v742
      %v871 = vsel %vm615, %v487, %v743
      %v872 = vsel %vm616, %v488, %v744
      %v873 = vsel %vm617, %v489, %v745
      %v874 = vsel %vm618, %v490, %v746
      %v875 = vsel %vm619, %v491, %v747
      %v876 = vsel %vm620, %v492, %v748
      %v877 = vsel %vm621, %v493, %v749
      %v878 = vsel %vm622, %v494, %v750
      %v879 = vsel %vm623, %v495, %v751
      %v880 = vsel %vm624, %v496, %v752
      %v881 = vsel %vm625, %v497, %v753
      %v882 = vsel %vm626, %v498, %v754
      %v883 = vsel %vm627, %v499, %v755
      %v884 = vsel %vm628, %v500, %v756
      %v885 = vsel %vm629, %v501, %v757
      %v886 = vsel %vm630, %v502, %v758
      %v887 = vsel %vm631, %v503, %v759
      %v888 = vsel %vm632, %v504, %v760
      %v889 = vsel %vm633, %v505, %v761
      %v890 = vsel %vm634, %v506, %v762
      %v891 = vsel %vm635, %v507, %v763
      %v892 = vsel %vm636, %v508, %v764
      %v893 = vsel %vm637, %v509, %v765
      %v894 = vsel %vm638, %v510, %v766
      %v895 = vsel %vm639, %v511, %v767
      %v896 = vsel %vm640, %v512, %v768
      %v897 = vsel %vm641, %v513, %v769
      %v898 = vsel %vm642, %v514, %v770
      %v899 = vsel %vm643, %v515, %v771
      %v900 = vsel %vm644, %v516, %v772
      %v901 = vsel %vm645, %v517, %v773
      %v902 = vsel %vm646, %v518, %v774
      %v903 = vsel %vm647, %v519, %v775
      %v904 = vsel %vm648, %v520, %v776
      %v905 = vsel %vm649, %v521, %v777
      %v906 = vsel %vm650, %v522, %v778
      %v907 = vsel %vm651, %v523, %v779
      %v908 = vsel %vm652, %v524, %v780
      %v909 = vsel %vm653, %v525, %v781
      %v910 = vsel %vm654, %v526, %v782
      %v911 = vsel %vm655, %v527, %v783
      %v912 = vsel %vm656, %v528, %v784
      %v913 = vsel %vm657, %v529, %v785
      %v914 = vsel %vm658, %v530, %v786
      %v915 = vsel %vm659, %v531, %v787
      %v916 = vsel %vm660, %v532, %v788
      %v917 = vsel %vm661, %v533, %v789
      %v918 = vsel %vm662, %v534, %v790
      %v919 = vsel %vm663, %v535, %v791
      %v920 = vsel %vm664, %v536, %v792
      %v921 = vsel %vm665, %v537, %v793
      %v922 = vsel %vm666, %v538, %v794
      %v923 = vsel %vm667, %v539, %v795
      %v924 = vsel %vm668, %v540, %v796
      %v925 = vsel %vm669, %v541, %v797
      %v926 = vsel %vm670, %v542, %v798
      %v927 = vsel %vm671, %v543, %v799
      %v928 = vsel %vm672, %v544, %v800
      %v929 = vsel %vm673, %v545, %v801
      %v930 = vsel %vm674, %v546, %v802
      %v931 = vsel %vm675, %v547, %v803
      %v932 = vsel %vm676, %v548, %v804
      %v933 = vsel %vm677, %v549, %v805
      %v934 = vsel %vm678, %v550, %v806
      %v935 = vsel %vm679, %v551, %v807
      %v936 = vsel %vm680, %v552, %v808
      %v937 = vsel %vm681, %v553, %v809
      %v938 = vsel %vm682, %v554, %v810
      %v939 = vsel %vm683, %v555, %v811
      %v940 = vsel %vm684, %v556, %v812
      %v941 = vsel %vm685, %v557, %v813
      %v942 = vsel %vm686, %v558, %v814
      %v943 = vsel %vm687, %v559, %v815
      %v944 = vsel %vm688, %v560, %v816
      %v945 = vsel %vm689, %v561, %v817
      %v946 = vsel %vm690, %v562, %v818
      %v947 = vsel %vm691, %v563, %v819
      %v948 = vsel %vm692, %v564, %v820
      %v949 = vsel %vm693, %v565, %v821
      %v950 = vsel %vm694, %v566, %v822
      %v951 = vsel %vm695, %v567, %v823
      %v952 = vsel %vm696, %v568, %v824
      %vm953 = vcmask 64512
      %954 = vst.msk [vmem:[%s170] sm:$0xff] %vm953, %v825
      %955 = vst.msk [vmem:[%s170 + $0x8] sm:$0xff] %vm953, %v826
      %956 = vst.msk [vmem:[%s170 + $0x10] sm:$0xff] %vm953, %v827
      %957 = vst.msk [vmem:[%s170 + $0x18] sm:$0xff] %vm953, %v828
      %958 = vst.msk [vmem:[%s170 + $0x20] sm:$0xff] %vm953, %v829
      %959 = vst.msk [vmem:[%s170 + $0x28] sm:$0xff] %vm953, %v830
      %960 = vst.msk [vmem:[%s170 + $0x30] sm:$0xff] %vm953, %v831
      %961 = vst.msk [vmem:[%s170 + $0x38] sm:$0xff] %vm953, %v832
      %962 = vst.msk [vmem:[%s170 + $0x40] sm:$0xff] %vm953, %v833
      %963 = vst.msk [vmem:[%s170 + $0x48] sm:$0xff] %vm953, %v834
      %964 = vst.msk [vmem:[%s170 + $0x50] sm:$0xff] %vm953, %v835
      %965 = vst.msk [vmem:[%s170 + $0x58] sm:$0xff] %vm953, %v836
      %966 = vst.msk [vmem:[%s170 + $0x60] sm:$0xff] %vm953, %v837
      %967 = vst.msk [vmem:[%s170 + $0x68] sm:$0xff] %vm953, %v838
      %968 = vst.msk [vmem:[%s170 + $0x70] sm:$0xff] %vm953, %v839
      %969 = vst.msk [vmem:[%s170 + $0x78] sm:$0xff] %vm953, %v840
      %970 = vst.msk [vmem:[%s170 + $0x80] sm:$0xff] %vm953, %v841
      %971 = vst.msk [vmem:[%s170 + $0x88] sm:$0xff] %vm953, %v842
      %972 = vst.msk [vmem:[%s170 + $0x90] sm:$0xff] %vm953, %v843
      %973 = vst.msk [vmem:[%s170 + $0x98] sm:$0xff] %vm953, %v844
      %974 = vst.msk [vmem:[%s170 + $0xa0] sm:$0xff] %vm953, %v845
      %975 = vst.msk [vmem:[%s170 + $0xa8] sm:$0xff] %vm953, %v846
      %976 = vst.msk [vmem:[%s170 + $0xb0] sm:$0xff] %vm953, %v847
      %977 = vst.msk [vmem:[%s170 + $0xb8] sm:$0xff] %vm953, %v848
      %978 = vst.msk [vmem:[%s170 + $0xc0] sm:$0xff] %vm953, %v849
      %979 = vst.msk [vmem:[%s170 + $0xc8] sm:$0xff] %vm953, %v850
      %980 = vst.msk [vmem:[%s170 + $0xd0] sm:$0xff] %vm953, %v851
      %981 = vst.msk [vmem:[%s170 + $0xd8] sm:$0xff] %vm953, %v852
      %982 = vst.msk [vmem:[%s170 + $0xe0] sm:$0xff] %vm953, %v853
      %983 = vst.msk [vmem:[%s170 + $0xe8] sm:$0xff] %vm953, %v854
      %984 = vst.msk [vmem:[%s170 + $0xf0] sm:$0xff] %vm953, %v855
      %985 = vst.msk [vmem:[%s170 + $0xf8] sm:$0xff] %vm953, %v856
      %986 = vst.msk [vmem:[%s170 + $0x100] sm:$0xff] %vm953, %v857
      %987 = vst.msk [vmem:[%s170 + $0x108] sm:$0xff] %vm953, %v858
      %988 = vst.msk [vmem:[%s170 + $0x110] sm:$0xff] %vm953, %v859
      %989 = vst.msk [vmem:[%s170 + $0x118] sm:$0xff] %vm953, %v860
      %990 = vst.msk [vmem:[%s170 + $0x120] sm:$0xff] %vm953, %v861
      %991 = vst.msk [vmem:[%s170 + $0x128] sm:$0xff] %vm953, %v862
      %992 = vst.msk [vmem:[%s170 + $0x130] sm:$0xff] %vm953, %v863
      %993 = vst.msk [vmem:[%s170 + $0x138] sm:$0xff] %vm953, %v864
      %994 = vst.msk [vmem:[%s170 + $0x140] sm:$0xff] %vm953, %v865
      %995 = vst.msk [vmem:[%s170 + $0x148] sm:$0xff] %vm953, %v866
      %996 = vst.msk [vmem:[%s170 + $0x150] sm:$0xff] %vm953, %v867
      %997 = vst.msk [vmem:[%s170 + $0x158] sm:$0xff] %vm953, %v868
      %998 = vst.msk [vmem:[%s170 + $0x160] sm:$0xff] %vm953, %v869
      %999 = vst.msk [vmem:[%s170 + $0x168] sm:$0xff] %vm953, %v870
      %1000 = vst.msk [vmem:[%s170 + $0x170] sm:$0xff] %vm953, %v871
      %1001 = vst.msk [vmem:[%s170 + $0x178] sm:$0xff] %vm953, %v872
      %1002 = vst.msk [vmem:[%s170 + $0x180] sm:$0xff] %vm953, %v873
      %1003 = vst.msk [vmem:[%s170 + $0x188] sm:$0xff] %vm953, %v874
      %1004 = vst.msk [vmem:[%s170 + $0x190] sm:$0xff] %vm953, %v875
      %1005 = vst.msk [vmem:[%s170 + $0x198] sm:$0xff] %vm953, %v876
      %1006 = vst.msk [vmem:[%s170 + $0x1a0] sm:$0xff] %vm953, %v877
      %1007 = vst.msk [vmem:[%s170 + $0x1a8] sm:$0xff] %vm953, %v878
      %1008 = vst.msk [vmem:[%s170 + $0x1b0] sm:$0xff] %vm953, %v879
      %1009 = vst.msk [vmem:[%s170 + $0x1b8] sm:$0xff] %vm953, %v880
      %1010 = vst.msk [vmem:[%s170 + $0x1c0] sm:$0xff] %vm953, %v881
      %1011 = vst.msk [vmem:[%s170 + $0x1c8] sm:$0xff] %vm953, %v882
      %1012 = vst.msk [vmem:[%s170 + $0x1d0] sm:$0xff] %vm953, %v883
      %1013 = vst.msk [vmem:[%s170 + $0x1d8] sm:$0xff] %vm953, %v884
      %1014 = vst.msk [vmem:[%s170 + $0x1e0] sm:$0xff] %vm953, %v885
      %1015 = vst.msk [vmem:[%s170 + $0x1e8] sm:$0xff] %vm953, %v886
      %1016 = vst.msk [vmem:[%s170 + $0x1f0] sm:$0xff] %vm953, %v887
      %1017 = vst.msk [vmem:[%s170 + $0x1f8] sm:$0xff] %vm953, %v888
      %1018 = vst.msk [vmem:[%s170 + $0x200] sm:$0xff] %vm953, %v889
      %1019 = vst.msk [vmem:[%s170 + $0x208] sm:$0xff] %vm953, %v890
      %1020 = vst.msk [vmem:[%s170 + $0x210] sm:$0xff] %vm953, %v891
      %1021 = vst.msk [vmem:[%s170 + $0x218] sm:$0xff] %vm953, %v892
      %1022 = vst.msk [vmem:[%s170 + $0x220] sm:$0xff] %vm953, %v893
      %1023 = vst.msk [vmem:[%s170 + $0x228] sm:$0xff] %vm953, %v894
      %1024 = vst.msk [vmem:[%s170 + $0x230] sm:$0xff] %vm953, %v895
      %1025 = vst.msk [vmem:[%s170 + $0x238] sm:$0xff] %vm953, %v896
      %1026 = vst.msk [vmem:[%s170 + $0x240] sm:$0xff] %vm953, %v897
      %1027 = vst.msk [vmem:[%s170 + $0x248] sm:$0xff] %vm953, %v898
      %1028 = vst.msk [vmem:[%s170 + $0x250] sm:$0xff] %vm953, %v899
      %1029 = vst.msk [vmem:[%s170 + $0x258] sm:$0xff] %vm953, %v900
      %1030 = vst.msk [vmem:[%s170 + $0x260] sm:$0xff] %vm953, %v901
      %1031 = vst.msk [vmem:[%s170 + $0x268] sm:$0xff] %vm953, %v902
      %1032 = vst.msk [vmem:[%s170 + $0x270] sm:$0xff] %vm953, %v903
      %1033 = vst.msk [vmem:[%s170 + $0x278] sm:$0xff] %vm953, %v904
      %1034 = vst.msk [vmem:[%s170 + $0x280] sm:$0xff] %vm953, %v905
      %1035 = vst.msk [vmem:[%s170 + $0x288] sm:$0xff] %vm953, %v906
      %1036 = vst.msk [vmem:[%s170 + $0x290] sm:$0xff] %vm953, %v907
      %1037 = vst.msk [vmem:[%s170 + $0x298] sm:$0xff] %vm953, %v908
      %1038 = vst.msk [vmem:[%s170 + $0x2a0] sm:$0xff] %vm953, %v909
      %1039 = vst.msk [vmem:[%s170 + $0x2a8] sm:$0xff] %vm953, %v910
      %1040 = vst.msk [vmem:[%s170 + $0x2b0] sm:$0xff] %vm953, %v911
      %1041 = vst.msk [vmem:[%s170 + $0x2b8] sm:$0xff] %vm953, %v912
      %1042 = vst.msk [vmem:[%s170 + $0x2c0] sm:$0xff] %vm953, %v913
      %1043 = vst.msk [vmem:[%s170 + $0x2c8] sm:$0xff] %vm953, %v914
      %1044 = vst.msk [vmem:[%s170 + $0x2d0] sm:$0xff] %vm953, %v915
      %1045 = vst.msk [vmem:[%s170 + $0x2d8] sm:$0xff] %vm953, %v916
      %1046 = vst.msk [vmem:[%s170 + $0x2e0] sm:$0xff] %vm953, %v917
      %1047 = vst.msk [vmem:[%s170 + $0x2e8] sm:$0xff] %vm953, %v918
      %1048 = vst.msk [vmem:[%s170 + $0x2f0] sm:$0xff] %vm953, %v919
      %1049 = vst.msk [vmem:[%s170 + $0x2f8] sm:$0xff] %vm953, %v920
      %1050 = vst.msk [vmem:[%s170 + $0x300] sm:$0xff] %vm953, %v921
      %1051 = vst.msk [vmem:[%s170 + $0x308] sm:$0xff] %vm953, %v922
      %1052 = vst.msk [vmem:[%s170 + $0x310] sm:$0xff] %vm953, %v923
      %1053 = vst.msk [vmem:[%s170 + $0x318] sm:$0xff] %vm953, %v924
      %1054 = vst.msk [vmem:[%s170 + $0x320] sm:$0xff] %vm953, %v925
      %1055 = vst.msk [vmem:[%s170 + $0x328] sm:$0xff] %vm953, %v926
      %1056 = vst.msk [vmem:[%s170 + $0x330] sm:$0xff] %vm953, %v927
      %1057 = vst.msk [vmem:[%s170 + $0x338] sm:$0xff] %vm953, %v928
      %1058 = vst.msk [vmem:[%s170 + $0x340] sm:$0xff] %vm953, %v929
      %1059 = vst.msk [vmem:[%s170 + $0x348] sm:$0xff] %vm953, %v930
      %1060 = vst.msk [vmem:[%s170 + $0x350] sm:$0xff] %vm953, %v931
      %1061 = vst.msk [vmem:[%s170 + $0x358] sm:$0xff] %vm953, %v932
      %1062 = vst.msk [vmem:[%s170 + $0x360] sm:$0xff] %vm953, %v933
      %1063 = vst.msk [vmem:[%s170 + $0x368] sm:$0xff] %vm953, %v934
      %1064 = vst.msk [vmem:[%s170 + $0x370] sm:$0xff] %vm953, %v935
      %1065 = vst.msk [vmem:[%s170 + $0x378] sm:$0xff] %vm953, %v936
      %1066 = vst.msk [vmem:[%s170 + $0x380] sm:$0xff] %vm953, %v937
      %1067 = vst.msk [vmem:[%s170 + $0x388] sm:$0xff] %vm953, %v938
      %1068 = vst.msk [vmem:[%s170 + $0x390] sm:$0xff] %vm953, %v939
      %1069 = vst.msk [vmem:[%s170 + $0x398] sm:$0xff] %vm953, %v940
      %1070 = vst.msk [vmem:[%s170 + $0x3a0] sm:$0xff] %vm953, %v941
      %1071 = vst.msk [vmem:[%s170 + $0x3a8] sm:$0xff] %vm953, %v942
      %1072 = vst.msk [vmem:[%s170 + $0x3b0] sm:$0xff] %vm953, %v943
      %1073 = vst.msk [vmem:[%s170 + $0x3b8] sm:$0xff] %vm953, %v944
      %1074 = vst.msk [vmem:[%s170 + $0x3c0] sm:$0xff] %vm953, %v945
      %1075 = vst.msk [vmem:[%s170 + $0x3c8] sm:$0xff] %vm953, %v946
      %1076 = vst.msk [vmem:[%s170 + $0x3d0] sm:$0xff] %vm953, %v947
      %1077 = vst.msk [vmem:[%s170 + $0x3d8] sm:$0xff] %vm953, %v948
      %1078 = vst.msk [vmem:[%s170 + $0x3e0] sm:$0xff] %vm953, %v949
      %1079 = vst.msk [vmem:[%s170 + $0x3e8] sm:$0xff] %vm953, %v950
      %1080 = vst.msk [vmem:[%s170 + $0x3f0] sm:$0xff] %vm953, %v951
      %1081 = vst.msk [vmem:[%s170 + $0x3f8] sm:$0xff] %vm953, %v952
      %p1082 = scmp.lt.s32.totalorder %s14, 1
      %s1083 = scalar_select %p1082, %s14, 1
      %s1084 = smul.addr %s1083, 128
      %s1085 = smul.addr %s1084, 8
      %s1086 = scalar_lea.vmem %s3, %s1085
      // Predicated region
      $region33: #{decoder_block_forward.3} parent=31 // pred_check
        %p1087 = pneg %p100
      $region34: #{decoder_block_forward.3} parent=31 // pred_check_branch
        %1089 = sbr.rel (%p1087) target = $region36
      $region35: #{decoder_block_forward.3} parent=31 // pred_region
        _
      $region36: #{decoder_block_forward.3} parent=31 // pred_fallthru
        _
    $region32: #{decoder_block_forward.3} parent=5 // pred_fallthru
      _
    %p1090 = scmp.le.s32.totalorder 2, %s9
    // Predicated region
    $region37: #{decoder_block_forward.3} parent=5 // pred_check
      %p1091 = pneg %p1090
    $region38: #{decoder_block_forward.3} parent=5 // pred_check_branch
      %1093 = sbr.rel (%p1091) target = $region40
    $region39: #{decoder_block_forward.3} parent=5 // pred_region
      %s1094 = ssub.s32 %s9, 2
      // Predicated region
      $region41: #{decoder_block_forward.3} parent=39 // pred_check
        %p1095 = pneg %p106
      $region42: #{decoder_block_forward.3} parent=39 // pred_check_branch
        %1097 = sbr.rel (%p1095) target = $region44
      $region43: #{decoder_block_forward.3} parent=39 // pred_region
        %p1098 = scmp.lt.s32.totalorder %s15, 1
        %s1099 = scalar_select %p1098, %s15, 1
        %s1100 = smul.addr %s1099, 128
        %s1101 = smul.addr %s1100, 8
        %s1102 = scalar_lea.vmem %s3, %s1101
      $region44: #{decoder_block_forward.3} parent=39 // pred_fallthru
        _
    $region40: #{decoder_block_forward.3} parent=5 // pred_fallthru
      _
  $region6: #{decoder_block_forward.3} parent=0 // loop_footer
    %s13 = sadd.s32 1, %s9
  $region7: #{decoder_block_forward.3} parent=0 // loop_footer_branch
    %8 = sbr.rel target = $region3
  $region8: #{decoder_block_forward.3} parent=0 // loop_exit
    _

// kernel: decoder_block_forward.2
$region0: #{decoder_block_forward.2}
  #allocation0 [shape = 'u32[]', space=smem, size = 0x4, offset = 0x4, fixed_abs, tag = 'smem constant byte address 0x4 - core index']
  #allocation1 [shape = 'u32[144,128]{1,0:T(1,128)}', space=vmem, size = 0x12000, scoped, tag = 'internal scratch']
  %s0 = inlined_call_operand.vmem [shape: f32[2,18,18,4], index: 0, kind: input, shape index: {}]
  %s1 = inlined_call_operand.vmem [shape: f32[36,8], index: 1, kind: input, shape index: {}]
  %s2 = inlined_call_operand.vmem [shape: f32[24,8], index: 2, kind: input, shape index: {}]
  %s3 = inlined_call_operand.vmem [shape: f32[24,8], index: 3, kind: input, shape index: {}]
  %s4 = inlined_call_operand.vmem [shape: f32[16,8], index: 4, kind: input, shape index: {}]
  %s5 = inlined_call_operand.vmem [shape: f32[2,4,16,16,8], index: 5, kind: output, shape index: {0}]
  %s6 = inlined_call_operand.vmem [shape: f32[2,2,8], index: 6, kind: output, shape index: {1}]
  %7 = xla_tuple %s5, %s6
  %s8 = sld [smem:[#allocation0]]
  $region61: #{decoder_block_forward.2} parent=0
    _
  %s10 = ssub.s32 1, %s8
  %s11 = scalar_select 0, %s10, %s8
  loop: start=0, step=1, limit=4
  $region2: #{decoder_block_forward.2} parent=0 // loop_pre_header
    _
  $region3: #{decoder_block_forward.2} parent=0 // loop_header
    %s13 = sphi 0, %s17
    %p14 = scmp.ge.s32.totalorder %s13, 4
    %s23 = sphi 0, %s25
    %s26 = sphi 0, %s23
    %s27 = sphi 0, %s26
    %s43 = sphi 0, %s27
    %s47 = sphi 0, %s47
    %s49 = sphi 0, %s47
    %s50 = sphi 0, %s49
    %s64 = sphi 0, %s50
    %s68 = sphi 0, %s68
    %s70 = sphi 0, %s68
    %s71 = sphi 0, %s70
    %s85 = sphi 0, %s71
    %s89 = sphi 0, %s89
    %s91 = sphi 0, %s89
    %s92 = sphi 0, %s91
    %s106 = sphi 0, %s92
    %s110 = sphi 0, %s110
    %s112 = sphi 0, %s110
    %s113 = sphi 0, %s112
    %s127 = sphi 0, %s113
    %s133 = sphi 0, %s135
    %s136 = sphi 0, %s133
    %s137 = sphi 0, %s136
    %s153 = sphi 0, %s137
    %s159 = sphi 0, %s161
    %s162 = sphi 0, %s159
    %s163 = sphi 0, %s162
    %s179 = sphi 0, %s163
  $region4: #{decoder_block_forward.2} parent=0 // loop_header_branch
    %16 = sbr.rel (%p14) target = $region8
  $region5: #{decoder_block_forward.2} parent=0 // loop_body
    %s18 = ssub.s32 %s13, 1
    %s19 = ssub.s32 %s13, 2
    %s20 = sadd.s32 %s13, 1
    %s21 = ssub.s32 %s13, %s20
    %p22 = scmp.eq.s32.totalorder %s21, 0
    %s24 = sadd.s32 %s23, 1
    %s25 = scalar_select %p22, %s23, %s24
    %p28 = pneg %p22
    %p29 = scmp.eq.s32.totalorder %s13, 1
    %p30 = por %p28, %p29
    %p31 = scmp.ne.s32.totalorder %s23, %s26
    %p32 = scmp.eq.s32.totalorder %s13, 0
    %p33 = por %p31, %p32
    %p34 = scmp.ne.s32.totalorder %s23, %s26
    %p35 = scmp.eq.s32.totalorder %s18, 1
    %p36 = por %p34, %p35
    %p37 = scmp.ne.s32.totalorder %s26, %s27
    %p38 = scmp.eq.s32.totalorder %s18, 0
    %p39 = por %p37, %p38
    %p40 = scmp.ne.s32.totalorder %s26, %s27
    %p41 = scmp.eq.s32.totalorder %s19, 1
    %p42 = por %p40, %p41
    %p44 = scmp.ne.s32.totalorder %s27, %s43
    %p45 = scmp.eq.s32.totalorder %s19, 0
    %p46 = por %p44, %p45
    %s48 = sadd.s32 %s47, 1
    %p51 = scmp.eq.s32.totalorder %s13, 1
    %p52 = scmp.ne.s32.totalorder %s47, %s49
    %p53 = scmp.eq.s32.totalorder %s13, 0
    %p54 = por %p52, %p53
    %p55 = scmp.ne.s32.totalorder %s47, %s49
    %p56 = scmp.eq.s32.totalorder %s18, 1
    %p57 = por %p55, %p56
    %p58 = scmp.ne.s32.totalorder %s49, %s50
    %p59 = scmp.eq.s32.totalorder %s18, 0
    %p60 = por %p58, %p59
    %p61 = scmp.ne.s32.totalorder %s49, %s50
    %p62 = scmp.eq.s32.totalorder %s19, 1
    %p63 = por %p61, %p62
    %p65 = scmp.ne.s32.totalorder %s50, %s64
    %p66 = scmp.eq.s32.totalorder %s19, 0
    %p67 = por %p65, %p66
    %s69 = sadd.s32 %s68, 1
    %p72 = scmp.eq.s32.totalorder %s13, 1
    %p73 = scmp.ne.s32.totalorder %s68, %s70
    %p74 = scmp.eq.s32.totalorder %s13, 0
    %p75 = por %p73, %p74
    %p76 = scmp.ne.s32.totalorder %s68, %s70
    %p77 = scmp.eq.s32.totalorder %s18, 1
    %p78 = por %p76, %p77
    %p79 = scmp.ne.s32.totalorder %s70, %s71
    %p80 = scmp.eq.s32.totalorder %s18, 0
    %p81 = por %p79, %p80
    %p82 = scmp.ne.s32.totalorder %s70, %s71
    %p83 = scmp.eq.s32.totalorder %s19, 1
    %p84 = por %p82, %p83
    %p86 = scmp.ne.s32.totalorder %s71, %s85
    %p87 = scmp.eq.s32.totalorder %s19, 0
    %p88 = por %p86, %p87
    %s90 = sadd.s32 %s89, 1
    %p93 = scmp.eq.s32.totalorder %s13, 1
    %p94 = scmp.ne.s32.totalorder %s89, %s91
    %p95 = scmp.eq.s32.totalorder %s13, 0
    %p96 = por %p94, %p95
    %p97 = scmp.ne.s32.totalorder %s89, %s91
    %p98 = scmp.eq.s32.totalorder %s18, 1
    %p99 = por %p97, %p98
    %p100 = scmp.ne.s32.totalorder %s91, %s92
    %p101 = scmp.eq.s32.totalorder %s18, 0
    %p102 = por %p100, %p101
    %p103 = scmp.ne.s32.totalorder %s91, %s92
    %p104 = scmp.eq.s32.totalorder %s19, 1
    %p105 = por %p103, %p104
    %p107 = scmp.ne.s32.totalorder %s92, %s106
    %p108 = scmp.eq.s32.totalorder %s19, 0
    %p109 = por %p107, %p108
    %s111 = sadd.s32 %s110, 1
    %p114 = scmp.eq.s32.totalorder %s13, 1
    %p115 = scmp.ne.s32.totalorder %s110, %s112
    %p116 = scmp.eq.s32.totalorder %s13, 0
    %p117 = por %p115, %p116
    %p118 = scmp.ne.s32.totalorder %s110, %s112
    %p119 = scmp.eq.s32.totalorder %s18, 1
    %p120 = por %p118, %p119
    %p121 = scmp.ne.s32.totalorder %s112, %s113
    %p122 = scmp.eq.s32.totalorder %s18, 0
    %p123 = por %p121, %p122
    %p124 = scmp.ne.s32.totalorder %s112, %s113
    %p125 = scmp.eq.s32.totalorder %s19, 1
    %p126 = por %p124, %p125
    %p128 = scmp.ne.s32.totalorder %s113, %s127
    %p129 = scmp.eq.s32.totalorder %s19, 0
    %p130 = por %p128, %p129
    %s131 = ssub.s32 %s13, %s20
    %p132 = scmp.eq.s32.totalorder %s131, 0
    %s134 = sadd.s32 %s133, 1
    %s135 = scalar_select %p132, %s133, %s134
    %p138 = pneg %p132
    %p139 = scmp.eq.s32.totalorder %s13, 1
    %p140 = por %p138, %p139
    %p141 = scmp.ne.s32.totalorder %s133, %s136
    %p142 = scmp.eq.s32.totalorder %s13, 0
    %p143 = por %p141, %p142
    %p144 = scmp.ne.s32.totalorder %s133, %s136
    %p145 = scmp.eq.s32.totalorder %s18, 1
    %p146 = por %p144, %p145
    %p147 = scmp.ne.s32.totalorder %s136, %s137
    %p148 = scmp.eq.s32.totalorder %s18, 0
    %p149 = por %p147, %p148
    %p150 = scmp.ne.s32.totalorder %s136, %s137
    %p151 = scmp.eq.s32.totalorder %s19, 1
    %p152 = por %p150, %p151
    %p154 = scmp.ne.s32.totalorder %s137, %s153
    %p155 = scmp.eq.s32.totalorder %s19, 0
    %p156 = por %p154, %p155
    %s157 = ssub.s32 %s13, %s20
    %p158 = scmp.eq.s32.totalorder %s157, 0
    %s160 = sadd.s32 %s159, 1
    %s161 = scalar_select %p158, %s159, %s160
    %p164 = pneg %p158
    %p165 = scmp.eq.s32.totalorder %s13, 1
    %p166 = por %p164, %p165
    %p167 = scmp.ne.s32.totalorder %s159, %s162
    %p168 = scmp.eq.s32.totalorder %s13, 0
    %p169 = por %p167, %p168
    %p170 = scmp.ne.s32.totalorder %s159, %s162
    %p171 = scmp.eq.s32.totalorder %s18, 1
    %p172 = por %p170, %p171
    %p173 = scmp.ne.s32.totalorder %s162, %s163
    %p174 = scmp.eq.s32.totalorder %s18, 0
    %p175 = por %p173, %p174
    %p176 = scmp.ne.s32.totalorder %s162, %s163
    %p177 = scmp.eq.s32.totalorder %s19, 1
    %p178 = por %p176, %p177
    %p180 = scmp.ne.s32.totalorder %s163, %s179
    %p181 = scmp.eq.s32.totalorder %s19, 0
    %p182 = por %p180, %p181
    %p183 = scmp.le.s32.totalorder 1, %s13
    %p184 = scmp.lt.s32.totalorder %s13, 3
    %p185 = pnand %p183, %p184
    %p186 = pneg %p185
    // Predicated region
    $region9: #{decoder_block_forward.2} parent=5 // pred_check
      _
    $region10: #{decoder_block_forward.2} parent=5 // pred_check_branch
      %188 = sbr.rel (%p185) target = $region12
    $region11: #{decoder_block_forward.2} parent=5 // pred_region
      %s189 = ssub.s32 %s13, 1
      // Predicated region
      $region13: #{decoder_block_forward.2} parent=11 // pred_check
        %p190 = pneg %p60
      $region14: #{decoder_block_forward.2} parent=11 // pred_check_branch
        %192 = sbr.rel (%p190) target = $region16
      $region15: #{decoder_block_forward.2} parent=11 // pred_region
        _
      $region16: #{decoder_block_forward.2} parent=11 // pred_fallthru
        _
      // Predicated region
      $region17: #{decoder_block_forward.2} parent=11 // pred_check
        %p193 = pneg %p81
      $region18: #{decoder_block_forward.2} parent=11 // pred_check_branch
        %195 = sbr.rel (%p193) target = $region20
      $region19: #{decoder_block_forward.2} parent=11 // pred_region
        _
      $region20: #{decoder_block_forward.2} parent=11 // pred_fallthru
        _
      // Predicated region
      $region21: #{decoder_block_forward.2} parent=11 // pred_check
        %p196 = pneg %p102
      $region22: #{decoder_block_forward.2} parent=11 // pred_check_branch
        %198 = sbr.rel (%p196) target = $region24
      $region23: #{decoder_block_forward.2} parent=11 // pred_region
        _
      $region24: #{decoder_block_forward.2} parent=11 // pred_fallthru
        _
      // Predicated region
      $region25: #{decoder_block_forward.2} parent=11 // pred_check
        %p199 = pneg %p123
      $region26: #{decoder_block_forward.2} parent=11 // pred_check_branch
        %201 = sbr.rel (%p199) target = $region28
      $region27: #{decoder_block_forward.2} parent=11 // pred_region
        _
      $region28: #{decoder_block_forward.2} parent=11 // pred_fallthru
        _
    $region12: #{decoder_block_forward.2} parent=5 // pred_fallthru
      _
    %p202 = scmp.lt.s32.totalorder %s13, 2
    // Predicated region
    $region29: #{decoder_block_forward.2} parent=5 // pred_check
      %p203 = pneg %p202
    $region30: #{decoder_block_forward.2} parent=5 // pred_check_branch
      %205 = sbr.rel (%p203) target = $region32
    $region31: #{decoder_block_forward.2} parent=5 // pred_region
      // Predicated region
      $region33: #{decoder_block_forward.2} parent=31 // pred_check
        %p206 = pneg %p33
      $region34: #{decoder_block_forward.2} parent=31 // pred_check_branch
        %208 = sbr.rel (%p206) target = $region36
      $region35: #{decoder_block_forward.2} parent=31 // pred_region
        %p209 = scmp.lt.s32.totalorder %s13, 1
        %s210 = scalar_select %p209, %s13, 1
        %s211 = smul.addr %s210, 54
        %s212 = smul.addr %s211, 8
        %s213 = scalar_lea.vmem %s0, %s212
      $region36: #{decoder_block_forward.2} parent=31 // pred_fallthru
        _
    $region32: #{decoder_block_forward.2} parent=5 // pred_fallthru
      _
    %p214 = scmp.le.s32.totalorder 1, %s13
    %p215 = scmp.lt.s32.totalorder %s13, 3
    %p216 = pnand %p214, %p215
    %p217 = pneg %p216
    // Predicated region
    $region37: #{decoder_block_forward.2} parent=5 // pred_check
      _
    $region38: #{decoder_block_forward.2} parent=5 // pred_check_branch
      %219 = sbr.rel (%p216) target = $region40
    $region39: #{decoder_block_forward.2} parent=5 // pred_region
      %s220 = ssub.s32 %s13, 1
      %p221 = scmp.lt.s32.totalorder %s18, 1
      %s222 = scalar_select %p221, %s18, 1
      %s223 = smul.addr %s222, 54
      %s224 = smul.addr %s223, 8
      %s225 = scalar_lea.vmem %s0, %s224
      %p226 = pneg %p39
      %p227 = pneg %p36
      %p228 = pneg %p60
      %p229 = pneg %p57
      %p230 = pneg %p81
      %p231 = pneg %p78
      %p232 = pneg %p102
      %p233 = pneg %p99
      %p234 = pneg %p123
      %p235 = pneg %p120
      %p236 = pneg %p149
      %p237 = pneg %p146
      %p238 = scmp.lt.s32.totalorder %s18, 1
      %s239 = scalar_select %p238, %s18, 1
      %s240 = smul.addr %s239, 128
      %s241 = smul.addr %s240, 8
      %s242 = scalar_lea.vmem %s5, %s241
      %p243 = pneg %p175
      %p244 = pneg %p172
      %p245 = scmp.lt.s32.totalorder %s18, 1
      %s246 = scalar_select %p245, %s18, 1
      %s247 = smul.addr %s246, 2
      %s248 = scalar_lea.vmem %s6, %s247
      %p249 = scmp.lt.s32.totalorder %s18, 1
      %s250 = scalar_select %p249, %s18, 1
      %s251 = smul.addr %s250, 54
      %s252 = smul.addr %s251, 8
      %s253 = scalar_lea.vmem %s0, %s252
      %p254 = scmp.lt.s32.totalorder %s18, 1
      %s255 = scalar_select %p254, %s18, 1
      %s256 = smul.addr %s255, 128
      %s257 = smul.addr %s256, 8
      %s258 = scalar_lea.vmem %s5, %s257
      %p259 = scmp.lt.s32.totalorder %s18, 1
      %s260 = scalar_select %p259, %s18, 1
      %s261 = smul.addr %s260, 2
      %s262 = scalar_lea.vmem %s6, %s261
      %v263 = vld [vmem:[%s253] sm:$0xff]
      %v264 = vld [vmem:[%s253 + $0x8] sm:$0xff]
      %v265 = vld [vmem:[%s253 + $0x18] sm:$0xff]
      %v266 = vld [vmem:[%s253 + $0x20] sm:$0xff]
      %v267 = vld [vmem:[%s253 + $0x30] sm:$0xff]
      %v268 = vld [vmem:[%s253 + $0x38] sm:$0xff]
      %v269 = vld [vmem:[%s253 + $0x48] sm:$0xff]
      %v270 = vld [vmem:[%s253 + $0x50] sm:$0xff]
      %v271 = vld [vmem:[%s253 + $0x60] sm:$0xff]
      %v272 = vld [vmem:[%s253 + $0x68] sm:$0xff]
      %v273 = vld [vmem:[%s253 + $0x78] sm:$0xff]
      %v274 = vld [vmem:[%s253 + $0x80] sm:$0xff]
      %v275 = vld [vmem:[%s253 + $0x90] sm:$0xff]
      %v276 = vld [vmem:[%s253 + $0x98] sm:$0xff]
      %v277 = vld [vmem:[%s253 + $0xa8] sm:$0xff]
      %v278 = vld [vmem:[%s253 + $0xb0] sm:$0xff]
      %v279 = vld [vmem:[%s253 + $0xc0] sm:$0xff]
      %v280 = vld [vmem:[%s253 + $0xc8] sm:$0xff]
      %v281 = vld [vmem:[%s253 + $0xd8] sm:$0xff]
      %v282 = vld [vmem:[%s253 + $0xe0] sm:$0xff]
      %v283 = vld [vmem:[%s253 + $0xf0] sm:$0xff]
      %v284 = vld [vmem:[%s253 + $0xf8] sm:$0xff]
      %v285 = vld [vmem:[%s253 + $0x108] sm:$0xff]
      %v286 = vld [vmem:[%s253 + $0x110] sm:$0xff]
      %v287 = vld [vmem:[%s253 + $0x120] sm:$0xff]
      %v288 = vld [vmem:[%s253 + $0x128] sm:$0xff]
      %v289 = vld [vmem:[%s253 + $0x138] sm:$0xff]
      %v290 = vld [vmem:[%s253 + $0x140] sm:$0xff]
      %v291 = vld [vmem:[%s253 + $0x150] sm:$0xff]
      %v292 = vld [vmem:[%s253 + $0x158] sm:$0xff]
      %v293 = vld [vmem:[%s253 + $0x168] sm:$0xff]
      %v294 = vld [vmem:[%s253 + $0x170] sm:$0xff]
      %v295 = vld [vmem:[%s253 + $0x1] sm:$0xff]
      %v296 = vld [vmem:[%s253 + $0x9] sm:$0xff]
      %v297 = vld [vmem:[%s253 + $0x19] sm:$0xff]
      %v298 = vld [vmem:[%s253 + $0x21] sm:$0xff]
      %v299 = vld [vmem:[%s253 + $0x31] sm:$0xff]
      %v300 = vld [vmem:[%s253 + $0x39] sm:$0xff]
      %v301 = vld [vmem:[%s253 + $0x49] sm:$0xff]
      %v302 = vld [vmem:[%s253 + $0x51] sm:$0xff]
      %v303 = vld [vmem:[%s253 + $0x61] sm:$0xff]
      %v304 = vld [vmem:[%s253 + $0x69] sm:$0xff]
      %v305 = vld [vmem:[%s253 + $0x79] sm:$0xff]
      %v306 = vld [vmem:[%s253 + $0x81] sm:$0xff]
      %v307 = vld [vmem:[%s253 + $0x91] sm:$0xff]
      %v308 = vld [vmem:[%s253 + $0x99] sm:$0xff]
      %v309 = vld [vmem:[%s253 + $0xa9] sm:$0xff]
      %v310 = vld [vmem:[%s253 + $0xb1] sm:$0xff]
      %v311 = vld [vmem:[%s253 + $0xc1] sm:$0xff]
      %v312 = vld [vmem:[%s253 + $0xc9] sm:$0xff]
      %v313 = vld [vmem:[%s253 + $0xd9] sm:$0xff]
      %v314 = vld [vmem:[%s253 + $0xe1] sm:$0xff]
      %v315 = vld [vmem:[%s253 + $0xf1] sm:$0xff]
      %v316 = vld [vmem:[%s253 + $0xf9] sm:$0xff]
      %v317 = vld [vmem:[%s253 + $0x109] sm:$0xff]
      %v318 = vld [vmem:[%s253 + $0x111] sm:$0xff]
      %v319 = vld [vmem:[%s253 + $0x121] sm:$0xff]
      %v320 = vld [vmem:[%s253 + $0x129] sm:$0xff]
      %v321 = vld [vmem:[%s253 + $0x139] sm:$0xff]
      %v322 = vld [vmem:[%s253 + $0x141] sm:$0xff]
      %v323 = vld [vmem:[%s253 + $0x151] sm:$0xff]
      %v324 = vld [vmem:[%s253 + $0x159] sm:$0xff]
      %v325 = vld [vmem:[%s253 + $0x169] sm:$0xff]
      %v326 = vld [vmem:[%s253 + $0x171] sm:$0xff]
      %v327 = vld [vmem:[%s253 + $0x2] sm:$0xff]
      %v328 = vld [vmem:[%s253 + $0xa] sm:$0xff]
      %v329 = vld [vmem:[%s253 + $0x1a] sm:$0xff]
      %v330 = vld [vmem:[%s253 + $0x22] sm:$0xff]
      %v331 = vld [vmem:[%s253 + $0x32] sm:$0xff]
      %v332 = vld [vmem:[%s253 + $0x3a] sm:$0xff]
      %v333 = vld [vmem:[%s253 + $0x4a] sm:$0xff]
      %v334 = vld [vmem:[%s253 + $0x52] sm:$0xff]
      %v335 = vld [vmem:[%s253 + $0x62] sm:$0xff]
      %v336 = vld [vmem:[%s253 + $0x6a] sm:$0xff]
      %v337 = vld [vmem:[%s253 + $0x7a] sm:$0xff]
      %v338 = vld [vmem:[%s253 + $0x82] sm:$0xff]
      %v339 = vld [vmem:[%s253 + $0x92] sm:$0xff]
      %v340 = vld [vmem:[%s253 + $0x9a] sm:$0xff]
      %v341 = vld [vmem:[%s253 + $0xaa] sm:$0xff]
      %v342 = vld [vmem:[%s253 + $0xb2] sm:$0xff]
      %v343 = vld [vmem:[%s253 + $0xc2] sm:$0xff]
      %v344 = vld [vmem:[%s253 + $0xca] sm:$0xff]
      %v345 = vld [vmem:[%s253 + $0xda] sm:$0xff]
      %v346 = vld [vmem:[%s253 + $0xe2] sm:$0xff]
      %v347 = vld [vmem:[%s253 + $0xf2] sm:$0xff]
      %v348 = vld [vmem:[%s253 + $0xfa] sm:$0xff]
      %v349 = vld [vmem:[%s253 + $0x10a] sm:$0xff]
      %v350 = vld [vmem:[%s253 + $0x112] sm:$0xff]
      %v351 = vld [vmem:[%s253 + $0x122] sm:$0xff]
      %v352 = vld [vmem:[%s253 + $0x12a] sm:$0xff]
      %v353 = vld [vmem:[%s253 + $0x13a] sm:$0xff]
      %v354 = vld [vmem:[%s253 + $0x142] sm:$0xff]
      %v355 = vld [vmem:[%s253 + $0x152] sm:$0xff]
      %v356 = vld [vmem:[%s253 + $0x15a] sm:$0xff]
      %v357 = vld [vmem:[%s253 + $0x16a] sm:$0xff]
      %v358 = vld [vmem:[%s253 + $0x172] sm:$0xff]
      %s359 = scalar_lea.vmem %s253, 24
      %v360 = vld [vmem:[%s359] sm:$0xff]
      %v361 = vld [vmem:[%s359 + $0x8] sm:$0xff]
      %v362 = vld [vmem:[%s359 + $0x18] sm:$0xff]
      %v363 = vld [vmem:[%s359 + $0x20] sm:$0xff]
      %v364 = vld [vmem:[%s359 + $0x30] sm:$0xff]
      %v365 = vld [vmem:[%s359 + $0x38] sm:$0xff]
      %v366 = vld [vmem:[%s359 + $0x48] sm:$0xff]
      %v367 = vld [vmem:[%s359 + $0x50] sm:$0xff]
      %v368 = vld [vmem:[%s359 + $0x60] sm:$0xff]
      %v369 = vld [vmem:[%s359 + $0x68] sm:$0xff]
      %v370 = vld [vmem:[%s359 + $0x78] sm:$0xff]
      %v371 = vld [vmem:[%s359 + $0x80] sm:$0xff]
      %v372 = vld [vmem:[%s359 + $0x90] sm:$0xff]
      %v373 = vld [vmem:[%s359 + $0x98] sm:$0xff]
      %v374 = vld [vmem:[%s359 + $0xa8] sm:$0xff]
      %v375 = vld [vmem:[%s359 + $0xb0] sm:$0xff]
      %v376 = vld [vmem:[%s359 + $0xc0] sm:$0xff]
      %v377 = vld [vmem:[%s359 + $0xc8] sm:$0xff]
      %v378 = vld [vmem:[%s359 + $0xd8] sm:$0xff]
      %v379 = vld [vmem:[%s359 + $0xe0] sm:$0xff]
      %v380 = vld [vmem:[%s359 + $0xf0] sm:$0xff]
      %v381 = vld [vmem:[%s359 + $0xf8] sm:$0xff]
      %v382 = vld [vmem:[%s359 + $0x108] sm:$0xff]
      %v383 = vld [vmem:[%s359 + $0x110] sm:$0xff]
      %v384 = vld [vmem:[%s359 + $0x120] sm:$0xff]
      %v385 = vld [vmem:[%s359 + $0x128] sm:$0xff]
      %v386 = vld [vmem:[%s359 + $0x138] sm:$0xff]
      %v387 = vld [vmem:[%s359 + $0x140] sm:$0xff]
      %v388 = vld [vmem:[%s359 + $0x150] sm:$0xff]
      %v389 = vld [vmem:[%s359 + $0x158] sm:$0xff]
      %v390 = vld [vmem:[%s359 + $0x168] sm:$0xff]
      %v391 = vld [vmem:[%s359 + $0x170] sm:$0xff]
      %v392 = vld [vmem:[%s359 + $0x1] sm:$0xff]
      %v393 = vld [vmem:[%s359 + $0x9] sm:$0xff]
      %v394 = vld [vmem:[%s359 + $0x19] sm:$0xff]
      %v395 = vld [vmem:[%s359 + $0x21] sm:$0xff]
      %v396 = vld [vmem:[%s359 + $0x31] sm:$0xff]
      %v397 = vld [vmem:[%s359 + $0x39] sm:$0xff]
      %v398 = vld [vmem:[%s359 + $0x49] sm:$0xff]
      %v399 = vld [vmem:[%s359 + $0x51] sm:$0xff]
      %v400 = vld [vmem:[%s359 + $0x61] sm:$0xff]
      %v401 = vld [vmem:[%s359 + $0x69] sm:$0xff]
      %v402 = vld [vmem:[%s359 + $0x79] sm:$0xff]
      %v403 = vld [vmem:[%s359 + $0x81] sm:$0xff]
      %v404 = vld [vmem:[%s359 + $0x91] sm:$0xff]
      %v405 = vld [vmem:[%s359 + $0x99] sm:$0xff]
      %v406 = vld [vmem:[%s359 + $0xa9] sm:$0xff]
      %v407 = vld [vmem:[%s359 + $0xb1] sm:$0xff]
      %v408 = vld [vmem:[%s359 + $0xc1] sm:$0xff]
      %v409 = vld [vmem:[%s359 + $0xc9] sm:$0xff]
      %v410 = vld [vmem:[%s359 + $0xd9] sm:$0xff]
      %v411 = vld [vmem:[%s359 + $0xe1] sm:$0xff]
      %v412 = vld [vmem:[%s359 + $0xf1] sm:$0xff]
      %v413 = vld [vmem:[%s359 + $0xf9] sm:$0xff]
      %v414 = vld [vmem:[%s359 + $0x109] sm:$0xff]
      %v415 = vld [vmem:[%s359 + $0x111] sm:$0xff]
      %v416 = vld [vmem:[%s359 + $0x121] sm:$0xff]
      %v417 = vld [vmem:[%s359 + $0x129] sm:$0xff]
      %v418 = vld [vmem:[%s359 + $0x139] sm:$0xff]
      %v419 = vld [vmem:[%s359 + $0x141] sm:$0xff]
      %v420 = vld [vmem:[%s359 + $0x151] sm:$0xff]
      %v421 = vld [vmem:[%s359 + $0x159] sm:$0xff]
      %v422 = vld [vmem:[%s359 + $0x169] sm:$0xff]
      %v423 = vld [vmem:[%s359 + $0x171] sm:$0xff]
      %v424 = vld [vmem:[%s359 + $0x2] sm:$0xff]
      %v425 = vld [vmem:[%s359 + $0xa] sm:$0xff]
      %v426 = vld [vmem:[%s359 + $0x1a] sm:$0xff]
      %v427 = vld [vmem:[%s359 + $0x22] sm:$0xff]
      %v428 = vld [vmem:[%s359 + $0x32] sm:$0xff]
      %v429 = vld [vmem:[%s359 + $0x3a] sm:$0xff]
      %v430 = vld [vmem:[%s359 + $0x4a] sm:$0xff]
      %v431 = vld [vmem:[%s359 + $0x52] sm:$0xff]
      %v432 = vld [vmem:[%s359 + $0x62] sm:$0xff]
      %v433 = vld [vmem:[%s359 + $0x6a] sm:$0xff]
      %v434 = vld [vmem:[%s359 + $0x7a] sm:$0xff]
      %v435 = vld [vmem:[%s359 + $0x82] sm:$0xff]
      %v436 = vld [vmem:[%s359 + $0x92] sm:$0xff]
      %v437 = vld [vmem:[%s359 + $0x9a] sm:$0xff]
      %v438 = vld [vmem:[%s359 + $0xaa] sm:$0xff]
      %v439 = vld [vmem:[%s359 + $0xb2] sm:$0xff]
      %v440 = vld [vmem:[%s359 + $0xc2] sm:$0xff]
      %v441 = vld [vmem:[%s359 + $0xca] sm:$0xff]
      %v442 = vld [vmem:[%s359 + $0xda] sm:$0xff]
      %v443 = vld [vmem:[%s359 + $0xe2] sm:$0xff]
      %v444 = vld [vmem:[%s359 + $0xf2] sm:$0xff]
      %v445 = vld [vmem:[%s359 + $0xfa] sm:$0xff]
      %v446 = vld [vmem:[%s359 + $0x10a] sm:$0xff]
      %v447 = vld [vmem:[%s359 + $0x112] sm:$0xff]
      %v448 = vld [vmem:[%s359 + $0x122] sm:$0xff]
      %v449 = vld [vmem:[%s359 + $0x12a] sm:$0xff]
      %v450 = vld [vmem:[%s359 + $0x13a] sm:$0xff]
      %v451 = vld [vmem:[%s359 + $0x142] sm:$0xff]
      %v452 = vld [vmem:[%s359 + $0x152] sm:$0xff]
      %v453 = vld [vmem:[%s359 + $0x15a] sm:$0xff]
      %v454 = vld [vmem:[%s359 + $0x16a] sm:$0xff]
      %v455 = vld [vmem:[%s359 + $0x172] sm:$0xff]
      %s456 = scalar_lea.vmem %s253, 48
      %v457 = vld [vmem:[%s456] sm:$0xff]
      %v458 = vld [vmem:[%s456 + $0x8] sm:$0xff]
      %v459 = vld [vmem:[%s456 + $0x18] sm:$0xff]
      %v460 = vld [vmem:[%s456 + $0x20] sm:$0xff]
      %v461 = vld [vmem:[%s456 + $0x30] sm:$0xff]
      %v462 = vld [vmem:[%s456 + $0x38] sm:$0xff]
      %v463 = vld [vmem:[%s456 + $0x48] sm:$0xff]
      %v464 = vld [vmem:[%s456 + $0x50] sm:$0xff]
      %v465 = vld [vmem:[%s456 + $0x60] sm:$0xff]
      %v466 = vld [vmem:[%s456 + $0x68] sm:$0xff]
      %v467 = vld [vmem:[%s456 + $0x78] sm:$0xff]
      %v468 = vld [vmem:[%s456 + $0x80] sm:$0xff]
      %v469 = vld [vmem:[%s456 + $0x90] sm:$0xff]
      %v470 = vld [vmem:[%s456 + $0x98] sm:$0xff]
      %v471 = vld [vmem:[%s456 + $0xa8] sm:$0xff]
      %v472 = vld [vmem:[%s456 + $0xb0] sm:$0xff]
      %v473 = vld [vmem:[%s456 + $0xc0] sm:$0xff]
      %v474 = vld [vmem:[%s456 + $0xc8] sm:$0xff]
      %v475 = vld [vmem:[%s456 + $0xd8] sm:$0xff]
      %v476 = vld [vmem:[%s456 + $0xe0] sm:$0xff]
      %v477 = vld [vmem:[%s456 + $0xf0] sm:$0xff]
      %v478 = vld [vmem:[%s456 + $0xf8] sm:$0xff]
      %v479 = vld [vmem:[%s456 + $0x108] sm:$0xff]
      %v480 = vld [vmem:[%s456 + $0x110] sm:$0xff]
      %v481 = vld [vmem:[%s456 + $0x120] sm:$0xff]
      %v482 = vld [vmem:[%s456 + $0x128] sm:$0xff]
      %v483 = vld [vmem:[%s456 + $0x138] sm:$0xff]
      %v484 = vld [vmem:[%s456 + $0x140] sm:$0xff]
      %v485 = vld [vmem:[%s456 + $0x150] sm:$0xff]
      %v486 = vld [vmem:[%s456 + $0x158] sm:$0xff]
      %v487 = vld [vmem:[%s456 + $0x168] sm:$0xff]
      %v488 = vld [vmem:[%s456 + $0x170] sm:$0xff]
      %v489 = vld [vmem:[%s456 + $0x1] sm:$0xff]
      %v490 = vld [vmem:[%s456 + $0x9] sm:$0xff]
      %v491 = vld [vmem:[%s456 + $0x19] sm:$0xff]
      %v492 = vld [vmem:[%s456 + $0x21] sm:$0xff]
      %v493 = vld [vmem:[%s456 + $0x31] sm:$0xff]
      %v494 = vld [vmem:[%s456 + $0x39] sm:$0xff]
      %v495 = vld [vmem:[%s456 + $0x49] sm:$0xff]
      %v496 = vld [vmem:[%s456 + $0x51] sm:$0xff]
      %v497 = vld [vmem:[%s456 + $0x61] sm:$0xff]
      %v498 = vld [vmem:[%s456 + $0x69] sm:$0xff]
      %v499 = vld [vmem:[%s456 + $0x79] sm:$0xff]
      %v500 = vld [vmem:[%s456 + $0x81] sm:$0xff]
      %v501 = vld [vmem:[%s456 + $0x91] sm:$0xff]
      %v502 = vld [vmem:[%s456 + $0x99] sm:$0xff]
      %v503 = vld [vmem:[%s456 + $0xa9] sm:$0xff]
      %v504 = vld [vmem:[%s456 + $0xb1] sm:$0xff]
      %v505 = vld [vmem:[%s456 + $0xc1] sm:$0xff]
      %v506 = vld [vmem:[%s456 + $0xc9] sm:$0xff]
      %v507 = vld [vmem:[%s456 + $0xd9] sm:$0xff]
      %v508 = vld [vmem:[%s456 + $0xe1] sm:$0xff]
      %v509 = vld [vmem:[%s456 + $0xf1] sm:$0xff]
      %v510 = vld [vmem:[%s456 + $0xf9] sm:$0xff]
      %v511 = vld [vmem:[%s456 + $0x109] sm:$0xff]
      %v512 = vld [vmem:[%s456 + $0x111] sm:$0xff]
      %v513 = vld [vmem:[%s456 + $0x121] sm:$0xff]
      %v514 = vld [vmem:[%s456 + $0x129] sm:$0xff]
      %v515 = vld [vmem:[%s456 + $0x139] sm:$0xff]
      %v516 = vld [vmem:[%s456 + $0x141] sm:$0xff]
      %v517 = vld [vmem:[%s456 + $0x151] sm:$0xff]
      %v518 = vld [vmem:[%s456 + $0x159] sm:$0xff]
      %v519 = vld [vmem:[%s456 + $0x169] sm:$0xff]
      %v520 = vld [vmem:[%s456 + $0x171] sm:$0xff]
      %v521 = vld [vmem:[%s456 + $0x2] sm:$0xff]
      %v522 = vld [vmem:[%s456 + $0xa] sm:$0xff]
      %v523 = vld [vmem:[%s456 + $0x1a] sm:$0xff]
      %v524 = vld [vmem:[%s456 + $0x22] sm:$0xff]
      %v525 = vld [vmem:[%s456 + $0x32] sm:$0xff]
      %v526 = vld [vmem:[%s456 + $0x3a] sm:$0xff]
      %v527 = vld [vmem:[%s456 + $0x4a] sm:$0xff]
      %v528 = vld [vmem:[%s456 + $0x52] sm:$0xff]
      %v529 = vld [vmem:[%s456 + $0x62] sm:$0xff]
      %v530 = vld [vmem:[%s456 + $0x6a] sm:$0xff]
      %v531 = vld [vmem:[%s456 + $0x7a] sm:$0xff]
      %v532 = vld [vmem:[%s456 + $0x82] sm:$0xff]
      %v533 = vld [vmem:[%s456 + $0x92] sm:$0xff]
      %v534 = vld [vmem:[%s456 + $0x9a] sm:$0xff]
      %v535 = vld [vmem:[%s456 + $0xaa] sm:$0xff]
      %v536 = vld [vmem:[%s456 + $0xb2] sm:$0xff]
      %v537 = vld [vmem:[%s456 + $0xc2] sm:$0xff]
      %v538 = vld [vmem:[%s456 + $0xca] sm:$0xff]
      %v539 = vld [vmem:[%s456 + $0xda] sm:$0xff]
      %v540 = vld [vmem:[%s456 + $0xe2] sm:$0xff]
      %v541 = vld [vmem:[%s456 + $0xf2] sm:$0xff]
      %v542 = vld [vmem:[%s456 + $0xfa] sm:$0xff]
      %v543 = vld [vmem:[%s456 + $0x10a] sm:$0xff]
      %v544 = vld [vmem:[%s456 + $0x112] sm:$0xff]
      %v545 = vld [vmem:[%s456 + $0x122] sm:$0xff]
      %v546 = vld [vmem:[%s456 + $0x12a] sm:$0xff]
      %v547 = vld [vmem:[%s456 + $0x13a] sm:$0xff]
      %v548 = vld [vmem:[%s456 + $0x142] sm:$0xff]
      %v549 = vld [vmem:[%s456 + $0x152] sm:$0xff]
      %v550 = vld [vmem:[%s456 + $0x15a] sm:$0xff]
      %v551 = vld [vmem:[%s456 + $0x16a] sm:$0xff]
      %v552 = vld [vmem:[%s456 + $0x172] sm:$0xff]
      %585 = vrot.lane.b32.xlu0 %v295, 4
      %v586 = vpop.permute.xlu0 %585
      %587 = vrot.lane.b32.xlu0 %v296, 4
      %v588 = vpop.permute.xlu0 %587
      %589 = vrot.lane.b32.xlu0 %v297, 4
      %v590 = vpop.permute.xlu0 %589
      %591 = vrot.lane.b32.xlu0 %v298, 4
      %v592 = vpop.permute.xlu0 %591
      %593 = vrot.lane.b32.xlu0 %v299, 4
      %v594 = vpop.permute.xlu0 %593
      %595 = vrot.lane.b32.xlu0 %v300, 4
      %v596 = vpop.permute.xlu0 %595
      %597 = vrot.lane.b32.xlu0 %v301, 4
      %v598 = vpop.permute.xlu0 %597
      %599 = vrot.lane.b32.xlu0 %v302, 4
      %v600 = vpop.permute.xlu0 %599
      %601 = vrot.lane.b32.xlu0 %v303, 4
      %v602 = vpop.permute.xlu0 %601
      %603 = vrot.lane.b32.xlu0 %v304, 4
      %v604 = vpop.permute.xlu0 %603
      %605 = vrot.lane.b32.xlu0 %v305, 4
      %v606 = vpop.permute.xlu0 %605
      %607 = vrot.lane.b32.xlu0 %v306, 4
      %v608 = vpop.permute.xlu0 %607
      %609 = vrot.lane.b32.xlu0 %v307, 4
      %v610 = vpop.permute.xlu0 %609
      %611 = vrot.lane.b32.xlu0 %v308, 4
      %v612 = vpop.permute.xlu0 %611
      %613 = vrot.lane.b32.xlu0 %v309, 4
      %v614 = vpop.permute.xlu0 %613
      %615 = vrot.lane.b32.xlu0 %v310, 4
      %v616 = vpop.permute.xlu0 %615
      %617 = vrot.lane.b32.xlu0 %v311, 4
      %v618 = vpop.permute.xlu0 %617
      %619 = vrot.lane.b32.xlu0 %v312, 4
      %v620 = vpop.permute.xlu0 %619
      %621 = vrot.lane.b32.xlu0 %v313, 4
      %v622 = vpop.permute.xlu0 %621
      %623 = vrot.lane.b32.xlu0 %v314, 4
      %v624 = vpop.permute.xlu0 %623
      %625 = vrot.lane.b32.xlu0 %v315, 4
      %v626 = vpop.permute.xlu0 %625
      %627 = vrot.lane.b32.xlu0 %v316, 4
      %v628 = vpop.permute.xlu0 %627
      %629 = vrot.lane.b32.xlu0 %v317, 4
      %v630 = vpop.permute.xlu0 %629
      %631 = vrot.lane.b32.xlu0 %v318, 4
      %v632 = vpop.permute.xlu0 %631
      %633 = vrot.lane.b32.xlu0 %v319, 4
      %v634 = vpop.permute.xlu0 %633
      %635 = vrot.lane.b32.xlu0 %v320, 4
      %v636 = vpop.permute.xlu0 %635
      %637 = vrot.lane.b32.xlu0 %v321, 4
      %v638 = vpop.permute.xlu0 %637
      %639 = vrot.lane.b32.xlu0 %v322, 4
      %v640 = vpop.permute.xlu0 %639
      %641 = vrot.lane.b32.xlu0 %v323, 4
      %v642 = vpop.permute.xlu0 %641
      %643 = vrot.lane.b32.xlu0 %v324, 4
      %v644 = vpop.permute.xlu0 %643
      %645 = vrot.lane.b32.xlu0 %v325, 4
      %v646 = vpop.permute.xlu0 %645
      %647 = vrot.lane.b32.xlu0 %v326, 4
      %v648 = vpop.permute.xlu0 %647
      %713 = vrot.lane.b32.xlu0 %v327, 8
      %v714 = vpop.permute.xlu0 %713
      %715 = vrot.lane.b32.xlu0 %v328, 8
      %v716 = vpop.permute.xlu0 %715
      %717 = vrot.lane.b32.xlu0 %v329, 8
      %v718 = vpop.permute.xlu0 %717
      %719 = vrot.lane.b32.xlu0 %v330, 8
      %v720 = vpop.permute.xlu0 %719
      %721 = vrot.lane.b32.xlu0 %v331, 8
      %v722 = vpop.permute.xlu0 %721
      %723 = vrot.lane.b32.xlu0 %v332, 8
      %v724 = vpop.permute.xlu0 %723
      %725 = vrot.lane.b32.xlu0 %v333, 8
      %v726 = vpop.permute.xlu0 %725
      %727 = vrot.lane.b32.xlu0 %v334, 8
      %v728 = vpop.permute.xlu0 %727
      %729 = vrot.lane.b32.xlu0 %v335, 8
      %v730 = vpop.permute.xlu0 %729
      %731 = vrot.lane.b32.xlu0 %v336, 8
      %v732 = vpop.permute.xlu0 %731
      %733 = vrot.lane.b32.xlu0 %v337, 8
      %v734 = vpop.permute.xlu0 %733
      %735 = vrot.lane.b32.xlu0 %v338, 8
      %v736 = vpop.permute.xlu0 %735
      %737 = vrot.lane.b32.xlu0 %v339, 8
      %v738 = vpop.permute.xlu0 %737
      %739 = vrot.lane.b32.xlu0 %v340, 8
      %v740 = vpop.permute.xlu0 %739
      %741 = vrot.lane.b32.xlu0 %v341, 8
      %v742 = vpop.permute.xlu0 %741
      %743 = vrot.lane.b32.xlu0 %v342, 8
      %v744 = vpop.permute.xlu0 %743
      %745 = vrot.lane.b32.xlu0 %v343, 8
      %v746 = vpop.permute.xlu0 %745
      %747 = vrot.lane.b32.xlu0 %v344, 8
      %v748 = vpop.permute.xlu0 %747
      %749 = vrot.lane.b32.xlu0 %v345, 8
      %v750 = vpop.permute.xlu0 %749
      %751 = vrot.lane.b32.xlu0 %v346, 8
      %v752 = vpop.permute.xlu0 %751
      %753 = vrot.lane.b32.xlu0 %v347, 8
      %v754 = vpop.permute.xlu0 %753
      %755 = vrot.lane.b32.xlu0 %v348, 8
      %v756 = vpop.permute.xlu0 %755
      %757 = vrot.lane.b32.xlu0 %v349, 8
      %v758 = vpop.permute.xlu0 %757
      %759 = vrot.lane.b32.xlu0 %v350, 8
      %v760 = vpop.permute.xlu0 %759
      %761 = vrot.lane.b32.xlu0 %v351, 8
      %v762 = vpop.permute.xlu0 %761
      %763 = vrot.lane.b32.xlu0 %v352, 8
      %v764 = vpop.permute.xlu0 %763
      %765 = vrot.lane.b32.xlu0 %v353, 8
      %v766 = vpop.permute.xlu0 %765
      %767 = vrot.lane.b32.xlu0 %v354, 8
      %v768 = vpop.permute.xlu0 %767
      %769 = vrot.lane.b32.xlu0 %v355, 8
      %v770 = vpop.permute.xlu0 %769
      %771 = vrot.lane.b32.xlu0 %v356, 8
      %v772 = vpop.permute.xlu0 %771
      %773 = vrot.lane.b32.xlu0 %v357, 8
      %v774 = vpop.permute.xlu0 %773
      %775 = vrot.lane.b32.xlu0 %v358, 8
      %v776 = vpop.permute.xlu0 %775
      %841 = vrot.lane.b32.xlu0 %v360, 12
      %v842 = vpop.permute.xlu0 %841
      %843 = vrot.lane.b32.xlu0 %v361, 12
      %v844 = vpop.permute.xlu0 %843
      %845 = vrot.lane.b32.xlu0 %v362, 12
      %v846 = vpop.permute.xlu0 %845
      %847 = vrot.lane.b32.xlu0 %v363, 12
      %v848 = vpop.permute.xlu0 %847
      %849 = vrot.lane.b32.xlu0 %v364, 12
      %v850 = vpop.permute.xlu0 %849
      %851 = vrot.lane.b32.xlu0 %v365, 12
      %v852 = vpop.permute.xlu0 %851
      %853 = vrot.lane.b32.xlu0 %v366, 12
      %v854 = vpop.permute.xlu0 %853
      %855 = vrot.lane.b32.xlu0 %v367, 12
      %v856 = vpop.permute.xlu0 %855
      %857 = vrot.lane.b32.xlu0 %v368, 12
      %v858 = vpop.permute.xlu0 %857
      %859 = vrot.lane.b32.xlu0 %v369, 12
      %v860 = vpop.permute.xlu0 %859
      %861 = vrot.lane.b32.xlu0 %v370, 12
      %v862 = vpop.permute.xlu0 %861
      %863 = vrot.lane.b32.xlu0 %v371, 12
      %v864 = vpop.permute.xlu0 %863
      %865 = vrot.lane.b32.xlu0 %v372, 12
      %v866 = vpop.permute.xlu0 %865
      %867 = vrot.lane.b32.xlu0 %v373, 12
      %v868 = vpop.permute.xlu0 %867
      %869 = vrot.lane.b32.xlu0 %v374, 12
      %v870 = vpop.permute.xlu0 %869
      %871 = vrot.lane.b32.xlu0 %v375, 12
      %v872 = vpop.permute.xlu0 %871
      %873 = vrot.lane.b32.xlu0 %v376, 12
      %v874 = vpop.permute.xlu0 %873
      %875 = vrot.lane.b32.xlu0 %v377, 12
      %v876 = vpop.permute.xlu0 %875
      %877 = vrot.lane.b32.xlu0 %v378, 12
      %v878 = vpop.permute.xlu0 %877
      %879 = vrot.lane.b32.xlu0 %v379, 12
      %v880 = vpop.permute.xlu0 %879
      %881 = vrot.lane.b32.xlu0 %v380, 12
      %v882 = vpop.permute.xlu0 %881
      %883 = vrot.lane.b32.xlu0 %v381, 12
      %v884 = vpop.permute.xlu0 %883
      %885 = vrot.lane.b32.xlu0 %v382, 12
      %v886 = vpop.permute.xlu0 %885
      %887 = vrot.lane.b32.xlu0 %v383, 12
      %v888 = vpop.permute.xlu0 %887
      %889 = vrot.lane.b32.xlu0 %v384, 12
      %v890 = vpop.permute.xlu0 %889
      %891 = vrot.lane.b32.xlu0 %v385, 12
      %v892 = vpop.permute.xlu0 %891
      %893 = vrot.lane.b32.xlu0 %v386, 12
      %v894 = vpop.permute.xlu0 %893
      %895 = vrot.lane.b32.xlu0 %v387, 12
      %v896 = vpop.permute.xlu0 %895
      %897 = vrot.lane.b32.xlu0 %v388, 12
      %v898 = vpop.permute.xlu0 %897
      %899 = vrot.lane.b32.xlu0 %v389, 12
      %v900 = vpop.permute.xlu0 %899
      %901 = vrot.lane.b32.xlu0 %v390, 12
      %v902 = vpop.permute.xlu0 %901
      %903 = vrot.lane.b32.xlu0 %v391, 12
      %v904 = vpop.permute.xlu0 %903
      %969 = vrot.lane.b32.xlu0 %v392, 16
      %v970 = vpop.permute.xlu0 %969
      %971 = vrot.lane.b32.xlu0 %v393, 16
      %v972 = vpop.permute.xlu0 %971
      %973 = vrot.lane.b32.xlu0 %v394, 16
      %v974 = vpop.permute.xlu0 %973
      %975 = vrot.lane.b32.xlu0 %v395, 16
      %v976 = vpop.permute.xlu0 %975
      %977 = vrot.lane.b32.xlu0 %v396, 16
      %v978 = vpop.permute.xlu0 %977
      %979 = vrot.lane.b32.xlu0 %v397, 16
      %v980 = vpop.permute.xlu0 %979
      %981 = vrot.lane.b32.xlu0 %v398, 16
      %v982 = vpop.permute.xlu0 %981
      %983 = vrot.lane.b32.xlu0 %v399, 16
      %v984 = vpop.permute.xlu0 %983
      %985 = vrot.lane.b32.xlu0 %v400, 16
      %v986 = vpop.permute.xlu0 %985
      %987 = vrot.lane.b32.xlu0 %v401, 16
      %v988 = vpop.permute.xlu0 %987
      %989 = vrot.lane.b32.xlu0 %v402, 16
      %v990 = vpop.permute.xlu0 %989
      %991 = vrot.lane.b32.xlu0 %v403, 16
      %v992 = vpop.permute.xlu0 %991
      %993 = vrot.lane.b32.xlu0 %v404, 16
      %v994 = vpop.permute.xlu0 %993
      %995 = vrot.lane.b32.xlu0 %v405, 16
      %v996 = vpop.permute.xlu0 %995
      %997 = vrot.lane.b32.xlu0 %v406, 16
      %v998 = vpop.permute.xlu0 %997
      %999 = vrot.lane.b32.xlu0 %v407, 16
      %v1000 = vpop.permute.xlu0 %999
      %1001 = vrot.lane.b32.xlu0 %v408, 16
      %v1002 = vpop.permute.xlu0 %1001
      %1003 = vrot.lane.b32.xlu0 %v409, 16
      %v1004 = vpop.permute.xlu0 %1003
      %1005 = vrot.lane.b32.xlu0 %v410, 16
      %v1006 = vpop.permute.xlu0 %1005
      %1007 = vrot.lane.b32.xlu0 %v411, 16
      %v1008 = vpop.permute.xlu0 %1007
      %1009 = vrot.lane.b32.xlu0 %v412, 16
      %v1010 = vpop.permute.xlu0 %1009
      %1011 = vrot.lane.b32.xlu0 %v413, 16
      %v1012 = vpop.permute.xlu0 %1011
      %1013 = vrot.lane.b32.xlu0 %v414, 16
      %v1014 = vpop.permute.xlu0 %1013
      %1015 = vrot.lane.b32.xlu0 %v415, 16
      %v1016 = vpop.permute.xlu0 %1015
      %1017 = vrot.lane.b32.xlu0 %v416, 16
      %v1018 = vpop.permute.xlu0 %1017
      %1019 = vrot.lane.b32.xlu0 %v417, 16
      %v1020 = vpop.permute.xlu0 %1019
      %1021 = vrot.lane.b32.xlu0 %v418, 16
      %v1022 = vpop.permute.xlu0 %1021
      %1023 = vrot.lane.b32.xlu0 %v419, 16
      %v1024 = vpop.permute.xlu0 %1023
      %1025 = vrot.lane.b32.xlu0 %v420, 16
      %v1026 = vpop.permute.xlu0 %1025
      %1027 = vrot.lane.b32.xlu0 %v421, 16
      %v1028 = vpop.permute.xlu0 %1027
      %1029 = vrot.lane.b32.xlu0 %v422, 16
      %v1030 = vpop.permute.xlu0 %1029
      %1031 = vrot.lane.b32.xlu0 %v423, 16
      %v1032 = vpop.permute.xlu0 %1031
      %1097 = vrot.lane.b32.xlu0 %v424, 20
      %v1098 = vpop.permute.xlu0 %1097
      %1099 = vrot.lane.b32.xlu0 %v425, 20
      %v1100 = vpop.permute.xlu0 %1099
      %1101 = vrot.lane.b32.xlu0 %v426, 20
      %v1102 = vpop.permute.xlu0 %1101
      %1103 = vrot.lane.b32.xlu0 %v427, 20
      %v1104 = vpop.permute.xlu0 %1103
      %1105 = vrot.lane.b32.xlu0 %v428, 20
      %v1106 = vpop.permute.xlu0 %1105
      %1107 = vrot.lane.b32.xlu0 %v429, 20
      %v1108 = vpop.permute.xlu0 %1107
      %1109 = vrot.lane.b32.xlu0 %v430, 20
      %v1110 = vpop.permute.xlu0 %1109
      %1111 = vrot.lane.b32.xlu0 %v431, 20
      %v1112 = vpop.permute.xlu0 %1111
      %1113 = vrot.lane.b32.xlu0 %v432, 20
      %v1114 = vpop.permute.xlu0 %1113
      %1115 = vrot.lane.b32.xlu0 %v433, 20
      %v1116 = vpop.permute.xlu0 %1115
      %1117 = vrot.lane.b32.xlu0 %v434, 20
      %v1118 = vpop.permute.xlu0 %1117
      %1119 = vrot.lane.b32.xlu0 %v435, 20
      %v1120 = vpop.permute.xlu0 %1119
      %1121 = vrot.lane.b32.xlu0 %v436, 20
      %v1122 = vpop.permute.xlu0 %1121
      %1123 = vrot.lane.b32.xlu0 %v437, 20
      %v1124 = vpop.permute.xlu0 %1123
      %1125 = vrot.lane.b32.xlu0 %v438, 20
      %v1126 = vpop.permute.xlu0 %1125
      %1127 = vrot.lane.b32.xlu0 %v439, 20
      %v1128 = vpop.permute.xlu0 %1127
      %1129 = vrot.lane.b32.xlu0 %v440, 20
      %v1130 = vpop.permute.xlu0 %1129
      %1131 = vrot.lane.b32.xlu0 %v441, 20
      %v1132 = vpop.permute.xlu0 %1131
      %1133 = vrot.lane.b32.xlu0 %v442, 20
      %v1134 = vpop.permute.xlu0 %1133
      %1135 = vrot.lane.b32.xlu0 %v443, 20
      %v1136 = vpop.permute.xlu0 %1135
      %1137 = vrot.lane.b32.xlu0 %v444, 20
      %v1138 = vpop.permute.xlu0 %1137
      %1139 = vrot.lane.b32.xlu0 %v445, 20
      %v1140 = vpop.permute.xlu0 %1139
      %1141 = vrot.lane.b32.xlu0 %v446, 20
      %v1142 = vpop.permute.xlu0 %1141
      %1143 = vrot.lane.b32.xlu0 %v447, 20
      %v1144 = vpop.permute.xlu0 %1143
      %1145 = vrot.lane.b32.xlu0 %v448, 20
      %v1146 = vpop.permute.xlu0 %1145
      %1147 = vrot.lane.b32.xlu0 %v449, 20
      %v1148 = vpop.permute.xlu0 %1147
      %1149 = vrot.lane.b32.xlu0 %v450, 20
      %v1150 = vpop.permute.xlu0 %1149
      %1151 = vrot.lane.b32.xlu0 %v451, 20
      %v1152 = vpop.permute.xlu0 %1151
      %1153 = vrot.lane.b32.xlu0 %v452, 20
      %v1154 = vpop.permute.xlu0 %1153
      %1155 = vrot.lane.b32.xlu0 %v453, 20
      %v1156 = vpop.permute.xlu0 %1155
      %1157 = vrot.lane.b32.xlu0 %v454, 20
      %v1158 = vpop.permute.xlu0 %1157
      %1159 = vrot.lane.b32.xlu0 %v455, 20
      %v1160 = vpop.permute.xlu0 %1159
      %1225 = vrot.lane.b32.xlu0 %v457, 24
      %v1226 = vpop.permute.xlu0 %1225
      %1227 = vrot.lane.b32.xlu0 %v458, 24
      %v1228 = vpop.permute.xlu0 %1227
      %1229 = vrot.lane.b32.xlu0 %v459, 24
      %v1230 = vpop.permute.xlu0 %1229
      %1231 = vrot.lane.b32.xlu0 %v460, 24
      %v1232 = vpop.permute.xlu0 %1231
      %1233 = vrot.lane.b32.xlu0 %v461, 24
      %v1234 = vpop.permute.xlu0 %1233
      %1235 = vrot.lane.b32.xlu0 %v462, 24
      %v1236 = vpop.permute.xlu0 %1235
      %1237 = vrot.lane.b32.xlu0 %v463, 24
      %v1238 = vpop.permute.xlu0 %1237
      %1239 = vrot.lane.b32.xlu0 %v464, 24
      %v1240 = vpop.permute.xlu0 %1239
      %1241 = vrot.lane.b32.xlu0 %v465, 24
      %v1242 = vpop.permute.xlu0 %1241
      %1243 = vrot.lane.b32.xlu0 %v466, 24
      %v1244 = vpop.permute.xlu0 %1243
      %1245 = vrot.lane.b32.xlu0 %v467, 24
      %v1246 = vpop.permute.xlu0 %1245
      %1247 = vrot.lane.b32.xlu0 %v468, 24
      %v1248 = vpop.permute.xlu0 %1247
      %1249 = vrot.lane.b32.xlu0 %v469, 24
      %v1250 = vpop.permute.xlu0 %1249
      %1251 = vrot.lane.b32.xlu0 %v470, 24
      %v1252 = vpop.permute.xlu0 %1251
      %1253 = vrot.lane.b32.xlu0 %v471, 24
      %v1254 = vpop.permute.xlu0 %1253
      %1255 = vrot.lane.b32.xlu0 %v472, 24
      %v1256 = vpop.permute.xlu0 %1255
      %1257 = vrot.lane.b32.xlu0 %v473, 24
      %v1258 = vpop.permute.xlu0 %1257
      %1259 = vrot.lane.b32.xlu0 %v474, 24
      %v1260 = vpop.permute.xlu0 %1259
      %1261 = vrot.lane.b32.xlu0 %v475, 24
      %v1262 = vpop.permute.xlu0 %1261
      %1263 = vrot.lane.b32.xlu0 %v476, 24
      %v1264 = vpop.permute.xlu0 %1263
      %1265 = vrot.lane.b32.xlu0 %v477, 24
      %v1266 = vpop.permute.xlu0 %1265
      %1267 = vrot.lane.b32.xlu0 %v478, 24
      %v1268 = vpop.permute.xlu0 %1267
      %1269 = vrot.lane.b32.xlu0 %v479, 24
      %v1270 = vpop.permute.xlu0 %1269
      %1271 = vrot.lane.b32.xlu0 %v480, 24
      %v1272 = vpop.permute.xlu0 %1271
      %1273 = vrot.lane.b32.xlu0 %v481, 24
      %v1274 = vpop.permute.xlu0 %1273
      %1275 = vrot.lane.b32.xlu0 %v482, 24
      %v1276 = vpop.permute.xlu0 %1275
      %1277 = vrot.lane.b32.xlu0 %v483, 24
      %v1278 = vpop.permute.xlu0 %1277
      %1279 = vrot.lane.b32.xlu0 %v484, 24
      %v1280 = vpop.permute.xlu0 %1279
      %1281 = vrot.lane.b32.xlu0 %v485, 24
      %v1282 = vpop.permute.xlu0 %1281
      %1283 = vrot.lane.b32.xlu0 %v486, 24
      %v1284 = vpop.permute.xlu0 %1283
      %1285 = vrot.lane.b32.xlu0 %v487, 24
      %v1286 = vpop.permute.xlu0 %1285
      %1287 = vrot.lane.b32.xlu0 %v488, 24
      %v1288 = vpop.permute.xlu0 %1287
      %1353 = vrot.lane.b32.xlu0 %v489, 28
      %v1354 = vpop.permute.xlu0 %1353
      %1355 = vrot.lane.b32.xlu0 %v490, 28
      %v1356 = vpop.permute.xlu0 %1355
      %1357 = vrot.lane.b32.xlu0 %v491, 28
      %v1358 = vpop.permute.xlu0 %1357
      %1359 = vrot.lane.b32.xlu0 %v492, 28
      %v1360 = vpop.permute.xlu0 %1359
      %1361 = vrot.lane.b32.xlu0 %v493, 28
      %v1362 = vpop.permute.xlu0 %1361
      %1363 = vrot.lane.b32.xlu0 %v494, 28
      %v1364 = vpop.permute.xlu0 %1363
      %1365 = vrot.lane.b32.xlu0 %v495, 28
      %v1366 = vpop.permute.xlu0 %1365
      %1367 = vrot.lane.b32.xlu0 %v496, 28
      %v1368 = vpop.permute.xlu0 %1367
      %1369 = vrot.lane.b32.xlu0 %v497, 28
      %v1370 = vpop.permute.xlu0 %1369
      %1371 = vrot.lane.b32.xlu0 %v498, 28
      %v1372 = vpop.permute.xlu0 %1371
      %1373 = vrot.lane.b32.xlu0 %v499, 28
      %v1374 = vpop.permute.xlu0 %1373
      %1375 = vrot.lane.b32.xlu0 %v500, 28
      %v1376 = vpop.permute.xlu0 %1375
      %1377 = vrot.lane.b32.xlu0 %v501, 28
      %v1378 = vpop.permute.xlu0 %1377
      %1379 = vrot.lane.b32.xlu0 %v502, 28
      %v1380 = vpop.permute.xlu0 %1379
      %1381 = vrot.lane.b32.xlu0 %v503, 28
      %v1382 = vpop.permute.xlu0 %1381
      %1383 = vrot.lane.b32.xlu0 %v504, 28
      %v1384 = vpop.permute.xlu0 %1383
      %1385 = vrot.lane.b32.xlu0 %v505, 28
      %v1386 = vpop.permute.xlu0 %1385
      %1387 = vrot.lane.b32.xlu0 %v506, 28
      %v1388 = vpop.permute.xlu0 %1387
      %1389 = vrot.lane.b32.xlu0 %v507, 28
      %v1390 = vpop.permute.xlu0 %1389
      %1391 = vrot.lane.b32.xlu0 %v508, 28
      %v1392 = vpop.permute.xlu0 %1391
      %1393 = vrot.lane.b32.xlu0 %v509, 28
      %v1394 = vpop.permute.xlu0 %1393
      %1395 = vrot.lane.b32.xlu0 %v510, 28
      %v1396 = vpop.permute.xlu0 %1395
      %1397 = vrot.lane.b32.xlu0 %v511, 28
      %v1398 = vpop.permute.xlu0 %1397
      %1399 = vrot.lane.b32.xlu0 %v512, 28
      %v1400 = vpop.permute.xlu0 %1399
      %1401 = vrot.lane.b32.xlu0 %v513, 28
      %v1402 = vpop.permute.xlu0 %1401
      %1403 = vrot.lane.b32.xlu0 %v514, 28
      %v1404 = vpop.permute.xlu0 %1403
      %1405 = vrot.lane.b32.xlu0 %v515, 28
      %v1406 = vpop.permute.xlu0 %1405
      %1407 = vrot.lane.b32.xlu0 %v516, 28
      %v1408 = vpop.permute.xlu0 %1407
      %1409 = vrot.lane.b32.xlu0 %v517, 28
      %v1410 = vpop.permute.xlu0 %1409
      %1411 = vrot.lane.b32.xlu0 %v518, 28
      %v1412 = vpop.permute.xlu0 %1411
      %1413 = vrot.lane.b32.xlu0 %v519, 28
      %v1414 = vpop.permute.xlu0 %1413
      %1415 = vrot.lane.b32.xlu0 %v520, 28
      %v1416 = vpop.permute.xlu0 %1415
      %1481 = vrot.lane.b32.xlu0 %v521, 32
      %v1482 = vpop.permute.xlu0 %1481
      %1483 = vrot.lane.b32.xlu0 %v522, 32
      %v1484 = vpop.permute.xlu0 %1483
      %1485 = vrot.lane.b32.xlu0 %v523, 32
      %v1486 = vpop.permute.xlu0 %1485
      %1487 = vrot.lane.b32.xlu0 %v524, 32
      %v1488 = vpop.permute.xlu0 %1487
      %1489 = vrot.lane.b32.xlu0 %v525, 32
      %v1490 = vpop.permute.xlu0 %1489
      %1491 = vrot.lane.b32.xlu0 %v526, 32
      %v1492 = vpop.permute.xlu0 %1491
      %1493 = vrot.lane.b32.xlu0 %v527, 32
      %v1494 = vpop.permute.xlu0 %1493
      %1495 = vrot.lane.b32.xlu0 %v528, 32
      %v1496 = vpop.permute.xlu0 %1495
      %1497 = vrot.lane.b32.xlu0 %v529, 32
      %v1498 = vpop.permute.xlu0 %1497
      %1499 = vrot.lane.b32.xlu0 %v530, 32
      %v1500 = vpop.permute.xlu0 %1499
      %1501 = vrot.lane.b32.xlu0 %v531, 32
      %v1502 = vpop.permute.xlu0 %1501
      %1503 = vrot.lane.b32.xlu0 %v532, 32
      %v1504 = vpop.permute.xlu0 %1503
      %1505 = vrot.lane.b32.xlu0 %v533, 32
      %v1506 = vpop.permute.xlu0 %1505
      %1507 = vrot.lane.b32.xlu0 %v534, 32
      %v1508 = vpop.permute.xlu0 %1507
      %1509 = vrot.lane.b32.xlu0 %v535, 32
      %v1510 = vpop.permute.xlu0 %1509
      %1511 = vrot.lane.b32.xlu0 %v536, 32
      %v1512 = vpop.permute.xlu0 %1511
      %1513 = vrot.lane.b32.xlu0 %v537, 32
      %v1514 = vpop.permute.xlu0 %1513
      %1515 = vrot.lane.b32.xlu0 %v538, 32
      %v1516 = vpop.permute.xlu0 %1515
      %1517 = vrot.lane.b32.xlu0 %v539, 32
      %v1518 = vpop.permute.xlu0 %1517
      %1519 = vrot.lane.b32.xlu0 %v540, 32
      %v1520 = vpop.permute.xlu0 %1519
      %1521 = vrot.lane.b32.xlu0 %v541, 32
      %v1522 = vpop.permute.xlu0 %1521
      %1523 = vrot.lane.b32.xlu0 %v542, 32
      %v1524 = vpop.permute.xlu0 %1523
      %1525 = vrot.lane.b32.xlu0 %v543, 32
      %v1526 = vpop.permute.xlu0 %1525
      %1527 = vrot.lane.b32.xlu0 %v544, 32
      %v1528 = vpop.permute.xlu0 %1527
      %1529 = vrot.lane.b32.xlu0 %v545, 32
      %v1530 = vpop.permute.xlu0 %1529
      %1531 = vrot.lane.b32.xlu0 %v546, 32
      %v1532 = vpop.permute.xlu0 %1531
      %1533 = vrot.lane.b32.xlu0 %v547, 32
      %v1534 = vpop.permute.xlu0 %1533
      %1535 = vrot.lane.b32.xlu0 %v548, 32
      %v1536 = vpop.permute.xlu0 %1535
      %1537 = vrot.lane.b32.xlu0 %v549, 32
      %v1538 = vpop.permute.xlu0 %1537
      %1539 = vrot.lane.b32.xlu0 %v550, 32
      %v1540 = vpop.permute.xlu0 %1539
      %1541 = vrot.lane.b32.xlu0 %v551, 32
      %v1542 = vpop.permute.xlu0 %1541
      %1543 = vrot.lane.b32.xlu0 %v552, 32
      %v1544 = vpop.permute.xlu0 %1543
      %vm1577 = vcmask 31744
      %v1578 = vsel %vm1577, %v263, %v586
      %v1579 = vsel %vm1577, %v264, %v588
      %v1580 = vsel %vm1577, %v265, %v590
      %v1581 = vsel %vm1577, %v266, %v592
      %v1582 = vsel %vm1577, %v267, %v594
      %v1583 = vsel %vm1577, %v268, %v596
      %v1584 = vsel %vm1577, %v269, %v598
      %v1585 = vsel %vm1577, %v270, %v600
      %v1586 = vsel %vm1577, %v271, %v602
      %v1587 = vsel %vm1577, %v272, %v604
      %v1588 = vsel %vm1577, %v273, %v606
      %v1589 = vsel %vm1577, %v274, %v608
      %v1590 = vsel %vm1577, %v275, %v610
      %v1591 = vsel %vm1577, %v276, %v612
      %v1592 = vsel %vm1577, %v277, %v614
      %v1593 = vsel %vm1577, %v278, %v616
      %v1594 = vsel %vm1577, %v279, %v618
      %v1595 = vsel %vm1577, %v280, %v620
      %v1596 = vsel %vm1577, %v281, %v622
      %v1597 = vsel %vm1577, %v282, %v624
      %v1598 = vsel %vm1577, %v283, %v626
      %v1599 = vsel %vm1577, %v284, %v628
      %v1600 = vsel %vm1577, %v285, %v630
      %v1601 = vsel %vm1577, %v286, %v632
      %v1602 = vsel %vm1577, %v287, %v634
      %v1603 = vsel %vm1577, %v288, %v636
      %v1604 = vsel %vm1577, %v289, %v638
      %v1605 = vsel %vm1577, %v290, %v640
      %v1606 = vsel %vm1577, %v291, %v642
      %v1607 = vsel %vm1577, %v292, %v644
      %v1608 = vsel %vm1577, %v293, %v646
      %v1609 = vsel %vm1577, %v294, %v648
      %vm1610 = vcmask 64512
      %v1611 = vsel %vm1610, %v1578, %v714
      %v1612 = vsel %vm1610, %v1579, %v716
      %v1613 = vsel %vm1610, %v1580, %v718
      %v1614 = vsel %vm1610, %v1581, %v720
      %v1615 = vsel %vm1610, %v1582, %v722
      %v1616 = vsel %vm1610, %v1583, %v724
      %v1617 = vsel %vm1610, %v1584, %v726
      %v1618 = vsel %vm1610, %v1585, %v728
      %v1619 = vsel %vm1610, %v1586, %v730
      %v1620 = vsel %vm1610, %v1587, %v732
      %v1621 = vsel %vm1610, %v1588, %v734
      %v1622 = vsel %vm1610, %v1589, %v736
      %v1623 = vsel %vm1610, %v1590, %v738
      %v1624 = vsel %vm1610, %v1591, %v740
      %v1625 = vsel %vm1610, %v1592, %v742
      %v1626 = vsel %vm1610, %v1593, %v744
      %v1627 = vsel %vm1610, %v1594, %v746
      %v1628 = vsel %vm1610, %v1595, %v748
      %v1629 = vsel %vm1610, %v1596, %v750
      %v1630 = vsel %vm1610, %v1597, %v752
      %v1631 = vsel %vm1610, %v1598, %v754
      %v1632 = vsel %vm1610, %v1599, %v756
      %v1633 = vsel %vm1610, %v1600, %v758
      %v1634 = vsel %vm1610, %v1601, %v760
      %v1635 = vsel %vm1610, %v1602, %v762
      %v1636 = vsel %vm1610, %v1603, %v764
      %v1637 = vsel %vm1610, %v1604, %v766
      %v1638 = vsel %vm1610, %v1605, %v768
      %v1639 = vsel %vm1610, %v1606, %v770
      %v1640 = vsel %vm1610, %v1607, %v772
      %v1641 = vsel %vm1610, %v1608, %v774
      %v1642 = vsel %vm1610, %v1609, %v776
      %vm1643 = vcmask 97280
      %v1644 = vsel %vm1643, %v1611, %v842
      %v1645 = vsel %vm1643, %v1612, %v844
      %v1646 = vsel %vm1643, %v1613, %v846
      %v1647 = vsel %vm1643, %v1614, %v848
      %v1648 = vsel %vm1643, %v1615, %v850
      %v1649 = vsel %vm1643, %v1616, %v852
      %v1650 = vsel %vm1643, %v1617, %v854
      %v1651 = vsel %vm1643, %v1618, %v856
      %v1652 = vsel %vm1643, %v1619, %v858
      %v1653 = vsel %vm1643, %v1620, %v860
      %v1654 = vsel %vm1643, %v1621, %v862
      %v1655 = vsel %vm1643, %v1622, %v864
      %v1656 = vsel %vm1643, %v1623, %v866
      %v1657 = vsel %vm1643, %v1624, %v868
      %v1658 = vsel %vm1643, %v1625, %v870
      %v1659 = vsel %vm1643, %v1626, %v872
      %v1660 = vsel %vm1643, %v1627, %v874
      %v1661 = vsel %vm1643, %v1628, %v876
      %v1662 = vsel %vm1643, %v1629, %v878
      %v1663 = vsel %vm1643, %v1630, %v880
      %v1664 = vsel %vm1643, %v1631, %v882
      %v1665 = vsel %vm1643, %v1632, %v884
      %v1666 = vsel %vm1643, %v1633, %v886
      %v1667 = vsel %vm1643, %v1634, %v888
      %v1668 = vsel %vm1643, %v1635, %v890
      %v1669 = vsel %vm1643, %v1636, %v892
      %v1670 = vsel %vm1643, %v1637, %v894
      %v1671 = vsel %vm1643, %v1638, %v896
      %v1672 = vsel %vm1643, %v1639, %v898
      %v1673 = vsel %vm1643, %v1640, %v900
      %v1674 = vsel %vm1643, %v1641, %v902
      %v1675 = vsel %vm1643, %v1642, %v904
      %vm1676 = vcmask 130048
      %v1677 = vsel %vm1676, %v1644, %v970
      %v1678 = vsel %vm1676, %v1645, %v972
      %v1679 = vsel %vm1676, %v1646, %v974
      %v1680 = vsel %vm1676, %v1647, %v976
      %v1681 = vsel %vm1676, %v1648, %v978
      %v1682 = vsel %vm1676, %v1649, %v980
      %v1683 = vsel %vm1676, %v1650, %v982
      %v1684 = vsel %vm1676, %v1651, %v984
      %v1685 = vsel %vm1676, %v1652, %v986
      %v1686 = vsel %vm1676, %v1653, %v988
      %v1687 = vsel %vm1676, %v1654, %v990
      %v1688 = vsel %vm1676, %v1655, %v992
      %v1689 = vsel %vm1676, %v1656, %v994
      %v1690 = vsel %vm1676, %v1657, %v996
      %v1691 = vsel %vm1676, %v1658, %v998
      %v1692 = vsel %vm1676, %v1659, %v1000
      %v1693 = vsel %vm1676, %v1660, %v1002
      %v1694 = vsel %vm1676, %v1661, %v1004
      %v1695 = vsel %vm1676, %v1662, %v1006
      %v1696 = vsel %vm1676, %v1663, %v1008
      %v1697 = vsel %vm1676, %v1664, %v1010
      %v1698 = vsel %vm1676, %v1665, %v1012
      %v1699 = vsel %vm1676, %v1666, %v1014
      %v1700 = vsel %vm1676, %v1667, %v1016
      %v1701 = vsel %vm1676, %v1668, %v1018
      %v1702 = vsel %vm1676, %v1669, %v1020
      %v1703 = vsel %vm1676, %v1670, %v1022
      %v1704 = vsel %vm1676, %v1671, %v1024
      %v1705 = vsel %vm1676, %v1672, %v1026
      %v1706 = vsel %vm1676, %v1673, %v1028
      %v1707 = vsel %vm1676, %v1674, %v1030
      %v1708 = vsel %vm1676, %v1675, %v1032
      %vm1709 = vcmask 162816
      %v1710 = vsel %vm1709, %v1677, %v1098
      %v1711 = vsel %vm1709, %v1678, %v1100
      %v1712 = vsel %vm1709, %v1679, %v1102
      %v1713 = vsel %vm1709, %v1680, %v1104
      %v1714 = vsel %vm1709, %v1681, %v1106
      %v1715 = vsel %vm1709, %v1682, %v1108
      %v1716 = vsel %vm1709, %v1683, %v1110
      %v1717 = vsel %vm1709, %v1684, %v1112
      %v1718 = vsel %vm1709, %v1685, %v1114
      %v1719 = vsel %vm1709, %v1686, %v1116
      %v1720 = vsel %vm1709, %v1687, %v1118
      %v1721 = vsel %vm1709, %v1688, %v1120
      %v1722 = vsel %vm1709, %v1689, %v1122
      %v1723 = vsel %vm1709, %v1690, %v1124
      %v1724 = vsel %vm1709, %v1691, %v1126
      %v1725 = vsel %vm1709, %v1692, %v1128
      %v1726 = vsel %vm1709, %v1693, %v1130
      %v1727 = vsel %vm1709, %v1694, %v1132
      %v1728 = vsel %vm1709, %v1695, %v1134
      %v1729 = vsel %vm1709, %v1696, %v1136
      %v1730 = vsel %vm1709, %v1697, %v1138
      %v1731 = vsel %vm1709, %v1698, %v1140
      %v1732 = vsel %vm1709, %v1699, %v1142
      %v1733 = vsel %vm1709, %v1700, %v1144
      %v1734 = vsel %vm1709, %v1701, %v1146
      %v1735 = vsel %vm1709, %v1702, %v1148
      %v1736 = vsel %vm1709, %v1703, %v1150
      %v1737 = vsel %vm1709, %v1704, %v1152
      %v1738 = vsel %vm1709, %v1705, %v1154
      %v1739 = vsel %vm1709, %v1706, %v1156
      %v1740 = vsel %vm1709, %v1707, %v1158
      %v1741 = vsel %vm1709, %v1708, %v1160
      %vm1742 = vcmask 195584
      %v1743 = vsel %vm1742, %v1710, %v1226
      %v1744 = vsel %vm1742, %v1711, %v1228
      %v1745 = vsel %vm1742, %v1712, %v1230
      %v1746 = vsel %vm1742, %v1713, %v1232
      %v1747 = vsel %vm1742, %v1714, %v1234
      %v1748 = vsel %vm1742, %v1715, %v1236
      %v1749 = vsel %vm1742, %v1716, %v1238
      %v1750 = vsel %vm1742, %v1717, %v1240
      %v1751 = vsel %vm1742, %v1718, %v1242
      %v1752 = vsel %vm1742, %v1719, %v1244
      %v1753 = vsel %vm1742, %v1720, %v1246
      %v1754 = vsel %vm1742, %v1721, %v1248
      %v1755 = vsel %vm1742, %v1722, %v1250
      %v1756 = vsel %vm1742, %v1723, %v1252
      %v1757 = vsel %vm1742, %v1724, %v1254
      %v1758 = vsel %vm1742, %v1725, %v1256
      %v1759 = vsel %vm1742, %v1726, %v1258
      %v1760 = vsel %vm1742, %v1727, %v1260
      %v1761 = vsel %vm1742, %v1728, %v1262
      %v1762 = vsel %vm1742, %v1729, %v1264
      %v1763 = vsel %vm1742, %v1730, %v1266
      %v1764 = vsel %vm1742, %v1731, %v1268
      %v1765 = vsel %vm1742, %v1732, %v1270
      %v1766 = vsel %vm1742, %v1733, %v1272
      %v1767 = vsel %vm1742, %v1734, %v1274
      %v1768 = vsel %vm1742, %v1735, %v1276
      %v1769 = vsel %vm1742, %v1736, %v1278
      %v1770 = vsel %vm1742, %v1737, %v1280
      %v1771 = vsel %vm1742, %v1738, %v1282
      %v1772 = vsel %vm1742, %v1739, %v1284
      %v1773 = vsel %vm1742, %v1740, %v1286
      %v1774 = vsel %vm1742, %v1741, %v1288
      %vm1775 = vcmask 228352
      %v1776 = vsel %vm1775, %v1743, %v1354
      %v1777 = vsel %vm1775, %v1744, %v1356
      %v1778 = vsel %vm1775, %v1745, %v1358
      %v1779 = vsel %vm1775, %v1746, %v1360
      %v1780 = vsel %vm1775, %v1747, %v1362
      %v1781 = vsel %vm1775, %v1748, %v1364
      %v1782 = vsel %vm1775, %v1749, %v1366
      %v1783 = vsel %vm1775, %v1750, %v1368
      %v1784 = vsel %vm1775, %v1751, %v1370
      %v1785 = vsel %vm1775, %v1752, %v1372
      %v1786 = vsel %vm1775, %v1753, %v1374
      %v1787 = vsel %vm1775, %v1754, %v1376
      %v1788 = vsel %vm1775, %v1755, %v1378
      %v1789 = vsel %vm1775, %v1756, %v1380
      %v1790 = vsel %vm1775, %v1757, %v1382
      %v1791 = vsel %vm1775, %v1758, %v1384
      %v1792 = vsel %vm1775, %v1759, %v1386
      %v1793 = vsel %vm1775, %v1760, %v1388
      %v1794 = vsel %vm1775, %v1761, %v1390
      %v1795 = vsel %vm1775, %v1762, %v1392
      %v1796 = vsel %vm1775, %v1763, %v1394
      %v1797 = vsel %vm1775, %v1764, %v1396
      %v1798 = vsel %vm1775, %v1765, %v1398
      %v1799 = vsel %vm1775, %v1766, %v1400
      %v1800 = vsel %vm1775, %v1767, %v1402
      %v1801 = vsel %vm1775, %v1768, %v1404
      %v1802 = vsel %vm1775, %v1769, %v1406
      %v1803 = vsel %vm1775, %v1770, %v1408
      %v1804 = vsel %vm1775, %v1771, %v1410
      %v1805 = vsel %vm1775, %v1772, %v1412
      %v1806 = vsel %vm1775, %v1773, %v1414
      %v1807 = vsel %vm1775, %v1774, %v1416
      %vm1808 = vcmask 261120
      %v1809 = vsel %vm1808, %v1776, %v1482
      %v1810 = vsel %vm1808, %v1777, %v1484
      %v1811 = vsel %vm1808, %v1778, %v1486
      %v1812 = vsel %vm1808, %v1779, %v1488
      %v1813 = vsel %vm1808, %v1780, %v1490
      %v1814 = vsel %vm1808, %v1781, %v1492
      %v1815 = vsel %vm1808, %v1782, %v1494
      %v1816 = vsel %vm1808, %v1783, %v1496
      %v1817 = vsel %vm1808, %v1784, %v1498
      %v1818 = vsel %vm1808, %v1785, %v1500
      %v1819 = vsel %vm1808, %v1786, %v1502
      %v1820 = vsel %vm1808, %v1787, %v1504
      %v1821 = vsel %vm1808, %v1788, %v1506
      %v1822 = vsel %vm1808, %v1789, %v1508
      %v1823 = vsel %vm1808, %v1790, %v1510
      %v1824 = vsel %vm1808, %v1791, %v1512
      %v1825 = vsel %vm1808, %v1792, %v1514
      %v1826 = vsel %vm1808, %v1793, %v1516
      %v1827 = vsel %vm1808, %v1794, %v1518
      %v1828 = vsel %vm1808, %v1795, %v1520
      %v1829 = vsel %vm1808, %v1796, %v1522
      %v1830 = vsel %vm1808, %v1797, %v1524
      %v1831 = vsel %vm1808, %v1798, %v1526
      %v1832 = vsel %vm1808, %v1799, %v1528
      %v1833 = vsel %vm1808, %v1800, %v1530
      %v1834 = vsel %vm1808, %v1801, %v1532
      %v1835 = vsel %vm1808, %v1802, %v1534
      %v1836 = vsel %vm1808, %v1803, %v1536
      %v1837 = vsel %vm1808, %v1804, %v1538
      %v1838 = vsel %vm1808, %v1805, %v1540
      %v1839 = vsel %vm1808, %v1806, %v1542
      %v1840 = vsel %vm1808, %v1807, %v1544
      %v1841 = vld [vmem:[%s1] sm:$0xff]
      %v1842 = vld [vmem:[%s1 + $0x8] sm:$0xff]
      %v1843 = vld [vmem:[%s1 + $0x10] sm:$0xff]
      %v1844 = vld [vmem:[%s1 + $0x18] sm:$0xff]
      %v1845 = vld [vmem:[%s1 + $0x20] sm:$0xf]
      %vm1846 = vcmask 293888
      %v1848 = vsel %vm1846, %v1809, 0
      %v1851 = vsel %vm1846, %v1810, 0
      %v1854 = vsel %vm1846, %v1811, 0
      %v1857 = vsel %vm1846, %v1812, 0
      %v1860 = vsel %vm1846, %v1813, 0
      %v1863 = vsel %vm1846, %v1814, 0
      %v1866 = vsel %vm1846, %v1815, 0
      %v1869 = vsel %vm1846, %v1816, 0
      %v1872 = vsel %vm1846, %v1817, 0
      %v1875 = vsel %vm1846, %v1818, 0
      %v1878 = vsel %vm1846, %v1819, 0
      %v1881 = vsel %vm1846, %v1820, 0
      %v1884 = vsel %vm1846, %v1821, 0
      %v1887 = vsel %vm1846, %v1822, 0
      %v1890 = vsel %vm1846, %v1823, 0
      %v1893 = vsel %vm1846, %v1824, 0
      %v1896 = vsel %vm1846, %v1825, 0
      %v1899 = vsel %vm1846, %v1826, 0
      %v1902 = vsel %vm1846, %v1827, 0
      %v1905 = vsel %vm1846, %v1828, 0
      %v1908 = vsel %vm1846, %v1829, 0
      %v1911 = vsel %vm1846, %v1830, 0
      %v1914 = vsel %vm1846, %v1831, 0
      %v1917 = vsel %vm1846, %v1832, 0
      %v1920 = vsel %vm1846, %v1833, 0
      %v1923 = vsel %vm1846, %v1834, 0
      %v1926 = vsel %vm1846, %v1835, 0
      %v1929 = vsel %vm1846, %v1836, 0
      %v1932 = vsel %vm1846, %v1837, 0
      %v1935 = vsel %vm1846, %v1838, 0
      %v1938 = vsel %vm1846, %v1839, 0
      %v1941 = vsel %vm1846, %v1840, 0
      %vm1943 = vcmask 1043456
      %v1945 = vsel %vm1943, %v1845, 0
      %1947 = vmatprep.subr.mxu0 0.0
      %1948 = vmatpush1.msra.mxu0 %v1841
      %1949 = vmatprep.subr.mxu0 0.0
      %1950 = vmatpush1.msra.mxu0 %v1842
      %1951 = vmatprep.subr.mxu0 0.0
      %1952 = vmatpush1.msra.mxu0 %v1843
      %1953 = vmatprep.subr.mxu0 0.0
      %1954 = vmatpush1.msra.mxu0 %v1844
      %1955 = vmatprep.subr.mxu0 0.0
      %1956 = vmatpush1.msra.mxu0 %v1945
      %1957 = vmatprep.subr.mxu0 0.0
      %1958 = vmatpush1.msra.mxu0 0.0
      %1959 = vmatprep.subr.mxu0 0.0
      %1960 = vmatpush1.msra.mxu0 0.0
      %1961 = vmatprep.subr.mxu0 0.0
      %1962 = vmatpush1.msra.mxu0 0.0
      %1963 = vmatprep.subr.mxu0 0.0
      %1964 = vmatpush1.msra.mxu0 0.0
      %1965 = vmatprep.subr.mxu0 0.0
      %1966 = vmatpush1.msra.mxu0 0.0
      %1967 = vmatprep.subr.mxu0 0.0
      %1968 = vmatpush1.msra.mxu0 0.0
      %1969 = vmatprep.subr.mxu0 0.0
      %1970 = vmatpush1.msra.mxu0 0.0
      %1971 = vmatprep.subr.mxu0 0.0
      %1972 = vmatpush1.msra.mxu0 0.0
      %1973 = vmatprep.subr.mxu0 0.0
      %1974 = vmatpush1.msra.mxu0 0.0
      %1975 = vmatprep.subr.mxu0 0.0
      %1976 = vmatpush1.msra.mxu0 0.0
      %1977 = vmatprep.subr.mxu0 0.0
      %1978 = vmatpush1.msra.mxu0 0.0
      %1979 = vmatprep.subr.mxu0 0.0
      %1980 = vmatpush1.msra.mxu0 0.0
      %1981 = vmatprep.subr.mxu0 0.0
      %1982 = vmatpush1.msra.mxu0 0.0
      %1983 = vmatprep.subr.mxu0 0.0
      %1984 = vmatpush1.msra.mxu0 0.0
      %1985 = vmatprep.subr.mxu0 0.0
      %1986 = vmatpush1.msra.mxu0 0.0
      %1987 = vmatprep.subr.mxu0 0.0
      %1988 = vmatpush1.msra.mxu0 0.0
      %1989 = vmatprep.subr.mxu0 0.0
      %1990 = vmatpush1.msra.mxu0 0.0
      %1991 = vmatprep.subr.mxu0 0.0
      %1992 = vmatpush1.msra.mxu0 0.0
      %1993 = vmatprep.subr.mxu0 0.0
      %1994 = vmatpush1.msra.mxu0 0.0
      %1995 = vmatprep.subr.mxu0 0.0
      %1996 = vmatpush1.msra.mxu0 0.0
      %1997 = vmatprep.subr.mxu0 0.0
      %1998 = vmatpush1.msra.mxu0 0.0
      %1999 = vmatprep.subr.mxu0 0.0
      %2000 = vmatpush1.msra.mxu0 0.0
      %2001 = vmatprep.subr.mxu0 0.0
      %2002 = vmatpush1.msra.mxu0 0.0
      %2003 = vmatprep.subr.mxu0 0.0
      %2004 = vmatpush1.msra.mxu0 0.0
      %2005 = vmatprep.subr.mxu0 0.0
      %2006 = vmatpush1.msra.mxu0 0.0
      %2007 = vmatprep.subr.mxu0 0.0
      %2008 = vmatpush1.msra.mxu0 0.0
      %2009 = vmatprep.subr.mxu0 0.0
      %2010 = vmatpush1.msra.mxu0 0.0
      %2011 = vmatprep.mubr.f32.mxu0 0.0
      %2012 = vmatmul.mubr.f32.gmra.mrb[0].mxu0 %v1848
      %v2013 = vpop.f32.mrb[0].mxu0
      %v2014 = vadd.f32 0.0, %v2013
      %v2015 = vpop.f32.mrb[0].mxu0
      %2016 = vmatprep.mubr.f32.mxu0 0.0
      %2017 = vmatmul.mubr.f32.gmra.mrb[0].mxu0 %v1851
      %v2018 = vpop.f32.mrb[0].mxu0
      %v2019 = vadd.f32 0.0, %v2018
      %v2020 = vpop.f32.mrb[0].mxu0
      %2021 = vmatprep.mubr.f32.mxu0 0.0
      %2022 = vmatmul.mubr.f32.gmra.mrb[0].mxu0 %v1854
      %v2023 = vpop.f32.mrb[0].mxu0
      %v2024 = vadd.f32 0.0, %v2023
      %v2025 = vpop.f32.mrb[0].mxu0
      %2026 = vmatprep.mubr.f32.mxu0 0.0
      %2027 = vmatmul.mubr.f32.gmra.mrb[0].mxu0 %v1857
      %v2028 = vpop.f32.mrb[0].mxu0
      %v2029 = vadd.f32 0.0, %v2028
      %v2030 = vpop.f32.mrb[0].mxu0
      %2031 = vmatprep.mubr.f32.mxu0 0.0
      %2032 = vmatmul.mubr.f32.gmra.mrb[0].mxu0 %v1860
      %v2033 = vpop.f32.mrb[0].mxu0
      %v2034 = vadd.f32 0.0, %v2033
      %v2035 = vpop.f32.mrb[0].mxu0
      %2036 = vmatprep.mubr.f32.mxu0 0.0
      %2037 = vmatmul.mubr.f32.gmra.mrb[0].mxu0 %v1863
      %v2038 = vpop.f32.mrb[0].mxu0
      %v2039 = vadd.f32 0.0, %v2038
      %v2040 = vpop.f32.mrb[0].mxu0
      %2041 = vmatprep.mubr.f32.mxu0 0.0
      %2042 = vmatmul.mubr.f32.gmra.mrb[0].mxu0 %v1866
      %v2043 = vpop.f32.mrb[0].mxu0
      %v2044 = vadd.f32 0.0, %v2043
      %v2045 = vpop.f32.mrb[0].mxu0
      %2046 = vmatprep.mubr.f32.mxu0 0.0
      %2047 = vmatmul.mubr.f32.gmra.mrb[0].mxu0 %v1869
      %v2048 = vpop.f32.mrb[0].mxu0
      %v2049 = vadd.f32 0.0, %v2048
      %v2050 = vpop.f32.mrb[0].mxu0
      %2051 = vmatprep.mubr.f32.mxu0 0.0
      %2052 = vmatmul.mubr.f32.gmra.mrb[0].mxu0 %v1872
      %v2053 = vpop.f32.mrb[0].mxu0
      %v2054 = vadd.f32 0.0, %v2053
      %v2055 = vpop.f32.mrb[0].mxu0
      %2056 = vmatprep.mubr.f32.mxu0 0.0
      %2057 = vmatmul.mubr.f32.gmra.mrb[0].mxu0 %v1875
      %v2058 = vpop.f32.mrb[0].mxu0
      %v2059 = vadd.f32 0.0, %v2058
      %v2060 = vpop.f32.mrb[0].mxu0
      %2061 = vmatprep.mubr.f32.mxu0 0.0
      %2062 = vmatmul.mubr.f32.gmra.mrb[0].mxu0 %v1878
      %v2063 = vpop.f32.mrb[0].mxu0
      %v2064 = vadd.f32 0.0, %v2063
      %v2065 = vpop.f32.mrb[0].mxu0
      %2066 = vmatprep.mubr.f32.mxu0 0.0
      %2067 = vmatmul.mubr.f32.gmra.mrb[0].mxu0 %v1881
      %v2068 = vpop.f32.mrb[0].mxu0
      %v2069 = vadd.f32 0.0, %v2068
      %v2070 = vpop.f32.mrb[0].mxu0
      %2071 = vmatprep.mubr.f32.mxu0 0.0
      %2072 = vmatmul.mubr.f32.gmra.mrb[0].mxu0 %v1884
      %v2073 = vpop.f32.mrb[0].mxu0
      %v2074 = vadd.f32 0.0, %v2073
      %v2075 = vpop.f32.mrb[0].mxu0
      %2076 = vmatprep.mubr.f32.mxu0 0.0
      %2077 = vmatmul.mubr.f32.gmra.mrb[0].mxu0 %v1887
      %v2078 = vpop.f32.mrb[0].mxu0
      %v2079 = vadd.f32 0.0, %v2078
      %v2080 = vpop.f32.mrb[0].mxu0
      %2081 = vmatprep.mubr.f32.mxu0 0.0
      %2082 = vmatmul.mubr.f32.gmra.mrb[0].mxu0 %v1890
      %v2083 = vpop.f32.mrb[0].mxu0
      %v2084 = vadd.f32 0.0, %v2083
      %v2085 = vpop.f32.mrb[0].mxu0
      %2086 = vmatprep.mubr.f32.mxu0 0.0
      %2087 = vmatmul.mubr.f32.gmra.mrb[0].mxu0 %v1893
      %v2088 = vpop.f32.mrb[0].mxu0
      %v2089 = vadd.f32 0.0, %v2088
      %v2090 = vpop.f32.mrb[0].mxu0
      %2091 = vmatprep.mubr.f32.mxu0 0.0
      %2092 = vmatmul.mubr.f32.gmra.mrb[0].mxu0 %v1896
      %v2093 = vpop.f32.mrb[0].mxu0
      %v2094 = vadd.f32 0.0, %v2093
      %v2095 = vpop.f32.mrb[0].mxu0
      %2096 = vmatprep.mubr.f32.mxu0 0.0
      %2097 = vmatmul.mubr.f32.gmra.mrb[0].mxu0 %v1899
      %v2098 = vpop.f32.mrb[0].mxu0
      %v2099 = vadd.f32 0.0, %v2098
      %v2100 = vpop.f32.mrb[0].mxu0
      %2101 = vmatprep.mubr.f32.mxu0 0.0
      %2102 = vmatmul.mubr.f32.gmra.mrb[0].mxu0 %v1902
      %v2103 = vpop.f32.mrb[0].mxu0
      %v2104 = vadd.f32 0.0, %v2103
      %v2105 = vpop.f32.mrb[0].mxu0
      %2106 = vmatprep.mubr.f32.mxu0 0.0
      %2107 = vmatmul.mubr.f32.gmra.mrb[0].mxu0 %v1905
      %v2108 = vpop.f32.mrb[0].mxu0
      %v2109 = vadd.f32 0.0, %v2108
      %v2110 = vpop.f32.mrb[0].mxu0
      %2111 = vmatprep.mubr.f32.mxu0 0.0
      %2112 = vmatmul.mubr.f32.gmra.mrb[0].mxu0 %v1908
      %v2113 = vpop.f32.mrb[0].mxu0
      %v2114 = vadd.f32 0.0, %v2113
      %v2115 = vpop.f32.mrb[0].mxu0
      %2116 = vmatprep.mubr.f32.mxu0 0.0
      %2117 = vmatmul.mubr.f32.gmra.mrb[0].mxu0 %v1911
      %v2118 = vpop.f32.mrb[0].mxu0
      %v2119 = vadd.f32 0.0, %v2118
      %v2120 = vpop.f32.mrb[0].mxu0
      %2121 = vmatprep.mubr.f32.mxu0 0.0
      %2122 = vmatmul.mubr.f32.gmra.mrb[0].mxu0 %v1914
      %v2123 = vpop.f32.mrb[0].mxu0
      %v2124 = vadd.f32 0.0, %v2123
      %v2125 = vpop.f32.mrb[0].mxu0
      %2126 = vmatprep.mubr.f32.mxu0 0.0
      %2127 = vmatmul.mubr.f32.gmra.mrb[0].mxu0 %v1917
      %v2128 = vpop.f32.mrb[0].mxu0
      %v2129 = vadd.f32 0.0, %v2128
      %v2130 = vpop.f32.mrb[0].mxu0
      %2131 = vmatprep.mubr.f32.mxu0 0.0
      %2132 = vmatmul.mubr.f32.gmra.mrb[0].mxu0 %v1920
      %v2133 = vpop.f32.mrb[0].mxu0
      %v2134 = vadd.f32 0.0, %v2133
      %v2135 = vpop.f32.mrb[0].mxu0
      %2136 = vmatprep.mubr.f32.mxu0 0.0
      %2137 = vmatmul.mubr.f32.gmra.mrb[0].mxu0 %v1923
      %v2138 = vpop.f32.mrb[0].mxu0
      %v2139 = vadd.f32 0.0, %v2138
      %v2140 = vpop.f32.mrb[0].mxu0
      %2141 = vmatprep.mubr.f32.mxu0 0.0
      %2142 = vmatmul.mubr.f32.gmra.mrb[0].mxu0 %v1926
      %v2143 = vpop.f32.mrb[0].mxu0
      %v2144 = vadd.f32 0.0, %v2143
      %v2145 = vpop.f32.mrb[0].mxu0
      %2146 = vmatprep.mubr.f32.mxu0 0.0
      %2147 = vmatmul.mubr.f32.gmra.mrb[0].mxu0 %v1929
      %v2148 = vpop.f32.mrb[0].mxu0
      %v2149 = vadd.f32 0.0, %v2148
      %v2150 = vpop.f32.mrb[0].mxu0
      %2151 = vmatprep.mubr.f32.mxu0 0.0
      %2152 = vmatmul.mubr.f32.gmra.mrb[0].mxu0 %v1932
      %v2153 = vpop.f32.mrb[0].mxu0
      %v2154 = vadd.f32 0.0, %v2153
      %v2155 = vpop.f32.mrb[0].mxu0
      %2156 = vmatprep.mubr.f32.mxu0 0.0
      %2157 = vmatmul.mubr.f32.gmra.mrb[0].mxu0 %v1935
      %v2158 = vpop.f32.mrb[0].mxu0
      %v2159 = vadd.f32 0.0, %v2158
      %v2160 = vpop.f32.mrb[0].mxu0
      %2161 = vmatprep.mubr.f32.mxu0 0.0
      %2162 = vmatmul.mubr.f32.gmra.mrb[0].mxu0 %v1938
      %v2163 = vpop.f32.mrb[0].mxu0
      %v2164 = vadd.f32 0.0, %v2163
      %v2165 = vpop.f32.mrb[0].mxu0
      %2166 = vmatprep.mubr.f32.mxu0 0.0
      %2167 = vmatmul.mubr.f32.gmra.mrb[0].mxu0 %v1941
      %v2168 = vpop.f32.mrb[0].mxu0
      %v2169 = vadd.f32 0.0, %v2168
      %v2170 = vpop.f32.mrb[0].mxu0
      %2171 = vdwg.mxu0
      %2172 = vst.msk [vmem:[%s258] sm:$0xff] %vm1610, %v2014
      %2173 = vst.msk [vmem:[%s258 + $0x8] sm:$0xff] %vm1610, %v2019
      %2174 = vst.msk [vmem:[%s258 + $0x10] sm:$0xff] %vm1610, %v2024
      %2175 = vst.msk [vmem:[%s258 + $0x18] sm:$0xff] %vm1610, %v2029
      %2176 = vst.msk [vmem:[%s258 + $0x20] sm:$0xff] %vm1610, %v2034
      %2177 = vst.msk [vmem:[%s258 + $0x28] sm:$0xff] %vm1610, %v2039
      %2178 = vst.msk [vmem:[%s258 + $0x30] sm:$0xff] %vm1610, %v2044
      %2179 = vst.msk [vmem:[%s258 + $0x38] sm:$0xff] %vm1610, %v2049
      %2180 = vst.msk [vmem:[%s258 + $0x40] sm:$0xff] %vm1610, %v2054
      %2181 = vst.msk [vmem:[%s258 + $0x48] sm:$0xff] %vm1610, %v2059
      %2182 = vst.msk [vmem:[%s258 + $0x50] sm:$0xff] %vm1610, %v2064
      %2183 = vst.msk [vmem:[%s258 + $0x58] sm:$0xff] %vm1610, %v2069
      %2184 = vst.msk [vmem:[%s258 + $0x60] sm:$0xff] %vm1610, %v2074
      %2185 = vst.msk [vmem:[%s258 + $0x68] sm:$0xff] %vm1610, %v2079
      %2186 = vst.msk [vmem:[%s258 + $0x70] sm:$0xff] %vm1610, %v2084
      %2187 = vst.msk [vmem:[%s258 + $0x78] sm:$0xff] %vm1610, %v2089
      %2188 = vst.msk [vmem:[%s258 + $0x80] sm:$0xff] %vm1610, %v2094
      %2189 = vst.msk [vmem:[%s258 + $0x88] sm:$0xff] %vm1610, %v2099
      %2190 = vst.msk [vmem:[%s258 + $0x90] sm:$0xff] %vm1610, %v2104
      %2191 = vst.msk [vmem:[%s258 + $0x98] sm:$0xff] %vm1610, %v2109
      %2192 = vst.msk [vmem:[%s258 + $0xa0] sm:$0xff] %vm1610, %v2114
      %2193 = vst.msk [vmem:[%s258 + $0xa8] sm:$0xff] %vm1610, %v2119
      %2194 = vst.msk [vmem:[%s258 + $0xb0] sm:$0xff] %vm1610, %v2124
      %2195 = vst.msk [vmem:[%s258 + $0xb8] sm:$0xff] %vm1610, %v2129
      %2196 = vst.msk [vmem:[%s258 + $0xc0] sm:$0xff] %vm1610, %v2134
      %2197 = vst.msk [vmem:[%s258 + $0xc8] sm:$0xff] %vm1610, %v2139
      %2198 = vst.msk [vmem:[%s258 + $0xd0] sm:$0xff] %vm1610, %v2144
      %2199 = vst.msk [vmem:[%s258 + $0xd8] sm:$0xff] %vm1610, %v2149
      %2200 = vst.msk [vmem:[%s258 + $0xe0] sm:$0xff] %vm1610, %v2154
      %2201 = vst.msk [vmem:[%s258 + $0xe8] sm:$0xff] %vm1610, %v2159
      %2202 = vst.msk [vmem:[%s258 + $0xf0] sm:$0xff] %vm1610, %v2164
      %2203 = vst.msk [vmem:[%s258 + $0xf8] sm:$0xff] %vm1610, %v2169
      %v2204 = vsel %vm1610, %v2014, 0.0
      %v2205 = vsel %vm1610, %v2019, 0.0
      %v2206 = vadd.f32 %v2204, %v2205
      %v2207 = vsel %vm1610, %v2024, 0.0
      %v2208 = vadd.f32 %v2206, %v2207
      %v2209 = vsel %vm1610, %v2029, 0.0
      %v2210 = vadd.f32 %v2208, %v2209
      %v2211 = vsel %vm1610, %v2034, 0.0
      %v2212 = vadd.f32 %v2210, %v2211
      %v2213 = vsel %vm1610, %v2039, 0.0
      %v2214 = vadd.f32 %v2212, %v2213
      %v2215 = vsel %vm1610, %v2044, 0.0
      %v2216 = vadd.f32 %v2214, %v2215
      %v2217 = vsel %vm1610, %v2049, 0.0
      %v2218 = vadd.f32 %v2216, %v2217
      %v2219 = vsel %vm1610, %v2054, 0.0
      %v2220 = vadd.f32 %v2218, %v2219
      %v2221 = vsel %vm1610, %v2059, 0.0
      %v2222 = vadd.f32 %v2220, %v2221
      %v2223 = vsel %vm1610, %v2064, 0.0
      %v2224 = vadd.f32 %v2222, %v2223
      %v2225 = vsel %vm1610, %v2069, 0.0
      %v2226 = vadd.f32 %v2224, %v2225
      %v2227 = vsel %vm1610, %v2074, 0.0
      %v2228 = vadd.f32 %v2226, %v2227
      %v2229 = vsel %vm1610, %v2079, 0.0
      %v2230 = vadd.f32 %v2228, %v2229
      %v2231 = vsel %vm1610, %v2084, 0.0
      %v2232 = vadd.f32 %v2230, %v2231
      %v2233 = vsel %vm1610, %v2089, 0.0
      %v2234 = vadd.f32 %v2232, %v2233
      %v2235 = vsel %vm1610, %v2094, 0.0
      %v2236 = vadd.f32 %v2234, %v2235
      %v2237 = vsel %vm1610, %v2099, 0.0
      %v2238 = vadd.f32 %v2236, %v2237
      %v2239 = vsel %vm1610, %v2104, 0.0
      %v2240 = vadd.f32 %v2238, %v2239
      %v2241 = vsel %vm1610, %v2109, 0.0
      %v2242 = vadd.f32 %v2240, %v2241
      %v2243 = vsel %vm1610, %v2114, 0.0
      %v2244 = vadd.f32 %v2242, %v2243
      %v2245 = vsel %vm1610, %v2119, 0.0
      %v2246 = vadd.f32 %v2244, %v2245
      %v2247 = vsel %vm1610, %v2124, 0.0
      %v2248 = vadd.f32 %v2246, %v2247
      %v2249 = vsel %vm1610, %v2129, 0.0
      %v2250 = vadd.f32 %v2248, %v2249
      %v2251 = vsel %vm1610, %v2134, 0.0
      %v2252 = vadd.f32 %v2250, %v2251
      %v2253 = vsel %vm1610, %v2139, 0.0
      %v2254 = vadd.f32 %v2252, %v2253
      %v2255 = vsel %vm1610, %v2144, 0.0
      %v2256 = vadd.f32 %v2254, %v2255
      %v2257 = vsel %vm1610, %v2149, 0.0
      %v2258 = vadd.f32 %v2256, %v2257
      %v2259 = vsel %vm1610, %v2154, 0.0
      %v2260 = vadd.f32 %v2258, %v2259
      %v2261 = vsel %vm1610, %v2159, 0.0
      %v2262 = vadd.f32 %v2260, %v2261
      %v2263 = vsel %vm1610, %v2164, 0.0
      %v2264 = vadd.f32 %v2262, %v2263
      %v2265 = vsel %vm1610, %v2169, 0.0
      %v2266 = vadd.f32 %v2264, %v2265
      %v2267 = vrot.slane %v2266, 4
      %v2268 = vadd.f32 %v2266, %v2267
      %v2269 = vrot.slane %v2268, 2
      %v2270 = vadd.f32 %v2268, %v2269
      %v2271 = vrot.slane %v2270, 1
      %v2272 = vadd.f32 %v2270, %v2271
      %v2273 = vadd.f32 %v2272, 0.0
      %v2274 = vmul.f32 %v2014, %v2014
      %v2275 = vmul.f32 %v2019, %v2019
      %v2276 = vmul.f32 %v2024, %v2024
      %v2277 = vmul.f32 %v2029, %v2029
      %v2278 = vmul.f32 %v2034, %v2034
      %v2279 = vmul.f32 %v2039, %v2039
      %v2280 = vmul.f32 %v2044, %v2044
      %v2281 = vmul.f32 %v2049, %v2049
      %v2282 = vmul.f32 %v2054, %v2054
      %v2283 = vmul.f32 %v2059, %v2059
      %v2284 = vmul.f32 %v2064, %v2064
      %v2285 = vmul.f32 %v2069, %v2069
      %v2286 = vmul.f32 %v2074, %v2074
      %v2287 = vmul.f32 %v2079, %v2079
      %v2288 = vmul.f32 %v2084, %v2084
      %v2289 = vmul.f32 %v2089, %v2089
      %v2290 = vmul.f32 %v2094, %v2094
      %v2291 = vmul.f32 %v2099, %v2099
      %v2292 = vmul.f32 %v2104, %v2104
      %v2293 = vmul.f32 %v2109, %v2109
      %v2294 = vmul.f32 %v2114, %v2114
      %v2295 = vmul.f32 %v2119, %v2119
      %v2296 = vmul.f32 %v2124, %v2124
      %v2297 = vmul.f32 %v2129, %v2129
      %v2298 = vmul.f32 %v2134, %v2134
      %v2299 = vmul.f32 %v2139, %v2139
      %v2300 = vmul.f32 %v2144, %v2144
      %v2301 = vmul.f32 %v2149, %v2149
      %v2302 = vmul.f32 %v2154, %v2154
      %v2303 = vmul.f32 %v2159, %v2159
      %v2304 = vmul.f32 %v2164, %v2164
      %v2305 = vmul.f32 %v2169, %v2169
      %v2306 = vsel %vm1610, %v2274, 0.0
      %v2307 = vsel %vm1610, %v2275, 0.0
      %v2308 = vadd.f32 %v2306, %v2307
      %v2309 = vsel %vm1610, %v2276, 0.0
      %v2310 = vadd.f32 %v2308, %v2309
      %v2311 = vsel %vm1610, %v2277, 0.0
      %v2312 = vadd.f32 %v2310, %v2311
      %v2313 = vsel %vm1610, %v2278, 0.0
      %v2314 = vadd.f32 %v2312, %v2313
      %v2315 = vsel %vm1610, %v2279, 0.0
      %v2316 = vadd.f32 %v2314, %v2315
      %v2317 = vsel %vm1610, %v2280, 0.0
      %v2318 = vadd.f32 %v2316, %v2317
      %v2319 = vsel %vm1610, %v2281, 0.0
      %v2320 = vadd.f32 %v2318, %v2319
      %v2321 = vsel %vm1610, %v2282, 0.0
      %v2322 = vadd.f32 %v2320, %v2321
      %v2323 = vsel %vm1610, %v2283, 0.0
      %v2324 = vadd.f32 %v2322, %v2323
      %v2325 = vsel %vm1610, %v2284, 0.0
      %v2326 = vadd.f32 %v2324, %v2325
      %v2327 = vsel %vm1610, %v2285, 0.0
      %v2328 = vadd.f32 %v2326, %v2327
      %v2329 = vsel %vm1610, %v2286, 0.0
      %v2330 = vadd.f32 %v2328, %v2329
      %v2331 = vsel %vm1610, %v2287, 0.0
      %v2332 = vadd.f32 %v2330, %v2331
      %v2333 = vsel %vm1610, %v2288, 0.0
      %v2334 = vadd.f32 %v2332, %v2333
      %v2335 = vsel %vm1610, %v2289, 0.0
      %v2336 = vadd.f32 %v2334, %v2335
      %v2337 = vsel %vm1610, %v2290, 0.0
      %v2338 = vadd.f32 %v2336, %v2337
      %v2339 = vsel %vm1610, %v2291, 0.0
      %v2340 = vadd.f32 %v2338, %v2339
      %v2341 = vsel %vm1610, %v2292, 0.0
      %v2342 = vadd.f32 %v2340, %v2341
      %v2343 = vsel %vm1610, %v2293, 0.0
      %v2344 = vadd.f32 %v2342, %v2343
      %v2345 = vsel %vm1610, %v2294, 0.0
      %v2346 = vadd.f32 %v2344, %v2345
      %v2347 = vsel %vm1610, %v2295, 0.0
      %v2348 = vadd.f32 %v2346, %v2347
      %v2349 = vsel %vm1610, %v2296, 0.0
      %v2350 = vadd.f32 %v2348, %v2349
      %v2351 = vsel %vm1610, %v2297, 0.0
      %v2352 = vadd.f32 %v2350, %v2351
      %v2353 = vsel %vm1610, %v2298, 0.0
      %v2354 = vadd.f32 %v2352, %v2353
      %v2355 = vsel %vm1610, %v2299, 0.0
      %v2356 = vadd.f32 %v2354, %v2355
      %v2357 = vsel %vm1610, %v2300, 0.0
      %v2358 = vadd.f32 %v2356, %v2357
      %v2359 = vsel %vm1610, %v2301, 0.0
      %v2360 = vadd.f32 %v2358, %v2359
      %v2361 = vsel %vm1610, %v2302, 0.0
      %v2362 = vadd.f32 %v2360, %v2361
      %v2363 = vsel %vm1610, %v2303, 0.0
      %v2364 = vadd.f32 %v2362, %v2363
      %v2365 = vsel %vm1610, %v2304, 0.0
      %v2366 = vadd.f32 %v2364, %v2365
      %v2367 = vsel %vm1610, %v2305, 0.0
      %v2368 = vadd.f32 %v2366, %v2367
      %v2369 = vrot.slane %v2368, 4
      %v2370 = vadd.f32 %v2368, %v2369
      %v2371 = vrot.slane %v2370, 2
      %v2372 = vadd.f32 %v2370, %v2371
      %v2373 = vrot.slane %v2372, 1
      %v2374 = vadd.f32 %v2372, %v2373
      %v2375 = vadd.f32 %v2374, 0.0
      %v2376 = vld [vmem:[%s253 + $0x1] sm:$0xff]
      %v2377 = vld [vmem:[%s253 + $0x9] sm:$0xff]
      %v2378 = vld [vmem:[%s253 + $0x19] sm:$0xff]
      %v2379 = vld [vmem:[%s253 + $0x21] sm:$0xff]
      %v2380 = vld [vmem:[%s253 + $0x31] sm:$0xff]
      %v2381 = vld [vmem:[%s253 + $0x39] sm:$0xff]
      %v2382 = vld [vmem:[%s253 + $0x49] sm:$0xff]
      %v2383 = vld [vmem:[%s253 + $0x51] sm:$0xff]
      %v2384 = vld [vmem:[%s253 + $0x61] sm:$0xff]
      %v2385 = vld [vmem:[%s253 + $0x69] sm:$0xff]
      %v2386 = vld [vmem:[%s253 + $0x79] sm:$0xff]
      %v2387 = vld [vmem:[%s253 + $0x81] sm:$0xff]
      %v2388 = vld [vmem:[%s253 + $0x91] sm:$0xff]
      %v2389 = vld [vmem:[%s253 + $0x99] sm:$0xff]
      %v2390 = vld [vmem:[%s253 + $0xa9] sm:$0xff]
      %v2391 = vld [vmem:[%s253 + $0xb1] sm:$0xff]
      %v2392 = vld [vmem:[%s253 + $0xc1] sm:$0xff]
      %v2393 = vld [vmem:[%s253 + $0xc9] sm:$0xff]
      %v2394 = vld [vmem:[%s253 + $0xd9] sm:$0xff]
      %v2395 = vld [vmem:[%s253 + $0xe1] sm:$0xff]
      %v2396 = vld [vmem:[%s253 + $0xf1] sm:$0xff]
      %v2397 = vld [vmem:[%s253 + $0xf9] sm:$0xff]
      %v2398 = vld [vmem:[%s253 + $0x109] sm:$0xff]
      %v2399 = vld [vmem:[%s253 + $0x111] sm:$0xff]
      %v2400 = vld [vmem:[%s253 + $0x121] sm:$0xff]
      %v2401 = vld [vmem:[%s253 + $0x129] sm:$0xff]
      %v2402 = vld [vmem:[%s253 + $0x139] sm:$0xff]
      %v2403 = vld [vmem:[%s253 + $0x141] sm:$0xff]
      %v2404 = vld [vmem:[%s253 + $0x151] sm:$0xff]
      %v2405 = vld [vmem:[%s253 + $0x159] sm:$0xff]
      %v2406 = vld [vmem:[%s253 + $0x169] sm:$0xff]
      %v2407 = vld [vmem:[%s253 + $0x171] sm:$0xff]
      %v2408 = vld [vmem:[%s253 + $0x2] sm:$0xff]
      %v2409 = vld [vmem:[%s253 + $0xa] sm:$0xff]
      %v2410 = vld [vmem:[%s253 + $0x1a] sm:$0xff]
      %v2411 = vld [vmem:[%s253 + $0x22] sm:$0xff]
      %v2412 = vld [vmem:[%s253 + $0x32] sm:$0xff]
      %v2413 = vld [vmem:[%s253 + $0x3a] sm:$0xff]
      %v2414 = vld [vmem:[%s253 + $0x4a] sm:$0xff]
      %v2415 = vld [vmem:[%s253 + $0x52] sm:$0xff]
      %v2416 = vld [vmem:[%s253 + $0x62] sm:$0xff]
      %v2417 = vld [vmem:[%s253 + $0x6a] sm:$0xff]
      %v2418 = vld [vmem:[%s253 + $0x7a] sm:$0xff]
      %v2419 = vld [vmem:[%s253 + $0x82] sm:$0xff]
      %v2420 = vld [vmem:[%s253 + $0x92] sm:$0xff]
      %v2421 = vld [vmem:[%s253 + $0x9a] sm:$0xff]
      %v2422 = vld [vmem:[%s253 + $0xaa] sm:$0xff]
      %v2423 = vld [vmem:[%s253 + $0xb2] sm:$0xff]
      %v2424 = vld [vmem:[%s253 + $0xc2] sm:$0xff]
      %v2425 = vld [vmem:[%s253 + $0xca] sm:$0xff]
      %v2426 = vld [vmem:[%s253 + $0xda] sm:$0xff]
      %v2427 = vld [vmem:[%s253 + $0xe2] sm:$0xff]
      %v2428 = vld [vmem:[%s253 + $0xf2] sm:$0xff]
      %v2429 = vld [vmem:[%s253 + $0xfa] sm:$0xff]
      %v2430 = vld [vmem:[%s253 + $0x10a] sm:$0xff]
      %v2431 = vld [vmem:[%s253 + $0x112] sm:$0xff]
      %v2432 = vld [vmem:[%s253 + $0x122] sm:$0xff]
      %v2433 = vld [vmem:[%s253 + $0x12a] sm:$0xff]
      %v2434 = vld [vmem:[%s253 + $0x13a] sm:$0xff]
      %v2435 = vld [vmem:[%s253 + $0x142] sm:$0xff]
      %v2436 = vld [vmem:[%s253 + $0x152] sm:$0xff]
      %v2437 = vld [vmem:[%s253 + $0x15a] sm:$0xff]
      %v2438 = vld [vmem:[%s253 + $0x16a] sm:$0xff]
      %v2439 = vld [vmem:[%s253 + $0x172] sm:$0xff]
      %v2440 = vld [vmem:[%s359 + $0x1] sm:$0xff]
      %v2441 = vld [vmem:[%s359 + $0x9] sm:$0xff]
      %v2442 = vld [vmem:[%s359 + $0x19] sm:$0xff]
      %v2443 = vld [vmem:[%s359 + $0x21] sm:$0xff]
      %v2444 = vld [vmem:[%s359 + $0x31] sm:$0xff]
      %v2445 = vld [vmem:[%s359 + $0x39] sm:$0xff]
      %v2446 = vld [vmem:[%s359 + $0x49] sm:$0xff]
      %v2447 = vld [vmem:[%s359 + $0x51] sm:$0xff]
      %v2448 = vld [vmem:[%s359 + $0x61] sm:$0xff]
      %v2449 = vld [vmem:[%s359 + $0x69] sm:$0xff]
      %v2450 = vld [vmem:[%s359 + $0x79] sm:$0xff]
      %v2451 = vld [vmem:[%s359 + $0x81] sm:$0xff]
      %v2452 = vld [vmem:[%s359 + $0x91] sm:$0xff]
      %v2453 = vld [vmem:[%s359 + $0x99] sm:$0xff]
      %v2454 = vld [vmem:[%s359 + $0xa9] sm:$0xff]
      %v2455 = vld [vmem:[%s359 + $0xb1] sm:$0xff]
      %v2456 = vld [vmem:[%s359 + $0xc1] sm:$0xff]
      %v2457 = vld [vmem:[%s359 + $0xc9] sm:$0xff]
      %v2458 = vld [vmem:[%s359 + $0xd9] sm:$0xff]
      %v2459 = vld [vmem:[%s359 + $0xe1] sm:$0xff]
      %v2460 = vld [vmem:[%s359 + $0xf1] sm:$0xff]
      %v2461 = vld [vmem:[%s359 + $0xf9] sm:$0xff]
      %v2462 = vld [vmem:[%s359 + $0x109] sm:$0xff]
      %v2463 = vld [vmem:[%s359 + $0x111] sm:$0xff]
      %v2464 = vld [vmem:[%s359 + $0x121] sm:$0xff]
      %v2465 = vld [vmem:[%s359 + $0x129] sm:$0xff]
      %v2466 = vld [vmem:[%s359 + $0x139] sm:$0xff]
      %v2467 = vld [vmem:[%s359 + $0x141] sm:$0xff]
      %v2468 = vld [vmem:[%s359 + $0x151] sm:$0xff]
      %v2469 = vld [vmem:[%s359 + $0x159] sm:$0xff]
      %v2470 = vld [vmem:[%s359 + $0x169] sm:$0xff]
      %v2471 = vld [vmem:[%s359 + $0x171] sm:$0xff]
      %v2472 = vld [vmem:[%s359 + $0x2] sm:$0xff]
      %v2473 = vld [vmem:[%s359 + $0xa] sm:$0xff]
      %v2474 = vld [vmem:[%s359 + $0x1a] sm:$0xff]
      %v2475 = vld [vmem:[%s359 + $0x22] sm:$0xff]
      %v2476 = vld [vmem:[%s359 + $0x32] sm:$0xff]
      %v2477 = vld [vmem:[%s359 + $0x3a] sm:$0xff]
      %v2478 = vld [vmem:[%s359 + $0x4a] sm:$0xff]
      %v2479 = vld [vmem:[%s359 + $0x52] sm:$0xff]
      %v2480 = vld [vmem:[%s359 + $0x62] sm:$0xff]
      %v2481 = vld [vmem:[%s359 + $0x6a] sm:$0xff]
      %v2482 = vld [vmem:[%s359 + $0x7a] sm:$0xff]
      %v2483 = vld [vmem:[%s359 + $0x82] sm:$0xff]
      %v2484 = vld [vmem:[%s359 + $0x92] sm:$0xff]
      %v2485 = vld [vmem:[%s359 + $0x9a] sm:$0xff]
      %v2486 = vld [vmem:[%s359 + $0xaa] sm:$0xff]
      %v2487 = vld [vmem:[%s359 + $0xb2] sm:$0xff]
      %v2488 = vld [vmem:[%s359 + $0xc2] sm:$0xff]
      %v2489 = vld [vmem:[%s359 + $0xca] sm:$0xff]
      %v2490 = vld [vmem:[%s359 + $0xda] sm:$0xff]
      %v2491 = vld [vmem:[%s359 + $0xe2] sm:$0xff]
      %v2492 = vld [vmem:[%s359 + $0xf2] sm:$0xff]
      %v2493 = vld [vmem:[%s359 + $0xfa] sm:$0xff]
      %v2494 = vld [vmem:[%s359 + $0x10a] sm:$0xff]
      %v2495 = vld [vmem:[%s359 + $0x112] sm:$0xff]
      %v2496 = vld [vmem:[%s359 + $0x122] sm:$0xff]
      %v2497 = vld [vmem:[%s359 + $0x12a] sm:$0xff]
      %v2498 = vld [vmem:[%s359 + $0x13a] sm:$0xff]
      %v2499 = vld [vmem:[%s359 + $0x142] sm:$0xff]
      %v2500 = vld [vmem:[%s359 + $0x152] sm:$0xff]
      %v2501 = vld [vmem:[%s359 + $0x15a] sm:$0xff]
      %v2502 = vld [vmem:[%s359 + $0x16a] sm:$0xff]
      %v2503 = vld [vmem:[%s359 + $0x172] sm:$0xff]
      %v2504 = vld [vmem:[%s456 + $0x1] sm:$0xff]
      %v2505 = vld [vmem:[%s456 + $0x9] sm:$0xff]
      %v2506 = vld [vmem:[%s456 + $0x19] sm:$0xff]
      %v2507 = vld [vmem:[%s456 + $0x21] sm:$0xff]
      %v2508 = vld [vmem:[%s456 + $0x31] sm:$0xff]
      %v2509 = vld [vmem:[%s456 + $0x39] sm:$0xff]
      %v2510 = vld [vmem:[%s456 + $0x49] sm:$0xff]
      %v2511 = vld [vmem:[%s456 + $0x51] sm:$0xff]
      %v2512 = vld [vmem:[%s456 + $0x61] sm:$0xff]
      %v2513 = vld [vmem:[%s456 + $0x69] sm:$0xff]
      %v2514 = vld [vmem:[%s456 + $0x79] sm:$0xff]
      %v2515 = vld [vmem:[%s456 + $0x81] sm:$0xff]
      %v2516 = vld [vmem:[%s456 + $0x91] sm:$0xff]
      %v2517 = vld [vmem:[%s456 + $0x99] sm:$0xff]
      %v2518 = vld [vmem:[%s456 + $0xa9] sm:$0xff]
      %v2519 = vld [vmem:[%s456 + $0xb1] sm:$0xff]
      %v2520 = vld [vmem:[%s456 + $0xc1] sm:$0xff]
      %v2521 = vld [vmem:[%s456 + $0xc9] sm:$0xff]
      %v2522 = vld [vmem:[%s456 + $0xd9] sm:$0xff]
      %v2523 = vld [vmem:[%s456 + $0xe1] sm:$0xff]
      %v2524 = vld [vmem:[%s456 + $0xf1] sm:$0xff]
      %v2525 = vld [vmem:[%s456 + $0xf9] sm:$0xff]
      %v2526 = vld [vmem:[%s456 + $0x109] sm:$0xff]
      %v2527 = vld [vmem:[%s456 + $0x111] sm:$0xff]
      %v2528 = vld [vmem:[%s456 + $0x121] sm:$0xff]
      %v2529 = vld [vmem:[%s456 + $0x129] sm:$0xff]
      %v2530 = vld [vmem:[%s456 + $0x139] sm:$0xff]
      %v2531 = vld [vmem:[%s456 + $0x141] sm:$0xff]
      %v2532 = vld [vmem:[%s456 + $0x151] sm:$0xff]
      %v2533 = vld [vmem:[%s456 + $0x159] sm:$0xff]
      %v2534 = vld [vmem:[%s456 + $0x169] sm:$0xff]
      %v2535 = vld [vmem:[%s456 + $0x171] sm:$0xff]
      %v2536 = vld [vmem:[%s456 + $0x2] sm:$0xff]
      %v2537 = vld [vmem:[%s456 + $0xa] sm:$0xff]
      %v2538 = vld [vmem:[%s456 + $0x1a] sm:$0xff]
      %v2539 = vld [vmem:[%s456 + $0x22] sm:$0xff]
      %v2540 = vld [vmem:[%s456 + $0x32] sm:$0xff]
      %v2541 = vld [vmem:[%s456 + $0x3a] sm:$0xff]
      %v2542 = vld [vmem:[%s456 + $0x4a] sm:$0xff]
      %v2543 = vld [vmem:[%s456 + $0x52] sm:$0xff]
      %v2544 = vld [vmem:[%s456 + $0x62] sm:$0xff]
      %v2545 = vld [vmem:[%s456 + $0x6a] sm:$0xff]
      %v2546 = vld [vmem:[%s456 + $0x7a] sm:$0xff]
      %v2547 = vld [vmem:[%s456 + $0x82] sm:$0xff]
      %v2548 = vld [vmem:[%s456 + $0x92] sm:$0xff]
      %v2549 = vld [vmem:[%s456 + $0x9a] sm:$0xff]
      %v2550 = vld [vmem:[%s456 + $0xaa] sm:$0xff]
      %v2551 = vld [vmem:[%s456 + $0xb2] sm:$0xff]
      %v2552 = vld [vmem:[%s456 + $0xc2] sm:$0xff]
      %v2553 = vld [vmem:[%s456 + $0xca] sm:$0xff]
      %v2554 = vld [vmem:[%s456 + $0xda] sm:$0xff]
      %v2555 = vld [vmem:[%s456 + $0xe2] sm:$0xff]
      %v2556 = vld [vmem:[%s456 + $0xf2] sm:$0xff]
      %v2557 = vld [vmem:[%s456 + $0xfa] sm:$0xff]
      %v2558 = vld [vmem:[%s456 + $0x10a] sm:$0xff]
      %v2559 = vld [vmem:[%s456 + $0x112] sm:$0xff]
      %v2560 = vld [vmem:[%s456 + $0x122] sm:$0xff]
      %v2561 = vld [vmem:[%s456 + $0x12a] sm:$0xff]
      %v2562 = vld [vmem:[%s456 + $0x13a] sm:$0xff]
      %v2563 = vld [vmem:[%s456 + $0x142] sm:$0xff]
      %v2564 = vld [vmem:[%s456 + $0x152] sm:$0xff]
      %v2565 = vld [vmem:[%s456 + $0x15a] sm:$0xff]
      %v2566 = vld [vmem:[%s456 + $0x16a] sm:$0xff]
      %v2567 = vld [vmem:[%s456 + $0x172] sm:$0xff]
      %2600 = vrot.lane.b32.xlu0 %v2408, 4
      %v2601 = vpop.permute.xlu0 %2600
      %2602 = vrot.lane.b32.xlu0 %v2409, 4
      %v2603 = vpop.permute.xlu0 %2602
      %2604 = vrot.lane.b32.xlu0 %v2410, 4
      %v2605 = vpop.permute.xlu0 %2604
      %2606 = vrot.lane.b32.xlu0 %v2411, 4
      %v2607 = vpop.permute.xlu0 %2606
      %2608 = vrot.lane.b32.xlu0 %v2412, 4
      %v2609 = vpop.permute.xlu0 %2608
      %2610 = vrot.lane.b32.xlu0 %v2413, 4
      %v2611 = vpop.permute.xlu0 %2610
      %2612 = vrot.lane.b32.xlu0 %v2414, 4
      %v2613 = vpop.permute.xlu0 %2612
      %2614 = vrot.lane.b32.xlu0 %v2415, 4
      %v2615 = vpop.permute.xlu0 %2614
      %2616 = vrot.lane.b32.xlu0 %v2416, 4
      %v2617 = vpop.permute.xlu0 %2616
      %2618 = vrot.lane.b32.xlu0 %v2417, 4
      %v2619 = vpop.permute.xlu0 %2618
      %2620 = vrot.lane.b32.xlu0 %v2418, 4
      %v2621 = vpop.permute.xlu0 %2620
      %2622 = vrot.lane.b32.xlu0 %v2419, 4
      %v2623 = vpop.permute.xlu0 %2622
      %2624 = vrot.lane.b32.xlu0 %v2420, 4
      %v2625 = vpop.permute.xlu0 %2624
      %2626 = vrot.lane.b32.xlu0 %v2421, 4
      %v2627 = vpop.permute.xlu0 %2626
      %2628 = vrot.lane.b32.xlu0 %v2422, 4
      %v2629 = vpop.permute.xlu0 %2628
      %2630 = vrot.lane.b32.xlu0 %v2423, 4
      %v2631 = vpop.permute.xlu0 %2630
      %2632 = vrot.lane.b32.xlu0 %v2424, 4
      %v2633 = vpop.permute.xlu0 %2632
      %2634 = vrot.lane.b32.xlu0 %v2425, 4
      %v2635 = vpop.permute.xlu0 %2634
      %2636 = vrot.lane.b32.xlu0 %v2426, 4
      %v2637 = vpop.permute.xlu0 %2636
      %2638 = vrot.lane.b32.xlu0 %v2427, 4
      %v2639 = vpop.permute.xlu0 %2638
      %2640 = vrot.lane.b32.xlu0 %v2428, 4
      %v2641 = vpop.permute.xlu0 %2640
      %2642 = vrot.lane.b32.xlu0 %v2429, 4
      %v2643 = vpop.permute.xlu0 %2642
      %2644 = vrot.lane.b32.xlu0 %v2430, 4
      %v2645 = vpop.permute.xlu0 %2644
      %2646 = vrot.lane.b32.xlu0 %v2431, 4
      %v2647 = vpop.permute.xlu0 %2646
      %2648 = vrot.lane.b32.xlu0 %v2432, 4
      %v2649 = vpop.permute.xlu0 %2648
      %2650 = vrot.lane.b32.xlu0 %v2433, 4
      %v2651 = vpop.permute.xlu0 %2650
      %2652 = vrot.lane.b32.xlu0 %v2434, 4
      %v2653 = vpop.permute.xlu0 %2652
      %2654 = vrot.lane.b32.xlu0 %v2435, 4
      %v2655 = vpop.permute.xlu0 %2654
      %2656 = vrot.lane.b32.xlu0 %v2436, 4
      %v2657 = vpop.permute.xlu0 %2656
      %2658 = vrot.lane.b32.xlu0 %v2437, 4
      %v2659 = vpop.permute.xlu0 %2658
      %2660 = vrot.lane.b32.xlu0 %v2438, 4
      %v2661 = vpop.permute.xlu0 %2660
      %2662 = vrot.lane.b32.xlu0 %v2439, 4
      %v2663 = vpop.permute.xlu0 %2662
      %2728 = vrot.lane.b32.xlu0 %v2440, 8
      %v2729 = vpop.permute.xlu0 %2728
      %2730 = vrot.lane.b32.xlu0 %v2441, 8
      %v2731 = vpop.permute.xlu0 %2730
      %2732 = vrot.lane.b32.xlu0 %v2442, 8
      %v2733 = vpop.permute.xlu0 %2732
      %2734 = vrot.lane.b32.xlu0 %v2443, 8
      %v2735 = vpop.permute.xlu0 %2734
      %2736 = vrot.lane.b32.xlu0 %v2444, 8
      %v2737 = vpop.permute.xlu0 %2736
      %2738 = vrot.lane.b32.xlu0 %v2445, 8
      %v2739 = vpop.permute.xlu0 %2738
      %2740 = vrot.lane.b32.xlu0 %v2446, 8
      %v2741 = vpop.permute.xlu0 %2740
      %2742 = vrot.lane.b32.xlu0 %v2447, 8
      %v2743 = vpop.permute.xlu0 %2742
      %2744 = vrot.lane.b32.xlu0 %v2448, 8
      %v2745 = vpop.permute.xlu0 %2744
      %2746 = vrot.lane.b32.xlu0 %v2449, 8
      %v2747 = vpop.permute.xlu0 %2746
      %2748 = vrot.lane.b32.xlu0 %v2450, 8
      %v2749 = vpop.permute.xlu0 %2748
      %2750 = vrot.lane.b32.xlu0 %v2451, 8
      %v2751 = vpop.permute.xlu0 %2750
      %2752 = vrot.lane.b32.xlu0 %v2452, 8
      %v2753 = vpop.permute.xlu0 %2752
      %2754 = vrot.lane.b32.xlu0 %v2453, 8
      %v2755 = vpop.permute.xlu0 %2754
      %2756 = vrot.lane.b32.xlu0 %v2454, 8
      %v2757 = vpop.permute.xlu0 %2756
      %2758 = vrot.lane.b32.xlu0 %v2455, 8
      %v2759 = vpop.permute.xlu0 %2758
      %2760 = vrot.lane.b32.xlu0 %v2456, 8
      %v2761 = vpop.permute.xlu0 %2760
      %2762 = vrot.lane.b32.xlu0 %v2457, 8
      %v2763 = vpop.permute.xlu0 %2762
      %2764 = vrot.lane.b32.xlu0 %v2458, 8
      %v2765 = vpop.permute.xlu0 %2764
      %2766 = vrot.lane.b32.xlu0 %v2459, 8
      %v2767 = vpop.permute.xlu0 %2766
      %2768 = vrot.lane.b32.xlu0 %v2460, 8
      %v2769 = vpop.permute.xlu0 %2768
      %2770 = vrot.lane.b32.xlu0 %v2461, 8
      %v2771 = vpop.permute.xlu0 %2770
      %2772 = vrot.lane.b32.xlu0 %v2462, 8
      %v2773 = vpop.permute.xlu0 %2772
      %2774 = vrot.lane.b32.xlu0 %v2463, 8
      %v2775 = vpop.permute.xlu0 %2774
      %2776 = vrot.lane.b32.xlu0 %v2464, 8
      %v2777 = vpop.permute.xlu0 %2776
      %2778 = vrot.lane.b32.xlu0 %v2465, 8
      %v2779 = vpop.permute.xlu0 %2778
      %2780 = vrot.lane.b32.xlu0 %v2466, 8
      %v2781 = vpop.permute.xlu0 %2780
      %2782 = vrot.lane.b32.xlu0 %v2467, 8
      %v2783 = vpop.permute.xlu0 %2782
      %2784 = vrot.lane.b32.xlu0 %v2468, 8
      %v2785 = vpop.permute.xlu0 %2784
      %2786 = vrot.lane.b32.xlu0 %v2469, 8
      %v2787 = vpop.permute.xlu0 %2786
      %2788 = vrot.lane.b32.xlu0 %v2470, 8
      %v2789 = vpop.permute.xlu0 %2788
      %2790 = vrot.lane.b32.xlu0 %v2471, 8
      %v2791 = vpop.permute.xlu0 %2790
      %2856 = vrot.lane.b32.xlu0 %v2472, 12
      %v2857 = vpop.permute.xlu0 %2856
      %2858 = vrot.lane.b32.xlu0 %v2473, 12
      %v2859 = vpop.permute.xlu0 %2858
      %2860 = vrot.lane.b32.xlu0 %v2474, 12
      %v2861 = vpop.permute.xlu0 %2860
      %2862 = vrot.lane.b32.xlu0 %v2475, 12
      %v2863 = vpop.permute.xlu0 %2862
      %2864 = vrot.lane.b32.xlu0 %v2476, 12
      %v2865 = vpop.permute.xlu0 %2864
      %2866 = vrot.lane.b32.xlu0 %v2477, 12
      %v2867 = vpop.permute.xlu0 %2866
      %2868 = vrot.lane.b32.xlu0 %v2478, 12
      %v2869 = vpop.permute.xlu0 %2868
      %2870 = vrot.lane.b32.xlu0 %v2479, 12
      %v2871 = vpop.permute.xlu0 %2870
      %2872 = vrot.lane.b32.xlu0 %v2480, 12
      %v2873 = vpop.permute.xlu0 %2872
      %2874 = vrot.lane.b32.xlu0 %v2481, 12
      %v2875 = vpop.permute.xlu0 %2874
      %2876 = vrot.lane.b32.xlu0 %v2482, 12
      %v2877 = vpop.permute.xlu0 %2876
      %2878 = vrot.lane.b32.xlu0 %v2483, 12
      %v2879 = vpop.permute.xlu0 %2878
      %2880 = vrot.lane.b32.xlu0 %v2484, 12
      %v2881 = vpop.permute.xlu0 %2880
      %2882 = vrot.lane.b32.xlu0 %v2485, 12
      %v2883 = vpop.permute.xlu0 %2882
      %2884 = vrot.lane.b32.xlu0 %v2486, 12
      %v2885 = vpop.permute.xlu0 %2884
      %2886 = vrot.lane.b32.xlu0 %v2487, 12
      %v2887 = vpop.permute.xlu0 %2886
      %2888 = vrot.lane.b32.xlu0 %v2488, 12
      %v2889 = vpop.permute.xlu0 %2888
      %2890 = vrot.lane.b32.xlu0 %v2489, 12
      %v2891 = vpop.permute.xlu0 %2890
      %2892 = vrot.lane.b32.xlu0 %v2490, 12
      %v2893 = vpop.permute.xlu0 %2892
      %2894 = vrot.lane.b32.xlu0 %v2491, 12
      %v2895 = vpop.permute.xlu0 %2894
      %2896 = vrot.lane.b32.xlu0 %v2492, 12
      %v2897 = vpop.permute.xlu0 %2896
      %2898 = vrot.lane.b32.xlu0 %v2493, 12
      %v2899 = vpop.permute.xlu0 %2898
      %2900 = vrot.lane.b32.xlu0 %v2494, 12
      %v2901 = vpop.permute.xlu0 %2900
      %2902 = vrot.lane.b32.xlu0 %v2495, 12
      %v2903 = vpop.permute.xlu0 %2902
      %2904 = vrot.lane.b32.xlu0 %v2496, 12
      %v2905 = vpop.permute.xlu0 %2904
      %2906 = vrot.lane.b32.xlu0 %v2497, 12
      %v2907 = vpop.permute.xlu0 %2906
      %2908 = vrot.lane.b32.xlu0 %v2498, 12
      %v2909 = vpop.permute.xlu0 %2908
      %2910 = vrot.lane.b32.xlu0 %v2499, 12
      %v2911 = vpop.permute.xlu0 %2910
      %2912 = vrot.lane.b32.xlu0 %v2500, 12
      %v2913 = vpop.permute.xlu0 %2912
      %2914 = vrot.lane.b32.xlu0 %v2501, 12
      %v2915 = vpop.permute.xlu0 %2914
      %2916 = vrot.lane.b32.xlu0 %v2502, 12
      %v2917 = vpop.permute.xlu0 %2916
      %2918 = vrot.lane.b32.xlu0 %v2503, 12
      %v2919 = vpop.permute.xlu0 %2918
      %2984 = vrot.lane.b32.xlu0 %v2504, 16
      %v2985 = vpop.permute.xlu0 %2984
      %2986 = vrot.lane.b32.xlu0 %v2505, 16
      %v2987 = vpop.permute.xlu0 %2986
      %2988 = vrot.lane.b32.xlu0 %v2506, 16
      %v2989 = vpop.permute.xlu0 %2988
      %2990 = vrot.lane.b32.xlu0 %v2507, 16
      %v2991 = vpop.permute.xlu0 %2990
      %2992 = vrot.lane.b32.xlu0 %v2508, 16
      %v2993 = vpop.permute.xlu0 %2992
      %2994 = vrot.lane.b32.xlu0 %v2509, 16
      %v2995 = vpop.permute.xlu0 %2994
      %2996 = vrot.lane.b32.xlu0 %v2510, 16
      %v2997 = vpop.permute.xlu0 %2996
      %2998 = vrot.lane.b32.xlu0 %v2511, 16
      %v2999 = vpop.permute.xlu0 %2998
      %3000 = vrot.lane.b32.xlu0 %v2512, 16
      %v3001 = vpop.permute.xlu0 %3000
      %3002 = vrot.lane.b32.xlu0 %v2513, 16
      %v3003 = vpop.permute.xlu0 %3002
      %3004 = vrot.lane.b32.xlu0 %v2514, 16
      %v3005 = vpop.permute.xlu0 %3004
      %3006 = vrot.lane.b32.xlu0 %v2515, 16
      %v3007 = vpop.permute.xlu0 %3006
      %3008 = vrot.lane.b32.xlu0 %v2516, 16
      %v3009 = vpop.permute.xlu0 %3008
      %3010 = vrot.lane.b32.xlu0 %v2517, 16
      %v3011 = vpop.permute.xlu0 %3010
      %3012 = vrot.lane.b32.xlu0 %v2518, 16
      %v3013 = vpop.permute.xlu0 %3012
      %3014 = vrot.lane.b32.xlu0 %v2519, 16
      %v3015 = vpop.permute.xlu0 %3014
      %3016 = vrot.lane.b32.xlu0 %v2520, 16
      %v3017 = vpop.permute.xlu0 %3016
      %3018 = vrot.lane.b32.xlu0 %v2521, 16
      %v3019 = vpop.permute.xlu0 %3018
      %3020 = vrot.lane.b32.xlu0 %v2522, 16
      %v3021 = vpop.permute.xlu0 %3020
      %3022 = vrot.lane.b32.xlu0 %v2523, 16
      %v3023 = vpop.permute.xlu0 %3022
      %3024 = vrot.lane.b32.xlu0 %v2524, 16
      %v3025 = vpop.permute.xlu0 %3024
      %3026 = vrot.lane.b32.xlu0 %v2525, 16
      %v3027 = vpop.permute.xlu0 %3026
      %3028 = vrot.lane.b32.xlu0 %v2526, 16
      %v3029 = vpop.permute.xlu0 %3028
      %3030 = vrot.lane.b32.xlu0 %v2527, 16
      %v3031 = vpop.permute.xlu0 %3030
      %3032 = vrot.lane.b32.xlu0 %v2528, 16
      %v3033 = vpop.permute.xlu0 %3032
      %3034 = vrot.lane.b32.xlu0 %v2529, 16
      %v3035 = vpop.permute.xlu0 %3034
      %3036 = vrot.lane.b32.xlu0 %v2530, 16
      %v3037 = vpop.permute.xlu0 %3036
      %3038 = vrot.lane.b32.xlu0 %v2531, 16
      %v3039 = vpop.permute.xlu0 %3038
      %3040 = vrot.lane.b32.xlu0 %v2532, 16
      %v3041 = vpop.permute.xlu0 %3040
      %3042 = vrot.lane.b32.xlu0 %v2533, 16
      %v3043 = vpop.permute.xlu0 %3042
      %3044 = vrot.lane.b32.xlu0 %v2534, 16
      %v3045 = vpop.permute.xlu0 %3044
      %3046 = vrot.lane.b32.xlu0 %v2535, 16
      %v3047 = vpop.permute.xlu0 %3046
      %3112 = vrot.lane.b32.xlu0 %v2536, 20
      %v3113 = vpop.permute.xlu0 %3112
      %3114 = vrot.lane.b32.xlu0 %v2537, 20
      %v3115 = vpop.permute.xlu0 %3114
      %3116 = vrot.lane.b32.xlu0 %v2538, 20
      %v3117 = vpop.permute.xlu0 %3116
      %3118 = vrot.lane.b32.xlu0 %v2539, 20
      %v3119 = vpop.permute.xlu0 %3118
      %3120 = vrot.lane.b32.xlu0 %v2540, 20
      %v3121 = vpop.permute.xlu0 %3120
      %3122 = vrot.lane.b32.xlu0 %v2541, 20
      %v3123 = vpop.permute.xlu0 %3122
      %3124 = vrot.lane.b32.xlu0 %v2542, 20
      %v3125 = vpop.permute.xlu0 %3124
      %3126 = vrot.lane.b32.xlu0 %v2543, 20
      %v3127 = vpop.permute.xlu0 %3126
      %3128 = vrot.lane.b32.xlu0 %v2544, 20
      %v3129 = vpop.permute.xlu0 %3128
      %3130 = vrot.lane.b32.xlu0 %v2545, 20
      %v3131 = vpop.permute.xlu0 %3130
      %3132 = vrot.lane.b32.xlu0 %v2546, 20
      %v3133 = vpop.permute.xlu0 %3132
      %3134 = vrot.lane.b32.xlu0 %v2547, 20
      %v3135 = vpop.permute.xlu0 %3134
      %3136 = vrot.lane.b32.xlu0 %v2548, 20
      %v3137 = vpop.permute.xlu0 %3136
      %3138 = vrot.lane.b32.xlu0 %v2549, 20
      %v3139 = vpop.permute.xlu0 %3138
      %3140 = vrot.lane.b32.xlu0 %v2550, 20
      %v3141 = vpop.permute.xlu0 %3140
      %3142 = vrot.lane.b32.xlu0 %v2551, 20
      %v3143 = vpop.permute.xlu0 %3142
      %3144 = vrot.lane.b32.xlu0 %v2552, 20
      %v3145 = vpop.permute.xlu0 %3144
      %3146 = vrot.lane.b32.xlu0 %v2553, 20
      %v3147 = vpop.permute.xlu0 %3146
      %3148 = vrot.lane.b32.xlu0 %v2554, 20
      %v3149 = vpop.permute.xlu0 %3148
      %3150 = vrot.lane.b32.xlu0 %v2555, 20
      %v3151 = vpop.permute.xlu0 %3150
      %3152 = vrot.lane.b32.xlu0 %v2556, 20
      %v3153 = vpop.permute.xlu0 %3152
      %3154 = vrot.lane.b32.xlu0 %v2557, 20
      %v3155 = vpop.permute.xlu0 %3154
      %3156 = vrot.lane.b32.xlu0 %v2558, 20
      %v3157 = vpop.permute.xlu0 %3156
      %3158 = vrot.lane.b32.xlu0 %v2559, 20
      %v3159 = vpop.permute.xlu0 %3158
      %3160 = vrot.lane.b32.xlu0 %v2560, 20
      %v3161 = vpop.permute.xlu0 %3160
      %3162 = vrot.lane.b32.xlu0 %v2561, 20
      %v3163 = vpop.permute.xlu0 %3162
      %3164 = vrot.lane.b32.xlu0 %v2562, 20
      %v3165 = vpop.permute.xlu0 %3164
      %3166 = vrot.lane.b32.xlu0 %v2563, 20
      %v3167 = vpop.permute.xlu0 %3166
      %3168 = vrot.lane.b32.xlu0 %v2564, 20
      %v3169 = vpop.permute.xlu0 %3168
      %3170 = vrot.lane.b32.xlu0 %v2565, 20
      %v3171 = vpop.permute.xlu0 %3170
      %3172 = vrot.lane.b32.xlu0 %v2566, 20
      %v3173 = vpop.permute.xlu0 %3172
      %3174 = vrot.lane.b32.xlu0 %v2567, 20
      %v3175 = vpop.permute.xlu0 %3174
      %v3208 = vsel %vm1577, %v2376, %v2601
      %v3209 = vsel %vm1577, %v2377, %v2603
      %v3210 = vsel %vm1577, %v2378, %v2605
      %v3211 = vsel %vm1577, %v2379, %v2607
      %v3212 = vsel %vm1577, %v2380, %v2609
      %v3213 = vsel %vm1577, %v2381, %v2611
      %v3214 = vsel %vm1577, %v2382, %v2613
      %v3215 = vsel %vm1577, %v2383, %v2615
      %v3216 = vsel %vm1577, %v2384, %v2617
      %v3217 = vsel %vm1577, %v2385, %v2619
      %v3218 = vsel %vm1577, %v2386, %v2621
      %v3219 = vsel %vm1577, %v2387, %v2623
      %v3220 = vsel %vm1577, %v2388, %v2625
      %v3221 = vsel %vm1577, %v2389, %v2627
      %v3222 = vsel %vm1577, %v2390, %v2629
      %v3223 = vsel %vm1577, %v2391, %v2631
      %v3224 = vsel %vm1577, %v2392, %v2633
      %v3225 = vsel %vm1577, %v2393, %v2635
      %v3226 = vsel %vm1577, %v2394, %v2637
      %v3227 = vsel %vm1577, %v2395, %v2639
      %v3228 = vsel %vm1577, %v2396, %v2641
      %v3229 = vsel %vm1577, %v2397, %v2643
      %v3230 = vsel %vm1577, %v2398, %v2645
      %v3231 = vsel %vm1577, %v2399, %v2647
      %v3232 = vsel %vm1577, %v2400, %v2649
      %v3233 = vsel %vm1577, %v2401, %v2651
      %v3234 = vsel %vm1577, %v2402, %v2653
      %v3235 = vsel %vm1577, %v2403, %v2655
      %v3236 = vsel %vm1577, %v2404, %v2657
      %v3237 = vsel %vm1577, %v2405, %v2659
      %v3238 = vsel %vm1577, %v2406, %v2661
      %v3239 = vsel %vm1577, %v2407, %v2663
      %v3240 = vsel %vm1610, %v3208, %v2729
      %v3241 = vsel %vm1610, %v3209, %v2731
      %v3242 = vsel %vm1610, %v3210, %v2733
      %v3243 = vsel %vm1610, %v3211, %v2735
      %v3244 = vsel %vm1610, %v3212, %v2737
      %v3245 = vsel %vm1610, %v3213, %v2739
      %v3246 = vsel %vm1610, %v3214, %v2741
      %v3247 = vsel %vm1610, %v3215, %v2743
      %v3248 = vsel %vm1610, %v3216, %v2745
      %v3249 = vsel %vm1610, %v3217, %v2747
      %v3250 = vsel %vm1610, %v3218, %v2749
      %v3251 = vsel %vm1610, %v3219, %v2751
      %v3252 = vsel %vm1610, %v3220, %v2753
      %v3253 = vsel %vm1610, %v3221, %v2755
      %v3254 = vsel %vm1610, %v3222, %v2757
      %v3255 = vsel %vm1610, %v3223, %v2759
      %v3256 = vsel %vm1610, %v3224, %v2761
      %v3257 = vsel %vm1610, %v3225, %v2763
      %v3258 = vsel %vm1610, %v3226, %v2765
      %v3259 = vsel %vm1610, %v3227, %v2767
      %v3260 = vsel %vm1610, %v3228, %v2769
      %v3261 = vsel %vm1610, %v3229, %v2771
      %v3262 = vsel %vm1610, %v3230, %v2773
      %v3263 = vsel %vm1610, %v3231, %v2775
      %v3264 = vsel %vm1610, %v3232, %v2777
      %v3265 = vsel %vm1610, %v3233, %v2779
      %v3266 = vsel %vm1610, %v3234, %v2781
      %v3267 = vsel %vm1610, %v3235, %v2783
      %v3268 = vsel %vm1610, %v3236, %v2785
      %v3269 = vsel %vm1610, %v3237, %v2787
      %v3270 = vsel %vm1610, %v3238, %v2789
      %v3271 = vsel %vm1610, %v3239, %v2791
      %v3272 = vsel %vm1643, %v3240, %v2857
      %v3273 = vsel %vm1643, %v3241, %v2859
      %v3274 = vsel %vm1643, %v3242, %v2861
      %v3275 = vsel %vm1643, %v3243, %v2863
      %v3276 = vsel %vm1643, %v3244, %v2865
      %v3277 = vsel %vm1643, %v3245, %v2867
      %v3278 = vsel %vm1643, %v3246, %v2869
      %v3279 = vsel %vm1643, %v3247, %v2871
      %v3280 = vsel %vm1643, %v3248, %v2873
      %v3281 = vsel %vm1643, %v3249, %v2875
      %v3282 = vsel %vm1643, %v3250, %v2877
      %v3283 = vsel %vm1643, %v3251, %v2879
      %v3284 = vsel %vm1643, %v3252, %v2881
      %v3285 = vsel %vm1643, %v3253, %v2883
      %v3286 = vsel %vm1643, %v3254, %v2885
      %v3287 = vsel %vm1643, %v3255, %v2887
      %v3288 = vsel %vm1643, %v3256, %v2889
      %v3289 = vsel %vm1643, %v3257, %v2891
      %v3290 = vsel %vm1643, %v3258, %v2893
      %v3291 = vsel %vm1643, %v3259, %v2895
      %v3292 = vsel %vm1643, %v3260, %v2897
      %v3293 = vsel %vm1643, %v3261, %v2899
      %v3294 = vsel %vm1643, %v3262, %v2901
      %v3295 = vsel %vm1643, %v3263, %v2903
      %v3296 = vsel %vm1643, %v3264, %v2905
      %v3297 = vsel %vm1643, %v3265, %v2907
      %v3298 = vsel %vm1643, %v3266, %v2909
      %v3299 = vsel %vm1643, %v3267, %v2911
      %v3300 = vsel %vm1643, %v3268, %v2913
      %v3301 = vsel %vm1643, %v3269, %v2915
      %v3302 = vsel %vm1643, %v3270, %v2917
      %v3303 = vsel %vm1643, %v3271, %v2919
      %v3304 = vsel %vm1676, %v3272, %v2985
      %v3305 = vsel %vm1676, %v3273, %v2987
      %v3306 = vsel %vm1676, %v3274, %v2989
      %v3307 = vsel %vm1676, %v3275, %v2991
      %v3308 = vsel %vm1676, %v3276, %v2993
      %v3309 = vsel %vm1676, %v3277, %v2995
      %v3310 = vsel %vm1676, %v3278, %v2997
      %v3311 = vsel %vm1676, %v3279, %v2999
      %v3312 = vsel %vm1676, %v3280, %v3001
      %v3313 = vsel %vm1676, %v3281, %v3003
      %v3314 = vsel %vm1676, %v3282, %v3005
      %v3315 = vsel %vm1676, %v3283, %v3007
      %v3316 = vsel %vm1676, %v3284, %v3009
      %v3317 = vsel %vm1676, %v3285, %v3011
      %v3318 = vsel %vm1676, %v3286, %v3013
      %v3319 = vsel %vm1676, %v3287, %v3015
      %v3320 = vsel %vm1676, %v3288, %v3017
      %v3321 = vsel %vm1676, %v3289, %v3019
      %v3322 = vsel %vm1676, %v3290, %v3021
      %v3323 = vsel %vm1676, %v3291, %v3023
      %v3324 = vsel %vm1676, %v3292, %v3025
      %v3325 = vsel %vm1676, %v3293, %v3027
      %v3326 = vsel %vm1676, %v3294, %v3029
      %v3327 = vsel %vm1676, %v3295, %v3031
      %v3328 = vsel %vm1676, %v3296, %v3033
      %v3329 = vsel %vm1676, %v3297, %v3035
      %v3330 = vsel %vm1676, %v3298, %v3037
      %v3331 = vsel %vm1676, %v3299, %v3039
      %v3332 = vsel %vm1676, %v3300, %v3041
      %v3333 = vsel %vm1676, %v3301, %v3043
      %v3334 = vsel %vm1676, %v3302, %v3045
      %v3335 = vsel %vm1676, %v3303, %v3047
      %v3336 = vsel %vm1709, %v3304, %v3113
      %v3337 = vsel %vm1709, %v3305, %v3115
      %v3338 = vsel %vm1709, %v3306, %v3117
      %v3339 = vsel %vm1709, %v3307, %v3119
      %v3340 = vsel %vm1709, %v3308, %v3121
      %v3341 = vsel %vm1709, %v3309, %v3123
      %v3342 = vsel %vm1709, %v3310, %v3125
      %v3343 = vsel %vm1709, %v3311, %v3127
      %v3344 = vsel %vm1709, %v3312, %v3129
      %v3345 = vsel %vm1709, %v3313, %v3131
      %v3346 = vsel %vm1709, %v3314, %v3133
      %v3347 = vsel %vm1709, %v3315, %v3135
      %v3348 = vsel %vm1709, %v3316, %v3137
      %v3349 = vsel %vm1709, %v3317, %v3139
      %v3350 = vsel %vm1709, %v3318, %v3141
      %v3351 = vsel %vm1709, %v3319, %v3143
      %v3352 = vsel %vm1709, %v3320, %v3145
      %v3353 = vsel %vm1709, %v3321, %v3147
      %v3354 = vsel %vm1709, %v3322, %v3149
      %v3355 = vsel %vm1709, %v3323, %v3151
      %v3356 = vsel %vm1709, %v3324, %v3153
      %v3357 = vsel %vm1709, %v3325, %v3155
      %v3358 = vsel %vm1709, %v3326, %v3157
      %v3359 = vsel %vm1709, %v3327, %v3159
      %v3360 = vsel %vm1709, %v3328, %v3161
      %v3361 = vsel %vm1709, %v3329, %v3163
      %v3362 = vsel %vm1709, %v3330, %v3165
      %v3363 = vsel %vm1709, %v3331, %v3167
      %v3364 = vsel %vm1709, %v3332, %v3169
      %v3365 = vsel %vm1709, %v3333, %v3171
      %v3366 = vsel %vm1709, %v3334, %v3173
      %v3367 = vsel %vm1709, %v3335, %v3175
      %v3368 = vld [vmem:[%s2] sm:$0xff]
      %v3369 = vld [vmem:[%s2 + $0x8] sm:$0xff]
      %v3370 = vld [vmem:[%s2 + $0x10] sm:$0xff]
      %v3372 = vsel %vm1742, %v3336, 0
      %v3375 = vsel %vm1742, %v3337, 0
      %v3378 = vsel %vm1742, %v3338, 0
      %v3381 = vsel %vm1742, %v3339, 0
      %v3384 = vsel %vm1742, %v3340, 0
      %v3387 = vsel %vm1742, %v3341, 0
      %v3390 = vsel %vm1742, %v3342, 0
      %v3393 = vsel %vm1742, %v3343, 0
      %v3396 = vsel %vm1742, %v3344, 0
      %v3399 = vsel %vm1742, %v3345, 0
      %v3402 = vsel %vm1742, %v3346, 0
      %v3405 = vsel %vm1742, %v3347, 0
      %v3408 = vsel %vm1742, %v3348, 0
      %v3411 = vsel %vm1742, %v3349, 0
      %v3414 = vsel %vm1742, %v3350, 0
      %v3417 = vsel %vm1742, %v3351, 0
      %v3420 = vsel %vm1742, %v3352, 0
      %v3423 = vsel %vm1742, %v3353, 0
      %v3426 = vsel %vm1742, %v3354, 0
      %v3429 = vsel %vm1742, %v3355, 0
      %v3432 = vsel %vm1742, %v3356, 0
      %v3435 = vsel %vm1742, %v3357, 0
      %v3438 = vsel %vm1742, %v3358, 0
      %v3441 = vsel %vm1742, %v3359, 0
      %v3444 = vsel %vm1742, %v3360, 0
      %v3447 = vsel %vm1742, %v3361, 0
      %v3450 = vsel %vm1742, %v3362, 0
      %v3453 = vsel %vm1742, %v3363, 0
      %v3456 = vsel %vm1742, %v3364, 0
      %v3459 = vsel %vm1742, %v3365, 0
      %v3462 = vsel %vm1742, %v3366, 0
      %v3465 = vsel %vm1742, %v3367, 0
      %3467 = vmatprep.subr.mxu0 0.0
      %3468 = vmatpush1.msra.mxu0 %v3368
      %3469 = vmatprep.subr.mxu0 0.0
      %3470 = vmatpush1.msra.mxu0 %v3369
      %3471 = vmatprep.subr.mxu0 0.0
      %3472 = vmatpush1.msra.mxu0 %v3370
      %3473 = vmatprep.subr.mxu0 0.0
      %3474 = vmatpush1.msra.mxu0 0.0
      %3475 = vmatprep.subr.mxu0 0.0
      %3476 = vmatpush1.msra.mxu0 0.0
      %3477 = vmatprep.subr.mxu0 0.0
      %3478 = vmatpush1.msra.mxu0 0.0
      %3479 = vmatprep.subr.mxu0 0.0
      %3480 = vmatpush1.msra.mxu0 0.0
      %3481 = vmatprep.subr.mxu0 0.0
      %3482 = vmatpush1.msra.mxu0 0.0
      %3483 = vmatprep.subr.mxu0 0.0
      %3484 = vmatpush1.msra.mxu0 0.0
      %3485 = vmatprep.subr.mxu0 0.0
      %3486 = vmatpush1.msra.mxu0 0.0
      %3487 = vmatprep.subr.mxu0 0.0
      %3488 = vmatpush1.msra.mxu0 0.0
      %3489 = vmatprep.subr.mxu0 0.0
      %3490 = vmatpush1.msra.mxu0 0.0
      %3491 = vmatprep.subr.mxu0 0.0
      %3492 = vmatpush1.msra.mxu0 0.0
      %3493 = vmatprep.subr.mxu0 0.0
      %3494 = vmatpush1.msra.mxu0 0.0
      %3495 = vmatprep.subr.mxu0 0.0
      %3496 = vmatpush1.msra.mxu0 0.0
      %3497 = vmatprep.subr.mxu0 0.0
      %3498 = vmatpush1.msra.mxu0 0.0
      %3499 = vmatprep.subr.mxu0 0.0
      %3500 = vmatpush1.msra.mxu0 0.0
      %3501 = vmatprep.subr.mxu0 0.0
      %3502 = vmatpush1.msra.mxu0 0.0
      %3503 = vmatprep.subr.mxu0 0.0
      %3504 = vmatpush1.msra.mxu0 0.0
      %3505 = vmatprep.subr.mxu0 0.0
      %3506 = vmatpush1.msra.mxu0 0.0
      %3507 = vmatprep.subr.mxu0 0.0
      %3508 = vmatpush1.msra.mxu0 0.0
      %3509 = vmatprep.subr.mxu0 0.0
      %3510 = vmatpush1.msra.mxu0 0.0
      %3511 = vmatprep.subr.mxu0 0.0
      %3512 = vmatpush1.msra.mxu0 0.0
      %3513 = vmatprep.subr.mxu0 0.0
      %3514 = vmatpush1.msra.mxu0 0.0
      %3515 = vmatprep.subr.mxu0 0.0
      %3516 = vmatpush1.msra.mxu0 0.0
      %3517 = vmatprep.subr.mxu0 0.0
      %3518 = vmatpush1.msra.mxu0 0.0
      %3519 = vmatprep.subr.mxu0 0.0
      %3520 = vmatpush1.msra.mxu0 0.0
      %3521 = vmatprep.subr.mxu0 0.0
      %3522 = vmatpush1.msra.mxu0 0.0
      %3523 = vmatprep.subr.mxu0 0.0
      %3524 = vmatpush1.msra.mxu0 0.0
      %3525 = vmatprep.subr.mxu0 0.0
      %3526 = vmatpush1.msra.mxu0 0.0
      %3527 = vmatprep.subr.mxu0 0.0
      %3528 = vmatpush1.msra.mxu0 0.0
      %3529 = vmatprep.subr.mxu0 0.0
      %3530 = vmatpush1.msra.mxu0 0.0
      %3531 = vmatprep.mubr.f32.mxu0 0.0
      %3532 = vmatmul.mubr.f32.gmra.mrb[0].mxu0 %v3372
      %v3533 = vpop.f32.mrb[0].mxu0
      %v3534 = vadd.f32 0.0, %v3533
      %v3535 = vpop.f32.mrb[0].mxu0
      %3536 = vmatprep.mubr.f32.mxu0 0.0
      %3537 = vmatmul.mubr.f32.gmra.mrb[0].mxu0 %v3375
      %v3538 = vpop.f32.mrb[0].mxu0
      %v3539 = vadd.f32 0.0, %v3538
      %v3540 = vpop.f32.mrb[0].mxu0
      %3541 = vmatprep.mubr.f32.mxu0 0.0
      %3542 = vmatmul.mubr.f32.gmra.mrb[0].mxu0 %v3378
      %v3543 = vpop.f32.mrb[0].mxu0
      %v3544 = vadd.f32 0.0, %v3543
      %v3545 = vpop.f32.mrb[0].mxu0
      %3546 = vmatprep.mubr.f32.mxu0 0.0
      %3547 = vmatmul.mubr.f32.gmra.mrb[0].mxu0 %v3381
      %v3548 = vpop.f32.mrb[0].mxu0
      %v3549 = vadd.f32 0.0, %v3548
      %v3550 = vpop.f32.mrb[0].mxu0
      %3551 = vmatprep.mubr.f32.mxu0 0.0
      %3552 = vmatmul.mubr.f32.gmra.mrb[0].mxu0 %v3384
      %v3553 = vpop.f32.mrb[0].mxu0
      %v3554 = vadd.f32 0.0, %v3553
      %v3555 = vpop.f32.mrb[0].mxu0
      %3556 = vmatprep.mubr.f32.mxu0 0.0
      %3557 = vmatmul.mubr.f32.gmra.mrb[0].mxu0 %v3387
      %v3558 = vpop.f32.mrb[0].mxu0
      %v3559 = vadd.f32 0.0, %v3558
      %v3560 = vpop.f32.mrb[0].mxu0
      %3561 = vmatprep.mubr.f32.mxu0 0.0
      %3562 = vmatmul.mubr.f32.gmra.mrb[0].mxu0 %v3390
      %v3563 = vpop.f32.mrb[0].mxu0
      %v3564 = vadd.f32 0.0, %v3563
      %v3565 = vpop.f32.mrb[0].mxu0
      %3566 = vmatprep.mubr.f32.mxu0 0.0
      %3567 = vmatmul.mubr.f32.gmra.mrb[0].mxu0 %v3393
      %v3568 = vpop.f32.mrb[0].mxu0
      %v3569 = vadd.f32 0.0, %v3568
      %v3570 = vpop.f32.mrb[0].mxu0
      %3571 = vmatprep.mubr.f32.mxu0 0.0
      %3572 = vmatmul.mubr.f32.gmra.mrb[0].mxu0 %v3396
      %v3573 = vpop.f32.mrb[0].mxu0
      %v3574 = vadd.f32 0.0, %v3573
      %v3575 = vpop.f32.mrb[0].mxu0
      %3576 = vmatprep.mubr.f32.mxu0 0.0
      %3577 = vmatmul.mubr.f32.gmra.mrb[0].mxu0 %v3399
      %v3578 = vpop.f32.mrb[0].mxu0
      %v3579 = vadd.f32 0.0, %v3578
      %v3580 = vpop.f32.mrb[0].mxu0
      %3581 = vmatprep.mubr.f32.mxu0 0.0
      %3582 = vmatmul.mubr.f32.gmra.mrb[0].mxu0 %v3402
      %v3583 = vpop.f32.mrb[0].mxu0
      %v3584 = vadd.f32 0.0, %v3583
      %v3585 = vpop.f32.mrb[0].mxu0
      %3586 = vmatprep.mubr.f32.mxu0 0.0
      %3587 = vmatmul.mubr.f32.gmra.mrb[0].mxu0 %v3405
      %v3588 = vpop.f32.mrb[0].mxu0
      %v3589 = vadd.f32 0.0, %v3588
      %v3590 = vpop.f32.mrb[0].mxu0
      %3591 = vmatprep.mubr.f32.mxu0 0.0
      %3592 = vmatmul.mubr.f32.gmra.mrb[0].mxu0 %v3408
      %v3593 = vpop.f32.mrb[0].mxu0
      %v3594 = vadd.f32 0.0, %v3593
      %v3595 = vpop.f32.mrb[0].mxu0
      %3596 = vmatprep.mubr.f32.mxu0 0.0
      %3597 = vmatmul.mubr.f32.gmra.mrb[0].mxu0 %v3411
      %v3598 = vpop.f32.mrb[0].mxu0
      %v3599 = vadd.f32 0.0, %v3598
      %v3600 = vpop.f32.mrb[0].mxu0
      %3601 = vmatprep.mubr.f32.mxu0 0.0
      %3602 = vmatmul.mubr.f32.gmra.mrb[0].mxu0 %v3414
      %v3603 = vpop.f32.mrb[0].mxu0
      %v3604 = vadd.f32 0.0, %v3603
      %v3605 = vpop.f32.mrb[0].mxu0
      %3606 = vmatprep.mubr.f32.mxu0 0.0
      %3607 = vmatmul.mubr.f32.gmra.mrb[0].mxu0 %v3417
      %v3608 = vpop.f32.mrb[0].mxu0
      %v3609 = vadd.f32 0.0, %v3608
      %v3610 = vpop.f32.mrb[0].mxu0
      %3611 = vmatprep.mubr.f32.mxu0 0.0
      %3612 = vmatmul.mubr.f32.gmra.mrb[0].mxu0 %v3420
      %v3613 = vpop.f32.mrb[0].mxu0
      %v3614 = vadd.f32 0.0, %v3613
      %v3615 = vpop.f32.mrb[0].mxu0
      %3616 = vmatprep.mubr.f32.mxu0 0.0
      %3617 = vmatmul.mubr.f32.gmra.mrb[0].mxu0 %v3423
      %v3618 = vpop.f32.mrb[0].mxu0
      %v3619 = vadd.f32 0.0, %v3618
      %v3620 = vpop.f32.mrb[0].mxu0
      %3621 = vmatprep.mubr.f32.mxu0 0.0
      %3622 = vmatmul.mubr.f32.gmra.mrb[0].mxu0 %v3426
      %v3623 = vpop.f32.mrb[0].mxu0
      %v3624 = vadd.f32 0.0, %v3623
      %v3625 = vpop.f32.mrb[0].mxu0
      %3626 = vmatprep.mubr.f32.mxu0 0.0
      %3627 = vmatmul.mubr.f32.gmra.mrb[0].mxu0 %v3429
      %v3628 = vpop.f32.mrb[0].mxu0
      %v3629 = vadd.f32 0.0, %v3628
      %v3630 = vpop.f32.mrb[0].mxu0
      %3631 = vmatprep.mubr.f32.mxu0 0.0
      %3632 = vmatmul.mubr.f32.gmra.mrb[0].mxu0 %v3432
      %v3633 = vpop.f32.mrb[0].mxu0
      %v3634 = vadd.f32 0.0, %v3633
      %v3635 = vpop.f32.mrb[0].mxu0
      %3636 = vmatprep.mubr.f32.mxu0 0.0
      %3637 = vmatmul.mubr.f32.gmra.mrb[0].mxu0 %v3435
      %v3638 = vpop.f32.mrb[0].mxu0
      %v3639 = vadd.f32 0.0, %v3638
      %v3640 = vpop.f32.mrb[0].mxu0
      %3641 = vmatprep.mubr.f32.mxu0 0.0
      %3642 = vmatmul.mubr.f32.gmra.mrb[0].mxu0 %v3438
      %v3643 = vpop.f32.mrb[0].mxu0
      %v3644 = vadd.f32 0.0, %v3643
      %v3645 = vpop.f32.mrb[0].mxu0
      %3646 = vmatprep.mubr.f32.mxu0 0.0
      %3647 = vmatmul.mubr.f32.gmra.mrb[0].mxu0 %v3441
      %v3648 = vpop.f32.mrb[0].mxu0
      %v3649 = vadd.f32 0.0, %v3648
      %v3650 = vpop.f32.mrb[0].mxu0
      %3651 = vmatprep.mubr.f32.mxu0 0.0
      %3652 = vmatmul.mubr.f32.gmra.mrb[0].mxu0 %v3444
      %v3653 = vpop.f32.mrb[0].mxu0
      %v3654 = vadd.f32 0.0, %v3653
      %v3655 = vpop.f32.mrb[0].mxu0
      %3656 = vmatprep.mubr.f32.mxu0 0.0
      %3657 = vmatmul.mubr.f32.gmra.mrb[0].mxu0 %v3447
      %v3658 = vpop.f32.mrb[0].mxu0
      %v3659 = vadd.f32 0.0, %v3658
      %v3660 = vpop.f32.mrb[0].mxu0
      %3661 = vmatprep.mubr.f32.mxu0 0.0
      %3662 = vmatmul.mubr.f32.gmra.mrb[0].mxu0 %v3450
      %v3663 = vpop.f32.mrb[0].mxu0
      %v3664 = vadd.f32 0.0, %v3663
      %v3665 = vpop.f32.mrb[0].mxu0
      %3666 = vmatprep.mubr.f32.mxu0 0.0
      %3667 = vmatmul.mubr.f32.gmra.mrb[0].mxu0 %v3453
      %v3668 = vpop.f32.mrb[0].mxu0
      %v3669 = vadd.f32 0.0, %v3668
      %v3670 = vpop.f32.mrb[0].mxu0
      %3671 = vmatprep.mubr.f32.mxu0 0.0
      %3672 = vmatmul.mubr.f32.gmra.mrb[0].mxu0 %v3456
      %v3673 = vpop.f32.mrb[0].mxu0
      %v3674 = vadd.f32 0.0, %v3673
      %v3675 = vpop.f32.mrb[0].mxu0
      %3676 = vmatprep.mubr.f32.mxu0 0.0
      %3677 = vmatmul.mubr.f32.gmra.mrb[0].mxu0 %v3459
      %v3678 = vpop.f32.mrb[0].mxu0
      %v3679 = vadd.f32 0.0, %v3678
      %v3680 = vpop.f32.mrb[0].mxu0
      %3681 = vmatprep.mubr.f32.mxu0 0.0
      %3682 = vmatmul.mubr.f32.gmra.mrb[0].mxu0 %v3462
      %v3683 = vpop.f32.mrb[0].mxu0
      %v3684 = vadd.f32 0.0, %v3683
      %v3685 = vpop.f32.mrb[0].mxu0
      %3686 = vmatprep.mubr.f32.mxu0 0.0
      %3687 = vmatmul.mubr.f32.gmra.mrb[0].mxu0 %v3465
      %v3688 = vpop.f32.mrb[0].mxu0
      %v3689 = vadd.f32 0.0, %v3688
      %v3690 = vpop.f32.mrb[0].mxu0
      %3691 = vdwg.mxu0
      %s3692 = scalar_lea.vmem %s258, 256
      %3693 = vst.msk [vmem:[%s3692] sm:$0xff] %vm1610, %v3534
      %3694 = vst.msk [vmem:[%s3692 + $0x8] sm:$0xff] %vm1610, %v3539
      %3695 = vst.msk [vmem:[%s3692 + $0x10] sm:$0xff] %vm1610, %v3544
      %3696 = vst.msk [vmem:[%s3692 + $0x18] sm:$0xff] %vm1610, %v3549
      %3697 = vst.msk [vmem:[%s3692 + $0x20] sm:$0xff] %vm1610, %v3554
      %3698 = vst.msk [vmem:[%s3692 + $0x28] sm:$0xff] %vm1610, %v3559
      %3699 = vst.msk [vmem:[%s3692 + $0x30] sm:$0xff] %vm1610, %v3564
      %3700 = vst.msk [vmem:[%s3692 + $0x38] sm:$0xff] %vm1610, %v3569
      %3701 = vst.msk [vmem:[%s3692 + $0x40] sm:$0xff] %vm1610, %v3574
      %3702 = vst.msk [vmem:[%s3692 + $0x48] sm:$0xff] %vm1610, %v3579
      %3703 = vst.msk [vmem:[%s3692 + $0x50] sm:$0xff] %vm1610, %v3584
      %3704 = vst.msk [vmem:[%s3692 + $0x58] sm:$0xff] %vm1610, %v3589
      %3705 = vst.msk [vmem:[%s3692 + $0x60] sm:$0xff] %vm1610, %v3594
      %3706 = vst.msk [vmem:[%s3692 + $0x68] sm:$0xff] %vm1610, %v3599
      %3707 = vst.msk [vmem:[%s3692 + $0x70] sm:$0xff] %vm1610, %v3604
      %3708 = vst.msk [vmem:[%s3692 + $0x78] sm:$0xff] %vm1610, %v3609
      %3709 = vst.msk [vmem:[%s3692 + $0x80] sm:$0xff] %vm1610, %v3614
      %3710 = vst.msk [vmem:[%s3692 + $0x88] sm:$0xff] %vm1610, %v3619
      %3711 = vst.msk [vmem:[%s3692 + $0x90] sm:$0xff] %vm1610, %v3624
      %3712 = vst.msk [vmem:[%s3692 + $0x98] sm:$0xff] %vm1610, %v3629
      %3713 = vst.msk [vmem:[%s3692 + $0xa0] sm:$0xff] %vm1610, %v3634
      %3714 = vst.msk [vmem:[%s3692 + $0xa8] sm:$0xff] %vm1610, %v3639
      %3715 = vst.msk [vmem:[%s3692 + $0xb0] sm:$0xff] %vm1610, %v3644
      %3716 = vst.msk [vmem:[%s3692 + $0xb8] sm:$0xff] %vm1610, %v3649
      %3717 = vst.msk [vmem:[%s3692 + $0xc0] sm:$0xff] %vm1610, %v3654
      %3718 = vst.msk [vmem:[%s3692 + $0xc8] sm:$0xff] %vm1610, %v3659
      %3719 = vst.msk [vmem:[%s3692 + $0xd0] sm:$0xff] %vm1610, %v3664
      %3720 = vst.msk [vmem:[%s3692 + $0xd8] sm:$0xff] %vm1610, %v3669
      %3721 = vst.msk [vmem:[%s3692 + $0xe0] sm:$0xff] %vm1610, %v3674
      %3722 = vst.msk [vmem:[%s3692 + $0xe8] sm:$0xff] %vm1610, %v3679
      %3723 = vst.msk [vmem:[%s3692 + $0xf0] sm:$0xff] %vm1610, %v3684
      %3724 = vst.msk [vmem:[%s3692 + $0xf8] sm:$0xff] %vm1610, %v3689
      %v3725 = vsel %vm1610, %v3534, 0.0
      %v3726 = vsel %vm1610, %v3539, 0.0
      %v3727 = vadd.f32 %v3725, %v3726
      %v3728 = vsel %vm1610, %v3544, 0.0
      %v3729 = vadd.f32 %v3727, %v3728
      %v3730 = vsel %vm1610, %v3549, 0.0
      %v3731 = vadd.f32 %v3729, %v3730
      %v3732 = vsel %vm1610, %v3554, 0.0
      %v3733 = vadd.f32 %v3731, %v3732
      %v3734 = vsel %vm1610, %v3559, 0.0
      %v3735 = vadd.f32 %v3733, %v3734
      %v3736 = vsel %vm1610, %v3564, 0.0
      %v3737 = vadd.f32 %v3735, %v3736
      %v3738 = vsel %vm1610, %v3569, 0.0
      %v3739 = vadd.f32 %v3737, %v3738
      %v3740 = vsel %vm1610, %v3574, 0.0
      %v3741 = vadd.f32 %v3739, %v3740
      %v3742 = vsel %vm1610, %v3579, 0.0
      %v3743 = vadd.f32 %v3741, %v3742
      %v3744 = vsel %vm1610, %v3584, 0.0
      %v3745 = vadd.f32 %v3743, %v3744
      %v3746 = vsel %vm1610, %v3589, 0.0
      %v3747 = vadd.f32 %v3745, %v3746
      %v3748 = vsel %vm1610, %v3594, 0.0
      %v3749 = vadd.f32 %v3747, %v3748
      %v3750 = vsel %vm1610, %v3599, 0.0
      %v3751 = vadd.f32 %v3749, %v3750
      %v3752 = vsel %vm1610, %v3604, 0.0
      %v3753 = vadd.f32 %v3751, %v3752
      %v3754 = vsel %vm1610, %v3609, 0.0
      %v3755 = vadd.f32 %v3753, %v3754
      %v3756 = vsel %vm1610, %v3614, 0.0
      %v3757 = vadd.f32 %v3755, %v3756
      %v3758 = vsel %vm1610, %v3619, 0.0
      %v3759 = vadd.f32 %v3757, %v3758
      %v3760 = vsel %vm1610, %v3624, 0.0
      %v3761 = vadd.f32 %v3759, %v3760
      %v3762 = vsel %vm1610, %v3629, 0.0
      %v3763 = vadd.f32 %v3761, %v3762
      %v3764 = vsel %vm1610, %v3634, 0.0
      %v3765 = vadd.f32 %v3763, %v3764
      %v3766 = vsel %vm1610, %v3639, 0.0
      %v3767 = vadd.f32 %v3765, %v3766
      %v3768 = vsel %vm1610, %v3644, 0.0
      %v3769 = vadd.f32 %v3767, %v3768
      %v3770 = vsel %vm1610, %v3649, 0.0
      %v3771 = vadd.f32 %v3769, %v3770
      %v3772 = vsel %vm1610, %v3654, 0.0
      %v3773 = vadd.f32 %v3771, %v3772
      %v3774 = vsel %vm1610, %v3659, 0.0
      %v3775 = vadd.f32 %v3773, %v3774
      %v3776 = vsel %vm1610, %v3664, 0.0
      %v3777 = vadd.f32 %v3775, %v3776
      %v3778 = vsel %vm1610, %v3669, 0.0
      %v3779 = vadd.f32 %v3777, %v3778
      %v3780 = vsel %vm1610, %v3674, 0.0
      %v3781 = vadd.f32 %v3779, %v3780
      %v3782 = vsel %vm1610, %v3679, 0.0
      %v3783 = vadd.f32 %v3781, %v3782
      %v3784 = vsel %vm1610, %v3684, 0.0
      %v3785 = vadd.f32 %v3783, %v3784
      %v3786 = vsel %vm1610, %v3689, 0.0
      %v3787 = vadd.f32 %v3785, %v3786
      %v3788 = vrot.slane %v3787, 4
      %v3789 = vadd.f32 %v3787, %v3788
      %v3790 = vrot.slane %v3789, 2
      %v3791 = vadd.f32 %v3789, %v3790
      %v3792 = vrot.slane %v3791, 1
      %v3793 = vadd.f32 %v3791, %v3792
      %v3794 = vadd.f32 %v2273, %v3793
      %v3795 = vmul.f32 %v3534, %v3534
      %v3796 = vmul.f32 %v3539, %v3539
      %v3797 = vmul.f32 %v3544, %v3544
      %v3798 = vmul.f32 %v3549, %v3549
      %v3799 = vmul.f32 %v3554, %v3554
      %v3800 = vmul.f32 %v3559, %v3559
      %v3801 = vmul.f32 %v3564, %v3564
      %v3802 = vmul.f32 %v3569, %v3569
      %v3803 = vmul.f32 %v3574, %v3574
      %v3804 = vmul.f32 %v3579, %v3579
      %v3805 = vmul.f32 %v3584, %v3584
      %v3806 = vmul.f32 %v3589, %v3589
      %v3807 = vmul.f32 %v3594, %v3594
      %v3808 = vmul.f32 %v3599, %v3599
      %v3809 = vmul.f32 %v3604, %v3604
      %v3810 = vmul.f32 %v3609, %v3609
      %v3811 = vmul.f32 %v3614, %v3614
      %v3812 = vmul.f32 %v3619, %v3619
      %v3813 = vmul.f32 %v3624, %v3624
      %v3814 = vmul.f32 %v3629, %v3629
      %v3815 = vmul.f32 %v3634, %v3634
      %v3816 = vmul.f32 %v3639, %v3639
      %v3817 = vmul.f32 %v3644, %v3644
      %v3818 = vmul.f32 %v3649, %v3649
      %v3819 = vmul.f32 %v3654, %v3654
      %v3820 = vmul.f32 %v3659, %v3659
      %v3821 = vmul.f32 %v3664, %v3664
      %v3822 = vmul.f32 %v3669, %v3669
      %v3823 = vmul.f32 %v3674, %v3674
      %v3824 = vmul.f32 %v3679, %v3679
      %v3825 = vmul.f32 %v3684, %v3684
      %v3826 = vmul.f32 %v3689, %v3689
      %v3827 = vsel %vm1610, %v3795, 0.0
      %v3828 = vsel %vm1610, %v3796, 0.0
      %v3829 = vadd.f32 %v3827, %v3828
      %v3830 = vsel %vm1610, %v3797, 0.0
      %v3831 = vadd.f32 %v3829, %v3830
      %v3832 = vsel %vm1610, %v3798, 0.0
      %v3833 = vadd.f32 %v3831, %v3832
      %v3834 = vsel %vm1610, %v3799, 0.0
      %v3835 = vadd.f32 %v3833, %v3834
      %v3836 = vsel %vm1610, %v3800, 0.0
      %v3837 = vadd.f32 %v3835, %v3836
      %v3838 = vsel %vm1610, %v3801, 0.0
      %v3839 = vadd.f32 %v3837, %v3838
      %v3840 = vsel %vm1610, %v3802, 0.0
      %v3841 = vadd.f32 %v3839, %v3840
      %v3842 = vsel %vm1610, %v3803, 0.0
      %v3843 = vadd.f32 %v3841, %v3842
      %v3844 = vsel %vm1610, %v3804, 0.0
      %v3845 = vadd.f32 %v3843, %v3844
      %v3846 = vsel %vm1610, %v3805, 0.0
      %v3847 = vadd.f32 %v3845, %v3846
      %v3848 = vsel %vm1610, %v3806, 0.0
      %v3849 = vadd.f32 %v3847, %v3848
      %v3850 = vsel %vm1610, %v3807, 0.0
      %v3851 = vadd.f32 %v3849, %v3850
      %v3852 = vsel %vm1610, %v3808, 0.0
      %v3853 = vadd.f32 %v3851, %v3852
      %v3854 = vsel %vm1610, %v3809, 0.0
      %v3855 = vadd.f32 %v3853, %v3854
      %v3856 = vsel %vm1610, %v3810, 0.0
      %v3857 = vadd.f32 %v3855, %v3856
      %v3858 = vsel %vm1610, %v3811, 0.0
      %v3859 = vadd.f32 %v3857, %v3858
      %v3860 = vsel %vm1610, %v3812, 0.0
      %v3861 = vadd.f32 %v3859, %v3860
      %v3862 = vsel %vm1610, %v3813, 0.0
      %v3863 = vadd.f32 %v3861, %v3862
      %v3864 = vsel %vm1610, %v3814, 0.0
      %v3865 = vadd.f32 %v3863, %v3864
      %v3866 = vsel %vm1610, %v3815, 0.0
      %v3867 = vadd.f32 %v3865, %v3866
      %v3868 = vsel %vm1610, %v3816, 0.0
      %v3869 = vadd.f32 %v3867, %v3868
      %v3870 = vsel %vm1610, %v3817, 0.0
      %v3871 = vadd.f32 %v3869, %v3870
      %v3872 = vsel %vm1610, %v3818, 0.0
      %v3873 = vadd.f32 %v3871, %v3872
      %v3874 = vsel %vm1610, %v3819, 0.0
      %v3875 = vadd.f32 %v3873, %v3874
      %v3876 = vsel %vm1610, %v3820, 0.0
      %v3877 = vadd.f32 %v3875, %v3876
      %v3878 = vsel %vm1610, %v3821, 0.0
      %v3879 = vadd.f32 %v3877, %v3878
      %v3880 = vsel %vm1610, %v3822, 0.0
      %v3881 = vadd.f32 %v3879, %v3880
      %v3882 = vsel %vm1610, %v3823, 0.0
      %v3883 = vadd.f32 %v3881, %v3882
      %v3884 = vsel %vm1610, %v3824, 0.0
      %v3885 = vadd.f32 %v3883, %v3884
      %v3886 = vsel %vm1610, %v3825, 0.0
      %v3887 = vadd.f32 %v3885, %v3886
      %v3888 = vsel %vm1610, %v3826, 0.0
      %v3889 = vadd.f32 %v3887, %v3888
      %v3890 = vrot.slane %v3889, 4
      %v3891 = vadd.f32 %v3889, %v3890
      %v3892 = vrot.slane %v3891, 2
      %v3893 = vadd.f32 %v3891, %v3892
      %v3894 = vrot.slane %v3893, 1
      %v3895 = vadd.f32 %v3893, %v3894
      %v3896 = vadd.f32 %v2375, %v3895
      %v3897 = vld [vmem:[%s359] sm:$0xff]
      %v3898 = vld [vmem:[%s359 + $0x8] sm:$0xff]
      %v3899 = vld [vmem:[%s359 + $0x18] sm:$0xff]
      %v3900 = vld [vmem:[%s359 + $0x20] sm:$0xff]
      %v3901 = vld [vmem:[%s359 + $0x30] sm:$0xff]
      %v3902 = vld [vmem:[%s359 + $0x38] sm:$0xff]
      %v3903 = vld [vmem:[%s359 + $0x48] sm:$0xff]
      %v3904 = vld [vmem:[%s359 + $0x50] sm:$0xff]
      %v3905 = vld [vmem:[%s359 + $0x60] sm:$0xff]
      %v3906 = vld [vmem:[%s359 + $0x68] sm:$0xff]
      %v3907 = vld [vmem:[%s359 + $0x78] sm:$0xff]
      %v3908 = vld [vmem:[%s359 + $0x80] sm:$0xff]
      %v3909 = vld [vmem:[%s359 + $0x90] sm:$0xff]
      %v3910 = vld [vmem:[%s359 + $0x98] sm:$0xff]
      %v3911 = vld [vmem:[%s359 + $0xa8] sm:$0xff]
      %v3912 = vld [vmem:[%s359 + $0xb0] sm:$0xff]
      %v3913 = vld [vmem:[%s359 + $0xc0] sm:$0xff]
      %v3914 = vld [vmem:[%s359 + $0xc8] sm:$0xff]
      %v3915 = vld [vmem:[%s359 + $0xd8] sm:$0xff]
      %v3916 = vld [vmem:[%s359 + $0xe0] sm:$0xff]
      %v3917 = vld [vmem:[%s359 + $0xf0] sm:$0xff]
      %v3918 = vld [vmem:[%s359 + $0xf8] sm:$0xff]
      %v3919 = vld [vmem:[%s359 + $0x108] sm:$0xff]
      %v3920 = vld [vmem:[%s359 + $0x110] sm:$0xff]
      %v3921 = vld [vmem:[%s359 + $0x120] sm:$0xff]
      %v3922 = vld [vmem:[%s359 + $0x128] sm:$0xff]
      %v3923 = vld [vmem:[%s359 + $0x138] sm:$0xff]
      %v3924 = vld [vmem:[%s359 + $0x140] sm:$0xff]
      %v3925 = vld [vmem:[%s359 + $0x150] sm:$0xff]
      %v3926 = vld [vmem:[%s359 + $0x158] sm:$0xff]
      %v3927 = vld [vmem:[%s359 + $0x168] sm:$0xff]
      %v3928 = vld [vmem:[%s359 + $0x170] sm:$0xff]
      %v3929 = vld [vmem:[%s359 + $0x1] sm:$0xff]
      %v3930 = vld [vmem:[%s359 + $0x9] sm:$0xff]
      %v3931 = vld [vmem:[%s359 + $0x19] sm:$0xff]
      %v3932 = vld [vmem:[%s359 + $0x21] sm:$0xff]
      %v3933 = vld [vmem:[%s359 + $0x31] sm:$0xff]
      %v3934 = vld [vmem:[%s359 + $0x39] sm:$0xff]
      %v3935 = vld [vmem:[%s359 + $0x49] sm:$0xff]
      %v3936 = vld [vmem:[%s359 + $0x51] sm:$0xff]
      %v3937 = vld [vmem:[%s359 + $0x61] sm:$0xff]
      %v3938 = vld [vmem:[%s359 + $0x69] sm:$0xff]
      %v3939 = vld [vmem:[%s359 + $0x79] sm:$0xff]
      %v3940 = vld [vmem:[%s359 + $0x81] sm:$0xff]
      %v3941 = vld [vmem:[%s359 + $0x91] sm:$0xff]
      %v3942 = vld [vmem:[%s359 + $0x99] sm:$0xff]
      %v3943 = vld [vmem:[%s359 + $0xa9] sm:$0xff]
      %v3944 = vld [vmem:[%s359 + $0xb1] sm:$0xff]
      %v3945 = vld [vmem:[%s359 + $0xc1] sm:$0xff]
      %v3946 = vld [vmem:[%s359 + $0xc9] sm:$0xff]
      %v3947 = vld [vmem:[%s359 + $0xd9] sm:$0xff]
      %v3948 = vld [vmem:[%s359 + $0xe1] sm:$0xff]
      %v3949 = vld [vmem:[%s359 + $0xf1] sm:$0xff]
      %v3950 = vld [vmem:[%s359 + $0xf9] sm:$0xff]
      %v3951 = vld [vmem:[%s359 + $0x109] sm:$0xff]
      %v3952 = vld [vmem:[%s359 + $0x111] sm:$0xff]
      %v3953 = vld [vmem:[%s359 + $0x121] sm:$0xff]
      %v3954 = vld [vmem:[%s359 + $0x129] sm:$0xff]
      %v3955 = vld [vmem:[%s359 + $0x139] sm:$0xff]
      %v3956 = vld [vmem:[%s359 + $0x141] sm:$0xff]
      %v3957 = vld [vmem:[%s359 + $0x151] sm:$0xff]
      %v3958 = vld [vmem:[%s359 + $0x159] sm:$0xff]
      %v3959 = vld [vmem:[%s359 + $0x169] sm:$0xff]
      %v3960 = vld [vmem:[%s359 + $0x171] sm:$0xff]
      %v3961 = vld [vmem:[%s359 + $0x2] sm:$0xff]
      %v3962 = vld [vmem:[%s359 + $0xa] sm:$0xff]
      %v3963 = vld [vmem:[%s359 + $0x1a] sm:$0xff]
      %v3964 = vld [vmem:[%s359 + $0x22] sm:$0xff]
      %v3965 = vld [vmem:[%s359 + $0x32] sm:$0xff]
      %v3966 = vld [vmem:[%s359 + $0x3a] sm:$0xff]
      %v3967 = vld [vmem:[%s359 + $0x4a] sm:$0xff]
      %v3968 = vld [vmem:[%s359 + $0x52] sm:$0xff]
      %v3969 = vld [vmem:[%s359 + $0x62] sm:$0xff]
      %v3970 = vld [vmem:[%s359 + $0x6a] sm:$0xff]
      %v3971 = vld [vmem:[%s359 + $0x7a] sm:$0xff]
      %v3972 = vld [vmem:[%s359 + $0x82] sm:$0xff]
      %v3973 = vld [vmem:[%s359 + $0x92] sm:$0xff]
      %v3974 = vld [vmem:[%s359 + $0x9a] sm:$0xff]
      %v3975 = vld [vmem:[%s359 + $0xaa] sm:$0xff]
      %v3976 = vld [vmem:[%s359 + $0xb2] sm:$0xff]
      %v3977 = vld [vmem:[%s359 + $0xc2] sm:$0xff]
      %v3978 = vld [vmem:[%s359 + $0xca] sm:$0xff]
      %v3979 = vld [vmem:[%s359 + $0xda] sm:$0xff]
      %v3980 = vld [vmem:[%s359 + $0xe2] sm:$0xff]
      %v3981 = vld [vmem:[%s359 + $0xf2] sm:$0xff]
      %v3982 = vld [vmem:[%s359 + $0xfa] sm:$0xff]
      %v3983 = vld [vmem:[%s359 + $0x10a] sm:$0xff]
      %v3984 = vld [vmem:[%s359 + $0x112] sm:$0xff]
      %v3985 = vld [vmem:[%s359 + $0x122] sm:$0xff]
      %v3986 = vld [vmem:[%s359 + $0x12a] sm:$0xff]
      %v3987 = vld [vmem:[%s359 + $0x13a] sm:$0xff]
      %v3988 = vld [vmem:[%s359 + $0x142] sm:$0xff]
      %v3989 = vld [vmem:[%s359 + $0x152] sm:$0xff]
      %v3990 = vld [vmem:[%s359 + $0x15a] sm:$0xff]
      %v3991 = vld [vmem:[%s359 + $0x16a] sm:$0xff]
      %v3992 = vld [vmem:[%s359 + $0x172] sm:$0xff]
      %v3993 = vld [vmem:[%s456] sm:$0xff]
      %v3994 = vld [vmem:[%s456 + $0x8] sm:$0xff]
      %v3995 = vld [vmem:[%s456 + $0x18] sm:$0xff]
      %v3996 = vld [vmem:[%s456 + $0x20] sm:$0xff]
      %v3997 = vld [vmem:[%s456 + $0x30] sm:$0xff]
      %v3998 = vld [vmem:[%s456 + $0x38] sm:$0xff]
      %v3999 = vld [vmem:[%s456 + $0x48] sm:$0xff]
      %v4000 = vld [vmem:[%s456 + $0x50] sm:$0xff]
      %v4001 = vld [vmem:[%s456 + $0x60] sm:$0xff]
      %v4002 = vld [vmem:[%s456 + $0x68] sm:$0xff]
      %v4003 = vld [vmem:[%s456 + $0x78] sm:$0xff]
      %v4004 = vld [vmem:[%s456 + $0x80] sm:$0xff]
      %v4005 = vld [vmem:[%s456 + $0x90] sm:$0xff]
      %v4006 = vld [vmem:[%s456 + $0x98] sm:$0xff]
      %v4007 = vld [vmem:[%s456 + $0xa8] sm:$0xff]
      %v4008 = vld [vmem:[%s456 + $0xb0] sm:$0xff]
      %v4009 = vld [vmem:[%s456 + $0xc0] sm:$0xff]
      %v4010 = vld [vmem:[%s456 + $0xc8] sm:$0xff]
      %v4011 = vld [vmem:[%s456 + $0xd8] sm:$0xff]
      %v4012 = vld [vmem:[%s456 + $0xe0] sm:$0xff]
      %v4013 = vld [vmem:[%s456 + $0xf0] sm:$0xff]
      %v4014 = vld [vmem:[%s456 + $0xf8] sm:$0xff]
      %v4015 = vld [vmem:[%s456 + $0x108] sm:$0xff]
      %v4016 = vld [vmem:[%s456 + $0x110] sm:$0xff]
      %v4017 = vld [vmem:[%s456 + $0x120] sm:$0xff]
      %v4018 = vld [vmem:[%s456 + $0x128] sm:$0xff]
      %v4019 = vld [vmem:[%s456 + $0x138] sm:$0xff]
      %v4020 = vld [vmem:[%s456 + $0x140] sm:$0xff]
      %v4021 = vld [vmem:[%s456 + $0x150] sm:$0xff]
      %v4022 = vld [vmem:[%s456 + $0x158] sm:$0xff]
      %v4023 = vld [vmem:[%s456 + $0x168] sm:$0xff]
      %v4024 = vld [vmem:[%s456 + $0x170] sm:$0xff]
      %v4025 = vld [vmem:[%s456 + $0x1] sm:$0xff]
      %v4026 = vld [vmem:[%s456 + $0x9] sm:$0xff]
      %v4027 = vld [vmem:[%s456 + $0x19] sm:$0xff]
      %v4028 = vld [vmem:[%s456 + $0x21] sm:$0xff]
      %v4029 = vld [vmem:[%s456 + $0x31] sm:$0xff]
      %v4030 = vld [vmem:[%s456 + $0x39] sm:$0xff]
      %v4031 = vld [vmem:[%s456 + $0x49] sm:$0xff]
      %v4032 = vld [vmem:[%s456 + $0x51] sm:$0xff]
      %v4033 = vld [vmem:[%s456 + $0x61] sm:$0xff]
      %v4034 = vld [vmem:[%s456 + $0x69] sm:$0xff]
      %v4035 = vld [vmem:[%s456 + $0x79] sm:$0xff]
      %v4036 = vld [vmem:[%s456 + $0x81] sm:$0xff]
      %v4037 = vld [vmem:[%s456 + $0x91] sm:$0xff]
      %v4038 = vld [vmem:[%s456 + $0x99] sm:$0xff]
      %v4039 = vld [vmem:[%s456 + $0xa9] sm:$0xff]
      %v4040 = vld [vmem:[%s456 + $0xb1] sm:$0xff]
      %v4041 = vld [vmem:[%s456 + $0xc1] sm:$0xff]
      %v4042 = vld [vmem:[%s456 + $0xc9] sm:$0xff]
      %v4043 = vld [vmem:[%s456 + $0xd9] sm:$0xff]
      %v4044 = vld [vmem:[%s456 + $0xe1] sm:$0xff]
      %v4045 = vld [vmem:[%s456 + $0xf1] sm:$0xff]
      %v4046 = vld [vmem:[%s456 + $0xf9] sm:$0xff]
      %v4047 = vld [vmem:[%s456 + $0x109] sm:$0xff]
      %v4048 = vld [vmem:[%s456 + $0x111] sm:$0xff]
      %v4049 = vld [vmem:[%s456 + $0x121] sm:$0xff]
      %v4050 = vld [vmem:[%s456 + $0x129] sm:$0xff]
      %v4051 = vld [vmem:[%s456 + $0x139] sm:$0xff]
      %v4052 = vld [vmem:[%s456 + $0x141] sm:$0xff]
      %v4053 = vld [vmem:[%s456 + $0x151] sm:$0xff]
      %v4054 = vld [vmem:[%s456 + $0x159] sm:$0xff]
      %v4055 = vld [vmem:[%s456 + $0x169] sm:$0xff]
      %v4056 = vld [vmem:[%s456 + $0x171] sm:$0xff]
      %v4057 = vld [vmem:[%s456 + $0x2] sm:$0xff]
      %v4058 = vld [vmem:[%s456 + $0xa] sm:$0xff]
      %v4059 = vld [vmem:[%s456 + $0x1a] sm:$0xff]
      %v4060 = vld [vmem:[%s456 + $0x22] sm:$0xff]
      %v4061 = vld [vmem:[%s456 + $0x32] sm:$0xff]
      %v4062 = vld [vmem:[%s456 + $0x3a] sm:$0xff]
      %v4063 = vld [vmem:[%s456 + $0x4a] sm:$0xff]
      %v4064 = vld [vmem:[%s456 + $0x52] sm:$0xff]
      %v4065 = vld [vmem:[%s456 + $0x62] sm:$0xff]
      %v4066 = vld [vmem:[%s456 + $0x6a] sm:$0xff]
      %v4067 = vld [vmem:[%s456 + $0x7a] sm:$0xff]
      %v4068 = vld [vmem:[%s456 + $0x82] sm:$0xff]
      %v4069 = vld [vmem:[%s456 + $0x92] sm:$0xff]
      %v4070 = vld [vmem:[%s456 + $0x9a] sm:$0xff]
      %v4071 = vld [vmem:[%s456 + $0xaa] sm:$0xff]
      %v4072 = vld [vmem:[%s456 + $0xb2] sm:$0xff]
      %v4073 = vld [vmem:[%s456 + $0xc2] sm:$0xff]
      %v4074 = vld [vmem:[%s456 + $0xca] sm:$0xff]
      %v4075 = vld [vmem:[%s456 + $0xda] sm:$0xff]
      %v4076 = vld [vmem:[%s456 + $0xe2] sm:$0xff]
      %v4077 = vld [vmem:[%s456 + $0xf2] sm:$0xff]
      %v4078 = vld [vmem:[%s456 + $0xfa] sm:$0xff]
      %v4079 = vld [vmem:[%s456 + $0x10a] sm:$0xff]
      %v4080 = vld [vmem:[%s456 + $0x112] sm:$0xff]
      %v4081 = vld [vmem:[%s456 + $0x122] sm:$0xff]
      %v4082 = vld [vmem:[%s456 + $0x12a] sm:$0xff]
      %v4083 = vld [vmem:[%s456 + $0x13a] sm:$0xff]
      %v4084 = vld [vmem:[%s456 + $0x142] sm:$0xff]
      %v4085 = vld [vmem:[%s456 + $0x152] sm:$0xff]
      %v4086 = vld [vmem:[%s456 + $0x15a] sm:$0xff]
      %v4087 = vld [vmem:[%s456 + $0x16a] sm:$0xff]
      %v4088 = vld [vmem:[%s456 + $0x172] sm:$0xff]
      %4121 = vrot.lane.b32.xlu0 %v3929, 4
      %v4122 = vpop.permute.xlu0 %4121
      %4123 = vrot.lane.b32.xlu0 %v3930, 4
      %v4124 = vpop.permute.xlu0 %4123
      %4125 = vrot.lane.b32.xlu0 %v3931, 4
      %v4126 = vpop.permute.xlu0 %4125
      %4127 = vrot.lane.b32.xlu0 %v3932, 4
      %v4128 = vpop.permute.xlu0 %4127
      %4129 = vrot.lane.b32.xlu0 %v3933, 4
      %v4130 = vpop.permute.xlu0 %4129
      %4131 = vrot.lane.b32.xlu0 %v3934, 4
      %v4132 = vpop.permute.xlu0 %4131
      %4133 = vrot.lane.b32.xlu0 %v3935, 4
      %v4134 = vpop.permute.xlu0 %4133
      %4135 = vrot.lane.b32.xlu0 %v3936, 4
      %v4136 = vpop.permute.xlu0 %4135
      %4137 = vrot.lane.b32.xlu0 %v3937, 4
      %v4138 = vpop.permute.xlu0 %4137
      %4139 = vrot.lane.b32.xlu0 %v3938, 4
      %v4140 = vpop.permute.xlu0 %4139
      %4141 = vrot.lane.b32.xlu0 %v3939, 4
      %v4142 = vpop.permute.xlu0 %4141
      %4143 = vrot.lane.b32.xlu0 %v3940, 4
      %v4144 = vpop.permute.xlu0 %4143
      %4145 = vrot.lane.b32.xlu0 %v3941, 4
      %v4146 = vpop.permute.xlu0 %4145
      %4147 = vrot.lane.b32.xlu0 %v3942, 4
      %v4148 = vpop.permute.xlu0 %4147
      %4149 = vrot.lane.b32.xlu0 %v3943, 4
      %v4150 = vpop.permute.xlu0 %4149
      %4151 = vrot.lane.b32.xlu0 %v3944, 4
      %v4152 = vpop.permute.xlu0 %4151
      %4153 = vrot.lane.b32.xlu0 %v3945, 4
      %v4154 = vpop.permute.xlu0 %4153
      %4155 = vrot.lane.b32.xlu0 %v3946, 4
      %v4156 = vpop.permute.xlu0 %4155
      %4157 = vrot.lane.b32.xlu0 %v3947, 4
      %v4158 = vpop.permute.xlu0 %4157
      %4159 = vrot.lane.b32.xlu0 %v3948, 4
      %v4160 = vpop.permute.xlu0 %4159
      %4161 = vrot.lane.b32.xlu0 %v3949, 4
      %v4162 = vpop.permute.xlu0 %4161
      %4163 = vrot.lane.b32.xlu0 %v3950, 4
      %v4164 = vpop.permute.xlu0 %4163
      %4165 = vrot.lane.b32.xlu0 %v3951, 4
      %v4166 = vpop.permute.xlu0 %4165
      %4167 = vrot.lane.b32.xlu0 %v3952, 4
      %v4168 = vpop.permute.xlu0 %4167
      %4169 = vrot.lane.b32.xlu0 %v3953, 4
      %v4170 = vpop.permute.xlu0 %4169
      %4171 = vrot.lane.b32.xlu0 %v3954, 4
      %v4172 = vpop.permute.xlu0 %4171
      %4173 = vrot.lane.b32.xlu0 %v3955, 4
      %v4174 = vpop.permute.xlu0 %4173
      %4175 = vrot.lane.b32.xlu0 %v3956, 4
      %v4176 = vpop.permute.xlu0 %4175
      %4177 = vrot.lane.b32.xlu0 %v3957, 4
      %v4178 = vpop.permute.xlu0 %4177
      %4179 = vrot.lane.b32.xlu0 %v3958, 4
      %v4180 = vpop.permute.xlu0 %4179
      %4181 = vrot.lane.b32.xlu0 %v3959, 4
      %v4182 = vpop.permute.xlu0 %4181
      %4183 = vrot.lane.b32.xlu0 %v3960, 4
      %v4184 = vpop.permute.xlu0 %4183
      %4249 = vrot.lane.b32.xlu0 %v3961, 8
      %v4250 = vpop.permute.xlu0 %4249
      %4251 = vrot.lane.b32.xlu0 %v3962, 8
      %v4252 = vpop.permute.xlu0 %4251
      %4253 = vrot.lane.b32.xlu0 %v3963, 8
      %v4254 = vpop.permute.xlu0 %4253
      %4255 = vrot.lane.b32.xlu0 %v3964, 8
      %v4256 = vpop.permute.xlu0 %4255
      %4257 = vrot.lane.b32.xlu0 %v3965, 8
      %v4258 = vpop.permute.xlu0 %4257
      %4259 = vrot.lane.b32.xlu0 %v3966, 8
      %v4260 = vpop.permute.xlu0 %4259
      %4261 = vrot.lane.b32.xlu0 %v3967, 8
      %v4262 = vpop.permute.xlu0 %4261
      %4263 = vrot.lane.b32.xlu0 %v3968, 8
      %v4264 = vpop.permute.xlu0 %4263
      %4265 = vrot.lane.b32.xlu0 %v3969, 8
      %v4266 = vpop.permute.xlu0 %4265
      %4267 = vrot.lane.b32.xlu0 %v3970, 8
      %v4268 = vpop.permute.xlu0 %4267
      %4269 = vrot.lane.b32.xlu0 %v3971, 8
      %v4270 = vpop.permute.xlu0 %4269
      %4271 = vrot.lane.b32.xlu0 %v3972, 8
      %v4272 = vpop.permute.xlu0 %4271
      %4273 = vrot.lane.b32.xlu0 %v3973, 8
      %v4274 = vpop.permute.xlu0 %4273
      %4275 = vrot.lane.b32.xlu0 %v3974, 8
      %v4276 = vpop.permute.xlu0 %4275
      %4277 = vrot.lane.b32.xlu0 %v3975, 8
      %v4278 = vpop.permute.xlu0 %4277
      %4279 = vrot.lane.b32.xlu0 %v3976, 8
      %v4280 = vpop.permute.xlu0 %4279
      %4281 = vrot.lane.b32.xlu0 %v3977, 8
      %v4282 = vpop.permute.xlu0 %4281
      %4283 = vrot.lane.b32.xlu0 %v3978, 8
      %v4284 = vpop.permute.xlu0 %4283
      %4285 = vrot.lane.b32.xlu0 %v3979, 8
      %v4286 = vpop.permute.xlu0 %4285
      %4287 = vrot.lane.b32.xlu0 %v3980, 8
      %v4288 = vpop.permute.xlu0 %4287
      %4289 = vrot.lane.b32.xlu0 %v3981, 8
      %v4290 = vpop.permute.xlu0 %4289
      %4291 = vrot.lane.b32.xlu0 %v3982, 8
      %v4292 = vpop.permute.xlu0 %4291
      %4293 = vrot.lane.b32.xlu0 %v3983, 8
      %v4294 = vpop.permute.xlu0 %4293
      %4295 = vrot.lane.b32.xlu0 %v3984, 8
      %v4296 = vpop.permute.xlu0 %4295
      %4297 = vrot.lane.b32.xlu0 %v3985, 8
      %v4298 = vpop.permute.xlu0 %4297
      %4299 = vrot.lane.b32.xlu0 %v3986, 8
      %v4300 = vpop.permute.xlu0 %4299
      %4301 = vrot.lane.b32.xlu0 %v3987, 8
      %v4302 = vpop.permute.xlu0 %4301
      %4303 = vrot.lane.b32.xlu0 %v3988, 8
      %v4304 = vpop.permute.xlu0 %4303
      %4305 = vrot.lane.b32.xlu0 %v3989, 8
      %v4306 = vpop.permute.xlu0 %4305
      %4307 = vrot.lane.b32.xlu0 %v3990, 8
      %v4308 = vpop.permute.xlu0 %4307
      %4309 = vrot.lane.b32.xlu0 %v3991, 8
      %v4310 = vpop.permute.xlu0 %4309
      %4311 = vrot.lane.b32.xlu0 %v3992, 8
      %v4312 = vpop.permute.xlu0 %4311
      %4377 = vrot.lane.b32.xlu0 %v3993, 12
      %v4378 = vpop.permute.xlu0 %4377
      %4379 = vrot.lane.b32.xlu0 %v3994, 12
      %v4380 = vpop.permute.xlu0 %4379
      %4381 = vrot.lane.b32.xlu0 %v3995, 12
      %v4382 = vpop.permute.xlu0 %4381
      %4383 = vrot.lane.b32.xlu0 %v3996, 12
      %v4384 = vpop.permute.xlu0 %4383
      %4385 = vrot.lane.b32.xlu0 %v3997, 12
      %v4386 = vpop.permute.xlu0 %4385
      %4387 = vrot.lane.b32.xlu0 %v3998, 12
      %v4388 = vpop.permute.xlu0 %4387
      %4389 = vrot.lane.b32.xlu0 %v3999, 12
      %v4390 = vpop.permute.xlu0 %4389
      %4391 = vrot.lane.b32.xlu0 %v4000, 12
      %v4392 = vpop.permute.xlu0 %4391
      %4393 = vrot.lane.b32.xlu0 %v4001, 12
      %v4394 = vpop.permute.xlu0 %4393
      %4395 = vrot.lane.b32.xlu0 %v4002, 12
      %v4396 = vpop.permute.xlu0 %4395
      %4397 = vrot.lane.b32.xlu0 %v4003, 12
      %v4398 = vpop.permute.xlu0 %4397
      %4399 = vrot.lane.b32.xlu0 %v4004, 12
      %v4400 = vpop.permute.xlu0 %4399
      %4401 = vrot.lane.b32.xlu0 %v4005, 12
      %v4402 = vpop.permute.xlu0 %4401
      %4403 = vrot.lane.b32.xlu0 %v4006, 12
      %v4404 = vpop.permute.xlu0 %4403
      %4405 = vrot.lane.b32.xlu0 %v4007, 12
      %v4406 = vpop.permute.xlu0 %4405
      %4407 = vrot.lane.b32.xlu0 %v4008, 12
      %v4408 = vpop.permute.xlu0 %4407
      %4409 = vrot.lane.b32.xlu0 %v4009, 12
      %v4410 = vpop.permute.xlu0 %4409
      %4411 = vrot.lane.b32.xlu0 %v4010, 12
      %v4412 = vpop.permute.xlu0 %4411
      %4413 = vrot.lane.b32.xlu0 %v4011, 12
      %v4414 = vpop.permute.xlu0 %4413
      %4415 = vrot.lane.b32.xlu0 %v4012, 12
      %v4416 = vpop.permute.xlu0 %4415
      %4417 = vrot.lane.b32.xlu0 %v4013, 12
      %v4418 = vpop.permute.xlu0 %4417
      %4419 = vrot.lane.b32.xlu0 %v4014, 12
      %v4420 = vpop.permute.xlu0 %4419
      %4421 = vrot.lane.b32.xlu0 %v4015, 12
      %v4422 = vpop.permute.xlu0 %4421
      %4423 = vrot.lane.b32.xlu0 %v4016, 12
      %v4424 = vpop.permute.xlu0 %4423
      %4425 = vrot.lane.b32.xlu0 %v4017, 12
      %v4426 = vpop.permute.xlu0 %4425
      %4427 = vrot.lane.b32.xlu0 %v4018, 12
      %v4428 = vpop.permute.xlu0 %4427
      %4429 = vrot.lane.b32.xlu0 %v4019, 12
      %v4430 = vpop.permute.xlu0 %4429
      %4431 = vrot.lane.b32.xlu0 %v4020, 12
      %v4432 = vpop.permute.xlu0 %4431
      %4433 = vrot.lane.b32.xlu0 %v4021, 12
      %v4434 = vpop.permute.xlu0 %4433
      %4435 = vrot.lane.b32.xlu0 %v4022, 12
      %v4436 = vpop.permute.xlu0 %4435
      %4437 = vrot.lane.b32.xlu0 %v4023, 12
      %v4438 = vpop.permute.xlu0 %4437
      %4439 = vrot.lane.b32.xlu0 %v4024, 12
      %v4440 = vpop.permute.xlu0 %4439
      %4505 = vrot.lane.b32.xlu0 %v4025, 16
      %v4506 = vpop.permute.xlu0 %4505
      %4507 = vrot.lane.b32.xlu0 %v4026, 16
      %v4508 = vpop.permute.xlu0 %4507
      %4509 = vrot.lane.b32.xlu0 %v4027, 16
      %v4510 = vpop.permute.xlu0 %4509
      %4511 = vrot.lane.b32.xlu0 %v4028, 16
      %v4512 = vpop.permute.xlu0 %4511
      %4513 = vrot.lane.b32.xlu0 %v4029, 16
      %v4514 = vpop.permute.xlu0 %4513
      %4515 = vrot.lane.b32.xlu0 %v4030, 16
      %v4516 = vpop.permute.xlu0 %4515
      %4517 = vrot.lane.b32.xlu0 %v4031, 16
      %v4518 = vpop.permute.xlu0 %4517
      %4519 = vrot.lane.b32.xlu0 %v4032, 16
      %v4520 = vpop.permute.xlu0 %4519
      %4521 = vrot.lane.b32.xlu0 %v4033, 16
      %v4522 = vpop.permute.xlu0 %4521
      %4523 = vrot.lane.b32.xlu0 %v4034, 16
      %v4524 = vpop.permute.xlu0 %4523
      %4525 = vrot.lane.b32.xlu0 %v4035, 16
      %v4526 = vpop.permute.xlu0 %4525
      %4527 = vrot.lane.b32.xlu0 %v4036, 16
      %v4528 = vpop.permute.xlu0 %4527
      %4529 = vrot.lane.b32.xlu0 %v4037, 16
      %v4530 = vpop.permute.xlu0 %4529
      %4531 = vrot.lane.b32.xlu0 %v4038, 16
      %v4532 = vpop.permute.xlu0 %4531
      %4533 = vrot.lane.b32.xlu0 %v4039, 16
      %v4534 = vpop.permute.xlu0 %4533
      %4535 = vrot.lane.b32.xlu0 %v4040, 16
      %v4536 = vpop.permute.xlu0 %4535
      %4537 = vrot.lane.b32.xlu0 %v4041, 16
      %v4538 = vpop.permute.xlu0 %4537
      %4539 = vrot.lane.b32.xlu0 %v4042, 16
      %v4540 = vpop.permute.xlu0 %4539
      %4541 = vrot.lane.b32.xlu0 %v4043, 16
      %v4542 = vpop.permute.xlu0 %4541
      %4543 = vrot.lane.b32.xlu0 %v4044, 16
      %v4544 = vpop.permute.xlu0 %4543
      %4545 = vrot.lane.b32.xlu0 %v4045, 16
      %v4546 = vpop.permute.xlu0 %4545
      %4547 = vrot.lane.b32.xlu0 %v4046, 16
      %v4548 = vpop.permute.xlu0 %4547
      %4549 = vrot.lane.b32.xlu0 %v4047, 16
      %v4550 = vpop.permute.xlu0 %4549
      %4551 = vrot.lane.b32.xlu0 %v4048, 16
      %v4552 = vpop.permute.xlu0 %4551
      %4553 = vrot.lane.b32.xlu0 %v4049, 16
      %v4554 = vpop.permute.xlu0 %4553
      %4555 = vrot.lane.b32.xlu0 %v4050, 16
      %v4556 = vpop.permute.xlu0 %4555
      %4557 = vrot.lane.b32.xlu0 %v4051, 16
      %v4558 = vpop.permute.xlu0 %4557
      %4559 = vrot.lane.b32.xlu0 %v4052, 16
      %v4560 = vpop.permute.xlu0 %4559
      %4561 = vrot.lane.b32.xlu0 %v4053, 16
      %v4562 = vpop.permute.xlu0 %4561
      %4563 = vrot.lane.b32.xlu0 %v4054, 16
      %v4564 = vpop.permute.xlu0 %4563
      %4565 = vrot.lane.b32.xlu0 %v4055, 16
      %v4566 = vpop.permute.xlu0 %4565
      %4567 = vrot.lane.b32.xlu0 %v4056, 16
      %v4568 = vpop.permute.xlu0 %4567
      %4633 = vrot.lane.b32.xlu0 %v4057, 20
      %v4634 = vpop.permute.xlu0 %4633
      %4635 = vrot.lane.b32.xlu0 %v4058, 20
      %v4636 = vpop.permute.xlu0 %4635
      %4637 = vrot.lane.b32.xlu0 %v4059, 20
      %v4638 = vpop.permute.xlu0 %4637
      %4639 = vrot.lane.b32.xlu0 %v4060, 20
      %v4640 = vpop.permute.xlu0 %4639
      %4641 = vrot.lane.b32.xlu0 %v4061, 20
      %v4642 = vpop.permute.xlu0 %4641
      %4643 = vrot.lane.b32.xlu0 %v4062, 20
      %v4644 = vpop.permute.xlu0 %4643
      %4645 = vrot.lane.b32.xlu0 %v4063, 20
      %v4646 = vpop.permute.xlu0 %4645
      %4647 = vrot.lane.b32.xlu0 %v4064, 20
      %v4648 = vpop.permute.xlu0 %4647
      %4649 = vrot.lane.b32.xlu0 %v4065, 20
      %v4650 = vpop.permute.xlu0 %4649
      %4651 = vrot.lane.b32.xlu0 %v4066, 20
      %v4652 = vpop.permute.xlu0 %4651
      %4653 = vrot.lane.b32.xlu0 %v4067, 20
      %v4654 = vpop.permute.xlu0 %4653
      %4655 = vrot.lane.b32.xlu0 %v4068, 20
      %v4656 = vpop.permute.xlu0 %4655
      %4657 = vrot.lane.b32.xlu0 %v4069, 20
      %v4658 = vpop.permute.xlu0 %4657
      %4659 = vrot.lane.b32.xlu0 %v4070, 20
      %v4660 = vpop.permute.xlu0 %4659
      %4661 = vrot.lane.b32.xlu0 %v4071, 20
      %v4662 = vpop.permute.xlu0 %4661
      %4663 = vrot.lane.b32.xlu0 %v4072, 20
      %v4664 = vpop.permute.xlu0 %4663
      %4665 = vrot.lane.b32.xlu0 %v4073, 20
      %v4666 = vpop.permute.xlu0 %4665
      %4667 = vrot.lane.b32.xlu0 %v4074, 20
      %v4668 = vpop.permute.xlu0 %4667
      %4669 = vrot.lane.b32.xlu0 %v4075, 20
      %v4670 = vpop.permute.xlu0 %4669
      %4671 = vrot.lane.b32.xlu0 %v4076, 20
      %v4672 = vpop.permute.xlu0 %4671
      %4673 = vrot.lane.b32.xlu0 %v4077, 20
      %v4674 = vpop.permute.xlu0 %4673
      %4675 = vrot.lane.b32.xlu0 %v4078, 20
      %v4676 = vpop.permute.xlu0 %4675
      %4677 = vrot.lane.b32.xlu0 %v4079, 20
      %v4678 = vpop.permute.xlu0 %4677
      %4679 = vrot.lane.b32.xlu0 %v4080, 20
      %v4680 = vpop.permute.xlu0 %4679
      %4681 = vrot.lane.b32.xlu0 %v4081, 20
      %v4682 = vpop.permute.xlu0 %4681
      %4683 = vrot.lane.b32.xlu0 %v4082, 20
      %v4684 = vpop.permute.xlu0 %4683
      %4685 = vrot.lane.b32.xlu0 %v4083, 20
      %v4686 = vpop.permute.xlu0 %4685
      %4687 = vrot.lane.b32.xlu0 %v4084, 20
      %v4688 = vpop.permute.xlu0 %4687
      %4689 = vrot.lane.b32.xlu0 %v4085, 20
      %v4690 = vpop.permute.xlu0 %4689
      %4691 = vrot.lane.b32.xlu0 %v4086, 20
      %v4692 = vpop.permute.xlu0 %4691
      %4693 = vrot.lane.b32.xlu0 %v4087, 20
      %v4694 = vpop.permute.xlu0 %4693
      %4695 = vrot.lane.b32.xlu0 %v4088, 20
      %v4696 = vpop.permute.xlu0 %4695
      %v4729 = vsel %vm1577, %v3897, %v4122
      %v4730 = vsel %vm1577, %v3898, %v4124
      %v4731 = vsel %vm1577, %v3899, %v4126
      %v4732 = vsel %vm1577, %v3900, %v4128
      %v4733 = vsel %vm1577, %v3901, %v4130
      %v4734 = vsel %vm1577, %v3902, %v4132
      %v4735 = vsel %vm1577, %v3903, %v4134
      %v4736 = vsel %vm1577, %v3904, %v4136
      %v4737 = vsel %vm1577, %v3905, %v4138
      %v4738 = vsel %vm1577, %v3906, %v4140
      %v4739 = vsel %vm1577, %v3907, %v4142
      %v4740 = vsel %vm1577, %v3908, %v4144
      %v4741 = vsel %vm1577, %v3909, %v4146
      %v4742 = vsel %vm1577, %v3910, %v4148
      %v4743 = vsel %vm1577, %v3911, %v4150
      %v4744 = vsel %vm1577, %v3912, %v4152
      %v4745 = vsel %vm1577, %v3913, %v4154
      %v4746 = vsel %vm1577, %v3914, %v4156
      %v4747 = vsel %vm1577, %v3915, %v4158
      %v4748 = vsel %vm1577, %v3916, %v4160
      %v4749 = vsel %vm1577, %v3917, %v4162
      %v4750 = vsel %vm1577, %v3918, %v4164
      %v4751 = vsel %vm1577, %v3919, %v4166
      %v4752 = vsel %vm1577, %v3920, %v4168
      %v4753 = vsel %vm1577, %v3921, %v4170
      %v4754 = vsel %vm1577, %v3922, %v4172
      %v4755 = vsel %vm1577, %v3923, %v4174
      %v4756 = vsel %vm1577, %v3924, %v4176
      %v4757 = vsel %vm1577, %v3925, %v4178
      %v4758 = vsel %vm1577, %v3926, %v4180
      %v4759 = vsel %vm1577, %v3927, %v4182
      %v4760 = vsel %vm1577, %v3928, %v4184
      %v4761 = vsel %vm1610, %v4729, %v4250
      %v4762 = vsel %vm1610, %v4730, %v4252
      %v4763 = vsel %vm1610, %v4731, %v4254
      %v4764 = vsel %vm1610, %v4732, %v4256
      %v4765 = vsel %vm1610, %v4733, %v4258
      %v4766 = vsel %vm1610, %v4734, %v4260
      %v4767 = vsel %vm1610, %v4735, %v4262
      %v4768 = vsel %vm1610, %v4736, %v4264
      %v4769 = vsel %vm1610, %v4737, %v4266
      %v4770 = vsel %vm1610, %v4738, %v4268
      %v4771 = vsel %vm1610, %v4739, %v4270
      %v4772 = vsel %vm1610, %v4740, %v4272
      %v4773 = vsel %vm1610, %v4741, %v4274
      %v4774 = vsel %vm1610, %v4742, %v4276
      %v4775 = vsel %vm1610, %v4743, %v4278
      %v4776 = vsel %vm1610, %v4744, %v4280
      %v4777 = vsel %vm1610, %v4745, %v4282
      %v4778 = vsel %vm1610, %v4746, %v4284
      %v4779 = vsel %vm1610, %v4747, %v4286
      %v4780 = vsel %vm1610, %v4748, %v4288
      %v4781 = vsel %vm1610, %v4749, %v4290
      %v4782 = vsel %vm1610, %v4750, %v4292
      %v4783 = vsel %vm1610, %v4751, %v4294
      %v4784 = vsel %vm1610, %v4752, %v4296
      %v4785 = vsel %vm1610, %v4753, %v4298
      %v4786 = vsel %vm1610, %v4754, %v4300
      %v4787 = vsel %vm1610, %v4755, %v4302
      %v4788 = vsel %vm1610, %v4756, %v4304
      %v4789 = vsel %vm1610, %v4757, %v4306
      %v4790 = vsel %vm1610, %v4758, %v4308
      %v4791 = vsel %vm1610, %v4759, %v4310
      %v4792 = vsel %vm1610, %v4760, %v4312
      %v4793 = vsel %vm1643, %v4761, %v4378
      %v4794 = vsel %vm1643, %v4762, %v4380
      %v4795 = vsel %vm1643, %v4763, %v4382
      %v4796 = vsel %vm1643, %v4764, %v4384
      %v4797 = vsel %vm1643, %v4765, %v4386
      %v4798 = vsel %vm1643, %v4766, %v4388
      %v4799 = vsel %vm1643, %v4767, %v4390
      %v4800 = vsel %vm1643, %v4768, %v4392
      %v4801 = vsel %vm1643, %v4769, %v4394
      %v4802 = vsel %vm1643, %v4770, %v4396
      %v4803 = vsel %vm1643, %v4771, %v4398
      %v4804 = vsel %vm1643, %v4772, %v4400
      %v4805 = vsel %vm1643, %v4773, %v4402
      %v4806 = vsel %vm1643, %v4774, %v4404
      %v4807 = vsel %vm1643, %v4775, %v4406
      %v4808 = vsel %vm1643, %v4776, %v4408
      %v4809 = vsel %vm1643, %v4777, %v4410
      %v4810 = vsel %vm1643, %v4778, %v4412
      %v4811 = vsel %vm1643, %v4779, %v4414
      %v4812 = vsel %vm1643, %v4780, %v4416
      %v4813 = vsel %vm1643, %v4781, %v4418
      %v4814 = vsel %vm1643, %v4782, %v4420
      %v4815 = vsel %vm1643, %v4783, %v4422
      %v4816 = vsel %vm1643, %v4784, %v4424
      %v4817 = vsel %vm1643, %v4785, %v4426
      %v4818 = vsel %vm1643, %v4786, %v4428
      %v4819 = vsel %vm1643, %v4787, %v4430
      %v4820 = vsel %vm1643, %v4788, %v4432
      %v4821 = vsel %vm1643, %v4789, %v4434
      %v4822 = vsel %vm1643, %v4790, %v4436
      %v4823 = vsel %vm1643, %v4791, %v4438
      %v4824 = vsel %vm1643, %v4792, %v4440
      %v4825 = vsel %vm1676, %v4793, %v4506
      %v4826 = vsel %vm1676, %v4794, %v4508
      %v4827 = vsel %vm1676, %v4795, %v4510
      %v4828 = vsel %vm1676, %v4796, %v4512
      %v4829 = vsel %vm1676, %v4797, %v4514
      %v4830 = vsel %vm1676, %v4798, %v4516
      %v4831 = vsel %vm1676, %v4799, %v4518
      %v4832 = vsel %vm1676, %v4800, %v4520
      %v4833 = vsel %vm1676, %v4801, %v4522
      %v4834 = vsel %vm1676, %v4802, %v4524
      %v4835 = vsel %vm1676, %v4803, %v4526
      %v4836 = vsel %vm1676, %v4804, %v4528
      %v4837 = vsel %vm1676, %v4805, %v4530
      %v4838 = vsel %vm1676, %v4806, %v4532
      %v4839 = vsel %vm1676, %v4807, %v4534
      %v4840 = vsel %vm1676, %v4808, %v4536
      %v4841 = vsel %vm1676, %v4809, %v4538
      %v4842 = vsel %vm1676, %v4810, %v4540
      %v4843 = vsel %vm1676, %v4811, %v4542
      %v4844 = vsel %vm1676, %v4812, %v4544
      %v4845 = vsel %vm1676, %v4813, %v4546
      %v4846 = vsel %vm1676, %v4814, %v4548
      %v4847 = vsel %vm1676, %v4815, %v4550
      %v4848 = vsel %vm1676, %v4816, %v4552
      %v4849 = vsel %vm1676, %v4817, %v4554
      %v4850 = vsel %vm1676, %v4818, %v4556
      %v4851 = vsel %vm1676, %v4819, %v4558
      %v4852 = vsel %vm1676, %v4820, %v4560
      %v4853 = vsel %vm1676, %v4821, %v4562
      %v4854 = vsel %vm1676, %v4822, %v4564
      %v4855 = vsel %vm1676, %v4823, %v4566
      %v4856 = vsel %vm1676, %v4824, %v4568
      %v4857 = vsel %vm1709, %v4825, %v4634
      %v4858 = vsel %vm1709, %v4826, %v4636
      %v4859 = vsel %vm1709, %v4827, %v4638
      %v4860 = vsel %vm1709, %v4828, %v4640
      %v4861 = vsel %vm1709, %v4829, %v4642
      %v4862 = vsel %vm1709, %v4830, %v4644
      %v4863 = vsel %vm1709, %v4831, %v4646
      %v4864 = vsel %vm1709, %v4832, %v4648
      %v4865 = vsel %vm1709, %v4833, %v4650
      %v4866 = vsel %vm1709, %v4834, %v4652
      %v4867 = vsel %vm1709, %v4835, %v4654
      %v4868 = vsel %vm1709, %v4836, %v4656
      %v4869 = vsel %vm1709, %v4837, %v4658
      %v4870 = vsel %vm1709, %v4838, %v4660
      %v4871 = vsel %vm1709, %v4839, %v4662
      %v4872 = vsel %vm1709, %v4840, %v4664
      %v4873 = vsel %vm1709, %v4841, %v4666
      %v4874 = vsel %vm1709, %v4842, %v4668
      %v4875 = vsel %vm1709, %v4843, %v4670
      %v4876 = vsel %vm1709, %v4844, %v4672
      %v4877 = vsel %vm1709, %v4845, %v4674
      %v4878 = vsel %vm1709, %v4846, %v4676
      %v4879 = vsel %vm1709, %v4847, %v4678
      %v4880 = vsel %vm1709, %v4848, %v4680
      %v4881 = vsel %vm1709, %v4849, %v4682
      %v4882 = vsel %vm1709, %v4850, %v4684
      %v4883 = vsel %vm1709, %v4851, %v4686
      %v4884 = vsel %vm1709, %v4852, %v4688
      %v4885 = vsel %vm1709, %v4853, %v4690
      %v4886 = vsel %vm1709, %v4854, %v4692
      %v4887 = vsel %vm1709, %v4855, %v4694
      %v4888 = vsel %vm1709, %v4856, %v4696
      %v4889 = vld [vmem:[%s3] sm:$0xff]
      %v4890 = vld [vmem:[%s3 + $0x8] sm:$0xff]
      %v4891 = vld [vmem:[%s3 + $0x10] sm:$0xff]
      %v4893 = vsel %vm1742, %v4857, 0
      %v4896 = vsel %vm1742, %v4858, 0
      %v4899 = vsel %vm1742, %v4859, 0
      %v4902 = vsel %vm1742, %v4860, 0
      %v4905 = vsel %vm1742, %v4861, 0
      %v4908 = vsel %vm1742, %v4862, 0
      %v4911 = vsel %vm1742, %v4863, 0
      %v4914 = vsel %vm1742, %v4864, 0
      %v4917 = vsel %vm1742, %v4865, 0
      %v4920 = vsel %vm1742, %v4866, 0
      %v4923 = vsel %vm1742, %v4867, 0
      %v4926 = vsel %vm1742, %v4868, 0
      %v4929 = vsel %vm1742, %v4869, 0
      %v4932 = vsel %vm1742, %v4870, 0
      %v4935 = vsel %vm1742, %v4871, 0
      %v4938 = vsel %vm1742, %v4872, 0
      %v4941 = vsel %vm1742, %v4873, 0
      %v4944 = vsel %vm1742, %v4874, 0
      %v4947 = vsel %vm1742, %v4875, 0
      %v4950 = vsel %vm1742, %v4876, 0
      %v4953 = vsel %vm1742, %v4877, 0
      %v4956 = vsel %vm1742, %v4878, 0
      %v4959 = vsel %vm1742, %v4879, 0
      %v4962 = vsel %vm1742, %v4880, 0
      %v4965 = vsel %vm1742, %v4881, 0
      %v4968 = vsel %vm1742, %v4882, 0
      %v4971 = vsel %vm1742, %v4883, 0
      %v4974 = vsel %vm1742, %v4884, 0
      %v4977 = vsel %vm1742, %v4885, 0
      %v4980 = vsel %vm1742, %v4886, 0
      %v4983 = vsel %vm1742, %v4887, 0
      %v4986 = vsel %vm1742, %v4888, 0
      %4988 = vmatprep.subr.mxu0 0.0
      %4989 = vmatpush1.msra.mxu0 %v4889
      %4990 = vmatprep.subr.mxu0 0.0
      %4991 = vmatpush1.msra.mxu0 %v4890
      %4992 = vmatprep.subr.mxu0 0.0
      %4993 = vmatpush1.msra.mxu0 %v4891
      %4994 = vmatprep.subr.mxu0 0.0
      %4995 = vmatpush1.msra.mxu0 0.0
      %4996 = vmatprep.subr.mxu0 0.0
      %4997 = vmatpush1.msra.mxu0 0.0
      %4998 = vmatprep.subr.mxu0 0.0
      %4999 = vmatpush1.msra.mxu0 0.0
      %5000 = vmatprep.subr.mxu0 0.0
      %5001 = vmatpush1.msra.mxu0 0.0
      %5002 = vmatprep.subr.mxu0 0.0
      %5003 = vmatpush1.msra.mxu0 0.0
      %5004 = vmatprep.subr.mxu0 0.0
      %5005 = vmatpush1.msra.mxu0 0.0
      %5006 = vmatprep.subr.mxu0 0.0
      %5007 = vmatpush1.msra.mxu0 0.0
      %5008 = vmatprep.subr.mxu0 0.0
      %5009 = vmatpush1.msra.mxu0 0.0
      %5010 = vmatprep.subr.mxu0 0.0
      %5011 = vmatpush1.msra.mxu0 0.0
      %5012 = vmatprep.subr.mxu0 0.0
      %5013 = vmatpush1.msra.mxu0 0.0
      %5014 = vmatprep.subr.mxu0 0.0
      %5015 = vmatpush1.msra.mxu0 0.0
      %5016 = vmatprep.subr.mxu0 0.0
      %5017 = vmatpush1.msra.mxu0 0.0
      %5018 = vmatprep.subr.mxu0 0.0
      %5019 = vmatpush1.msra.mxu0 0.0
      %5020 = vmatprep.subr.mxu0 0.0
      %5021 = vmatpush1.msra.mxu0 0.0
      %5022 = vmatprep.subr.mxu0 0.0
      %5023 = vmatpush1.msra.mxu0 0.0
      %5024 = vmatprep.subr.mxu0 0.0
      %5025 = vmatpush1.msra.mxu0 0.0
      %5026 = vmatprep.subr.mxu0 0.0
      %5027 = vmatpush1.msra.mxu0 0.0
      %5028 = vmatprep.subr.mxu0 0.0
      %5029 = vmatpush1.msra.mxu0 0.0
      %5030 = vmatprep.subr.mxu0 0.0
      %5031 = vmatpush1.msra.mxu0 0.0
      %5032 = vmatprep.subr.mxu0 0.0
      %5033 = vmatpush1.msra.mxu0 0.0
      %5034 = vmatprep.subr.mxu0 0.0
      %5035 = vmatpush1.msra.mxu0 0.0
      %5036 = vmatprep.subr.mxu0 0.0
      %5037 = vmatpush1.msra.mxu0 0.0
      %5038 = vmatprep.subr.mxu0 0.0
      %5039 = vmatpush1.msra.mxu0 0.0
      %5040 = vmatprep.subr.mxu0 0.0
      %5041 = vmatpush1.msra.mxu0 0.0
      %5042 = vmatprep.subr.mxu0 0.0
      %5043 = vmatpush1.msra.mxu0 0.0
      %5044 = vmatprep.subr.mxu0 0.0
      %5045 = vmatpush1.msra.mxu0 0.0
      %5046 = vmatprep.subr.mxu0 0.0
      %5047 = vmatpush1.msra.mxu0 0.0
      %5048 = vmatprep.subr.mxu0 0.0
      %5049 = vmatpush1.msra.mxu0 0.0
      %5050 = vmatprep.subr.mxu0 0.0
      %5051 = vmatpush1.msra.mxu0 0.0
      %5052 = vmatprep.mubr.f32.mxu0 0.0
      %5053 = vmatmul.mubr.f32.gmra.mrb[0].mxu0 %v4893
      %v5054 = vpop.f32.mrb[0].mxu0
      %v5055 = vadd.f32 0.0, %v5054
      %v5056 = vpop.f32.mrb[0].mxu0
      %5057 = vmatprep.mubr.f32.mxu0 0.0
      %5058 = vmatmul.mubr.f32.gmra.mrb[0].mxu0 %v4896
      %v5059 = vpop.f32.mrb[0].mxu0
      %v5060 = vadd.f32 0.0, %v5059
      %v5061 = vpop.f32.mrb[0].mxu0
      %5062 = vmatprep.mubr.f32.mxu0 0.0
      %5063 = vmatmul.mubr.f32.gmra.mrb[0].mxu0 %v4899
      %v5064 = vpop.f32.mrb[0].mxu0
      %v5065 = vadd.f32 0.0, %v5064
      %v5066 = vpop.f32.mrb[0].mxu0
      %5067 = vmatprep.mubr.f32.mxu0 0.0
      %5068 = vmatmul.mubr.f32.gmra.mrb[0].mxu0 %v4902
      %v5069 = vpop.f32.mrb[0].mxu0
      %v5070 = vadd.f32 0.0, %v5069
      %v5071 = vpop.f32.mrb[0].mxu0
      %5072 = vmatprep.mubr.f32.mxu0 0.0
      %5073 = vmatmul.mubr.f32.gmra.mrb[0].mxu0 %v4905
      %v5074 = vpop.f32.mrb[0].mxu0
      %v5075 = vadd.f32 0.0, %v5074
      %v5076 = vpop.f32.mrb[0].mxu0
      %5077 = vmatprep.mubr.f32.mxu0 0.0
      %5078 = vmatmul.mubr.f32.gmra.mrb[0].mxu0 %v4908
      %v5079 = vpop.f32.mrb[0].mxu0
      %v5080 = vadd.f32 0.0, %v5079
      %v5081 = vpop.f32.mrb[0].mxu0
      %5082 = vmatprep.mubr.f32.mxu0 0.0
      %5083 = vmatmul.mubr.f32.gmra.mrb[0].mxu0 %v4911
      %v5084 = vpop.f32.mrb[0].mxu0
      %v5085 = vadd.f32 0.0, %v5084
      %v5086 = vpop.f32.mrb[0].mxu0
      %5087 = vmatprep.mubr.f32.mxu0 0.0
      %5088 = vmatmul.mubr.f32.gmra.mrb[0].mxu0 %v4914
      %v5089 = vpop.f32.mrb[0].mxu0
      %v5090 = vadd.f32 0.0, %v5089
      %v5091 = vpop.f32.mrb[0].mxu0
      %5092 = vmatprep.mubr.f32.mxu0 0.0
      %5093 = vmatmul.mubr.f32.gmra.mrb[0].mxu0 %v4917
      %v5094 = vpop.f32.mrb[0].mxu0
      %v5095 = vadd.f32 0.0, %v5094
      %v5096 = vpop.f32.mrb[0].mxu0
      %5097 = vmatprep.mubr.f32.mxu0 0.0
      %5098 = vmatmul.mubr.f32.gmra.mrb[0].mxu0 %v4920
      %v5099 = vpop.f32.mrb[0].mxu0
      %v5100 = vadd.f32 0.0, %v5099
      %v5101 = vpop.f32.mrb[0].mxu0
      %5102 = vmatprep.mubr.f32.mxu0 0.0
      %5103 = vmatmul.mubr.f32.gmra.mrb[0].mxu0 %v4923
      %v5104 = vpop.f32.mrb[0].mxu0
      %v5105 = vadd.f32 0.0, %v5104
      %v5106 = vpop.f32.mrb[0].mxu0
      %5107 = vmatprep.mubr.f32.mxu0 0.0
      %5108 = vmatmul.mubr.f32.gmra.mrb[0].mxu0 %v4926
      %v5109 = vpop.f32.mrb[0].mxu0
      %v5110 = vadd.f32 0.0, %v5109
      %v5111 = vpop.f32.mrb[0].mxu0
      %5112 = vmatprep.mubr.f32.mxu0 0.0
      %5113 = vmatmul.mubr.f32.gmra.mrb[0].mxu0 %v4929
      %v5114 = vpop.f32.mrb[0].mxu0
      %v5115 = vadd.f32 0.0, %v5114
      %v5116 = vpop.f32.mrb[0].mxu0
      %5117 = vmatprep.mubr.f32.mxu0 0.0
      %5118 = vmatmul.mubr.f32.gmra.mrb[0].mxu0 %v4932
      %v5119 = vpop.f32.mrb[0].mxu0
      %v5120 = vadd.f32 0.0, %v5119
      %v5121 = vpop.f32.mrb[0].mxu0
      %5122 = vmatprep.mubr.f32.mxu0 0.0
      %5123 = vmatmul.mubr.f32.gmra.mrb[0].mxu0 %v4935
      %v5124 = vpop.f32.mrb[0].mxu0
      %v5125 = vadd.f32 0.0, %v5124
      %v5126 = vpop.f32.mrb[0].mxu0
      %5127 = vmatprep.mubr.f32.mxu0 0.0
      %5128 = vmatmul.mubr.f32.gmra.mrb[0].mxu0 %v4938
      %v5129 = vpop.f32.mrb[0].mxu0
      %v5130 = vadd.f32 0.0, %v5129
      %v5131 = vpop.f32.mrb[0].mxu0
      %5132 = vmatprep.mubr.f32.mxu0 0.0
      %5133 = vmatmul.mubr.f32.gmra.mrb[0].mxu0 %v4941
      %v5134 = vpop.f32.mrb[0].mxu0
      %v5135 = vadd.f32 0.0, %v5134
      %v5136 = vpop.f32.mrb[0].mxu0
      %5137 = vmatprep.mubr.f32.mxu0 0.0
      %5138 = vmatmul.mubr.f32.gmra.mrb[0].mxu0 %v4944
      %v5139 = vpop.f32.mrb[0].mxu0
      %v5140 = vadd.f32 0.0, %v5139
      %v5141 = vpop.f32.mrb[0].mxu0
      %5142 = vmatprep.mubr.f32.mxu0 0.0
      %5143 = vmatmul.mubr.f32.gmra.mrb[0].mxu0 %v4947
      %v5144 = vpop.f32.mrb[0].mxu0
      %v5145 = vadd.f32 0.0, %v5144
      %v5146 = vpop.f32.mrb[0].mxu0
      %5147 = vmatprep.mubr.f32.mxu0 0.0
      %5148 = vmatmul.mubr.f32.gmra.mrb[0].mxu0 %v4950
      %v5149 = vpop.f32.mrb[0].mxu0
      %v5150 = vadd.f32 0.0, %v5149
      %v5151 = vpop.f32.mrb[0].mxu0
      %5152 = vmatprep.mubr.f32.mxu0 0.0
      %5153 = vmatmul.mubr.f32.gmra.mrb[0].mxu0 %v4953
      %v5154 = vpop.f32.mrb[0].mxu0
      %v5155 = vadd.f32 0.0, %v5154
      %v5156 = vpop.f32.mrb[0].mxu0
      %5157 = vmatprep.mubr.f32.mxu0 0.0
      %5158 = vmatmul.mubr.f32.gmra.mrb[0].mxu0 %v4956
      %v5159 = vpop.f32.mrb[0].mxu0
      %v5160 = vadd.f32 0.0, %v5159
      %v5161 = vpop.f32.mrb[0].mxu0
      %5162 = vmatprep.mubr.f32.mxu0 0.0
      %5163 = vmatmul.mubr.f32.gmra.mrb[0].mxu0 %v4959
      %v5164 = vpop.f32.mrb[0].mxu0
      %v5165 = vadd.f32 0.0, %v5164
      %v5166 = vpop.f32.mrb[0].mxu0
      %5167 = vmatprep.mubr.f32.mxu0 0.0
      %5168 = vmatmul.mubr.f32.gmra.mrb[0].mxu0 %v4962
      %v5169 = vpop.f32.mrb[0].mxu0
      %v5170 = vadd.f32 0.0, %v5169
      %v5171 = vpop.f32.mrb[0].mxu0
      %5172 = vmatprep.mubr.f32.mxu0 0.0
      %5173 = vmatmul.mubr.f32.gmra.mrb[0].mxu0 %v4965
      %v5174 = vpop.f32.mrb[0].mxu0
      %v5175 = vadd.f32 0.0, %v5174
      %v5176 = vpop.f32.mrb[0].mxu0
      %5177 = vmatprep.mubr.f32.mxu0 0.0
      %5178 = vmatmul.mubr.f32.gmra.mrb[0].mxu0 %v4968
      %v5179 = vpop.f32.mrb[0].mxu0
      %v5180 = vadd.f32 0.0, %v5179
      %v5181 = vpop.f32.mrb[0].mxu0
      %5182 = vmatprep.mubr.f32.mxu0 0.0
      %5183 = vmatmul.mubr.f32.gmra.mrb[0].mxu0 %v4971
      %v5184 = vpop.f32.mrb[0].mxu0
      %v5185 = vadd.f32 0.0, %v5184
      %v5186 = vpop.f32.mrb[0].mxu0
      %5187 = vmatprep.mubr.f32.mxu0 0.0
      %5188 = vmatmul.mubr.f32.gmra.mrb[0].mxu0 %v4974
      %v5189 = vpop.f32.mrb[0].mxu0
      %v5190 = vadd.f32 0.0, %v5189
      %v5191 = vpop.f32.mrb[0].mxu0
      %5192 = vmatprep.mubr.f32.mxu0 0.0
      %5193 = vmatmul.mubr.f32.gmra.mrb[0].mxu0 %v4977
      %v5194 = vpop.f32.mrb[0].mxu0
      %v5195 = vadd.f32 0.0, %v5194
      %v5196 = vpop.f32.mrb[0].mxu0
      %5197 = vmatprep.mubr.f32.mxu0 0.0
      %5198 = vmatmul.mubr.f32.gmra.mrb[0].mxu0 %v4980
      %v5199 = vpop.f32.mrb[0].mxu0
      %v5200 = vadd.f32 0.0, %v5199
      %v5201 = vpop.f32.mrb[0].mxu0
      %5202 = vmatprep.mubr.f32.mxu0 0.0
      %5203 = vmatmul.mubr.f32.gmra.mrb[0].mxu0 %v4983
      %v5204 = vpop.f32.mrb[0].mxu0
      %v5205 = vadd.f32 0.0, %v5204
      %v5206 = vpop.f32.mrb[0].mxu0
      %5207 = vmatprep.mubr.f32.mxu0 0.0
      %5208 = vmatmul.mubr.f32.gmra.mrb[0].mxu0 %v4986
      %v5209 = vpop.f32.mrb[0].mxu0
      %v5210 = vadd.f32 0.0, %v5209
      %v5211 = vpop.f32.mrb[0].mxu0
      %5212 = vdwg.mxu0
      %s5213 = scalar_lea.vmem %s258, 512
      %5214 = vst.msk [vmem:[%s5213] sm:$0xff] %vm1610, %v5055
      %5215 = vst.msk [vmem:[%s5213 + $0x8] sm:$0xff] %vm1610, %v5060
      %5216 = vst.msk [vmem:[%s5213 + $0x10] sm:$0xff] %vm1610, %v5065
      %5217 = vst.msk [vmem:[%s5213 + $0x18] sm:$0xff] %vm1610, %v5070
      %5218 = vst.msk [vmem:[%s5213 + $0x20] sm:$0xff] %vm1610, %v5075
      %5219 = vst.msk [vmem:[%s5213 + $0x28] sm:$0xff] %vm1610, %v5080
      %5220 = vst.msk [vmem:[%s5213 + $0x30] sm:$0xff] %vm1610, %v5085
      %5221 = vst.msk [vmem:[%s5213 + $0x38] sm:$0xff] %vm1610, %v5090
      %5222 = vst.msk [vmem:[%s5213 + $0x40] sm:$0xff] %vm1610, %v5095
      %5223 = vst.msk [vmem:[%s5213 + $0x48] sm:$0xff] %vm1610, %v5100
      %5224 = vst.msk [vmem:[%s5213 + $0x50] sm:$0xff] %vm1610, %v5105
      %5225 = vst.msk [vmem:[%s5213 + $0x58] sm:$0xff] %vm1610, %v5110
      %5226 = vst.msk [vmem:[%s5213 + $0x60] sm:$0xff] %vm1610, %v5115
      %5227 = vst.msk [vmem:[%s5213 + $0x68] sm:$0xff] %vm1610, %v5120
      %5228 = vst.msk [vmem:[%s5213 + $0x70] sm:$0xff] %vm1610, %v5125
      %5229 = vst.msk [vmem:[%s5213 + $0x78] sm:$0xff] %vm1610, %v5130
      %5230 = vst.msk [vmem:[%s5213 + $0x80] sm:$0xff] %vm1610, %v5135
      %5231 = vst.msk [vmem:[%s5213 + $0x88] sm:$0xff] %vm1610, %v5140
      %5232 = vst.msk [vmem:[%s5213 + $0x90] sm:$0xff] %vm1610, %v5145
      %5233 = vst.msk [vmem:[%s5213 + $0x98] sm:$0xff] %vm1610, %v5150
      %5234 = vst.msk [vmem:[%s5213 + $0xa0] sm:$0xff] %vm1610, %v5155
      %5235 = vst.msk [vmem:[%s5213 + $0xa8] sm:$0xff] %vm1610, %v5160
      %5236 = vst.msk [vmem:[%s5213 + $0xb0] sm:$0xff] %vm1610, %v5165
      %5237 = vst.msk [vmem:[%s5213 + $0xb8] sm:$0xff] %vm1610, %v5170
      %5238 = vst.msk [vmem:[%s5213 + $0xc0] sm:$0xff] %vm1610, %v5175
      %5239 = vst.msk [vmem:[%s5213 + $0xc8] sm:$0xff] %vm1610, %v5180
      %5240 = vst.msk [vmem:[%s5213 + $0xd0] sm:$0xff] %vm1610, %v5185
      %5241 = vst.msk [vmem:[%s5213 + $0xd8] sm:$0xff] %vm1610, %v5190
      %5242 = vst.msk [vmem:[%s5213 + $0xe0] sm:$0xff] %vm1610, %v5195
      %5243 = vst.msk [vmem:[%s5213 + $0xe8] sm:$0xff] %vm1610, %v5200
      %5244 = vst.msk [vmem:[%s5213 + $0xf0] sm:$0xff] %vm1610, %v5205
      %5245 = vst.msk [vmem:[%s5213 + $0xf8] sm:$0xff] %vm1610, %v5210
      %v5246 = vsel %vm1610, %v5055, 0.0
      %v5247 = vsel %vm1610, %v5060, 0.0
      %v5248 = vadd.f32 %v5246, %v5247
      %v5249 = vsel %vm1610, %v5065, 0.0
      %v5250 = vadd.f32 %v5248, %v5249
      %v5251 = vsel %vm1610, %v5070, 0.0
      %v5252 = vadd.f32 %v5250, %v5251
      %v5253 = vsel %vm1610, %v5075, 0.0
      %v5254 = vadd.f32 %v5252, %v5253
      %v5255 = vsel %vm1610, %v5080, 0.0
      %v5256 = vadd.f32 %v5254, %v5255
      %v5257 = vsel %vm1610, %v5085, 0.0
      %v5258 = vadd.f32 %v5256, %v5257
      %v5259 = vsel %vm1610, %v5090, 0.0
      %v5260 = vadd.f32 %v5258, %v5259
      %v5261 = vsel %vm1610, %v5095, 0.0
      %v5262 = vadd.f32 %v5260, %v5261
      %v5263 = vsel %vm1610, %v5100, 0.0
      %v5264 = vadd.f32 %v5262, %v5263
      %v5265 = vsel %vm1610, %v5105, 0.0
      %v5266 = vadd.f32 %v5264, %v5265
      %v5267 = vsel %vm1610, %v5110, 0.0
      %v5268 = vadd.f32 %v5266, %v5267
      %v5269 = vsel %vm1610, %v5115, 0.0
      %v5270 = vadd.f32 %v5268, %v5269
      %v5271 = vsel %vm1610, %v5120, 0.0
      %v5272 = vadd.f32 %v5270, %v5271
      %v5273 = vsel %vm1610, %v5125, 0.0
      %v5274 = vadd.f32 %v5272, %v5273
      %v5275 = vsel %vm1610, %v5130, 0.0
      %v5276 = vadd.f32 %v5274, %v5275
      %v5277 = vsel %vm1610, %v5135, 0.0
      %v5278 = vadd.f32 %v5276, %v5277
      %v5279 = vsel %vm1610, %v5140, 0.0
      %v5280 = vadd.f32 %v5278, %v5279
      %v5281 = vsel %vm1610, %v5145, 0.0
      %v5282 = vadd.f32 %v5280, %v5281
      %v5283 = vsel %vm1610, %v5150, 0.0
      %v5284 = vadd.f32 %v5282, %v5283
      %v5285 = vsel %vm1610, %v5155, 0.0
      %v5286 = vadd.f32 %v5284, %v5285
      %v5287 = vsel %vm1610, %v5160, 0.0
      %v5288 = vadd.f32 %v5286, %v5287
      %v5289 = vsel %vm1610, %v5165, 0.0
      %v5290 = vadd.f32 %v5288, %v5289
      %v5291 = vsel %vm1610, %v5170, 0.0
      %v5292 = vadd.f32 %v5290, %v5291
      %v5293 = vsel %vm1610, %v5175, 0.0
      %v5294 = vadd.f32 %v5292, %v5293
      %v5295 = vsel %vm1610, %v5180, 0.0
      %v5296 = vadd.f32 %v5294, %v5295
      %v5297 = vsel %vm1610, %v5185, 0.0
      %v5298 = vadd.f32 %v5296, %v5297
      %v5299 = vsel %vm1610, %v5190, 0.0
      %v5300 = vadd.f32 %v5298, %v5299
      %v5301 = vsel %vm1610, %v5195, 0.0
      %v5302 = vadd.f32 %v5300, %v5301
      %v5303 = vsel %vm1610, %v5200, 0.0
      %v5304 = vadd.f32 %v5302, %v5303
      %v5305 = vsel %vm1610, %v5205, 0.0
      %v5306 = vadd.f32 %v5304, %v5305
      %v5307 = vsel %vm1610, %v5210, 0.0
      %v5308 = vadd.f32 %v5306, %v5307
      %v5309 = vrot.slane %v5308, 4
      %v5310 = vadd.f32 %v5308, %v5309
      %v5311 = vrot.slane %v5310, 2
      %v5312 = vadd.f32 %v5310, %v5311
      %v5313 = vrot.slane %v5312, 1
      %v5314 = vadd.f32 %v5312, %v5313
      %v5315 = vadd.f32 %v3794, %v5314
      %v5316 = vmul.f32 %v5055, %v5055
      %v5317 = vmul.f32 %v5060, %v5060
      %v5318 = vmul.f32 %v5065, %v5065
      %v5319 = vmul.f32 %v5070, %v5070
      %v5320 = vmul.f32 %v5075, %v5075
      %v5321 = vmul.f32 %v5080, %v5080
      %v5322 = vmul.f32 %v5085, %v5085
      %v5323 = vmul.f32 %v5090, %v5090
      %v5324 = vmul.f32 %v5095, %v5095
      %v5325 = vmul.f32 %v5100, %v5100
      %v5326 = vmul.f32 %v5105, %v5105
      %v5327 = vmul.f32 %v5110, %v5110
      %v5328 = vmul.f32 %v5115, %v5115
      %v5329 = vmul.f32 %v5120, %v5120
      %v5330 = vmul.f32 %v5125, %v5125
      %v5331 = vmul.f32 %v5130, %v5130
      %v5332 = vmul.f32 %v5135, %v5135
      %v5333 = vmul.f32 %v5140, %v5140
      %v5334 = vmul.f32 %v5145, %v5145
      %v5335 = vmul.f32 %v5150, %v5150
      %v5336 = vmul.f32 %v5155, %v5155
      %v5337 = vmul.f32 %v5160, %v5160
      %v5338 = vmul.f32 %v5165, %v5165
      %v5339 = vmul.f32 %v5170, %v5170
      %v5340 = vmul.f32 %v5175, %v5175
      %v5341 = vmul.f32 %v5180, %v5180
      %v5342 = vmul.f32 %v5185, %v5185
      %v5343 = vmul.f32 %v5190, %v5190
      %v5344 = vmul.f32 %v5195, %v5195
      %v5345 = vmul.f32 %v5200, %v5200
      %v5346 = vmul.f32 %v5205, %v5205
      %v5347 = vmul.f32 %v5210, %v5210
      %v5348 = vsel %vm1610, %v5316, 0.0
      %v5349 = vsel %vm1610, %v5317, 0.0
      %v5350 = vadd.f32 %v5348, %v5349
      %v5351 = vsel %vm1610, %v5318, 0.0
      %v5352 = vadd.f32 %v5350, %v5351
      %v5353 = vsel %vm1610, %v5319, 0.0
      %v5354 = vadd.f32 %v5352, %v5353
      %v5355 = vsel %vm1610, %v5320, 0.0
      %v5356 = vadd.f32 %v5354, %v5355
      %v5357 = vsel %vm1610, %v5321, 0.0
      %v5358 = vadd.f32 %v5356, %v5357
      %v5359 = vsel %vm1610, %v5322, 0.0
      %v5360 = vadd.f32 %v5358, %v5359
      %v5361 = vsel %vm1610, %v5323, 0.0
      %v5362 = vadd.f32 %v5360, %v5361
      %v5363 = vsel %vm1610, %v5324, 0.0
      %v5364 = vadd.f32 %v5362, %v5363
      %v5365 = vsel %vm1610, %v5325, 0.0
      %v5366 = vadd.f32 %v5364, %v5365
      %v5367 = vsel %vm1610, %v5326, 0.0
      %v5368 = vadd.f32 %v5366, %v5367
      %v5369 = vsel %vm1610, %v5327, 0.0
      %v5370 = vadd.f32 %v5368, %v5369
      %v5371 = vsel %vm1610, %v5328, 0.0
      %v5372 = vadd.f32 %v5370, %v5371
      %v5373 = vsel %vm1610, %v5329, 0.0
      %v5374 = vadd.f32 %v5372, %v5373
      %v5375 = vsel %vm1610, %v5330, 0.0
      %v5376 = vadd.f32 %v5374, %v5375
      %v5377 = vsel %vm1610, %v5331, 0.0
      %v5378 = vadd.f32 %v5376, %v5377
      %v5379 = vsel %vm1610, %v5332, 0.0
      %v5380 = vadd.f32 %v5378, %v5379
      %v5381 = vsel %vm1610, %v5333, 0.0
      %v5382 = vadd.f32 %v5380, %v5381
      %v5383 = vsel %vm1610, %v5334, 0.0
      %v5384 = vadd.f32 %v5382, %v5383
      %v5385 = vsel %vm1610, %v5335, 0.0
      %v5386 = vadd.f32 %v5384, %v5385
      %v5387 = vsel %vm1610, %v5336, 0.0
      %v5388 = vadd.f32 %v5386, %v5387
      %v5389 = vsel %vm1610, %v5337, 0.0
      %v5390 = vadd.f32 %v5388, %v5389
      %v5391 = vsel %vm1610, %v5338, 0.0
      %v5392 = vadd.f32 %v5390, %v5391
      %v5393 = vsel %vm1610, %v5339, 0.0
      %v5394 = vadd.f32 %v5392, %v5393
      %v5395 = vsel %vm1610, %v5340, 0.0
      %v5396 = vadd.f32 %v5394, %v5395
      %v5397 = vsel %vm1610, %v5341, 0.0
      %v5398 = vadd.f32 %v5396, %v5397
      %v5399 = vsel %vm1610, %v5342, 0.0
      %v5400 = vadd.f32 %v5398, %v5399
      %v5401 = vsel %vm1610, %v5343, 0.0
      %v5402 = vadd.f32 %v5400, %v5401
      %v5403 = vsel %vm1610, %v5344, 0.0
      %v5404 = vadd.f32 %v5402, %v5403
      %v5405 = vsel %vm1610, %v5345, 0.0
      %v5406 = vadd.f32 %v5404, %v5405
      %v5407 = vsel %vm1610, %v5346, 0.0
      %v5408 = vadd.f32 %v5406, %v5407
      %v5409 = vsel %vm1610, %v5347, 0.0
      %v5410 = vadd.f32 %v5408, %v5409
      %v5411 = vrot.slane %v5410, 4
      %v5412 = vadd.f32 %v5410, %v5411
      %v5413 = vrot.slane %v5412, 2
      %v5414 = vadd.f32 %v5412, %v5413
      %v5415 = vrot.slane %v5414, 1
      %v5416 = vadd.f32 %v5414, %v5415
      %v5417 = vadd.f32 %v3896, %v5416
      %v5418 = vld [vmem:[%s359 + $0x1] sm:$0xff]
      %v5419 = vld [vmem:[%s359 + $0x9] sm:$0xff]
      %v5420 = vld [vmem:[%s359 + $0x19] sm:$0xff]
      %v5421 = vld [vmem:[%s359 + $0x21] sm:$0xff]
      %v5422 = vld [vmem:[%s359 + $0x31] sm:$0xff]
      %v5423 = vld [vmem:[%s359 + $0x39] sm:$0xff]
      %v5424 = vld [vmem:[%s359 + $0x49] sm:$0xff]
      %v5425 = vld [vmem:[%s359 + $0x51] sm:$0xff]
      %v5426 = vld [vmem:[%s359 + $0x61] sm:$0xff]
      %v5427 = vld [vmem:[%s359 + $0x69] sm:$0xff]
      %v5428 = vld [vmem:[%s359 + $0x79] sm:$0xff]
      %v5429 = vld [vmem:[%s359 + $0x81] sm:$0xff]
      %v5430 = vld [vmem:[%s359 + $0x91] sm:$0xff]
      %v5431 = vld [vmem:[%s359 + $0x99] sm:$0xff]
      %v5432 = vld [vmem:[%s359 + $0xa9] sm:$0xff]
      %v5433 = vld [vmem:[%s359 + $0xb1] sm:$0xff]
      %v5434 = vld [vmem:[%s359 + $0xc1] sm:$0xff]
      %v5435 = vld [vmem:[%s359 + $0xc9] sm:$0xff]
      %v5436 = vld [vmem:[%s359 + $0xd9] sm:$0xff]
      %v5437 = vld [vmem:[%s359 + $0xe1] sm:$0xff]
      %v5438 = vld [vmem:[%s359 + $0xf1] sm:$0xff]
      %v5439 = vld [vmem:[%s359 + $0xf9] sm:$0xff]
      %v5440 = vld [vmem:[%s359 + $0x109] sm:$0xff]
      %v5441 = vld [vmem:[%s359 + $0x111] sm:$0xff]
      %v5442 = vld [vmem:[%s359 + $0x121] sm:$0xff]
      %v5443 = vld [vmem:[%s359 + $0x129] sm:$0xff]
      %v5444 = vld [vmem:[%s359 + $0x139] sm:$0xff]
      %v5445 = vld [vmem:[%s359 + $0x141] sm:$0xff]
      %v5446 = vld [vmem:[%s359 + $0x151] sm:$0xff]
      %v5447 = vld [vmem:[%s359 + $0x159] sm:$0xff]
      %v5448 = vld [vmem:[%s359 + $0x169] sm:$0xff]
      %v5449 = vld [vmem:[%s359 + $0x171] sm:$0xff]
      %v5450 = vld [vmem:[%s359 + $0x2] sm:$0xff]
      %v5451 = vld [vmem:[%s359 + $0xa] sm:$0xff]
      %v5452 = vld [vmem:[%s359 + $0x1a] sm:$0xff]
      %v5453 = vld [vmem:[%s359 + $0x22] sm:$0xff]
      %v5454 = vld [vmem:[%s359 + $0x32] sm:$0xff]
      %v5455 = vld [vmem:[%s359 + $0x3a] sm:$0xff]
      %v5456 = vld [vmem:[%s359 + $0x4a] sm:$0xff]
      %v5457 = vld [vmem:[%s359 + $0x52] sm:$0xff]
      %v5458 = vld [vmem:[%s359 + $0x62] sm:$0xff]
      %v5459 = vld [vmem:[%s359 + $0x6a] sm:$0xff]
      %v5460 = vld [vmem:[%s359 + $0x7a] sm:$0xff]
      %v5461 = vld [vmem:[%s359 + $0x82] sm:$0xff]
      %v5462 = vld [vmem:[%s359 + $0x92] sm:$0xff]
      %v5463 = vld [vmem:[%s359 + $0x9a] sm:$0xff]
      %v5464 = vld [vmem:[%s359 + $0xaa] sm:$0xff]
      %v5465 = vld [vmem:[%s359 + $0xb2] sm:$0xff]
      %v5466 = vld [vmem:[%s359 + $0xc2] sm:$0xff]
      %v5467 = vld [vmem:[%s359 + $0xca] sm:$0xff]
      %v5468 = vld [vmem:[%s359 + $0xda] sm:$0xff]
      %v5469 = vld [vmem:[%s359 + $0xe2] sm:$0xff]
      %v5470 = vld [vmem:[%s359 + $0xf2] sm:$0xff]
      %v5471 = vld [vmem:[%s359 + $0xfa] sm:$0xff]
      %v5472 = vld [vmem:[%s359 + $0x10a] sm:$0xff]
      %v5473 = vld [vmem:[%s359 + $0x112] sm:$0xff]
      %v5474 = vld [vmem:[%s359 + $0x122] sm:$0xff]
      %v5475 = vld [vmem:[%s359 + $0x12a] sm:$0xff]
      %v5476 = vld [vmem:[%s359 + $0x13a] sm:$0xff]
      %v5477 = vld [vmem:[%s359 + $0x142] sm:$0xff]
      %v5478 = vld [vmem:[%s359 + $0x152] sm:$0xff]
      %v5479 = vld [vmem:[%s359 + $0x15a] sm:$0xff]
      %v5480 = vld [vmem:[%s359 + $0x16a] sm:$0xff]
      %v5481 = vld [vmem:[%s359 + $0x172] sm:$0xff]
      %v5482 = vld [vmem:[%s456 + $0x1] sm:$0xff]
      %v5483 = vld [vmem:[%s456 + $0x9] sm:$0xff]
      %v5484 = vld [vmem:[%s456 + $0x19] sm:$0xff]
      %v5485 = vld [vmem:[%s456 + $0x21] sm:$0xff]
      %v5486 = vld [vmem:[%s456 + $0x31] sm:$0xff]
      %v5487 = vld [vmem:[%s456 + $0x39] sm:$0xff]
      %v5488 = vld [vmem:[%s456 + $0x49] sm:$0xff]
      %v5489 = vld [vmem:[%s456 + $0x51] sm:$0xff]
      %v5490 = vld [vmem:[%s456 + $0x61] sm:$0xff]
      %v5491 = vld [vmem:[%s456 + $0x69] sm:$0xff]
      %v5492 = vld [vmem:[%s456 + $0x79] sm:$0xff]
      %v5493 = vld [vmem:[%s456 + $0x81] sm:$0xff]
      %v5494 = vld [vmem:[%s456 + $0x91] sm:$0xff]
      %v5495 = vld [vmem:[%s456 + $0x99] sm:$0xff]
      %v5496 = vld [vmem:[%s456 + $0xa9] sm:$0xff]
      %v5497 = vld [vmem:[%s456 + $0xb1] sm:$0xff]
      %v5498 = vld [vmem:[%s456 + $0xc1] sm:$0xff]
      %v5499 = vld [vmem:[%s456 + $0xc9] sm:$0xff]
      %v5500 = vld [vmem:[%s456 + $0xd9] sm:$0xff]
      %v5501 = vld [vmem:[%s456 + $0xe1] sm:$0xff]
      %v5502 = vld [vmem:[%s456 + $0xf1] sm:$0xff]
      %v5503 = vld [vmem:[%s456 + $0xf9] sm:$0xff]
      %v5504 = vld [vmem:[%s456 + $0x109] sm:$0xff]
      %v5505 = vld [vmem:[%s456 + $0x111] sm:$0xff]
      %v5506 = vld [vmem:[%s456 + $0x121] sm:$0xff]
      %v5507 = vld [vmem:[%s456 + $0x129] sm:$0xff]
      %v5508 = vld [vmem:[%s456 + $0x139] sm:$0xff]
      %v5509 = vld [vmem:[%s456 + $0x141] sm:$0xff]
      %v5510 = vld [vmem:[%s456 + $0x151] sm:$0xff]
      %v5511 = vld [vmem:[%s456 + $0x159] sm:$0xff]
      %v5512 = vld [vmem:[%s456 + $0x169] sm:$0xff]
      %v5513 = vld [vmem:[%s456 + $0x171] sm:$0xff]
      %v5514 = vld [vmem:[%s456 + $0x2] sm:$0xff]
      %v5515 = vld [vmem:[%s456 + $0xa] sm:$0xff]
      %v5516 = vld [vmem:[%s456 + $0x1a] sm:$0xff]
      %v5517 = vld [vmem:[%s456 + $0x22] sm:$0xff]
      %v5518 = vld [vmem:[%s456 + $0x32] sm:$0xff]
      %v5519 = vld [vmem:[%s456 + $0x3a] sm:$0xff]
      %v5520 = vld [vmem:[%s456 + $0x4a] sm:$0xff]
      %v5521 = vld [vmem:[%s456 + $0x52] sm:$0xff]
      %v5522 = vld [vmem:[%s456 + $0x62] sm:$0xff]
      %v5523 = vld [vmem:[%s456 + $0x6a] sm:$0xff]
      %v5524 = vld [vmem:[%s456 + $0x7a] sm:$0xff]
      %v5525 = vld [vmem:[%s456 + $0x82] sm:$0xff]
      %v5526 = vld [vmem:[%s456 + $0x92] sm:$0xff]
      %v5527 = vld [vmem:[%s456 + $0x9a] sm:$0xff]
      %v5528 = vld [vmem:[%s456 + $0xaa] sm:$0xff]
      %v5529 = vld [vmem:[%s456 + $0xb2] sm:$0xff]
      %v5530 = vld [vmem:[%s456 + $0xc2] sm:$0xff]
      %v5531 = vld [vmem:[%s456 + $0xca] sm:$0xff]
      %v5532 = vld [vmem:[%s456 + $0xda] sm:$0xff]
      %v5533 = vld [vmem:[%s456 + $0xe2] sm:$0xff]
      %v5534 = vld [vmem:[%s456 + $0xf2] sm:$0xff]
      %v5535 = vld [vmem:[%s456 + $0xfa] sm:$0xff]
      %v5536 = vld [vmem:[%s456 + $0x10a] sm:$0xff]
      %v5537 = vld [vmem:[%s456 + $0x112] sm:$0xff]
      %v5538 = vld [vmem:[%s456 + $0x122] sm:$0xff]
      %v5539 = vld [vmem:[%s456 + $0x12a] sm:$0xff]
      %v5540 = vld [vmem:[%s456 + $0x13a] sm:$0xff]
      %v5541 = vld [vmem:[%s456 + $0x142] sm:$0xff]
      %v5542 = vld [vmem:[%s456 + $0x152] sm:$0xff]
      %v5543 = vld [vmem:[%s456 + $0x15a] sm:$0xff]
      %v5544 = vld [vmem:[%s456 + $0x16a] sm:$0xff]
      %v5545 = vld [vmem:[%s456 + $0x172] sm:$0xff]
      %5578 = vrot.lane.b32.xlu0 %v5450, 4
      %v5579 = vpop.permute.xlu0 %5578
      %5580 = vrot.lane.b32.xlu0 %v5451, 4
      %v5581 = vpop.permute.xlu0 %5580
      %5582 = vrot.lane.b32.xlu0 %v5452, 4
      %v5583 = vpop.permute.xlu0 %5582
      %5584 = vrot.lane.b32.xlu0 %v5453, 4
      %v5585 = vpop.permute.xlu0 %5584
      %5586 = vrot.lane.b32.xlu0 %v5454, 4
      %v5587 = vpop.permute.xlu0 %5586
      %5588 = vrot.lane.b32.xlu0 %v5455, 4
      %v5589 = vpop.permute.xlu0 %5588
      %5590 = vrot.lane.b32.xlu0 %v5456, 4
      %v5591 = vpop.permute.xlu0 %5590
      %5592 = vrot.lane.b32.xlu0 %v5457, 4
      %v5593 = vpop.permute.xlu0 %5592
      %5594 = vrot.lane.b32.xlu0 %v5458, 4
      %v5595 = vpop.permute.xlu0 %5594
      %5596 = vrot.lane.b32.xlu0 %v5459, 4
      %v5597 = vpop.permute.xlu0 %5596
      %5598 = vrot.lane.b32.xlu0 %v5460, 4
      %v5599 = vpop.permute.xlu0 %5598
      %5600 = vrot.lane.b32.xlu0 %v5461, 4
      %v5601 = vpop.permute.xlu0 %5600
      %5602 = vrot.lane.b32.xlu0 %v5462, 4
      %v5603 = vpop.permute.xlu0 %5602
      %5604 = vrot.lane.b32.xlu0 %v5463, 4
      %v5605 = vpop.permute.xlu0 %5604
      %5606 = vrot.lane.b32.xlu0 %v5464, 4
      %v5607 = vpop.permute.xlu0 %5606
      %5608 = vrot.lane.b32.xlu0 %v5465, 4
      %v5609 = vpop.permute.xlu0 %5608
      %5610 = vrot.lane.b32.xlu0 %v5466, 4
      %v5611 = vpop.permute.xlu0 %5610
      %5612 = vrot.lane.b32.xlu0 %v5467, 4
      %v5613 = vpop.permute.xlu0 %5612
      %5614 = vrot.lane.b32.xlu0 %v5468, 4
      %v5615 = vpop.permute.xlu0 %5614
      %5616 = vrot.lane.b32.xlu0 %v5469, 4
      %v5617 = vpop.permute.xlu0 %5616
      %5618 = vrot.lane.b32.xlu0 %v5470, 4
      %v5619 = vpop.permute.xlu0 %5618
      %5620 = vrot.lane.b32.xlu0 %v5471, 4
      %v5621 = vpop.permute.xlu0 %5620
      %5622 = vrot.lane.b32.xlu0 %v5472, 4
      %v5623 = vpop.permute.xlu0 %5622
      %5624 = vrot.lane.b32.xlu0 %v5473, 4
      %v5625 = vpop.permute.xlu0 %5624
      %5626 = vrot.lane.b32.xlu0 %v5474, 4
      %v5627 = vpop.permute.xlu0 %5626
      %5628 = vrot.lane.b32.xlu0 %v5475, 4
      %v5629 = vpop.permute.xlu0 %5628
      %5630 = vrot.lane.b32.xlu0 %v5476, 4
      %v5631 = vpop.permute.xlu0 %5630
      %5632 = vrot.lane.b32.xlu0 %v5477, 4
      %v5633 = vpop.permute.xlu0 %5632
      %5634 = vrot.lane.b32.xlu0 %v5478, 4
      %v5635 = vpop.permute.xlu0 %5634
      %5636 = vrot.lane.b32.xlu0 %v5479, 4
      %v5637 = vpop.permute.xlu0 %5636
      %5638 = vrot.lane.b32.xlu0 %v5480, 4
      %v5639 = vpop.permute.xlu0 %5638
      %5640 = vrot.lane.b32.xlu0 %v5481, 4
      %v5641 = vpop.permute.xlu0 %5640
      %5706 = vrot.lane.b32.xlu0 %v5482, 8
      %v5707 = vpop.permute.xlu0 %5706
      %5708 = vrot.lane.b32.xlu0 %v5483, 8
      %v5709 = vpop.permute.xlu0 %5708
      %5710 = vrot.lane.b32.xlu0 %v5484, 8
      %v5711 = vpop.permute.xlu0 %5710
      %5712 = vrot.lane.b32.xlu0 %v5485, 8
      %v5713 = vpop.permute.xlu0 %5712
      %5714 = vrot.lane.b32.xlu0 %v5486, 8
      %v5715 = vpop.permute.xlu0 %5714
      %5716 = vrot.lane.b32.xlu0 %v5487, 8
      %v5717 = vpop.permute.xlu0 %5716
      %5718 = vrot.lane.b32.xlu0 %v5488, 8
      %v5719 = vpop.permute.xlu0 %5718
      %5720 = vrot.lane.b32.xlu0 %v5489, 8
      %v5721 = vpop.permute.xlu0 %5720
      %5722 = vrot.lane.b32.xlu0 %v5490, 8
      %v5723 = vpop.permute.xlu0 %5722
      %5724 = vrot.lane.b32.xlu0 %v5491, 8
      %v5725 = vpop.permute.xlu0 %5724
      %5726 = vrot.lane.b32.xlu0 %v5492, 8
      %v5727 = vpop.permute.xlu0 %5726
      %5728 = vrot.lane.b32.xlu0 %v5493, 8
      %v5729 = vpop.permute.xlu0 %5728
      %5730 = vrot.lane.b32.xlu0 %v5494, 8
      %v5731 = vpop.permute.xlu0 %5730
      %5732 = vrot.lane.b32.xlu0 %v5495, 8
      %v5733 = vpop.permute.xlu0 %5732
      %5734 = vrot.lane.b32.xlu0 %v5496, 8
      %v5735 = vpop.permute.xlu0 %5734
      %5736 = vrot.lane.b32.xlu0 %v5497, 8
      %v5737 = vpop.permute.xlu0 %5736
      %5738 = vrot.lane.b32.xlu0 %v5498, 8
      %v5739 = vpop.permute.xlu0 %5738
      %5740 = vrot.lane.b32.xlu0 %v5499, 8
      %v5741 = vpop.permute.xlu0 %5740
      %5742 = vrot.lane.b32.xlu0 %v5500, 8
      %v5743 = vpop.permute.xlu0 %5742
      %5744 = vrot.lane.b32.xlu0 %v5501, 8
      %v5745 = vpop.permute.xlu0 %5744
      %5746 = vrot.lane.b32.xlu0 %v5502, 8
      %v5747 = vpop.permute.xlu0 %5746
      %5748 = vrot.lane.b32.xlu0 %v5503, 8
      %v5749 = vpop.permute.xlu0 %5748
      %5750 = vrot.lane.b32.xlu0 %v5504, 8
      %v5751 = vpop.permute.xlu0 %5750
      %5752 = vrot.lane.b32.xlu0 %v5505, 8
      %v5753 = vpop.permute.xlu0 %5752
      %5754 = vrot.lane.b32.xlu0 %v5506, 8
      %v5755 = vpop.permute.xlu0 %5754
      %5756 = vrot.lane.b32.xlu0 %v5507, 8
      %v5757 = vpop.permute.xlu0 %5756
      %5758 = vrot.lane.b32.xlu0 %v5508, 8
      %v5759 = vpop.permute.xlu0 %5758
      %5760 = vrot.lane.b32.xlu0 %v5509, 8
      %v5761 = vpop.permute.xlu0 %5760
      %5762 = vrot.lane.b32.xlu0 %v5510, 8
      %v5763 = vpop.permute.xlu0 %5762
      %5764 = vrot.lane.b32.xlu0 %v5511, 8
      %v5765 = vpop.permute.xlu0 %5764
      %5766 = vrot.lane.b32.xlu0 %v5512, 8
      %v5767 = vpop.permute.xlu0 %5766
      %5768 = vrot.lane.b32.xlu0 %v5513, 8
      %v5769 = vpop.permute.xlu0 %5768
      %5834 = vrot.lane.b32.xlu0 %v5514, 12
      %v5835 = vpop.permute.xlu0 %5834
      %5836 = vrot.lane.b32.xlu0 %v5515, 12
      %v5837 = vpop.permute.xlu0 %5836
      %5838 = vrot.lane.b32.xlu0 %v5516, 12
      %v5839 = vpop.permute.xlu0 %5838
      %5840 = vrot.lane.b32.xlu0 %v5517, 12
      %v5841 = vpop.permute.xlu0 %5840
      %5842 = vrot.lane.b32.xlu0 %v5518, 12
      %v5843 = vpop.permute.xlu0 %5842
      %5844 = vrot.lane.b32.xlu0 %v5519, 12
      %v5845 = vpop.permute.xlu0 %5844
      %5846 = vrot.lane.b32.xlu0 %v5520, 12
      %v5847 = vpop.permute.xlu0 %5846
      %5848 = vrot.lane.b32.xlu0 %v5521, 12
      %v5849 = vpop.permute.xlu0 %5848
      %5850 = vrot.lane.b32.xlu0 %v5522, 12
      %v5851 = vpop.permute.xlu0 %5850
      %5852 = vrot.lane.b32.xlu0 %v5523, 12
      %v5853 = vpop.permute.xlu0 %5852
      %5854 = vrot.lane.b32.xlu0 %v5524, 12
      %v5855 = vpop.permute.xlu0 %5854
      %5856 = vrot.lane.b32.xlu0 %v5525, 12
      %v5857 = vpop.permute.xlu0 %5856
      %5858 = vrot.lane.b32.xlu0 %v5526, 12
      %v5859 = vpop.permute.xlu0 %5858
      %5860 = vrot.lane.b32.xlu0 %v5527, 12
      %v5861 = vpop.permute.xlu0 %5860
      %5862 = vrot.lane.b32.xlu0 %v5528, 12
      %v5863 = vpop.permute.xlu0 %5862
      %5864 = vrot.lane.b32.xlu0 %v5529, 12
      %v5865 = vpop.permute.xlu0 %5864
      %5866 = vrot.lane.b32.xlu0 %v5530, 12
      %v5867 = vpop.permute.xlu0 %5866
      %5868 = vrot.lane.b32.xlu0 %v5531, 12
      %v5869 = vpop.permute.xlu0 %5868
      %5870 = vrot.lane.b32.xlu0 %v5532, 12
      %v5871 = vpop.permute.xlu0 %5870
      %5872 = vrot.lane.b32.xlu0 %v5533, 12
      %v5873 = vpop.permute.xlu0 %5872
      %5874 = vrot.lane.b32.xlu0 %v5534, 12
      %v5875 = vpop.permute.xlu0 %5874
      %5876 = vrot.lane.b32.xlu0 %v5535, 12
      %v5877 = vpop.permute.xlu0 %5876
      %5878 = vrot.lane.b32.xlu0 %v5536, 12
      %v5879 = vpop.permute.xlu0 %5878
      %5880 = vrot.lane.b32.xlu0 %v5537, 12
      %v5881 = vpop.permute.xlu0 %5880
      %5882 = vrot.lane.b32.xlu0 %v5538, 12
      %v5883 = vpop.permute.xlu0 %5882
      %5884 = vrot.lane.b32.xlu0 %v5539, 12
      %v5885 = vpop.permute.xlu0 %5884
      %5886 = vrot.lane.b32.xlu0 %v5540, 12
      %v5887 = vpop.permute.xlu0 %5886
      %5888 = vrot.lane.b32.xlu0 %v5541, 12
      %v5889 = vpop.permute.xlu0 %5888
      %5890 = vrot.lane.b32.xlu0 %v5542, 12
      %v5891 = vpop.permute.xlu0 %5890
      %5892 = vrot.lane.b32.xlu0 %v5543, 12
      %v5893 = vpop.permute.xlu0 %5892
      %5894 = vrot.lane.b32.xlu0 %v5544, 12
      %v5895 = vpop.permute.xlu0 %5894
      %5896 = vrot.lane.b32.xlu0 %v5545, 12
      %v5897 = vpop.permute.xlu0 %5896
      %v5930 = vsel %vm1577, %v5418, %v5579
      %v5931 = vsel %vm1577, %v5419, %v5581
      %v5932 = vsel %vm1577, %v5420, %v5583
      %v5933 = vsel %vm1577, %v5421, %v5585
      %v5934 = vsel %vm1577, %v5422, %v5587
      %v5935 = vsel %vm1577, %v5423, %v5589
      %v5936 = vsel %vm1577, %v5424, %v5591
      %v5937 = vsel %vm1577, %v5425, %v5593
      %v5938 = vsel %vm1577, %v5426, %v5595
      %v5939 = vsel %vm1577, %v5427, %v5597
      %v5940 = vsel %vm1577, %v5428, %v5599
      %v5941 = vsel %vm1577, %v5429, %v5601
      %v5942 = vsel %vm1577, %v5430, %v5603
      %v5943 = vsel %vm1577, %v5431, %v5605
      %v5944 = vsel %vm1577, %v5432, %v5607
      %v5945 = vsel %vm1577, %v5433, %v5609
      %v5946 = vsel %vm1577, %v5434, %v5611
      %v5947 = vsel %vm1577, %v5435, %v5613
      %v5948 = vsel %vm1577, %v5436, %v5615
      %v5949 = vsel %vm1577, %v5437, %v5617
      %v5950 = vsel %vm1577, %v5438, %v5619
      %v5951 = vsel %vm1577, %v5439, %v5621
      %v5952 = vsel %vm1577, %v5440, %v5623
      %v5953 = vsel %vm1577, %v5441, %v5625
      %v5954 = vsel %vm1577, %v5442, %v5627
      %v5955 = vsel %vm1577, %v5443, %v5629
      %v5956 = vsel %vm1577, %v5444, %v5631
      %v5957 = vsel %vm1577, %v5445, %v5633
      %v5958 = vsel %vm1577, %v5446, %v5635
      %v5959 = vsel %vm1577, %v5447, %v5637
      %v5960 = vsel %vm1577, %v5448, %v5639
      %v5961 = vsel %vm1577, %v5449, %v5641
      %v5962 = vsel %vm1610, %v5930, %v5707
      %v5963 = vsel %vm1610, %v5931, %v5709
      %v5964 = vsel %vm1610, %v5932, %v5711
      %v5965 = vsel %vm1610, %v5933, %v5713
      %v5966 = vsel %vm1610, %v5934, %v5715
      %v5967 = vsel %vm1610, %v5935, %v5717
      %v5968 = vsel %vm1610, %v5936, %v5719
      %v5969 = vsel %vm1610, %v5937, %v5721
      %v5970 = vsel %vm1610, %v5938, %v5723
      %v5971 = vsel %vm1610, %v5939, %v5725
      %v5972 = vsel %vm1610, %v5940, %v5727
      %v5973 = vsel %vm1610, %v5941, %v5729
      %v5974 = vsel %vm1610, %v5942, %v5731
      %v5975 = vsel %vm1610, %v5943, %v5733
      %v5976 = vsel %vm1610, %v5944, %v5735
      %v5977 = vsel %vm1610, %v5945, %v5737
      %v5978 = vsel %vm1610, %v5946, %v5739
      %v5979 = vsel %vm1610, %v5947, %v5741
      %v5980 = vsel %vm1610, %v5948, %v5743
      %v5981 = vsel %vm1610, %v5949, %v5745
      %v5982 = vsel %vm1610, %v5950, %v5747
      %v5983 = vsel %vm1610, %v5951, %v5749
      %v5984 = vsel %vm1610, %v5952, %v5751
      %v5985 = vsel %vm1610, %v5953, %v5753
      %v5986 = vsel %vm1610, %v5954, %v5755
      %v5987 = vsel %vm1610, %v5955, %v5757
      %v5988 = vsel %vm1610, %v5956, %v5759
      %v5989 = vsel %vm1610, %v5957, %v5761
      %v5990 = vsel %vm1610, %v5958, %v5763
      %v5991 = vsel %vm1610, %v5959, %v5765
      %v5992 = vsel %vm1610, %v5960, %v5767
      %v5993 = vsel %vm1610, %v5961, %v5769
      %v5994 = vsel %vm1643, %v5962, %v5835
      %v5995 = vsel %vm1643, %v5963, %v5837
      %v5996 = vsel %vm1643, %v5964, %v5839
      %v5997 = vsel %vm1643, %v5965, %v5841
      %v5998 = vsel %vm1643, %v5966, %v5843
      %v5999 = vsel %vm1643, %v5967, %v5845
      %v6000 = vsel %vm1643, %v5968, %v5847
      %v6001 = vsel %vm1643, %v5969, %v5849
      %v6002 = vsel %vm1643, %v5970, %v5851
      %v6003 = vsel %vm1643, %v5971, %v5853
      %v6004 = vsel %vm1643, %v5972, %v5855
      %v6005 = vsel %vm1643, %v5973, %v5857
      %v6006 = vsel %vm1643, %v5974, %v5859
      %v6007 = vsel %vm1643, %v5975, %v5861
      %v6008 = vsel %vm1643, %v5976, %v5863
      %v6009 = vsel %vm1643, %v5977, %v5865
      %v6010 = vsel %vm1643, %v5978, %v5867
      %v6011 = vsel %vm1643, %v5979, %v5869
      %v6012 = vsel %vm1643, %v5980, %v5871
      %v6013 = vsel %vm1643, %v5981, %v5873
      %v6014 = vsel %vm1643, %v5982, %v5875
      %v6015 = vsel %vm1643, %v5983, %v5877
      %v6016 = vsel %vm1643, %v5984, %v5879
      %v6017 = vsel %vm1643, %v5985, %v5881
      %v6018 = vsel %vm1643, %v5986, %v5883
      %v6019 = vsel %vm1643, %v5987, %v5885
      %v6020 = vsel %vm1643, %v5988, %v5887
      %v6021 = vsel %vm1643, %v5989, %v5889
      %v6022 = vsel %vm1643, %v5990, %v5891
      %v6023 = vsel %vm1643, %v5991, %v5893
      %v6024 = vsel %vm1643, %v5992, %v5895
      %v6025 = vsel %vm1643, %v5993, %v5897
      %v6026 = vld [vmem:[%s4] sm:$0xff]
      %v6027 = vld [vmem:[%s4 + $0x8] sm:$0xff]
      %v6029 = vsel %vm1676, %v5994, 0
      %v6032 = vsel %vm1676, %v5995, 0
      %v6035 = vsel %vm1676, %v5996, 0
      %v6038 = vsel %vm1676, %v5997, 0
      %v6041 = vsel %vm1676, %v5998, 0
      %v6044 = vsel %vm1676, %v5999, 0
      %v6047 = vsel %vm1676, %v6000, 0
      %v6050 = vsel %vm1676, %v6001, 0
      %v6053 = vsel %vm1676, %v6002, 0
      %v6056 = vsel %vm1676, %v6003, 0
      %v6059 = vsel %vm1676, %v6004, 0
      %v6062 = vsel %vm1676, %v6005, 0
      %v6065 = vsel %vm1676, %v6006, 0
      %v6068 = vsel %vm1676, %v6007, 0
      %v6071 = vsel %vm1676, %v6008, 0
      %v6074 = vsel %vm1676, %v6009, 0
      %v6077 = vsel %vm1676, %v6010, 0
      %v6080 = vsel %vm1676, %v6011, 0
      %v6083 = vsel %vm1676, %v6012, 0
      %v6086 = vsel %vm1676, %v6013, 0
      %v6089 = vsel %vm1676, %v6014, 0
      %v6092 = vsel %vm1676, %v6015, 0
      %v6095 = vsel %vm1676, %v6016, 0
      %v6098 = vsel %vm1676, %v6017, 0
      %v6101 = vsel %vm1676, %v6018, 0
      %v6104 = vsel %vm1676, %v6019, 0
      %v6107 = vsel %vm1676, %v6020, 0
      %v6110 = vsel %vm1676, %v6021, 0
      %v6113 = vsel %vm1676, %v6022, 0
      %v6116 = vsel %vm1676, %v6023, 0
      %v6119 = vsel %vm1676, %v6024, 0
      %v6122 = vsel %vm1676, %v6025, 0
      %6124 = vmatprep.subr.mxu0 0.0
      %6125 = vmatpush1.msra.mxu0 %v6026
      %6126 = vmatprep.subr.mxu0 0.0
      %6127 = vmatpush1.msra.mxu0 %v6027
      %6128 = vmatprep.subr.mxu0 0.0
      %6129 = vmatpush1.msra.mxu0 0.0
      %6130 = vmatprep.subr.mxu0 0.0
      %6131 = vmatpush1.msra.mxu0 0.0
      %6132 = vmatprep.subr.mxu0 0.0
      %6133 = vmatpush1.msra.mxu0 0.0
      %6134 = vmatprep.subr.mxu0 0.0
      %6135 = vmatpush1.msra.mxu0 0.0
      %6136 = vmatprep.subr.mxu0 0.0
      %6137 = vmatpush1.msra.mxu0 0.0
      %6138 = vmatprep.subr.mxu0 0.0
      %6139 = vmatpush1.msra.mxu0 0.0
      %6140 = vmatprep.subr.mxu0 0.0
      %6141 = vmatpush1.msra.mxu0 0.0
      %6142 = vmatprep.subr.mxu0 0.0
      %6143 = vmatpush1.msra.mxu0 0.0
      %6144 = vmatprep.subr.mxu0 0.0
      %6145 = vmatpush1.msra.mxu0 0.0
      %6146 = vmatprep.subr.mxu0 0.0
      %6147 = vmatpush1.msra.mxu0 0.0
      %6148 = vmatprep.subr.mxu0 0.0
      %6149 = vmatpush1.msra.mxu0 0.0
      %6150 = vmatprep.subr.mxu0 0.0
      %6151 = vmatpush1.msra.mxu0 0.0
      %6152 = vmatprep.subr.mxu0 0.0
      %6153 = vmatpush1.msra.mxu0 0.0
      %6154 = vmatprep.subr.mxu0 0.0
      %6155 = vmatpush1.msra.mxu0 0.0
      %6156 = vmatprep.subr.mxu0 0.0
      %6157 = vmatpush1.msra.mxu0 0.0
      %6158 = vmatprep.subr.mxu0 0.0
      %6159 = vmatpush1.msra.mxu0 0.0
      %6160 = vmatprep.subr.mxu0 0.0
      %6161 = vmatpush1.msra.mxu0 0.0
      %6162 = vmatprep.subr.mxu0 0.0
      %6163 = vmatpush1.msra.mxu0 0.0
      %6164 = vmatprep.subr.mxu0 0.0
      %6165 = vmatpush1.msra.mxu0 0.0
      %6166 = vmatprep.subr.mxu0 0.0
      %6167 = vmatpush1.msra.mxu0 0.0
      %6168 = vmatprep.subr.mxu0 0.0
      %6169 = vmatpush1.msra.mxu0 0.0
      %6170 = vmatprep.subr.mxu0 0.0
      %6171 = vmatpush1.msra.mxu0 0.0
      %6172 = vmatprep.subr.mxu0 0.0
      %6173 = vmatpush1.msra.mxu0 0.0
      %6174 = vmatprep.subr.mxu0 0.0
      %6175 = vmatpush1.msra.mxu0 0.0
      %6176 = vmatprep.subr.mxu0 0.0
      %6177 = vmatpush1.msra.mxu0 0.0
      %6178 = vmatprep.subr.mxu0 0.0
      %6179 = vmatpush1.msra.mxu0 0.0
      %6180 = vmatprep.subr.mxu0 0.0
      %6181 = vmatpush1.msra.mxu0 0.0
      %6182 = vmatprep.subr.mxu0 0.0
      %6183 = vmatpush1.msra.mxu0 0.0
      %6184 = vmatprep.subr.mxu0 0.0
      %6185 = vmatpush1.msra.mxu0 0.0
      %6186 = vmatprep.subr.mxu0 0.0
      %6187 = vmatpush1.msra.mxu0 0.0
      %6188 = vmatprep.mubr.f32.mxu0 0.0
      %6189 = vmatmul.mubr.f32.gmra.mrb[0].mxu0 %v6029
      %v6190 = vpop.f32.mrb[0].mxu0
      %v6191 = vadd.f32 0.0, %v6190
      %v6192 = vpop.f32.mrb[0].mxu0
      %6193 = vmatprep.mubr.f32.mxu0 0.0
      %6194 = vmatmul.mubr.f32.gmra.mrb[0].mxu0 %v6032
      %v6195 = vpop.f32.mrb[0].mxu0
      %v6196 = vadd.f32 0.0, %v6195
      %v6197 = vpop.f32.mrb[0].mxu0
      %6198 = vmatprep.mubr.f32.mxu0 0.0
      %6199 = vmatmul.mubr.f32.gmra.mrb[0].mxu0 %v6035
      %v6200 = vpop.f32.mrb[0].mxu0
      %v6201 = vadd.f32 0.0, %v6200
      %v6202 = vpop.f32.mrb[0].mxu0
      %6203 = vmatprep.mubr.f32.mxu0 0.0
      %6204 = vmatmul.mubr.f32.gmra.mrb[0].mxu0 %v6038
      %v6205 = vpop.f32.mrb[0].mxu0
      %v6206 = vadd.f32 0.0, %v6205
      %v6207 = vpop.f32.mrb[0].mxu0
      %6208 = vmatprep.mubr.f32.mxu0 0.0
      %6209 = vmatmul.mubr.f32.gmra.mrb[0].mxu0 %v6041
      %v6210 = vpop.f32.mrb[0].mxu0
      %v6211 = vadd.f32 0.0, %v6210
      %v6212 = vpop.f32.mrb[0].mxu0
      %6213 = vmatprep.mubr.f32.mxu0 0.0
      %6214 = vmatmul.mubr.f32.gmra.mrb[0].mxu0 %v6044
      %v6215 = vpop.f32.mrb[0].mxu0
      %v6216 = vadd.f32 0.0, %v6215
      %v6217 = vpop.f32.mrb[0].mxu0
      %6218 = vmatprep.mubr.f32.mxu0 0.0
      %6219 = vmatmul.mubr.f32.gmra.mrb[0].mxu0 %v6047
      %v6220 = vpop.f32.mrb[0].mxu0
      %v6221 = vadd.f32 0.0, %v6220
      %v6222 = vpop.f32.mrb[0].mxu0
      %6223 = vmatprep.mubr.f32.mxu0 0.0
      %6224 = vmatmul.mubr.f32.gmra.mrb[0].mxu0 %v6050
      %v6225 = vpop.f32.mrb[0].mxu0
      %v6226 = vadd.f32 0.0, %v6225
      %v6227 = vpop.f32.mrb[0].mxu0
      %6228 = vmatprep.mubr.f32.mxu0 0.0
      %6229 = vmatmul.mubr.f32.gmra.mrb[0].mxu0 %v6053
      %v6230 = vpop.f32.mrb[0].mxu0
      %v6231 = vadd.f32 0.0, %v6230
      %v6232 = vpop.f32.mrb[0].mxu0
      %6233 = vmatprep.mubr.f32.mxu0 0.0
      %6234 = vmatmul.mubr.f32.gmra.mrb[0].mxu0 %v6056
      %v6235 = vpop.f32.mrb[0].mxu0
      %v6236 = vadd.f32 0.0, %v6235
      %v6237 = vpop.f32.mrb[0].mxu0
      %6238 = vmatprep.mubr.f32.mxu0 0.0
      %6239 = vmatmul.mubr.f32.gmra.mrb[0].mxu0 %v6059
      %v6240 = vpop.f32.mrb[0].mxu0
      %v6241 = vadd.f32 0.0, %v6240
      %v6242 = vpop.f32.mrb[0].mxu0
      %6243 = vmatprep.mubr.f32.mxu0 0.0
      %6244 = vmatmul.mubr.f32.gmra.mrb[0].mxu0 %v6062
      %v6245 = vpop.f32.mrb[0].mxu0
      %v6246 = vadd.f32 0.0, %v6245
      %v6247 = vpop.f32.mrb[0].mxu0
      %6248 = vmatprep.mubr.f32.mxu0 0.0
      %6249 = vmatmul.mubr.f32.gmra.mrb[0].mxu0 %v6065
      %v6250 = vpop.f32.mrb[0].mxu0
      %v6251 = vadd.f32 0.0, %v6250
      %v6252 = vpop.f32.mrb[0].mxu0
      %6253 = vmatprep.mubr.f32.mxu0 0.0
      %6254 = vmatmul.mubr.f32.gmra.mrb[0].mxu0 %v6068
      %v6255 = vpop.f32.mrb[0].mxu0
      %v6256 = vadd.f32 0.0, %v6255
      %v6257 = vpop.f32.mrb[0].mxu0
      %6258 = vmatprep.mubr.f32.mxu0 0.0
      %6259 = vmatmul.mubr.f32.gmra.mrb[0].mxu0 %v6071
      %v6260 = vpop.f32.mrb[0].mxu0
      %v6261 = vadd.f32 0.0, %v6260
      %v6262 = vpop.f32.mrb[0].mxu0
      %6263 = vmatprep.mubr.f32.mxu0 0.0
      %6264 = vmatmul.mubr.f32.gmra.mrb[0].mxu0 %v6074
      %v6265 = vpop.f32.mrb[0].mxu0
      %v6266 = vadd.f32 0.0, %v6265
      %v6267 = vpop.f32.mrb[0].mxu0
      %6268 = vmatprep.mubr.f32.mxu0 0.0
      %6269 = vmatmul.mubr.f32.gmra.mrb[0].mxu0 %v6077
      %v6270 = vpop.f32.mrb[0].mxu0
      %v6271 = vadd.f32 0.0, %v6270
      %v6272 = vpop.f32.mrb[0].mxu0
      %6273 = vmatprep.mubr.f32.mxu0 0.0
      %6274 = vmatmul.mubr.f32.gmra.mrb[0].mxu0 %v6080
      %v6275 = vpop.f32.mrb[0].mxu0
      %v6276 = vadd.f32 0.0, %v6275
      %v6277 = vpop.f32.mrb[0].mxu0
      %6278 = vmatprep.mubr.f32.mxu0 0.0
      %6279 = vmatmul.mubr.f32.gmra.mrb[0].mxu0 %v6083
      %v6280 = vpop.f32.mrb[0].mxu0
      %v6281 = vadd.f32 0.0, %v6280
      %v6282 = vpop.f32.mrb[0].mxu0
      %6283 = vmatprep.mubr.f32.mxu0 0.0
      %6284 = vmatmul.mubr.f32.gmra.mrb[0].mxu0 %v6086
      %v6285 = vpop.f32.mrb[0].mxu0
      %v6286 = vadd.f32 0.0, %v6285
      %v6287 = vpop.f32.mrb[0].mxu0
      %6288 = vmatprep.mubr.f32.mxu0 0.0
      %6289 = vmatmul.mubr.f32.gmra.mrb[0].mxu0 %v6089
      %v6290 = vpop.f32.mrb[0].mxu0
      %v6291 = vadd.f32 0.0, %v6290
      %v6292 = vpop.f32.mrb[0].mxu0
      %6293 = vmatprep.mubr.f32.mxu0 0.0
      %6294 = vmatmul.mubr.f32.gmra.mrb[0].mxu0 %v6092
      %v6295 = vpop.f32.mrb[0].mxu0
      %v6296 = vadd.f32 0.0, %v6295
      %v6297 = vpop.f32.mrb[0].mxu0
      %6298 = vmatprep.mubr.f32.mxu0 0.0
      %6299 = vmatmul.mubr.f32.gmra.mrb[0].mxu0 %v6095
      %v6300 = vpop.f32.mrb[0].mxu0
      %v6301 = vadd.f32 0.0, %v6300
      %v6302 = vpop.f32.mrb[0].mxu0
      %6303 = vmatprep.mubr.f32.mxu0 0.0
      %6304 = vmatmul.mubr.f32.gmra.mrb[0].mxu0 %v6098
      %v6305 = vpop.f32.mrb[0].mxu0
      %v6306 = vadd.f32 0.0, %v6305
      %v6307 = vpop.f32.mrb[0].mxu0
      %6308 = vmatprep.mubr.f32.mxu0 0.0
      %6309 = vmatmul.mubr.f32.gmra.mrb[0].mxu0 %v6101
      %v6310 = vpop.f32.mrb[0].mxu0
      %v6311 = vadd.f32 0.0, %v6310
      %v6312 = vpop.f32.mrb[0].mxu0
      %6313 = vmatprep.mubr.f32.mxu0 0.0
      %6314 = vmatmul.mubr.f32.gmra.mrb[0].mxu0 %v6104
      %v6315 = vpop.f32.mrb[0].mxu0
      %v6316 = vadd.f32 0.0, %v6315
      %v6317 = vpop.f32.mrb[0].mxu0
      %6318 = vmatprep.mubr.f32.mxu0 0.0
      %6319 = vmatmul.mubr.f32.gmra.mrb[0].mxu0 %v6107
      %v6320 = vpop.f32.mrb[0].mxu0
      %v6321 = vadd.f32 0.0, %v6320
      %v6322 = vpop.f32.mrb[0].mxu0
      %6323 = vmatprep.mubr.f32.mxu0 0.0
      %6324 = vmatmul.mubr.f32.gmra.mrb[0].mxu0 %v6110
      %v6325 = vpop.f32.mrb[0].mxu0
      %v6326 = vadd.f32 0.0, %v6325
      %v6327 = vpop.f32.mrb[0].mxu0
      %6328 = vmatprep.mubr.f32.mxu0 0.0
      %6329 = vmatmul.mubr.f32.gmra.mrb[0].mxu0 %v6113
      %v6330 = vpop.f32.mrb[0].mxu0
      %v6331 = vadd.f32 0.0, %v6330
      %v6332 = vpop.f32.mrb[0].mxu0
      %6333 = vmatprep.mubr.f32.mxu0 0.0
      %6334 = vmatmul.mubr.f32.gmra.mrb[0].mxu0 %v6116
      %v6335 = vpop.f32.mrb[0].mxu0
      %v6336 = vadd.f32 0.0, %v6335
      %v6337 = vpop.f32.mrb[0].mxu0
      %6338 = vmatprep.mubr.f32.mxu0 0.0
      %6339 = vmatmul.mubr.f32.gmra.mrb[0].mxu0 %v6119
      %v6340 = vpop.f32.mrb[0].mxu0
      %v6341 = vadd.f32 0.0, %v6340
      %v6342 = vpop.f32.mrb[0].mxu0
      %6343 = vmatprep.mubr.f32.mxu0 0.0
      %6344 = vmatmul.mubr.f32.gmra.mrb[0].mxu0 %v6122
      %v6345 = vpop.f32.mrb[0].mxu0
      %v6346 = vadd.f32 0.0, %v6345
      %v6347 = vpop.f32.mrb[0].mxu0
      %6348 = vdwg.mxu0
      %s6349 = scalar_lea.vmem %s258, 768
      %6350 = vst.msk [vmem:[%s6349] sm:$0xff] %vm1610, %v6191
      %6351 = vst.msk [vmem:[%s6349 + $0x8] sm:$0xff] %vm1610, %v6196
      %6352 = vst.msk [vmem:[%s6349 + $0x10] sm:$0xff] %vm1610, %v6201
      %6353 = vst.msk [vmem:[%s6349 + $0x18] sm:$0xff] %vm1610, %v6206
      %6354 = vst.msk [vmem:[%s6349 + $0x20] sm:$0xff] %vm1610, %v6211
      %6355 = vst.msk [vmem:[%s6349 + $0x28] sm:$0xff] %vm1610, %v6216
      %6356 = vst.msk [vmem:[%s6349 + $0x30] sm:$0xff] %vm1610, %v6221
      %6357 = vst.msk [vmem:[%s6349 + $0x38] sm:$0xff] %vm1610, %v6226
      %6358 = vst.msk [vmem:[%s6349 + $0x40] sm:$0xff] %vm1610, %v6231
      %6359 = vst.msk [vmem:[%s6349 + $0x48] sm:$0xff] %vm1610, %v6236
      %6360 = vst.msk [vmem:[%s6349 + $0x50] sm:$0xff] %vm1610, %v6241
      %6361 = vst.msk [vmem:[%s6349 + $0x58] sm:$0xff] %vm1610, %v6246
      %6362 = vst.msk [vmem:[%s6349 + $0x60] sm:$0xff] %vm1610, %v6251
      %6363 = vst.msk [vmem:[%s6349 + $0x68] sm:$0xff] %vm1610, %v6256
      %6364 = vst.msk [vmem:[%s6349 + $0x70] sm:$0xff] %vm1610, %v6261
      %6365 = vst.msk [vmem:[%s6349 + $0x78] sm:$0xff] %vm1610, %v6266
      %6366 = vst.msk [vmem:[%s6349 + $0x80] sm:$0xff] %vm1610, %v6271
      %6367 = vst.msk [vmem:[%s6349 + $0x88] sm:$0xff] %vm1610, %v6276
      %6368 = vst.msk [vmem:[%s6349 + $0x90] sm:$0xff] %vm1610, %v6281
      %6369 = vst.msk [vmem:[%s6349 + $0x98] sm:$0xff] %vm1610, %v6286
      %6370 = vst.msk [vmem:[%s6349 + $0xa0] sm:$0xff] %vm1610, %v6291
      %6371 = vst.msk [vmem:[%s6349 + $0xa8] sm:$0xff] %vm1610, %v6296
      %6372 = vst.msk [vmem:[%s6349 + $0xb0] sm:$0xff] %vm1610, %v6301
      %6373 = vst.msk [vmem:[%s6349 + $0xb8] sm:$0xff] %vm1610, %v6306
      %6374 = vst.msk [vmem:[%s6349 + $0xc0] sm:$0xff] %vm1610, %v6311
      %6375 = vst.msk [vmem:[%s6349 + $0xc8] sm:$0xff] %vm1610, %v6316
      %6376 = vst.msk [vmem:[%s6349 + $0xd0] sm:$0xff] %vm1610, %v6321
      %6377 = vst.msk [vmem:[%s6349 + $0xd8] sm:$0xff] %vm1610, %v6326
      %6378 = vst.msk [vmem:[%s6349 + $0xe0] sm:$0xff] %vm1610, %v6331
      %6379 = vst.msk [vmem:[%s6349 + $0xe8] sm:$0xff] %vm1610, %v6336
      %6380 = vst.msk [vmem:[%s6349 + $0xf0] sm:$0xff] %vm1610, %v6341
      %6381 = vst.msk [vmem:[%s6349 + $0xf8] sm:$0xff] %vm1610, %v6346
      %v6382 = vsel %vm1610, %v6191, 0.0
      %v6383 = vsel %vm1610, %v6196, 0.0
      %v6384 = vadd.f32 %v6382, %v6383
      %v6385 = vsel %vm1610, %v6201, 0.0
      %v6386 = vadd.f32 %v6384, %v6385
      %v6387 = vsel %vm1610, %v6206, 0.0
      %v6388 = vadd.f32 %v6386, %v6387
      %v6389 = vsel %vm1610, %v6211, 0.0
      %v6390 = vadd.f32 %v6388, %v6389
      %v6391 = vsel %vm1610, %v6216, 0.0
      %v6392 = vadd.f32 %v6390, %v6391
      %v6393 = vsel %vm1610, %v6221, 0.0
      %v6394 = vadd.f32 %v6392, %v6393
      %v6395 = vsel %vm1610, %v6226, 0.0
      %v6396 = vadd.f32 %v6394, %v6395
      %v6397 = vsel %vm1610, %v6231, 0.0
      %v6398 = vadd.f32 %v6396, %v6397
      %v6399 = vsel %vm1610, %v6236, 0.0
      %v6400 = vadd.f32 %v6398, %v6399
      %v6401 = vsel %vm1610, %v6241, 0.0
      %v6402 = vadd.f32 %v6400, %v6401
      %v6403 = vsel %vm1610, %v6246, 0.0
      %v6404 = vadd.f32 %v6402, %v6403
      %v6405 = vsel %vm1610, %v6251, 0.0
      %v6406 = vadd.f32 %v6404, %v6405
      %v6407 = vsel %vm1610, %v6256, 0.0
      %v6408 = vadd.f32 %v6406, %v6407
      %v6409 = vsel %vm1610, %v6261, 0.0
      %v6410 = vadd.f32 %v6408, %v6409
      %v6411 = vsel %vm1610, %v6266, 0.0
      %v6412 = vadd.f32 %v6410, %v6411
      %v6413 = vsel %vm1610, %v6271, 0.0
      %v6414 = vadd.f32 %v6412, %v6413
      %v6415 = vsel %vm1610, %v6276, 0.0
      %v6416 = vadd.f32 %v6414, %v6415
      %v6417 = vsel %vm1610, %v6281, 0.0
      %v6418 = vadd.f32 %v6416, %v6417
      %v6419 = vsel %vm1610, %v6286, 0.0
      %v6420 = vadd.f32 %v6418, %v6419
      %v6421 = vsel %vm1610, %v6291, 0.0
      %v6422 = vadd.f32 %v6420, %v6421
      %v6423 = vsel %vm1610, %v6296, 0.0
      %v6424 = vadd.f32 %v6422, %v6423
      %v6425 = vsel %vm1610, %v6301, 0.0
      %v6426 = vadd.f32 %v6424, %v6425
      %v6427 = vsel %vm1610, %v6306, 0.0
      %v6428 = vadd.f32 %v6426, %v6427
      %v6429 = vsel %vm1610, %v6311, 0.0
      %v6430 = vadd.f32 %v6428, %v6429
      %v6431 = vsel %vm1610, %v6316, 0.0
      %v6432 = vadd.f32 %v6430, %v6431
      %v6433 = vsel %vm1610, %v6321, 0.0
      %v6434 = vadd.f32 %v6432, %v6433
      %v6435 = vsel %vm1610, %v6326, 0.0
      %v6436 = vadd.f32 %v6434, %v6435
      %v6437 = vsel %vm1610, %v6331, 0.0
      %v6438 = vadd.f32 %v6436, %v6437
      %v6439 = vsel %vm1610, %v6336, 0.0
      %v6440 = vadd.f32 %v6438, %v6439
      %v6441 = vsel %vm1610, %v6341, 0.0
      %v6442 = vadd.f32 %v6440, %v6441
      %v6443 = vsel %vm1610, %v6346, 0.0
      %v6444 = vadd.f32 %v6442, %v6443
      %v6445 = vrot.slane %v6444, 4
      %v6446 = vadd.f32 %v6444, %v6445
      %v6447 = vrot.slane %v6446, 2
      %v6448 = vadd.f32 %v6446, %v6447
      %v6449 = vrot.slane %v6448, 1
      %v6450 = vadd.f32 %v6448, %v6449
      %v6451 = vadd.f32 %v5315, %v6450
      %v6452 = vmul.f32 %v6191, %v6191
      %v6453 = vmul.f32 %v6196, %v6196
      %v6454 = vmul.f32 %v6201, %v6201
      %v6455 = vmul.f32 %v6206, %v6206
      %v6456 = vmul.f32 %v6211, %v6211
      %v6457 = vmul.f32 %v6216, %v6216
      %v6458 = vmul.f32 %v6221, %v6221
      %v6459 = vmul.f32 %v6226, %v6226
      %v6460 = vmul.f32 %v6231, %v6231
      %v6461 = vmul.f32 %v6236, %v6236
      %v6462 = vmul.f32 %v6241, %v6241
      %v6463 = vmul.f32 %v6246, %v6246
      %v6464 = vmul.f32 %v6251, %v6251
      %v6465 = vmul.f32 %v6256, %v6256
      %v6466 = vmul.f32 %v6261, %v6261
      %v6467 = vmul.f32 %v6266, %v6266
      %v6468 = vmul.f32 %v6271, %v6271
      %v6469 = vmul.f32 %v6276, %v6276
      %v6470 = vmul.f32 %v6281, %v6281
      %v6471 = vmul.f32 %v6286, %v6286
      %v6472 = vmul.f32 %v6291, %v6291
      %v6473 = vmul.f32 %v6296, %v6296
      %v6474 = vmul.f32 %v6301, %v6301
      %v6475 = vmul.f32 %v6306, %v6306
      %v6476 = vmul.f32 %v6311, %v6311
      %v6477 = vmul.f32 %v6316, %v6316
      %v6478 = vmul.f32 %v6321, %v6321
      %v6479 = vmul.f32 %v6326, %v6326
      %v6480 = vmul.f32 %v6331, %v6331
      %v6481 = vmul.f32 %v6336, %v6336
      %v6482 = vmul.f32 %v6341, %v6341
      %v6483 = vmul.f32 %v6346, %v6346
      %v6484 = vsel %vm1610, %v6452, 0.0
      %v6485 = vsel %vm1610, %v6453, 0.0
      %v6486 = vadd.f32 %v6484, %v6485
      %v6487 = vsel %vm1610, %v6454, 0.0
      %v6488 = vadd.f32 %v6486, %v6487
      %v6489 = vsel %vm1610, %v6455, 0.0
      %v6490 = vadd.f32 %v6488, %v6489
      %v6491 = vsel %vm1610, %v6456, 0.0
      %v6492 = vadd.f32 %v6490, %v6491
      %v6493 = vsel %vm1610, %v6457, 0.0
      %v6494 = vadd.f32 %v6492, %v6493
      %v6495 = vsel %vm1610, %v6458, 0.0
      %v6496 = vadd.f32 %v6494, %v6495
      %v6497 = vsel %vm1610, %v6459, 0.0
      %v6498 = vadd.f32 %v6496, %v6497
      %v6499 = vsel %vm1610, %v6460, 0.0
      %v6500 = vadd.f32 %v6498, %v6499
      %v6501 = vsel %vm1610, %v6461, 0.0
      %v6502 = vadd.f32 %v6500, %v6501
      %v6503 = vsel %vm1610, %v6462, 0.0
      %v6504 = vadd.f32 %v6502, %v6503
      %v6505 = vsel %vm1610, %v6463, 0.0
      %v6506 = vadd.f32 %v6504, %v6505
      %v6507 = vsel %vm1610, %v6464, 0.0
      %v6508 = vadd.f32 %v6506, %v6507
      %v6509 = vsel %vm1610, %v6465, 0.0
      %v6510 = vadd.f32 %v6508, %v6509
      %v6511 = vsel %vm1610, %v6466, 0.0
      %v6512 = vadd.f32 %v6510, %v6511
      %v6513 = vsel %vm1610, %v6467, 0.0
      %v6514 = vadd.f32 %v6512, %v6513
      %v6515 = vsel %vm1610, %v6468, 0.0
      %v6516 = vadd.f32 %v6514, %v6515
      %v6517 = vsel %vm1610, %v6469, 0.0
      %v6518 = vadd.f32 %v6516, %v6517
      %v6519 = vsel %vm1610, %v6470, 0.0
      %v6520 = vadd.f32 %v6518, %v6519
      %v6521 = vsel %vm1610, %v6471, 0.0
      %v6522 = vadd.f32 %v6520, %v6521
      %v6523 = vsel %vm1610, %v6472, 0.0
      %v6524 = vadd.f32 %v6522, %v6523
      %v6525 = vsel %vm1610, %v6473, 0.0
      %v6526 = vadd.f32 %v6524, %v6525
      %v6527 = vsel %vm1610, %v6474, 0.0
      %v6528 = vadd.f32 %v6526, %v6527
      %v6529 = vsel %vm1610, %v6475, 0.0
      %v6530 = vadd.f32 %v6528, %v6529
      %v6531 = vsel %vm1610, %v6476, 0.0
      %v6532 = vadd.f32 %v6530, %v6531
      %v6533 = vsel %vm1610, %v6477, 0.0
      %v6534 = vadd.f32 %v6532, %v6533
      %v6535 = vsel %vm1610, %v6478, 0.0
      %v6536 = vadd.f32 %v6534, %v6535
      %v6537 = vsel %vm1610, %v6479, 0.0
      %v6538 = vadd.f32 %v6536, %v6537
      %v6539 = vsel %vm1610, %v6480, 0.0
      %v6540 = vadd.f32 %v6538, %v6539
      %v6541 = vsel %vm1610, %v6481, 0.0
      %v6542 = vadd.f32 %v6540, %v6541
      %v6543 = vsel %vm1610, %v6482, 0.0
      %v6544 = vadd.f32 %v6542, %v6543
      %v6545 = vsel %vm1610, %v6483, 0.0
      %v6546 = vadd.f32 %v6544, %v6545
      %v6547 = vrot.slane %v6546, 4
      %v6548 = vadd.f32 %v6546, %v6547
      %v6549 = vrot.slane %v6548, 2
      %v6550 = vadd.f32 %v6548, %v6549
      %v6551 = vrot.slane %v6550, 1
      %v6552 = vadd.f32 %v6550, %v6551
      %v6553 = vadd.f32 %v5417, %v6552
      %vm6554 = vcmask 57344
      %6555 = vst.msk [vmem:[%s262] sm:$0x1] %vm6554, %v6451
      %6556 = vst.msk [vmem:[%s262 + $0x1] sm:$0x1] %vm6554, %v6553
      %p6557 = scmp.lt.s32.totalorder %s18, 1
      %s6558 = scalar_select %p6557, %s18, 1
      %s6559 = smul.addr %s6558, 128
      %s6560 = smul.addr %s6559, 8
      %s6561 = scalar_lea.vmem %s5, %s6560
      %p6562 = scmp.lt.s32.totalorder %s18, 1
      %s6563 = scalar_select %p6562, %s18, 1
      %s6564 = smul.addr %s6563, 2
      %s6565 = scalar_lea.vmem %s6, %s6564
      // Predicated region
      $region41: #{decoder_block_forward.2} parent=39 // pred_check
        %p6566 = pneg %p146
      $region42: #{decoder_block_forward.2} parent=39 // pred_check_branch
        %6568 = sbr.rel (%p6566) target = $region44
      $region43: #{decoder_block_forward.2} parent=39 // pred_region
        _
      $region44: #{decoder_block_forward.2} parent=39 // pred_fallthru
        _
      // Predicated region
      $region45: #{decoder_block_forward.2} parent=39 // pred_check
        %p6569 = pneg %p172
      $region46: #{decoder_block_forward.2} parent=39 // pred_check_branch
        %6571 = sbr.rel (%p6569) target = $region48
      $region47: #{decoder_block_forward.2} parent=39 // pred_region
        _
      $region48: #{decoder_block_forward.2} parent=39 // pred_fallthru
        _
    $region40: #{decoder_block_forward.2} parent=5 // pred_fallthru
      _
    %p6572 = scmp.le.s32.totalorder 2, %s13
    // Predicated region
    $region49: #{decoder_block_forward.2} parent=5 // pred_check
      %p6573 = pneg %p6572
    $region50: #{decoder_block_forward.2} parent=5 // pred_check_branch
      %6575 = sbr.rel (%p6573) target = $region52
    $region51: #{decoder_block_forward.2} parent=5 // pred_region
      %s6576 = ssub.s32 %s13, 2
      // Predicated region
      $region53: #{decoder_block_forward.2} parent=51 // pred_check
        %p6577 = pneg %p152
      $region54: #{decoder_block_forward.2} parent=51 // pred_check_branch
        %6579 = sbr.rel (%p6577) target = $region56
      $region55: #{decoder_block_forward.2} parent=51 // pred_region
        %p6580 = scmp.lt.s32.totalorder %s19, 1
        %s6581 = scalar_select %p6580, %s19, 1
        %s6582 = smul.addr %s6581, 128
        %s6583 = smul.addr %s6582, 8
        %s6584 = scalar_lea.vmem %s5, %s6583
      $region56: #{decoder_block_forward.2} parent=51 // pred_fallthru
        _
      // Predicated region
      $region57: #{decoder_block_forward.2} parent=51 // pred_check
        %p6585 = pneg %p178
      $region58: #{decoder_block_forward.2} parent=51 // pred_check_branch
        %6587 = sbr.rel (%p6585) target = $region60
      $region59: #{decoder_block_forward.2} parent=51 // pred_region
        %p6588 = scmp.lt.s32.totalorder %s19, 1
        %s6589 = scalar_select %p6588, %s19, 1
        %s6590 = smul.addr %s6589, 2
        %s6591 = scalar_lea.vmem %s6, %s6590
      $region60: #{decoder_block_forward.2} parent=51 // pred_fallthru
        _
    $region52: #{decoder_block_forward.2} parent=5 // pred_fallthru
      _
  $region6: #{decoder_block_forward.2} parent=0 // loop_footer
    %s17 = sadd.s32 1, %s13
  $region7: #{decoder_block_forward.2} parent=0 // loop_footer_branch
    %12 = sbr.rel target = $region3
  $region8: #{decoder_block_forward.2} parent=0 // loop_exit
    _

</llo_original>
